<compile_context>
chip_gen: v7x
topology: tpu7x:2x2x1
jax: 0.10.0
libtpu: 0.0.40
codegen_flags: <defaults>
</compile_context>

<pallas_src>
import math

import jax
import jax.numpy as jnp
from jax import lax
from jax.experimental import pallas as pl
from jax.experimental.pallas import tpu as pltpu


def _round_up(x, m):
    return ((x + m - 1) // m) * m


# ----------------------------------------------------------------------------
# Kernel: BOTH directions of one bidirectional LSTM layer, one time-chunk per
# grid step.  grid = (T_pad // tT,), dimension_semantics = ("arbitrary",).
#   final=False -> emits two (T_pad, B, H) per-direction sequence outputs (true width)
#   final=True  -> accumulates the last-valid-step slab in VMEM and emits only the
#                  fused attention+sigmoid result (B, 1).
# ----------------------------------------------------------------------------
def _make_bilstm_layer_kernel(tT, B, H, Hp, in_dims, final):
    n_streams = len(in_dims)
    G = 4 * Hp

    def kernel(*refs):
        it = iter(refs)
        lens_ref = next(it)                                   # (B, 1) int32
        xf_refs = [next(it) for _ in range(n_streams)]        # fwd-time chunk / stream
        xb_refs = [next(it) for _ in range(n_streams)]        # bwd-time chunk / stream
        wx_ref = next(it)                                     # (2, sum(in_dims), 4Hp) bf16
        wh_ref = next(it)                                     # (2, Hp, 4Hp) bf16
        b_ref = next(it)                                      # (2, 1, 4Hp) f32
        if final:
            attw_ref = next(it)                               # (1, 2Hp) f32
            y_ref = next(it)                                  # (B, 1) f32
        else:
            outf_ref = next(it)                               # (tT, B, H) bf16
            outb_ref = next(it)                               # (tT, B, H) bf16
        hf_ref = next(it)
        cf_ref = next(it)
        hb_ref = next(it)
        cb_ref = next(it)
        xgf_ref = next(it)
        xgb_ref = next(it)
        if final:
            last_ref = next(it)                               # (B, 2Hp) f32

        tc = pl.program_id(0)
        nc = pl.num_programs(0)
        tcb = nc - 1 - tc                  # backward direction's time-chunk index
        lens = lens_ref[...]               # (B, 1) int32

        @pl.when(tc == 0)
        def _init():
            hf_ref[...] = jnp.zeros_like(hf_ref)
            cf_ref[...] = jnp.zeros_like(cf_ref)
            hb_ref[...] = jnp.zeros_like(hb_ref)
            cb_ref[...] = jnp.zeros_like(cb_ref)
            if final:
                last_ref[...] = jnp.zeros_like(last_ref)
                y_ref[...] = jnp.zeros_like(y_ref)

        # ---- Hoisted input projection: ONE (tT*B, Din)x(Din, 4Hp) MXU matmul per
        # direction/stream for the whole chunk (off the serial recurrence path). ----
        def chunk_proj(x_refs, d):
            wx_d = wx_ref[d]                                  # (sum(in_dims), 4Hp) bf16
            acc = None
            off = 0
            for j, dj in enumerate(in_dims):
                xj = x_refs[j][...].reshape(tT * B, dj)       # bf16
                p = jnp.dot(xj, wx_d[off:off + dj, :],
                            preferred_element_type=jnp.float32)
                acc = p if acc is None else acc + p
                off += dj
            return (acc + b_ref[d]).reshape(tT, B, G)

        xgf_ref[...] = chunk_proj(xf_refs, 0).astype(jnp.bfloat16)
        xgb_ref[...] = chunk_proj(xb_refs, 1).astype(jnp.bfloat16)

        # Recurrent weights: read once per chunk; invariant across the time loop.
        wh_f = wh_ref[0]
        wh_b = wh_ref[1]

        def dir_step(h_ref, c_ref, xg_ref, wh, local, t):
            mask = lens > t                                   # packed-sequence mask (B,1)
            h = h_ref[...]                                    # bf16 (B, Hp)
            gates = xg_ref[local].astype(jnp.float32) + jnp.dot(
                h, wh, preferred_element_type=jnp.float32)
            # lane-aligned gate slices (each Hp = 128 lanes), torch gate order i,f,g,o
            i = jax.nn.sigmoid(gates[:, 0 * Hp:1 * Hp])
            f = jax.nn.sigmoid(gates[:, 1 * Hp:2 * Hp])
            g = jnp.tanh(gates[:, 2 * Hp:3 * Hp])
            o = jax.nn.sigmoid(gates[:, 3 * Hp:4 * Hp])
            c_new = f * c_ref[...] + i * g
            h_new = o * jnp.tanh(c_new)
            h_upd = jnp.where(mask, h_new, h.astype(jnp.float32))
            h_ref[...] = h_upd.astype(h_ref.dtype)
            c_ref[...] = jnp.where(mask, c_new, c_ref[...])
            return mask, h_upd

        def step(s, carry):
            # forward direction at global time t_f
            t_f = tc * tT + s
            mask_f, hf_upd = dir_step(hf_ref, cf_ref, xgf_ref, wh_f, s, t_f)
            # backward direction walks its chunk in reverse time order
            local_b = tT - 1 - s
            t_b = tcb * tT + local_b
            mask_b, hb_upd = dir_step(hb_ref, cb_ref, xgb_ref, wh_b, local_b, t_b)
            if final:
                # capture output at t == len-1 (fwd: its last valid step;
                # bwd: its first valid step) — accumulated in VMEM scratch only.
                last_ref[:, 0:Hp] = jnp.where(lens == t_f + 1, hf_upd,
                                              last_ref[:, 0:Hp])
                last_ref[:, Hp:2 * Hp] = jnp.where(lens == t_b + 1, hb_upd,
                                                   last_ref[:, Hp:2 * Hp])
            else:
                # zeros at padded positions == pad_packed_sequence semantics;
                # emit at TRUE hidden width H (no Hp padding tax on HBM traffic).
                outf_ref[s] = jnp.where(mask_f, hf_upd, 0.0)[:, :H].astype(
                    outf_ref.dtype)
                outb_ref[local_b] = jnp.where(mask_b, hb_upd, 0.0)[:, :H].astype(
                    outb_ref.dtype)
            return carry

        lax.fori_loop(0, tT, step, 0, unroll=True)

        if final:
            # Fused attention (softmax over the BATCH axis, exactly as the torch code
            # does) + sigmoid; both direction halves are already resident in VMEM.
            @pl.when(tc == nc - 1)
            def _attention():
                x = last_ref[...]                              # (B, 2Hp) f32
                w = attw_ref[...]                              # (1, 2Hp) f32
                valid = lens > 0                               # exclude padded batch rows
                scores = jnp.maximum(jnp.sum(x * w, axis=1, keepdims=True), 0.0)
                sc = jnp.where(valid, scores, -1e30)
                m = jnp.max(sc, axis=0, keepdims=True)
                e = jnp.where(valid, jnp.exp(sc - m), 0.0)
                attn = e / jnp.sum(e, axis=0, keepdims=True)
                attn = attn / jnp.sum(attn, axis=0, keepdims=True)  # torch's renormalize
                rep = jnp.sum(x * attn, axis=1, keepdims=True)      # weighted.sum(1)
                y_ref[...] = jax.nn.sigmoid(rep)

    return kernel


def run_bilstm_layer(x_streams, lens, wx, wh, b, *, H, Hp, tT, final, att_w=None):
    """x_streams: tuple of time-major (T_pad, B_pad, Dj) bf16 arrays.
    Returns (out_fwd, out_bwd) each (T_pad, B_pad, H) bf16, or (B_pad, 1) f32 when
    final=True (attention+sigmoid fused in)."""
    T_pad, B_pad = x_streams[0].shape[0], x_streams[0].shape[1]
    in_dims = tuple(xs.shape[2] for xs in x_streams)
    nc = T_pad // tT

    whole_vmem = pl.BlockSpec(memory_space=pltpu.MemorySpace.VMEM)
    fwd_chunk = [pl.BlockSpec((tT, B_pad, dj), lambda c: (c, 0, 0)) for dj in in_dims]
    bwd_chunk = [pl.BlockSpec((tT, B_pad, dj), lambda c: (nc - 1 - c, 0, 0))
                 for dj in in_dims]

    # lens / weights / bias are grid-invariant -> whole-array VMEM residency
    # (single copy, loaded once; no double-buffer waste).
    in_specs = [whole_vmem] + fwd_chunk + bwd_chunk + [whole_vmem] * 3
    inputs = [lens, *x_streams, *x_streams, wx, wh, b]

    scratch = [
        pltpu.VMEM((B_pad, Hp), jnp.bfloat16),           # h fwd (bf16: matmul dtype)
        pltpu.VMEM((B_pad, Hp), jnp.float32),            # c fwd (f32 for accuracy)
        pltpu.VMEM((B_pad, Hp), jnp.bfloat16),           # h bwd
        pltpu.VMEM((B_pad, Hp), jnp.float32),            # c bwd
        pltpu.VMEM((tT, B_pad, 4 * Hp), jnp.bfloat16),   # xg fwd (bf16 halves VMEM)
        pltpu.VMEM((tT, B_pad, 4 * Hp), jnp.bfloat16),   # xg bwd
    ]

    if final:
        in_specs.append(whole_vmem)
        inputs.append(att_w)
        out_shape = jax.ShapeDtypeStruct((B_pad, 1), jnp.float32)
        out_specs = pl.BlockSpec((B_pad, 1), lambda c: (0, 0))
        scratch.append(pltpu.VMEM((B_pad, 2 * Hp), jnp.float32))  # last-valid-step acc
    else:
        out_shape = [jax.ShapeDtypeStruct((T_pad, B_pad, H), jnp.bfloat16),
                     jax.ShapeDtypeStruct((T_pad, B_pad, H), jnp.bfloat16)]
        out_specs = [pl.BlockSpec((tT, B_pad, H), lambda c: (c, 0, 0)),
                     pl.BlockSpec((tT, B_pad, H), lambda c: (nc - 1 - c, 0, 0))]

    kernel = _make_bilstm_layer_kernel(tT, B_pad, H, Hp, in_dims, final)

    return pl.pallas_call(
        kernel,
        out_shape=out_shape,
        grid_spec=pltpu.PrefetchScalarGridSpec(
            num_scalar_prefetch=0,
            grid=(nc,),
            in_specs=in_specs,
            out_specs=out_specs,
            scratch_shapes=scratch,
        ),
        compiler_params=pltpu.CompilerParams(
            # Single grid axis carries the recurrence -> "arbitrary".  Both
            # directions are folded into one kernel so single-TC chips (v5e/v6e)
            # do not serialize the recurrence twice.
            dimension_semantics=("arbitrary",),
            # Explicit VMEM budget (tiny here; at production tT/B size it against
            # v7x's 64 MiB per core).
            vmem_limit_bytes=32 * 1024 * 1024,
        ),
    )(*inputs)


# ----------------------------------------------------------------------------
# Parameter preparation: gate/output dims padded per-gate to Hp (exact zeros, so
# padded hidden units provably stay 0); K dims kept at TRUE width; fwd/bwd stacked.
# ----------------------------------------------------------------------------
def _pad_axis_blocks(a, axis, sizes, padded_sizes):
    parts, off = [], 0
    for sz, szp in zip(sizes, padded_sizes):
        blk = lax.slice_in_dim(a, off, off + sz, axis=axis)
        pad = [(0, 0)] * a.ndim
        pad[axis] = (0, szp - sz)
        parts.append(jnp.pad(blk, pad))
        off += sz
    return jnp.concatenate(parts, axis=axis)


def init_params(key, dim_input, hidden, num_layers):
    """Raw params in the PyTorch nn.LSTM layout / init ranges (gate order i,f,g,o)."""
    layers = []
    kstd = 1.0 / math.sqrt(hidden)
    for layer in range(num_layers):
        in_dim = dim_input if layer == 0 else 2 * hidden
        dirs = []
        for _ in range(2):  # forward, backward
            key, k1, k2, k3, k4 = jax.random.split(key, 5)
            w_ih = jax.random.uniform(k1, (4 * hidden, in_dim), jnp.float32, -kstd, kstd)
            w_hh = jax.random.uniform(k2, (4 * hidden, hidden), jnp.float32, -kstd, kstd)
            b_ih = jax.random.uniform(k3, (4 * hidden,), jnp.float32, -kstd, kstd)
            b_hh = jax.random.uniform(k4, (4 * hidden,), jnp.float32, -kstd, kstd)
            dirs.append((w_ih, w_hh, b_ih + b_hh))
        layers.append(dirs)
    key, ka = jax.random.split(key)
    astd = 1.0 / math.sqrt(2 * hidden)
    att_w = jax.random.uniform(ka, (1, 2 * hidden), jnp.float32, -astd, astd)
    return {"lstm": layers, "att_w": att_w}


def prepare_params(raw, *, hidden, Hp):
    H = hidden
    gates_in, gates_out = [H] * 4, [Hp] * 4
    layers = []
    for layer in raw["lstm"]:
        wx_s, wh_s, b_s = [], [], []
        for (w_ih, w_hh, b) in layer:
            wx = _pad_axis_blocks(w_ih.T, 1, gates_in, gates_out)   # (Din_true, 4Hp)
            wh = _pad_axis_blocks(w_hh.T, 1, gates_in, gates_out)   # (H, 4Hp)
            wh = _pad_axis_blocks(wh, 0, [H], [Hp])                 # (Hp, 4Hp)
            bb = _pad_axis_blocks(b[None, :], 1, gates_in, gates_out)  # (1, 4Hp)
            wx_s.append(wx)
            wh_s.append(wh)
            b_s.append(bb)
        layers.append((jnp.stack(wx_s).astype(jnp.bfloat16),
                       jnp.stack(wh_s).astype(jnp.bfloat16),
                       jnp.stack(b_s).astype(jnp.float32)))
    att_w = _pad_axis_blocks(raw["att_w"], 1, [H, H], [Hp, Hp]).astype(jnp.float32)
    return {"layers": layers, "att_w": att_w}


# ----------------------------------------------------------------------------
# Full forward.
# ----------------------------------------------------------------------------
def build_forward(prepared, *, H, Hp, tT):
    layers = prepared["layers"]
    att_w = prepared["att_w"]

    @jax.jit
    def forward(xs, seqlen):
        B, T, D = xs.shape
        B_pad = _round_up(B, 8)
        T_pad = _round_up(T, tT)
        # time-major; batch padded to a sublane multiple; layer-0 lane dim kept at the
        # TRUE input width D (block last dim == full array dim is legal) — no Dp tax.
        x = jnp.transpose(xs, (1, 0, 2))
        x = jnp.pad(x, ((0, T_pad - T), (0, B_pad - B), (0, 0))).astype(jnp.bfloat16)
        lens = jnp.pad(seqlen.astype(jnp.int32), (0, B_pad - B)).reshape(B_pad, 1)

        streams = (x,)
        y = None
        for li, (wx, wh, b) in enumerate(layers):
            is_final = li == len(layers) - 1
            out = run_bilstm_layer(streams, lens, wx, wh, b, H=H, Hp=Hp, tT=tT,
                                   final=is_final,
                                   att_w=att_w if is_final else None)
            if is_final:
                y = out                              # (B_pad, 1) — attention fused
            else:
                streams = tuple(out)                 # (out_fwd, out_bwd), true width H
        return y[:B]

    return forward


# ----------------------------------------------------------------------------
# Pure-JAX reference (same semantics) for a correctness sanity check.
# matmul_dtype=bf16 mirrors the kernel's mixed precision; f32 = exact reference.
# ----------------------------------------------------------------------------
def reference_forward(xs, seqlen, raw, matmul_dtype=jnp.float32):
    B, T, D = xs.shape
    x = xs.astype(jnp.float32)
    lens = seqlen.astype(jnp.int32)
    md = matmul_dtype
    for layer in raw["lstm"]:
        dir_outs = []
        for d, (w_ih, w_hh, b) in enumerate(layer):
            H = w_hh.shape[1]
            wi = w_ih.T.astype(md)
            wh = w_hh.T.astype(md)
            bb = b[None, :]

            def cell(xt, h, c):
                g = (jnp.dot(xt.astype(md), wi, preferred_element_type=jnp.float32)
                     + jnp.dot(h.astype(md), wh, preferred_element_type=jnp.float32) + bb)
                i = jax.nn.sigmoid(g[:, 0:H])
                f = jax.nn.sigmoid(g[:, H:2 * H])
                gg = jnp.tanh(g[:, 2 * H:3 * H])
                o = jax.nn.sigmoid(g[:, 3 * H:4 * H])
                c2 = f * c + i * gg
                return o * jnp.tanh(c2), c2

            h = jnp.zeros((B, H), jnp.float32)
            c = jnp.zeros((B, H), jnp.float32)
            outs = [None] * T
            t_order = range(T) if d == 0 else range(T - 1, -1, -1)
            for t in t_order:
                m = (lens > t).astype(jnp.float32)[:, None]
                hn, cn = cell(x[:, t], h, c)
                h = m * hn + (1 - m) * h
                c = m * cn + (1 - m) * c
                outs[t] = m * h
            dir_outs.append(jnp.stack(outs, axis=1))
        x = jnp.concatenate(dir_outs, axis=-1)
    idx = lens - 1
    x_last = jnp.take_along_axis(x, idx[:, None, None], axis=1)[:, 0, :]
    w = raw["att_w"]
    scores = jnp.maximum(jnp.sum(x_last * w, axis=1), 0.0)
    attn = jax.nn.softmax(scores)
    attn = attn / jnp.sum(attn)
    rep = jnp.sum(x_last * attn[:, None], axis=1)
    return jax.nn.sigmoid(rep)[:, None]


if __name__ == "__main__":
    # BiLSTM_Att(dim_input=16, hidden=32, num_layers=2, droprate=0.0)
    B, T, D, H, L = 4, 8, 16, 32, 2
    tT = 4                              # time-chunk size (pipelined "arbitrary" grid axis)
    Hp = _round_up(H, 128)              # lane-dense padded hidden width for gates/states

    key = jax.random.PRNGKey(0)
    kp, kx = jax.random.split(key)
    raw = init_params(kp, D, H, L)
    prepared = prepare_params(raw, hidden=H, Hp=Hp)
    forward = build_forward(prepared, H=H, Hp=Hp, tT=tT)

    xs = jax.random.normal(kx, (B, T, D), jnp.float32)            # (B, T, D_in)
    seqlen = jnp.array([8, 5, 3, 6], dtype=jnp.int32)             # max == T

    y = jax.block_until_ready(forward(xs, seqlen))

    y_ref_mixed = reference_forward(xs, seqlen, raw, matmul_dtype=jnp.bfloat16)
    y_ref_f32 = reference_forward(xs, seqlen, raw, matmul_dtype=jnp.float32)

    assert y.shape == (B, 1)
    assert bool(jnp.all(jnp.isfinite(y)))
    assert bool(jnp.allclose(y, y_ref_mixed, atol=3e-2, rtol=3e-2)), (y, y_ref_mixed)
    assert bool(jnp.allclose(y, y_ref_f32, atol=7e-2, rtol=7e-2)), (y, y_ref_f32)
    print("KERNEL_OK")
</pallas_src>

<mosaic_0001>
module attributes {stable_mosaic.version = 11 : i64} {
  func.func @kernel(%arg0: i32, %arg1: memref<8x1xi32, #tpu.memory_space<vmem>>, %arg2: memref<4x8x16xbf16, #tpu.memory_space<vmem>>, %arg3: memref<4x8x16xbf16, #tpu.memory_space<vmem>>, %arg4: memref<2x16x512xbf16, #tpu.memory_space<vmem>>, %arg5: memref<2x128x512xbf16, #tpu.memory_space<vmem>>, %arg6: memref<2x1x512xf32, #tpu.memory_space<vmem>>, %arg7: memref<4x8x32xbf16, #tpu.memory_space<vmem>>, %arg8: memref<4x8x32xbf16, #tpu.memory_space<vmem>>, %arg9: memref<8x128xbf16, #tpu.memory_space<vmem>>, %arg10: memref<8x128xf32, #tpu.memory_space<vmem>>, %arg11: memref<8x128xbf16, #tpu.memory_space<vmem>>, %arg12: memref<8x128xf32, #tpu.memory_space<vmem>>, %arg13: memref<4x8x512xbf16, #tpu.memory_space<vmem>>, %arg14: memref<4x8x512xbf16, #tpu.memory_space<vmem>>) attributes {dimension_semantics = [#tpu.dimension_semantics<arbitrary>], iteration_bounds = array<i64: 2>, scalar_prefetch = 0 : i64, scratch_operands = 6 : i64, tpu.core_type = #tpu.core_type<tc>, window_params = [{pipeline_mode = #tpu.pipeline_mode<synchronous>, transform_indices = @transform_0, window_bounds = array<i64: 8, 1>}, {transform_indices = @transform_1, window_bounds = array<i64: 4, 8, 16>}, {transform_indices = @transform_2, window_bounds = array<i64: 4, 8, 16>}, {pipeline_mode = #tpu.pipeline_mode<synchronous>, transform_indices = @transform_3, window_bounds = array<i64: 2, 16, 512>}, {pipeline_mode = #tpu.pipeline_mode<synchronous>, transform_indices = @transform_4, window_bounds = array<i64: 2, 128, 512>}, {pipeline_mode = #tpu.pipeline_mode<synchronous>, transform_indices = @transform_5, window_bounds = array<i64: 2, 1, 512>}, {transform_indices = @transform_6, window_bounds = array<i64: 4, 8, 32>}, {transform_indices = @transform_7, window_bounds = array<i64: 4, 8, 32>}]} {
    %c1_i32 = arith.constant 1 : i32
    %0 = arith.subi %c1_i32, %arg0 : i32
    %c0 = arith.constant 0 : index
    %c0_0 = arith.constant 0 : index
    %1 = vector.load %arg1[%c0, %c0_0] : memref<8x1xi32, #tpu.memory_space<vmem>>, vector<8x1xi32>
    %c0_i32 = arith.constant 0 : i32
    %2 = arith.cmpi eq, %arg0, %c0_i32 : i32
    %3 = arith.extui %2 : i1 to i32
    %c0_i32_1 = arith.constant 0 : i32
    %4 = arith.cmpi ne, %3, %c0_i32_1 : i32
    scf.if %4 {
      %cst_198 = arith.constant 0.000000e+00 : bf16
      %501 = vector.broadcast %cst_198 : bf16 to vector<8x128xbf16>
      %c0_199 = arith.constant 0 : index
      %c0_200 = arith.constant 0 : index
      %502 = vector.load %arg9[%c0_199, %c0_200] : memref<8x128xbf16, #tpu.memory_space<vmem>>, vector<8x128xbf16>
      tpu.vector_store %arg9[%c0_199, %c0_200], %501 {strides = array<i32>} : memref<8x128xbf16, #tpu.memory_space<vmem>>, vector<8x128xbf16>,
      %cst_201 = arith.constant 0.000000e+00 : f32
      %503 = vector.broadcast %cst_201 : f32 to vector<8x128xf32>
      %c0_202 = arith.constant 0 : index
      %c0_203 = arith.constant 0 : index
      %504 = vector.load %arg10[%c0_202, %c0_203] : memref<8x128xf32, #tpu.memory_space<vmem>>, vector<8x128xf32>
      tpu.vector_store %arg10[%c0_202, %c0_203], %503 {strides = array<i32>} : memref<8x128xf32, #tpu.memory_space<vmem>>, vector<8x128xf32>,
      %cst_204 = arith.constant 0.000000e+00 : bf16
      %505 = vector.broadcast %cst_204 : bf16 to vector<8x128xbf16>
      %c0_205 = arith.constant 0 : index
      %c0_206 = arith.constant 0 : index
      %506 = vector.load %arg11[%c0_205, %c0_206] : memref<8x128xbf16, #tpu.memory_space<vmem>>, vector<8x128xbf16>
      tpu.vector_store %arg11[%c0_205, %c0_206], %505 {strides = array<i32>} : memref<8x128xbf16, #tpu.memory_space<vmem>>, vector<8x128xbf16>,
      %cst_207 = arith.constant 0.000000e+00 : f32
      %507 = vector.broadcast %cst_207 : f32 to vector<8x128xf32>
      %c0_208 = arith.constant 0 : index
      %c0_209 = arith.constant 0 : index
      %508 = vector.load %arg12[%c0_208, %c0_209] : memref<8x128xf32, #tpu.memory_space<vmem>>, vector<8x128xf32>
      tpu.vector_store %arg12[%c0_208, %c0_209], %507 {strides = array<i32>} : memref<8x128xf32, #tpu.memory_space<vmem>>, vector<8x128xf32>,
    } else {
    }
    %c0_2 = arith.constant 0 : index
    %c0_3 = arith.constant 0 : index
    %c0_4 = arith.constant 0 : index
    %5 = vector.load %arg4[%c0_2, %c0_3, %c0_4] : memref<2x16x512xbf16, #tpu.memory_space<vmem>>, vector<1x16x512xbf16>
    %6 = vector.shape_cast %5 : vector<1x16x512xbf16> to vector<16x512xbf16>
    %c0_5 = arith.constant 0 : index
    %c0_6 = arith.constant 0 : index
    %c0_7 = arith.constant 0 : index
    %7 = vector.load %arg2[%c0_5, %c0_6, %c0_7] : memref<4x8x16xbf16, #tpu.memory_space<vmem>>, vector<4x8x16xbf16>
    %8 = vector.shape_cast %7 : vector<4x8x16xbf16> to vector<32x16xbf16>
    %cst = arith.constant dense<0.000000e+00> : vector<32x512xf32>
    %9 = tpu.matmul %8, %6, %cst {dimension_numbers = #tpu.dot_dimension_numbers<[1], [0], [0], [1], [0, 0, 1, 1], [], []>} : vector<32x16xbf16>, vector<16x512xbf16>, vector<32x512xf32> -> vector<32x512xf32>
    %c0_8 = arith.constant 0 : index
    %c0_9 = arith.constant 0 : index
    %c0_10 = arith.constant 0 : index
    %10 = vector.load %arg6[%c0_8, %c0_9, %c0_10] : memref<2x1x512xf32, #tpu.memory_space<vmem>>, vector<1x1x512xf32>
    %11 = vector.shape_cast %10 : vector<1x1x512xf32> to vector<1x512xf32>
    %12 = vector.broadcast %11 : vector<1x512xf32> to vector<32x512xf32>
    %13 = arith.addf %9, %12 : vector<32x512xf32>
    %14 = vector.shape_cast %13 : vector<32x512xf32> to vector<4x8x512xf32>
    %15 = arith.truncf %14 : vector<4x8x512xf32> to vector<4x8x512xbf16>
    %c0_11 = arith.constant 0 : index
    %c0_12 = arith.constant 0 : index
    %c0_13 = arith.constant 0 : index
    %16 = vector.load %arg13[%c0_11, %c0_12, %c0_13] : memref<4x8x512xbf16, #tpu.memory_space<vmem>>, vector<4x8x512xbf16>
    tpu.vector_store %arg13[%c0_11, %c0_12, %c0_13], %15 {strides = array<i32>} : memref<4x8x512xbf16, #tpu.memory_space<vmem>>, vector<4x8x512xbf16>,
    %c1 = arith.constant 1 : index
    %c0_14 = arith.constant 0 : index
    %c0_15 = arith.constant 0 : index
    %17 = vector.load %arg4[%c1, %c0_14, %c0_15] : memref<2x16x512xbf16, #tpu.memory_space<vmem>>, vector<1x16x512xbf16>
    %18 = vector.shape_cast %17 : vector<1x16x512xbf16> to vector<16x512xbf16>
    %c0_16 = arith.constant 0 : index
    %c0_17 = arith.constant 0 : index
    %c0_18 = arith.constant 0 : index
    %19 = vector.load %arg3[%c0_16, %c0_17, %c0_18] : memref<4x8x16xbf16, #tpu.memory_space<vmem>>, vector<4x8x16xbf16>
    %20 = vector.shape_cast %19 : vector<4x8x16xbf16> to vector<32x16xbf16>
    %cst_19 = arith.constant dense<0.000000e+00> : vector<32x512xf32>
    %21 = tpu.matmul %20, %18, %cst_19 {dimension_numbers = #tpu.dot_dimension_numbers<[1], [0], [0], [1], [0, 0, 1, 1], [], []>} : vector<32x16xbf16>, vector<16x512xbf16>, vector<32x512xf32> -> vector<32x512xf32>
    %c1_20 = arith.constant 1 : index
    %c0_21 = arith.constant 0 : index
    %c0_22 = arith.constant 0 : index
    %22 = vector.load %arg6[%c1_20, %c0_21, %c0_22] : memref<2x1x512xf32, #tpu.memory_space<vmem>>, vector<1x1x512xf32>
    %23 = vector.shape_cast %22 : vector<1x1x512xf32> to vector<1x512xf32>
    %24 = vector.broadcast %23 : vector<1x512xf32> to vector<32x512xf32>
    %25 = arith.addf %21, %24 : vector<32x512xf32>
    %26 = vector.shape_cast %25 : vector<32x512xf32> to vector<4x8x512xf32>
    %27 = arith.truncf %26 : vector<4x8x512xf32> to vector<4x8x512xbf16>
    %c0_23 = arith.constant 0 : index
    %c0_24 = arith.constant 0 : index
    %c0_25 = arith.constant 0 : index
    %28 = vector.load %arg14[%c0_23, %c0_24, %c0_25] : memref<4x8x512xbf16, #tpu.memory_space<vmem>>, vector<4x8x512xbf16>
    tpu.vector_store %arg14[%c0_23, %c0_24, %c0_25], %27 {strides = array<i32>} : memref<4x8x512xbf16, #tpu.memory_space<vmem>>, vector<4x8x512xbf16>,
    %c0_26 = arith.constant 0 : index
    %c0_27 = arith.constant 0 : index
    %c0_28 = arith.constant 0 : index
    %29 = vector.load %arg5[%c0_26, %c0_27, %c0_28] : memref<2x128x512xbf16, #tpu.memory_space<vmem>>, vector<1x128x512xbf16>
    %30 = vector.shape_cast %29 : vector<1x128x512xbf16> to vector<128x512xbf16>
    %c1_29 = arith.constant 1 : index
    %c0_30 = arith.constant 0 : index
    %c0_31 = arith.constant 0 : index
    %31 = vector.load %arg5[%c1_29, %c0_30, %c0_31] : memref<2x128x512xbf16, #tpu.memory_space<vmem>>, vector<1x128x512xbf16>
    %32 = vector.shape_cast %31 : vector<1x128x512xbf16> to vector<128x512xbf16>
    %c0_i32_32 = arith.constant 0 : i32
    %c4_i32 = arith.constant 4 : i32
    %33 = arith.muli %arg0, %c4_i32 : i32
    %34 = arith.addi %33, %c0_i32_32 : i32
    %35 = vector.broadcast %34 : i32 to vector<8x1xi32>
    %36 = arith.cmpi sgt, %1, %35 : vector<8x1xi32>
    %c0_33 = arith.constant 0 : index
    %c0_34 = arith.constant 0 : index
    %37 = vector.load %arg9[%c0_33, %c0_34] : memref<8x128xbf16, #tpu.memory_space<vmem>>, vector<8x128xbf16>
    %38 = arith.index_cast %c0_i32_32 : i32 to index
    %c0_35 = arith.constant 0 : index
    %c0_36 = arith.constant 0 : index
    %39 = vector.load %arg13[%38, %c0_35, %c0_36] : memref<4x8x512xbf16, #tpu.memory_space<vmem>>, vector<1x8x512xbf16>
    %40 = vector.shape_cast %39 : vector<1x8x512xbf16> to vector<8x512xbf16>
    %41 = arith.extf %40 : vector<8x512xbf16> to vector<8x512xf32>
    %cst_37 = arith.constant dense<0.000000e+00> : vector<8x512xf32>
    %42 = tpu.matmul %37, %30, %cst_37 {dimension_numbers = #tpu.dot_dimension_numbers<[1], [0], [0], [1], [0, 0, 1, 1], [], []>} : vector<8x128xbf16>, vector<128x512xbf16>, vector<8x512xf32> -> vector<8x512xf32>
    %43 = arith.addf %41, %42 : vector<8x512xf32>
    %44 = vector.extract_strided_slice %43 {offsets = [0, 0], sizes = [8, 128], strides = [1, 1]} : vector<8x512xf32> to vector<8x128xf32>
    %45 = arith.negf %44 : vector<8x128xf32>
    %46 = math.exp %45 : vector<8x128xf32>
    %cst_38 = arith.constant 1.000000e+00 : f32
    %47 = vector.broadcast %cst_38 : f32 to vector<8x128xf32>
    %48 = arith.addf %47, %46 : vector<8x128xf32>
    %49 = arith.divf %47, %48 : vector<8x128xf32>
    %50 = vector.extract_strided_slice %43 {offsets = [0, 128], sizes = [8, 128], strides = [1, 1]} : vector<8x512xf32> to vector<8x128xf32>
    %51 = arith.negf %50 : vector<8x128xf32>
    %52 = math.exp %51 : vector<8x128xf32>
    %cst_39 = arith.constant 1.000000e+00 : f32
    %53 = vector.broadcast %cst_39 : f32 to vector<8x128xf32>
    %54 = arith.addf %53, %52 : vector<8x128xf32>
    %55 = arith.divf %53, %54 : vector<8x128xf32>
    %56 = vector.extract_strided_slice %43 {offsets = [0, 256], sizes = [8, 128], strides = [1, 1]} : vector<8x512xf32> to vector<8x128xf32>
    %57 = math.tanh %56 : vector<8x128xf32>
    %58 = vector.extract_strided_slice %43 {offsets = [0, 384], sizes = [8, 128], strides = [1, 1]} : vector<8x512xf32> to vector<8x128xf32>
    %59 = arith.negf %58 : vector<8x128xf32>
    %60 = math.exp %59 : vector<8x128xf32>
    %cst_40 = arith.constant 1.000000e+00 : f32
    %61 = vector.broadcast %cst_40 : f32 to vector<8x128xf32>
    %62 = arith.addf %61, %60 : vector<8x128xf32>
    %63 = arith.divf %61, %62 : vector<8x128xf32>
    %c0_41 = arith.constant 0 : index
    %c0_42 = arith.constant 0 : index
    %64 = vector.load %arg10[%c0_41, %c0_42] : memref<8x128xf32, #tpu.memory_space<vmem>>, vector<8x128xf32>
    %65 = arith.mulf %55, %64 : vector<8x128xf32>
    %66 = arith.mulf %49, %57 : vector<8x128xf32>
    %67 = arith.addf %65, %66 : vector<8x128xf32>
    %68 = math.tanh %67 : vector<8x128xf32>
    %69 = arith.mulf %63, %68 : vector<8x128xf32>
    %70 = arith.extf %37 : vector<8x128xbf16> to vector<8x128xf32>
    %71 = vector.shape_cast %36 : vector<8x1xi1> to vector<8x1xi1>
    %72 = vector.broadcast %71 : vector<8x1xi1> to vector<8x128xi1>
    %73 = arith.select %72, %69, %70 : vector<8x128xi1>, vector<8x128xf32>
    %74 = arith.truncf %73 : vector<8x128xf32> to vector<8x128xbf16>
    %c0_43 = arith.constant 0 : index
    %c0_44 = arith.constant 0 : index
    %75 = vector.load %arg9[%c0_43, %c0_44] : memref<8x128xbf16, #tpu.memory_space<vmem>>, vector<8x128xbf16>
    tpu.vector_store %arg9[%c0_43, %c0_44], %74 {strides = array<i32>} : memref<8x128xbf16, #tpu.memory_space<vmem>>, vector<8x128xbf16>,
    %c0_45 = arith.constant 0 : index
    %c0_46 = arith.constant 0 : index
    %76 = vector.load %arg10[%c0_45, %c0_46] : memref<8x128xf32, #tpu.memory_space<vmem>>, vector<8x128xf32>
    %77 = vector.shape_cast %36 : vector<8x1xi1> to vector<8x1xi1>
    %78 = vector.broadcast %77 : vector<8x1xi1> to vector<8x128xi1>
    %79 = arith.select %78, %67, %76 : vector<8x128xi1>, vector<8x128xf32>
    %c0_47 = arith.constant 0 : index
    %c0_48 = arith.constant 0 : index
    %80 = vector.load %arg10[%c0_47, %c0_48] : memref<8x128xf32, #tpu.memory_space<vmem>>, vector<8x128xf32>
    tpu.vector_store %arg10[%c0_47, %c0_48], %79 {strides = array<i32>} : memref<8x128xf32, #tpu.memory_space<vmem>>, vector<8x128xf32>,
    %c3_i32 = arith.constant 3 : i32
    %81 = arith.subi %c3_i32, %c0_i32_32 : i32
    %c4_i32_49 = arith.constant 4 : i32
    %82 = arith.muli %0, %c4_i32_49 : i32
    %83 = arith.addi %82, %81 : i32
    %84 = vector.broadcast %83 : i32 to vector<8x1xi32>
    %85 = arith.cmpi sgt, %1, %84 : vector<8x1xi32>
    %c0_50 = arith.constant 0 : index
    %c0_51 = arith.constant 0 : index
    %86 = vector.load %arg11[%c0_50, %c0_51] : memref<8x128xbf16, #tpu.memory_space<vmem>>, vector<8x128xbf16>
    %87 = arith.index_cast %81 : i32 to index
    %c0_52 = arith.constant 0 : index
    %c0_53 = arith.constant 0 : index
    %88 = vector.load %arg14[%87, %c0_52, %c0_53] : memref<4x8x512xbf16, #tpu.memory_space<vmem>>, vector<1x8x512xbf16>
    %89 = vector.shape_cast %88 : vector<1x8x512xbf16> to vector<8x512xbf16>
    %90 = arith.extf %89 : vector<8x512xbf16> to vector<8x512xf32>
    %cst_54 = arith.constant dense<0.000000e+00> : vector<8x512xf32>
    %91 = tpu.matmul %86, %32, %cst_54 {dimension_numbers = #tpu.dot_dimension_numbers<[1], [0], [0], [1], [0, 0, 1, 1], [], []>} : vector<8x128xbf16>, vector<128x512xbf16>, vector<8x512xf32> -> vector<8x512xf32>
    %92 = arith.addf %90, %91 : vector<8x512xf32>
    %93 = vector.extract_strided_slice %92 {offsets = [0, 0], sizes = [8, 128], strides = [1, 1]} : vector<8x512xf32> to vector<8x128xf32>
    %94 = arith.negf %93 : vector<8x128xf32>
    %95 = math.exp %94 : vector<8x128xf32>
    %cst_55 = arith.constant 1.000000e+00 : f32
    %96 = vector.broadcast %cst_55 : f32 to vector<8x128xf32>
    %97 = arith.addf %96, %95 : vector<8x128xf32>
    %98 = arith.divf %96, %97 : vector<8x128xf32>
    %99 = vector.extract_strided_slice %92 {offsets = [0, 128], sizes = [8, 128], strides = [1, 1]} : vector<8x512xf32> to vector<8x128xf32>
    %100 = arith.negf %99 : vector<8x128xf32>
    %101 = math.exp %100 : vector<8x128xf32>
    %cst_56 = arith.constant 1.000000e+00 : f32
    %102 = vector.broadcast %cst_56 : f32 to vector<8x128xf32>
    %103 = arith.addf %102, %101 : vector<8x128xf32>
    %104 = arith.divf %102, %103 : vector<8x128xf32>
    %105 = vector.extract_strided_slice %92 {offsets = [0, 256], sizes = [8, 128], strides = [1, 1]} : vector<8x512xf32> to vector<8x128xf32>
    %106 = math.tanh %105 : vector<8x128xf32>
    %107 = vector.extract_strided_slice %92 {offsets = [0, 384], sizes = [8, 128], strides = [1, 1]} : vector<8x512xf32> to vector<8x128xf32>
    %108 = arith.negf %107 : vector<8x128xf32>
    %109 = math.exp %108 : vector<8x128xf32>
    %cst_57 = arith.constant 1.000000e+00 : f32
    %110 = vector.broadcast %cst_57 : f32 to vector<8x128xf32>
    %111 = arith.addf %110, %109 : vector<8x128xf32>
    %112 = arith.divf %110, %111 : vector<8x128xf32>
    %c0_58 = arith.constant 0 : index
    %c0_59 = arith.constant 0 : index
    %113 = vector.load %arg12[%c0_58, %c0_59] : memref<8x128xf32, #tpu.memory_space<vmem>>, vector<8x128xf32>
    %114 = arith.mulf %104, %113 : vector<8x128xf32>
    %115 = arith.mulf %98, %106 : vector<8x128xf32>
    %116 = arith.addf %114, %115 : vector<8x128xf32>
    %117 = math.tanh %116 : vector<8x128xf32>
    %118 = arith.mulf %112, %117 : vector<8x128xf32>
    %119 = arith.extf %86 : vector<8x128xbf16> to vector<8x128xf32>
    %120 = vector.shape_cast %85 : vector<8x1xi1> to vector<8x1xi1>
    %121 = vector.broadcast %120 : vector<8x1xi1> to vector<8x128xi1>
    %122 = arith.select %121, %118, %119 : vector<8x128xi1>, vector<8x128xf32>
    %123 = arith.truncf %122 : vector<8x128xf32> to vector<8x128xbf16>
    %c0_60 = arith.constant 0 : index
    %c0_61 = arith.constant 0 : index
    %124 = vector.load %arg11[%c0_60, %c0_61] : memref<8x128xbf16, #tpu.memory_space<vmem>>, vector<8x128xbf16>
    tpu.vector_store %arg11[%c0_60, %c0_61], %123 {strides = array<i32>} : memref<8x128xbf16, #tpu.memory_space<vmem>>, vector<8x128xbf16>,
    %c0_62 = arith.constant 0 : index
    %c0_63 = arith.constant 0 : index
    %125 = vector.load %arg12[%c0_62, %c0_63] : memref<8x128xf32, #tpu.memory_space<vmem>>, vector<8x128xf32>
    %126 = vector.shape_cast %85 : vector<8x1xi1> to vector<8x1xi1>
    %127 = vector.broadcast %126 : vector<8x1xi1> to vector<8x128xi1>
    %128 = arith.select %127, %116, %125 : vector<8x128xi1>, vector<8x128xf32>
    %c0_64 = arith.constant 0 : index
    %c0_65 = arith.constant 0 : index
    %129 = vector.load %arg12[%c0_64, %c0_65] : memref<8x128xf32, #tpu.memory_space<vmem>>, vector<8x128xf32>
    tpu.vector_store %arg12[%c0_64, %c0_65], %128 {strides = array<i32>} : memref<8x128xf32, #tpu.memory_space<vmem>>, vector<8x128xf32>,
    %cst_66 = arith.constant 0.000000e+00 : f32
    %130 = vector.shape_cast %36 : vector<8x1xi1> to vector<8x1xi1>
    %131 = vector.broadcast %130 : vector<8x1xi1> to vector<8x128xi1>
    %132 = vector.broadcast %cst_66 : f32 to vector<8x128xf32>
    %133 = arith.select %131, %73, %132 : vector<8x128xi1>, vector<8x128xf32>
    %134 = vector.extract_strided_slice %133 {offsets = [0, 0], sizes = [8, 32], strides = [1, 1]} : vector<8x128xf32> to vector<8x32xf32>
    %135 = arith.truncf %134 : vector<8x32xf32> to vector<8x32xbf16>
    %136 = arith.index_cast %c0_i32_32 : i32 to index
    %c0_67 = arith.constant 0 : index
    %c0_68 = arith.constant 0 : index
    %137 = vector.load %arg7[%136, %c0_67, %c0_68] : memref<4x8x32xbf16, #tpu.memory_space<vmem>>, vector<1x8x32xbf16>
    %138 = vector.shape_cast %137 : vector<1x8x32xbf16> to vector<8x32xbf16>
    %139 = vector.shape_cast %135 : vector<8x32xbf16> to vector<1x8x32xbf16>
    tpu.vector_store %arg7[%136, %c0_67, %c0_68], %139 {strides = array<i32>} : memref<4x8x32xbf16, #tpu.memory_space<vmem>>, vector<1x8x32xbf16>,
    %cst_69 = arith.constant 0.000000e+00 : f32
    %140 = vector.shape_cast %85 : vector<8x1xi1> to vector<8x1xi1>
    %141 = vector.broadcast %140 : vector<8x1xi1> to vector<8x128xi1>
    %142 = vector.broadcast %cst_69 : f32 to vector<8x128xf32>
    %143 = arith.select %141, %122, %142 : vector<8x128xi1>, vector<8x128xf32>
    %144 = vector.extract_strided_slice %143 {offsets = [0, 0], sizes = [8, 32], strides = [1, 1]} : vector<8x128xf32> to vector<8x32xf32>
    %145 = arith.truncf %144 : vector<8x32xf32> to vector<8x32xbf16>
    %146 = arith.index_cast %81 : i32 to index
    %c0_70 = arith.constant 0 : index
    %c0_71 = arith.constant 0 : index
    %147 = vector.load %arg8[%146, %c0_70, %c0_71] : memref<4x8x32xbf16, #tpu.memory_space<vmem>>, vector<1x8x32xbf16>
    %148 = vector.shape_cast %147 : vector<1x8x32xbf16> to vector<8x32xbf16>
    %149 = vector.shape_cast %145 : vector<8x32xbf16> to vector<1x8x32xbf16>
    tpu.vector_store %arg8[%146, %c0_70, %c0_71], %149 {strides = array<i32>} : memref<4x8x32xbf16, #tpu.memory_space<vmem>>, vector<1x8x32xbf16>,
    %c1_i32_72 = arith.constant 1 : i32
    %c4_i32_73 = arith.constant 4 : i32
    %150 = arith.muli %arg0, %c4_i32_73 : i32
    %151 = arith.addi %150, %c1_i32_72 : i32
    %152 = vector.broadcast %151 : i32 to vector<8x1xi32>
    %153 = arith.cmpi sgt, %1, %152 : vector<8x1xi32>
    %c0_74 = arith.constant 0 : index
    %c0_75 = arith.constant 0 : index
    %154 = vector.load %arg9[%c0_74, %c0_75] : memref<8x128xbf16, #tpu.memory_space<vmem>>, vector<8x128xbf16>
    %155 = arith.index_cast %c1_i32_72 : i32 to index
    %c0_76 = arith.constant 0 : index
    %c0_77 = arith.constant 0 : index
    %156 = vector.load %arg13[%155, %c0_76, %c0_77] : memref<4x8x512xbf16, #tpu.memory_space<vmem>>, vector<1x8x512xbf16>
    %157 = vector.shape_cast %156 : vector<1x8x512xbf16> to vector<8x512xbf16>
    %158 = arith.extf %157 : vector<8x512xbf16> to vector<8x512xf32>
    %cst_78 = arith.constant dense<0.000000e+00> : vector<8x512xf32>
    %159 = tpu.matmul %154, %30, %cst_78 {dimension_numbers = #tpu.dot_dimension_numbers<[1], [0], [0], [1], [0, 0, 1, 1], [], []>} : vector<8x128xbf16>, vector<128x512xbf16>, vector<8x512xf32> -> vector<8x512xf32>
    %160 = arith.addf %158, %159 : vector<8x512xf32>
    %161 = vector.extract_strided_slice %160 {offsets = [0, 0], sizes = [8, 128], strides = [1, 1]} : vector<8x512xf32> to vector<8x128xf32>
    %162 = arith.negf %161 : vector<8x128xf32>
    %163 = math.exp %162 : vector<8x128xf32>
    %cst_79 = arith.constant 1.000000e+00 : f32
    %164 = vector.broadcast %cst_79 : f32 to vector<8x128xf32>
    %165 = arith.addf %164, %163 : vector<8x128xf32>
    %166 = arith.divf %164, %165 : vector<8x128xf32>
    %167 = vector.extract_strided_slice %160 {offsets = [0, 128], sizes = [8, 128], strides = [1, 1]} : vector<8x512xf32> to vector<8x128xf32>
    %168 = arith.negf %167 : vector<8x128xf32>
    %169 = math.exp %168 : vector<8x128xf32>
    %cst_80 = arith.constant 1.000000e+00 : f32
    %170 = vector.broadcast %cst_80 : f32 to vector<8x128xf32>
    %171 = arith.addf %170, %169 : vector<8x128xf32>
    %172 = arith.divf %170, %171 : vector<8x128xf32>
    %173 = vector.extract_strided_slice %160 {offsets = [0, 256], sizes = [8, 128], strides = [1, 1]} : vector<8x512xf32> to vector<8x128xf32>
    %174 = math.tanh %173 : vector<8x128xf32>
    %175 = vector.extract_strided_slice %160 {offsets = [0, 384], sizes = [8, 128], strides = [1, 1]} : vector<8x512xf32> to vector<8x128xf32>
    %176 = arith.negf %175 : vector<8x128xf32>
    %177 = math.exp %176 : vector<8x128xf32>
    %cst_81 = arith.constant 1.000000e+00 : f32
    %178 = vector.broadcast %cst_81 : f32 to vector<8x128xf32>
    %179 = arith.addf %178, %177 : vector<8x128xf32>
    %180 = arith.divf %178, %179 : vector<8x128xf32>
    %c0_82 = arith.constant 0 : index
    %c0_83 = arith.constant 0 : index
    %181 = vector.load %arg10[%c0_82, %c0_83] : memref<8x128xf32, #tpu.memory_space<vmem>>, vector<8x128xf32>
    %182 = arith.mulf %172, %181 : vector<8x128xf32>
    %183 = arith.mulf %166, %174 : vector<8x128xf32>
    %184 = arith.addf %182, %183 : vector<8x128xf32>
    %185 = math.tanh %184 : vector<8x128xf32>
    %186 = arith.mulf %180, %185 : vector<8x128xf32>
    %187 = arith.extf %154 : vector<8x128xbf16> to vector<8x128xf32>
    %188 = vector.shape_cast %153 : vector<8x1xi1> to vector<8x1xi1>
    %189 = vector.broadcast %188 : vector<8x1xi1> to vector<8x128xi1>
    %190 = arith.select %189, %186, %187 : vector<8x128xi1>, vector<8x128xf32>
    %191 = arith.truncf %190 : vector<8x128xf32> to vector<8x128xbf16>
    %c0_84 = arith.constant 0 : index
    %c0_85 = arith.constant 0 : index
    %192 = vector.load %arg9[%c0_84, %c0_85] : memref<8x128xbf16, #tpu.memory_space<vmem>>, vector<8x128xbf16>
    tpu.vector_store %arg9[%c0_84, %c0_85], %191 {strides = array<i32>} : memref<8x128xbf16, #tpu.memory_space<vmem>>, vector<8x128xbf16>,
    %c0_86 = arith.constant 0 : index
    %c0_87 = arith.constant 0 : index
    %193 = vector.load %arg10[%c0_86, %c0_87] : memref<8x128xf32, #tpu.memory_space<vmem>>, vector<8x128xf32>
    %194 = vector.shape_cast %153 : vector<8x1xi1> to vector<8x1xi1>
    %195 = vector.broadcast %194 : vector<8x1xi1> to vector<8x128xi1>
    %196 = arith.select %195, %184, %193 : vector<8x128xi1>, vector<8x128xf32>
    %c0_88 = arith.constant 0 : index
    %c0_89 = arith.constant 0 : index
    %197 = vector.load %arg10[%c0_88, %c0_89] : memref<8x128xf32, #tpu.memory_space<vmem>>, vector<8x128xf32>
    tpu.vector_store %arg10[%c0_88, %c0_89], %196 {strides = array<i32>} : memref<8x128xf32, #tpu.memory_space<vmem>>, vector<8x128xf32>,
    %c3_i32_90 = arith.constant 3 : i32
    %198 = arith.subi %c3_i32_90, %c1_i32_72 : i32
    %c4_i32_91 = arith.constant 4 : i32
    %199 = arith.muli %0, %c4_i32_91 : i32
    %200 = arith.addi %199, %198 : i32
    %201 = vector.broadcast %200 : i32 to vector<8x1xi32>
    %202 = arith.cmpi sgt, %1, %201 : vector<8x1xi32>
    %c0_92 = arith.constant 0 : index
    %c0_93 = arith.constant 0 : index
    %203 = vector.load %arg11[%c0_92, %c0_93] : memref<8x128xbf16, #tpu.memory_space<vmem>>, vector<8x128xbf16>
    %204 = arith.index_cast %198 : i32 to index
    %c0_94 = arith.constant 0 : index
    %c0_95 = arith.constant 0 : index
    %205 = vector.load %arg14[%204, %c0_94, %c0_95] : memref<4x8x512xbf16, #tpu.memory_space<vmem>>, vector<1x8x512xbf16>
    %206 = vector.shape_cast %205 : vector<1x8x512xbf16> to vector<8x512xbf16>
    %207 = arith.extf %206 : vector<8x512xbf16> to vector<8x512xf32>
    %cst_96 = arith.constant dense<0.000000e+00> : vector<8x512xf32>
    %208 = tpu.matmul %203, %32, %cst_96 {dimension_numbers = #tpu.dot_dimension_numbers<[1], [0], [0], [1], [0, 0, 1, 1], [], []>} : vector<8x128xbf16>, vector<128x512xbf16>, vector<8x512xf32> -> vector<8x512xf32>
    %209 = arith.addf %207, %208 : vector<8x512xf32>
    %210 = vector.extract_strided_slice %209 {offsets = [0, 0], sizes = [8, 128], strides = [1, 1]} : vector<8x512xf32> to vector<8x128xf32>
    %211 = arith.negf %210 : vector<8x128xf32>
    %212 = math.exp %211 : vector<8x128xf32>
    %cst_97 = arith.constant 1.000000e+00 : f32
    %213 = vector.broadcast %cst_97 : f32 to vector<8x128xf32>
    %214 = arith.addf %213, %212 : vector<8x128xf32>
    %215 = arith.divf %213, %214 : vector<8x128xf32>
    %216 = vector.extract_strided_slice %209 {offsets = [0, 128], sizes = [8, 128], strides = [1, 1]} : vector<8x512xf32> to vector<8x128xf32>
    %217 = arith.negf %216 : vector<8x128xf32>
    %218 = math.exp %217 : vector<8x128xf32>
    %cst_98 = arith.constant 1.000000e+00 : f32
    %219 = vector.broadcast %cst_98 : f32 to vector<8x128xf32>
    %220 = arith.addf %219, %218 : vector<8x128xf32>
    %221 = arith.divf %219, %220 : vector<8x128xf32>
    %222 = vector.extract_strided_slice %209 {offsets = [0, 256], sizes = [8, 128], strides = [1, 1]} : vector<8x512xf32> to vector<8x128xf32>
    %223 = math.tanh %222 : vector<8x128xf32>
    %224 = vector.extract_strided_slice %209 {offsets = [0, 384], sizes = [8, 128], strides = [1, 1]} : vector<8x512xf32> to vector<8x128xf32>
    %225 = arith.negf %224 : vector<8x128xf32>
    %226 = math.exp %225 : vector<8x128xf32>
    %cst_99 = arith.constant 1.000000e+00 : f32
    %227 = vector.broadcast %cst_99 : f32 to vector<8x128xf32>
    %228 = arith.addf %227, %226 : vector<8x128xf32>
    %229 = arith.divf %227, %228 : vector<8x128xf32>
    %c0_100 = arith.constant 0 : index
    %c0_101 = arith.constant 0 : index
    %230 = vector.load %arg12[%c0_100, %c0_101] : memref<8x128xf32, #tpu.memory_space<vmem>>, vector<8x128xf32>
    %231 = arith.mulf %221, %230 : vector<8x128xf32>
    %232 = arith.mulf %215, %223 : vector<8x128xf32>
    %233 = arith.addf %231, %232 : vector<8x128xf32>
    %234 = math.tanh %233 : vector<8x128xf32>
    %235 = arith.mulf %229, %234 : vector<8x128xf32>
    %236 = arith.extf %203 : vector<8x128xbf16> to vector<8x128xf32>
    %237 = vector.shape_cast %202 : vector<8x1xi1> to vector<8x1xi1>
    %238 = vector.broadcast %237 : vector<8x1xi1> to vector<8x128xi1>
    %239 = arith.select %238, %235, %236 : vector<8x128xi1>, vector<8x128xf32>
    %240 = arith.truncf %239 : vector<8x128xf32> to vector<8x128xbf16>
    %c0_102 = arith.constant 0 : index
    %c0_103 = arith.constant 0 : index
    %241 = vector.load %arg11[%c0_102, %c0_103] : memref<8x128xbf16, #tpu.memory_space<vmem>>, vector<8x128xbf16>
    tpu.vector_store %arg11[%c0_102, %c0_103], %240 {strides = array<i32>} : memref<8x128xbf16, #tpu.memory_space<vmem>>, vector<8x128xbf16>,
    %c0_104 = arith.constant 0 : index
    %c0_105 = arith.constant 0 : index
    %242 = vector.load %arg12[%c0_104, %c0_105] : memref<8x128xf32, #tpu.memory_space<vmem>>, vector<8x128xf32>
    %243 = vector.shape_cast %202 : vector<8x1xi1> to vector<8x1xi1>
    %244 = vector.broadcast %243 : vector<8x1xi1> to vector<8x128xi1>
    %245 = arith.select %244, %233, %242 : vector<8x128xi1>, vector<8x128xf32>
    %c0_106 = arith.constant 0 : index
    %c0_107 = arith.constant 0 : index
    %246 = vector.load %arg12[%c0_106, %c0_107] : memref<8x128xf32, #tpu.memory_space<vmem>>, vector<8x128xf32>
    tpu.vector_store %arg12[%c0_106, %c0_107], %245 {strides = array<i32>} : memref<8x128xf32, #tpu.memory_space<vmem>>, vector<8x128xf32>,
    %cst_108 = arith.constant 0.000000e+00 : f32
    %247 = vector.shape_cast %153 : vector<8x1xi1> to vector<8x1xi1>
    %248 = vector.broadcast %247 : vector<8x1xi1> to vector<8x128xi1>
    %249 = vector.broadcast %cst_108 : f32 to vector<8x128xf32>
    %250 = arith.select %248, %190, %249 : vector<8x128xi1>, vector<8x128xf32>
    %251 = vector.extract_strided_slice %250 {offsets = [0, 0], sizes = [8, 32], strides = [1, 1]} : vector<8x128xf32> to vector<8x32xf32>
    %252 = arith.truncf %251 : vector<8x32xf32> to vector<8x32xbf16>
    %253 = arith.index_cast %c1_i32_72 : i32 to index
    %c0_109 = arith.constant 0 : index
    %c0_110 = arith.constant 0 : index
    %254 = vector.load %arg7[%253, %c0_109, %c0_110] : memref<4x8x32xbf16, #tpu.memory_space<vmem>>, vector<1x8x32xbf16>
    %255 = vector.shape_cast %254 : vector<1x8x32xbf16> to vector<8x32xbf16>
    %256 = vector.shape_cast %252 : vector<8x32xbf16> to vector<1x8x32xbf16>
    tpu.vector_store %arg7[%253, %c0_109, %c0_110], %256 {strides = array<i32>} : memref<4x8x32xbf16, #tpu.memory_space<vmem>>, vector<1x8x32xbf16>,
    %cst_111 = arith.constant 0.000000e+00 : f32
    %257 = vector.shape_cast %202 : vector<8x1xi1> to vector<8x1xi1>
    %258 = vector.broadcast %257 : vector<8x1xi1> to vector<8x128xi1>
    %259 = vector.broadcast %cst_111 : f32 to vector<8x128xf32>
    %260 = arith.select %258, %239, %259 : vector<8x128xi1>, vector<8x128xf32>
    %261 = vector.extract_strided_slice %260 {offsets = [0, 0], sizes = [8, 32], strides = [1, 1]} : vector<8x128xf32> to vector<8x32xf32>
    %262 = arith.truncf %261 : vector<8x32xf32> to vector<8x32xbf16>
    %263 = arith.index_cast %198 : i32 to index
    %c0_112 = arith.constant 0 : index
    %c0_113 = arith.constant 0 : index
    %264 = vector.load %arg8[%263, %c0_112, %c0_113] : memref<4x8x32xbf16, #tpu.memory_space<vmem>>, vector<1x8x32xbf16>
    %265 = vector.shape_cast %264 : vector<1x8x32xbf16> to vector<8x32xbf16>
    %266 = vector.shape_cast %262 : vector<8x32xbf16> to vector<1x8x32xbf16>
    tpu.vector_store %arg8[%263, %c0_112, %c0_113], %266 {strides = array<i32>} : memref<4x8x32xbf16, #tpu.memory_space<vmem>>, vector<1x8x32xbf16>,
    %c2_i32 = arith.constant 2 : i32
    %c4_i32_114 = arith.constant 4 : i32
    %267 = arith.muli %arg0, %c4_i32_114 : i32
    %268 = arith.addi %267, %c2_i32 : i32
    %269 = vector.broadcast %268 : i32 to vector<8x1xi32>
    %270 = arith.cmpi sgt, %1, %269 : vector<8x1xi32>
    %c0_115 = arith.constant 0 : index
    %c0_116 = arith.constant 0 : index
    %271 = vector.load %arg9[%c0_115, %c0_116] : memref<8x128xbf16, #tpu.memory_space<vmem>>, vector<8x128xbf16>
    %272 = arith.index_cast %c2_i32 : i32 to index
    %c0_117 = arith.constant 0 : index
    %c0_118 = arith.constant 0 : index
    %273 = vector.load %arg13[%272, %c0_117, %c0_118] : memref<4x8x512xbf16, #tpu.memory_space<vmem>>, vector<1x8x512xbf16>
    %274 = vector.shape_cast %273 : vector<1x8x512xbf16> to vector<8x512xbf16>
    %275 = arith.extf %274 : vector<8x512xbf16> to vector<8x512xf32>
    %cst_119 = arith.constant dense<0.000000e+00> : vector<8x512xf32>
    %276 = tpu.matmul %271, %30, %cst_119 {dimension_numbers = #tpu.dot_dimension_numbers<[1], [0], [0], [1], [0, 0, 1, 1], [], []>} : vector<8x128xbf16>, vector<128x512xbf16>, vector<8x512xf32> -> vector<8x512xf32>
    %277 = arith.addf %275, %276 : vector<8x512xf32>
    %278 = vector.extract_strided_slice %277 {offsets = [0, 0], sizes = [8, 128], strides = [1, 1]} : vector<8x512xf32> to vector<8x128xf32>
    %279 = arith.negf %278 : vector<8x128xf32>
    %280 = math.exp %279 : vector<8x128xf32>
    %cst_120 = arith.constant 1.000000e+00 : f32
    %281 = vector.broadcast %cst_120 : f32 to vector<8x128xf32>
    %282 = arith.addf %281, %280 : vector<8x128xf32>
    %283 = arith.divf %281, %282 : vector<8x128xf32>
    %284 = vector.extract_strided_slice %277 {offsets = [0, 128], sizes = [8, 128], strides = [1, 1]} : vector<8x512xf32> to vector<8x128xf32>
    %285 = arith.negf %284 : vector<8x128xf32>
    %286 = math.exp %285 : vector<8x128xf32>
    %cst_121 = arith.constant 1.000000e+00 : f32
    %287 = vector.broadcast %cst_121 : f32 to vector<8x128xf32>
    %288 = arith.addf %287, %286 : vector<8x128xf32>
    %289 = arith.divf %287, %288 : vector<8x128xf32>
    %290 = vector.extract_strided_slice %277 {offsets = [0, 256], sizes = [8, 128], strides = [1, 1]} : vector<8x512xf32> to vector<8x128xf32>
    %291 = math.tanh %290 : vector<8x128xf32>
    %292 = vector.extract_strided_slice %277 {offsets = [0, 384], sizes = [8, 128], strides = [1, 1]} : vector<8x512xf32> to vector<8x128xf32>
    %293 = arith.negf %292 : vector<8x128xf32>
    %294 = math.exp %293 : vector<8x128xf32>
    %cst_122 = arith.constant 1.000000e+00 : f32
    %295 = vector.broadcast %cst_122 : f32 to vector<8x128xf32>
    %296 = arith.addf %295, %294 : vector<8x128xf32>
    %297 = arith.divf %295, %296 : vector<8x128xf32>
    %c0_123 = arith.constant 0 : index
    %c0_124 = arith.constant 0 : index
    %298 = vector.load %arg10[%c0_123, %c0_124] : memref<8x128xf32, #tpu.memory_space<vmem>>, vector<8x128xf32>
    %299 = arith.mulf %289, %298 : vector<8x128xf32>
    %300 = arith.mulf %283, %291 : vector<8x128xf32>
    %301 = arith.addf %299, %300 : vector<8x128xf32>
    %302 = math.tanh %301 : vector<8x128xf32>
    %303 = arith.mulf %297, %302 : vector<8x128xf32>
    %304 = arith.extf %271 : vector<8x128xbf16> to vector<8x128xf32>
    %305 = vector.shape_cast %270 : vector<8x1xi1> to vector<8x1xi1>
    %306 = vector.broadcast %305 : vector<8x1xi1> to vector<8x128xi1>
    %307 = arith.select %306, %303, %304 : vector<8x128xi1>, vector<8x128xf32>
    %308 = arith.truncf %307 : vector<8x128xf32> to vector<8x128xbf16>
    %c0_125 = arith.constant 0 : index
    %c0_126 = arith.constant 0 : index
    %309 = vector.load %arg9[%c0_125, %c0_126] : memref<8x128xbf16, #tpu.memory_space<vmem>>, vector<8x128xbf16>
    tpu.vector_store %arg9[%c0_125, %c0_126], %308 {strides = array<i32>} : memref<8x128xbf16, #tpu.memory_space<vmem>>, vector<8x128xbf16>,
    %c0_127 = arith.constant 0 : index
    %c0_128 = arith.constant 0 : index
    %310 = vector.load %arg10[%c0_127, %c0_128] : memref<8x128xf32, #tpu.memory_space<vmem>>, vector<8x128xf32>
    %311 = vector.shape_cast %270 : vector<8x1xi1> to vector<8x1xi1>
    %312 = vector.broadcast %311 : vector<8x1xi1> to vector<8x128xi1>
    %313 = arith.select %312, %301, %310 : vector<8x128xi1>, vector<8x128xf32>
    %c0_129 = arith.constant 0 : index
    %c0_130 = arith.constant 0 : index
    %314 = vector.load %arg10[%c0_129, %c0_130] : memref<8x128xf32, #tpu.memory_space<vmem>>, vector<8x128xf32>
    tpu.vector_store %arg10[%c0_129, %c0_130], %313 {strides = array<i32>} : memref<8x128xf32, #tpu.memory_space<vmem>>, vector<8x128xf32>,
    %c3_i32_131 = arith.constant 3 : i32
    %315 = arith.subi %c3_i32_131, %c2_i32 : i32
    %c4_i32_132 = arith.constant 4 : i32
    %316 = arith.muli %0, %c4_i32_132 : i32
    %317 = arith.addi %316, %315 : i32
    %318 = vector.broadcast %317 : i32 to vector<8x1xi32>
    %319 = arith.cmpi sgt, %1, %318 : vector<8x1xi32>
    %c0_133 = arith.constant 0 : index
    %c0_134 = arith.constant 0 : index
    %320 = vector.load %arg11[%c0_133, %c0_134] : memref<8x128xbf16, #tpu.memory_space<vmem>>, vector<8x128xbf16>
    %321 = arith.index_cast %315 : i32 to index
    %c0_135 = arith.constant 0 : index
    %c0_136 = arith.constant 0 : index
    %322 = vector.load %arg14[%321, %c0_135, %c0_136] : memref<4x8x512xbf16, #tpu.memory_space<vmem>>, vector<1x8x512xbf16>
    %323 = vector.shape_cast %322 : vector<1x8x512xbf16> to vector<8x512xbf16>
    %324 = arith.extf %323 : vector<8x512xbf16> to vector<8x512xf32>
    %cst_137 = arith.constant dense<0.000000e+00> : vector<8x512xf32>
    %325 = tpu.matmul %320, %32, %cst_137 {dimension_numbers = #tpu.dot_dimension_numbers<[1], [0], [0], [1], [0, 0, 1, 1], [], []>} : vector<8x128xbf16>, vector<128x512xbf16>, vector<8x512xf32> -> vector<8x512xf32>
    %326 = arith.addf %324, %325 : vector<8x512xf32>
    %327 = vector.extract_strided_slice %326 {offsets = [0, 0], sizes = [8, 128], strides = [1, 1]} : vector<8x512xf32> to vector<8x128xf32>
    %328 = arith.negf %327 : vector<8x128xf32>
    %329 = math.exp %328 : vector<8x128xf32>
    %cst_138 = arith.constant 1.000000e+00 : f32
    %330 = vector.broadcast %cst_138 : f32 to vector<8x128xf32>
    %331 = arith.addf %330, %329 : vector<8x128xf32>
    %332 = arith.divf %330, %331 : vector<8x128xf32>
    %333 = vector.extract_strided_slice %326 {offsets = [0, 128], sizes = [8, 128], strides = [1, 1]} : vector<8x512xf32> to vector<8x128xf32>
    %334 = arith.negf %333 : vector<8x128xf32>
    %335 = math.exp %334 : vector<8x128xf32>
    %cst_139 = arith.constant 1.000000e+00 : f32
    %336 = vector.broadcast %cst_139 : f32 to vector<8x128xf32>
    %337 = arith.addf %336, %335 : vector<8x128xf32>
    %338 = arith.divf %336, %337 : vector<8x128xf32>
    %339 = vector.extract_strided_slice %326 {offsets = [0, 256], sizes = [8, 128], strides = [1, 1]} : vector<8x512xf32> to vector<8x128xf32>
    %340 = math.tanh %339 : vector<8x128xf32>
    %341 = vector.extract_strided_slice %326 {offsets = [0, 384], sizes = [8, 128], strides = [1, 1]} : vector<8x512xf32> to vector<8x128xf32>
    %342 = arith.negf %341 : vector<8x128xf32>
    %343 = math.exp %342 : vector<8x128xf32>
    %cst_140 = arith.constant 1.000000e+00 : f32
    %344 = vector.broadcast %cst_140 : f32 to vector<8x128xf32>
    %345 = arith.addf %344, %343 : vector<8x128xf32>
    %346 = arith.divf %344, %345 : vector<8x128xf32>
    %c0_141 = arith.constant 0 : index
    %c0_142 = arith.constant 0 : index
    %347 = vector.load %arg12[%c0_141, %c0_142] : memref<8x128xf32, #tpu.memory_space<vmem>>, vector<8x128xf32>
    %348 = arith.mulf %338, %347 : vector<8x128xf32>
    %349 = arith.mulf %332, %340 : vector<8x128xf32>
    %350 = arith.addf %348, %349 : vector<8x128xf32>
    %351 = math.tanh %350 : vector<8x128xf32>
    %352 = arith.mulf %346, %351 : vector<8x128xf32>
    %353 = arith.extf %320 : vector<8x128xbf16> to vector<8x128xf32>
    %354 = vector.shape_cast %319 : vector<8x1xi1> to vector<8x1xi1>
    %355 = vector.broadcast %354 : vector<8x1xi1> to vector<8x128xi1>
    %356 = arith.select %355, %352, %353 : vector<8x128xi1>, vector<8x128xf32>
    %357 = arith.truncf %356 : vector<8x128xf32> to vector<8x128xbf16>
    %c0_143 = arith.constant 0 : index
    %c0_144 = arith.constant 0 : index
    %358 = vector.load %arg11[%c0_143, %c0_144] : memref<8x128xbf16, #tpu.memory_space<vmem>>, vector<8x128xbf16>
    tpu.vector_store %arg11[%c0_143, %c0_144], %357 {strides = array<i32>} : memref<8x128xbf16, #tpu.memory_space<vmem>>, vector<8x128xbf16>,
    %c0_145 = arith.constant 0 : index
    %c0_146 = arith.constant 0 : index
    %359 = vector.load %arg12[%c0_145, %c0_146] : memref<8x128xf32, #tpu.memory_space<vmem>>, vector<8x128xf32>
    %360 = vector.shape_cast %319 : vector<8x1xi1> to vector<8x1xi1>
    %361 = vector.broadcast %360 : vector<8x1xi1> to vector<8x128xi1>
    %362 = arith.select %361, %350, %359 : vector<8x128xi1>, vector<8x128xf32>
    %c0_147 = arith.constant 0 : index
    %c0_148 = arith.constant 0 : index
    %363 = vector.load %arg12[%c0_147, %c0_148] : memref<8x128xf32, #tpu.memory_space<vmem>>, vector<8x128xf32>
    tpu.vector_store %arg12[%c0_147, %c0_148], %362 {strides = array<i32>} : memref<8x128xf32, #tpu.memory_space<vmem>>, vector<8x128xf32>,
    %cst_149 = arith.constant 0.000000e+00 : f32
    %364 = vector.shape_cast %270 : vector<8x1xi1> to vector<8x1xi1>
    %365 = vector.broadcast %364 : vector<8x1xi1> to vector<8x128xi1>
    %366 = vector.broadcast %cst_149 : f32 to vector<8x128xf32>
    %367 = arith.select %365, %307, %366 : vector<8x128xi1>, vector<8x128xf32>
    %368 = vector.extract_strided_slice %367 {offsets = [0, 0], sizes = [8, 32], strides = [1, 1]} : vector<8x128xf32> to vector<8x32xf32>
    %369 = arith.truncf %368 : vector<8x32xf32> to vector<8x32xbf16>
    %370 = arith.index_cast %c2_i32 : i32 to index
    %c0_150 = arith.constant 0 : index
    %c0_151 = arith.constant 0 : index
    %371 = vector.load %arg7[%370, %c0_150, %c0_151] : memref<4x8x32xbf16, #tpu.memory_space<vmem>>, vector<1x8x32xbf16>
    %372 = vector.shape_cast %371 : vector<1x8x32xbf16> to vector<8x32xbf16>
    %373 = vector.shape_cast %369 : vector<8x32xbf16> to vector<1x8x32xbf16>
    tpu.vector_store %arg7[%370, %c0_150, %c0_151], %373 {strides = array<i32>} : memref<4x8x32xbf16, #tpu.memory_space<vmem>>, vector<1x8x32xbf16>,
    %cst_152 = arith.constant 0.000000e+00 : f32
    %374 = vector.shape_cast %319 : vector<8x1xi1> to vector<8x1xi1>
    %375 = vector.broadcast %374 : vector<8x1xi1> to vector<8x128xi1>
    %376 = vector.broadcast %cst_152 : f32 to vector<8x128xf32>
    %377 = arith.select %375, %356, %376 : vector<8x128xi1>, vector<8x128xf32>
    %378 = vector.extract_strided_slice %377 {offsets = [0, 0], sizes = [8, 32], strides = [1, 1]} : vector<8x128xf32> to vector<8x32xf32>
    %379 = arith.truncf %378 : vector<8x32xf32> to vector<8x32xbf16>
    %380 = arith.index_cast %315 : i32 to index
    %c0_153 = arith.constant 0 : index
    %c0_154 = arith.constant 0 : index
    %381 = vector.load %arg8[%380, %c0_153, %c0_154] : memref<4x8x32xbf16, #tpu.memory_space<vmem>>, vector<1x8x32xbf16>
    %382 = vector.shape_cast %381 : vector<1x8x32xbf16> to vector<8x32xbf16>
    %383 = vector.shape_cast %379 : vector<8x32xbf16> to vector<1x8x32xbf16>
    tpu.vector_store %arg8[%380, %c0_153, %c0_154], %383 {strides = array<i32>} : memref<4x8x32xbf16, #tpu.memory_space<vmem>>, vector<1x8x32xbf16>,
    %c3_i32_155 = arith.constant 3 : i32
    %c4_i32_156 = arith.constant 4 : i32
    %384 = arith.muli %arg0, %c4_i32_156 : i32
    %385 = arith.addi %384, %c3_i32_155 : i32
    %386 = vector.broadcast %385 : i32 to vector<8x1xi32>
    %387 = arith.cmpi sgt, %1, %386 : vector<8x1xi32>
    %c0_157 = arith.constant 0 : index
    %c0_158 = arith.constant 0 : index
    %388 = vector.load %arg9[%c0_157, %c0_158] : memref<8x128xbf16, #tpu.memory_space<vmem>>, vector<8x128xbf16>
    %389 = arith.index_cast %c3_i32_155 : i32 to index
    %c0_159 = arith.constant 0 : index
    %c0_160 = arith.constant 0 : index
    %390 = vector.load %arg13[%389, %c0_159, %c0_160] : memref<4x8x512xbf16, #tpu.memory_space<vmem>>, vector<1x8x512xbf16>
    %391 = vector.shape_cast %390 : vector<1x8x512xbf16> to vector<8x512xbf16>
    %392 = arith.extf %391 : vector<8x512xbf16> to vector<8x512xf32>
    %cst_161 = arith.constant dense<0.000000e+00> : vector<8x512xf32>
    %393 = tpu.matmul %388, %30, %cst_161 {dimension_numbers = #tpu.dot_dimension_numbers<[1], [0], [0], [1], [0, 0, 1, 1], [], []>} : vector<8x128xbf16>, vector<128x512xbf16>, vector<8x512xf32> -> vector<8x512xf32>
    %394 = arith.addf %392, %393 : vector<8x512xf32>
    %395 = vector.extract_strided_slice %394 {offsets = [0, 0], sizes = [8, 128], strides = [1, 1]} : vector<8x512xf32> to vector<8x128xf32>
    %396 = arith.negf %395 : vector<8x128xf32>
    %397 = math.exp %396 : vector<8x128xf32>
    %cst_162 = arith.constant 1.000000e+00 : f32
    %398 = vector.broadcast %cst_162 : f32 to vector<8x128xf32>
    %399 = arith.addf %398, %397 : vector<8x128xf32>
    %400 = arith.divf %398, %399 : vector<8x128xf32>
    %401 = vector.extract_strided_slice %394 {offsets = [0, 128], sizes = [8, 128], strides = [1, 1]} : vector<8x512xf32> to vector<8x128xf32>
    %402 = arith.negf %401 : vector<8x128xf32>
    %403 = math.exp %402 : vector<8x128xf32>
    %cst_163 = arith.constant 1.000000e+00 : f32
    %404 = vector.broadcast %cst_163 : f32 to vector<8x128xf32>
    %405 = arith.addf %404, %403 : vector<8x128xf32>
    %406 = arith.divf %404, %405 : vector<8x128xf32>
    %407 = vector.extract_strided_slice %394 {offsets = [0, 256], sizes = [8, 128], strides = [1, 1]} : vector<8x512xf32> to vector<8x128xf32>
    %408 = math.tanh %407 : vector<8x128xf32>
    %409 = vector.extract_strided_slice %394 {offsets = [0, 384], sizes = [8, 128], strides = [1, 1]} : vector<8x512xf32> to vector<8x128xf32>
    %410 = arith.negf %409 : vector<8x128xf32>
    %411 = math.exp %410 : vector<8x128xf32>
    %cst_164 = arith.constant 1.000000e+00 : f32
    %412 = vector.broadcast %cst_164 : f32 to vector<8x128xf32>
    %413 = arith.addf %412, %411 : vector<8x128xf32>
    %414 = arith.divf %412, %413 : vector<8x128xf32>
    %c0_165 = arith.constant 0 : index
    %c0_166 = arith.constant 0 : index
    %415 = vector.load %arg10[%c0_165, %c0_166] : memref<8x128xf32, #tpu.memory_space<vmem>>, vector<8x128xf32>
    %416 = arith.mulf %406, %415 : vector<8x128xf32>
    %417 = arith.mulf %400, %408 : vector<8x128xf32>
    %418 = arith.addf %416, %417 : vector<8x128xf32>
    %419 = math.tanh %418 : vector<8x128xf32>
    %420 = arith.mulf %414, %419 : vector<8x128xf32>
    %421 = arith.extf %388 : vector<8x128xbf16> to vector<8x128xf32>
    %422 = vector.shape_cast %387 : vector<8x1xi1> to vector<8x1xi1>
    %423 = vector.broadcast %422 : vector<8x1xi1> to vector<8x128xi1>
    %424 = arith.select %423, %420, %421 : vector<8x128xi1>, vector<8x128xf32>
    %425 = arith.truncf %424 : vector<8x128xf32> to vector<8x128xbf16>
    %c0_167 = arith.constant 0 : index
    %c0_168 = arith.constant 0 : index
    %426 = vector.load %arg9[%c0_167, %c0_168] : memref<8x128xbf16, #tpu.memory_space<vmem>>, vector<8x128xbf16>
    tpu.vector_store %arg9[%c0_167, %c0_168], %425 {strides = array<i32>} : memref<8x128xbf16, #tpu.memory_space<vmem>>, vector<8x128xbf16>,
    %c0_169 = arith.constant 0 : index
    %c0_170 = arith.constant 0 : index
    %427 = vector.load %arg10[%c0_169, %c0_170] : memref<8x128xf32, #tpu.memory_space<vmem>>, vector<8x128xf32>
    %428 = vector.shape_cast %387 : vector<8x1xi1> to vector<8x1xi1>
    %429 = vector.broadcast %428 : vector<8x1xi1> to vector<8x128xi1>
    %430 = arith.select %429, %418, %427 : vector<8x128xi1>, vector<8x128xf32>
    %c0_171 = arith.constant 0 : index
    %c0_172 = arith.constant 0 : index
    %431 = vector.load %arg10[%c0_171, %c0_172] : memref<8x128xf32, #tpu.memory_space<vmem>>, vector<8x128xf32>
    tpu.vector_store %arg10[%c0_171, %c0_172], %430 {strides = array<i32>} : memref<8x128xf32, #tpu.memory_space<vmem>>, vector<8x128xf32>,
    %c3_i32_173 = arith.constant 3 : i32
    %432 = arith.subi %c3_i32_173, %c3_i32_155 : i32
    %c4_i32_174 = arith.constant 4 : i32
    %433 = arith.muli %0, %c4_i32_174 : i32
    %434 = arith.addi %433, %432 : i32
    %435 = vector.broadcast %434 : i32 to vector<8x1xi32>
    %436 = arith.cmpi sgt, %1, %435 : vector<8x1xi32>
    %c0_175 = arith.constant 0 : index
    %c0_176 = arith.constant 0 : index
    %437 = vector.load %arg11[%c0_175, %c0_176] : memref<8x128xbf16, #tpu.memory_space<vmem>>, vector<8x128xbf16>
    %438 = arith.index_cast %432 : i32 to index
    %c0_177 = arith.constant 0 : index
    %c0_178 = arith.constant 0 : index
    %439 = vector.load %arg14[%438, %c0_177, %c0_178] : memref<4x8x512xbf16, #tpu.memory_space<vmem>>, vector<1x8x512xbf16>
    %440 = vector.shape_cast %439 : vector<1x8x512xbf16> to vector<8x512xbf16>
    %441 = arith.extf %440 : vector<8x512xbf16> to vector<8x512xf32>
    %cst_179 = arith.constant dense<0.000000e+00> : vector<8x512xf32>
    %442 = tpu.matmul %437, %32, %cst_179 {dimension_numbers = #tpu.dot_dimension_numbers<[1], [0], [0], [1], [0, 0, 1, 1], [], []>} : vector<8x128xbf16>, vector<128x512xbf16>, vector<8x512xf32> -> vector<8x512xf32>
    %443 = arith.addf %441, %442 : vector<8x512xf32>
    %444 = vector.extract_strided_slice %443 {offsets = [0, 0], sizes = [8, 128], strides = [1, 1]} : vector<8x512xf32> to vector<8x128xf32>
    %445 = arith.negf %444 : vector<8x128xf32>
    %446 = math.exp %445 : vector<8x128xf32>
    %cst_180 = arith.constant 1.000000e+00 : f32
    %447 = vector.broadcast %cst_180 : f32 to vector<8x128xf32>
    %448 = arith.addf %447, %446 : vector<8x128xf32>
    %449 = arith.divf %447, %448 : vector<8x128xf32>
    %450 = vector.extract_strided_slice %443 {offsets = [0, 128], sizes = [8, 128], strides = [1, 1]} : vector<8x512xf32> to vector<8x128xf32>
    %451 = arith.negf %450 : vector<8x128xf32>
    %452 = math.exp %451 : vector<8x128xf32>
    %cst_181 = arith.constant 1.000000e+00 : f32
    %453 = vector.broadcast %cst_181 : f32 to vector<8x128xf32>
    %454 = arith.addf %453, %452 : vector<8x128xf32>
    %455 = arith.divf %453, %454 : vector<8x128xf32>
    %456 = vector.extract_strided_slice %443 {offsets = [0, 256], sizes = [8, 128], strides = [1, 1]} : vector<8x512xf32> to vector<8x128xf32>
    %457 = math.tanh %456 : vector<8x128xf32>
    %458 = vector.extract_strided_slice %443 {offsets = [0, 384], sizes = [8, 128], strides = [1, 1]} : vector<8x512xf32> to vector<8x128xf32>
    %459 = arith.negf %458 : vector<8x128xf32>
    %460 = math.exp %459 : vector<8x128xf32>
    %cst_182 = arith.constant 1.000000e+00 : f32
    %461 = vector.broadcast %cst_182 : f32 to vector<8x128xf32>
    %462 = arith.addf %461, %460 : vector<8x128xf32>
    %463 = arith.divf %461, %462 : vector<8x128xf32>
    %c0_183 = arith.constant 0 : index
    %c0_184 = arith.constant 0 : index
    %464 = vector.load %arg12[%c0_183, %c0_184] : memref<8x128xf32, #tpu.memory_space<vmem>>, vector<8x128xf32>
    %465 = arith.mulf %455, %464 : vector<8x128xf32>
    %466 = arith.mulf %449, %457 : vector<8x128xf32>
    %467 = arith.addf %465, %466 : vector<8x128xf32>
    %468 = math.tanh %467 : vector<8x128xf32>
    %469 = arith.mulf %463, %468 : vector<8x128xf32>
    %470 = arith.extf %437 : vector<8x128xbf16> to vector<8x128xf32>
    %471 = vector.shape_cast %436 : vector<8x1xi1> to vector<8x1xi1>
    %472 = vector.broadcast %471 : vector<8x1xi1> to vector<8x128xi1>
    %473 = arith.select %472, %469, %470 : vector<8x128xi1>, vector<8x128xf32>
    %474 = arith.truncf %473 : vector<8x128xf32> to vector<8x128xbf16>
    %c0_185 = arith.constant 0 : index
    %c0_186 = arith.constant 0 : index
    %475 = vector.load %arg11[%c0_185, %c0_186] : memref<8x128xbf16, #tpu.memory_space<vmem>>, vector<8x128xbf16>
    tpu.vector_store %arg11[%c0_185, %c0_186], %474 {strides = array<i32>} : memref<8x128xbf16, #tpu.memory_space<vmem>>, vector<8x128xbf16>,
    %c0_187 = arith.constant 0 : index
    %c0_188 = arith.constant 0 : index
    %476 = vector.load %arg12[%c0_187, %c0_188] : memref<8x128xf32, #tpu.memory_space<vmem>>, vector<8x128xf32>
    %477 = vector.shape_cast %436 : vector<8x1xi1> to vector<8x1xi1>
    %478 = vector.broadcast %477 : vector<8x1xi1> to vector<8x128xi1>
    %479 = arith.select %478, %467, %476 : vector<8x128xi1>, vector<8x128xf32>
    %c0_189 = arith.constant 0 : index
    %c0_190 = arith.constant 0 : index
    %480 = vector.load %arg12[%c0_189, %c0_190] : memref<8x128xf32, #tpu.memory_space<vmem>>, vector<8x128xf32>
    tpu.vector_store %arg12[%c0_189, %c0_190], %479 {strides = array<i32>} : memref<8x128xf32, #tpu.memory_space<vmem>>, vector<8x128xf32>,
    %cst_191 = arith.constant 0.000000e+00 : f32
    %481 = vector.shape_cast %387 : vector<8x1xi1> to vector<8x1xi1>
    %482 = vector.broadcast %481 : vector<8x1xi1> to vector<8x128xi1>
    %483 = vector.broadcast %cst_191 : f32 to vector<8x128xf32>
    %484 = arith.select %482, %424, %483 : vector<8x128xi1>, vector<8x128xf32>
    %485 = vector.extract_strided_slice %484 {offsets = [0, 0], sizes = [8, 32], strides = [1, 1]} : vector<8x128xf32> to vector<8x32xf32>
    %486 = arith.truncf %485 : vector<8x32xf32> to vector<8x32xbf16>
    %487 = arith.index_cast %c3_i32_155 : i32 to index
    %c0_192 = arith.constant 0 : index
    %c0_193 = arith.constant 0 : index
    %488 = vector.load %arg7[%487, %c0_192, %c0_193] : memref<4x8x32xbf16, #tpu.memory_space<vmem>>, vector<1x8x32xbf16>
    %489 = vector.shape_cast %488 : vector<1x8x32xbf16> to vector<8x32xbf16>
    %490 = vector.shape_cast %486 : vector<8x32xbf16> to vector<1x8x32xbf16>
    tpu.vector_store %arg7[%487, %c0_192, %c0_193], %490 {strides = array<i32>} : memref<4x8x32xbf16, #tpu.memory_space<vmem>>, vector<1x8x32xbf16>,
    %cst_194 = arith.constant 0.000000e+00 : f32
    %491 = vector.shape_cast %436 : vector<8x1xi1> to vector<8x1xi1>
    %492 = vector.broadcast %491 : vector<8x1xi1> to vector<8x128xi1>
    %493 = vector.broadcast %cst_194 : f32 to vector<8x128xf32>
    %494 = arith.select %492, %473, %493 : vector<8x128xi1>, vector<8x128xf32>
    %495 = vector.extract_strided_slice %494 {offsets = [0, 0], sizes = [8, 32], strides = [1, 1]} : vector<8x128xf32> to vector<8x32xf32>
    %496 = arith.truncf %495 : vector<8x32xf32> to vector<8x32xbf16>
    %497 = arith.index_cast %432 : i32 to index
    %c0_195 = arith.constant 0 : index
    %c0_196 = arith.constant 0 : index
    %498 = vector.load %arg8[%497, %c0_195, %c0_196] : memref<4x8x32xbf16, #tpu.memory_space<vmem>>, vector<1x8x32xbf16>
    %499 = vector.shape_cast %498 : vector<1x8x32xbf16> to vector<8x32xbf16>
    %500 = vector.shape_cast %496 : vector<8x32xbf16> to vector<1x8x32xbf16>
    tpu.vector_store %arg8[%497, %c0_195, %c0_196], %500 {strides = array<i32>} : memref<4x8x32xbf16, #tpu.memory_space<vmem>>, vector<1x8x32xbf16>,
    %c4_i32_197 = arith.constant 4 : i32
    return
  }
  func.func @transform_0(%arg0: i32) -> (i32, i32) {
    %c0_i32 = arith.constant 0 : i32
    %c0_i32_0 = arith.constant 0 : i32
    %c0_i32_1 = arith.constant 0 : i32
    return %c0_i32, %c0_i32_0 : i32, i32
  }
  func.func @transform_1(%arg0: i32) -> (i32, i32, i32) {
    %c0_i32 = arith.constant 0 : i32
    %c0_i32_0 = arith.constant 0 : i32
    %c0_i32_1 = arith.constant 0 : i32
    return %arg0, %c0_i32, %c0_i32_0 : i32, i32, i32
  }
  func.func @transform_2(%arg0: i32) -> (i32, i32, i32) {
    %c1_i32 = arith.constant 1 : i32
    %0 = arith.subi %c1_i32, %arg0 : i32
    %c0_i32 = arith.constant 0 : i32
    %c0_i32_0 = arith.constant 0 : i32
    %c0_i32_1 = arith.constant 0 : i32
    return %0, %c0_i32, %c0_i32_0 : i32, i32, i32
  }
  func.func @transform_3(%arg0: i32) -> (i32, i32, i32) {
    %c0_i32 = arith.constant 0 : i32
    %c0_i32_0 = arith.constant 0 : i32
    %c0_i32_1 = arith.constant 0 : i32
    %c0_i32_2 = arith.constant 0 : i32
    return %c0_i32, %c0_i32_0, %c0_i32_1 : i32, i32, i32
  }
  func.func @transform_4(%arg0: i32) -> (i32, i32, i32) {
    %c0_i32 = arith.constant 0 : i32
    %c0_i32_0 = arith.constant 0 : i32
    %c0_i32_1 = arith.constant 0 : i32
    %c0_i32_2 = arith.constant 0 : i32
    return %c0_i32, %c0_i32_0, %c0_i32_1 : i32, i32, i32
  }
  func.func @transform_5(%arg0: i32) -> (i32, i32, i32) {
    %c0_i32 = arith.constant 0 : i32
    %c0_i32_0 = arith.constant 0 : i32
    %c0_i32_1 = arith.constant 0 : i32
    %c0_i32_2 = arith.constant 0 : i32
    return %c0_i32, %c0_i32_0, %c0_i32_1 : i32, i32, i32
  }
  func.func @transform_6(%arg0: i32) -> (i32, i32, i32) {
    %c0_i32 = arith.constant 0 : i32
    %c0_i32_0 = arith.constant 0 : i32
    %c0_i32_1 = arith.constant 0 : i32
    return %arg0, %c0_i32, %c0_i32_0 : i32, i32, i32
  }
  func.func @transform_7(%arg0: i32) -> (i32, i32, i32) {
    %c1_i32 = arith.constant 1 : i32
    %0 = arith.subi %c1_i32, %arg0 : i32
    %c0_i32 = arith.constant 0 : i32
    %c0_i32_0 = arith.constant 0 : i32
    %c0_i32_1 = arith.constant 0 : i32
    return %0, %c0_i32, %c0_i32_0 : i32, i32, i32
  }
}

module attributes {stable_mosaic.version = 11 : i64} {
  func.func @kernel(%arg0: i32, %arg1: memref<8x1xi32, #tpu.memory_space<vmem>>, %arg2: memref<4x8x32xbf16, #tpu.memory_space<vmem>>, %arg3: memref<4x8x32xbf16, #tpu.memory_space<vmem>>, %arg4: memref<4x8x32xbf16, #tpu.memory_space<vmem>>, %arg5: memref<4x8x32xbf16, #tpu.memory_space<vmem>>, %arg6: memref<2x64x512xbf16, #tpu.memory_space<vmem>>, %arg7: memref<2x128x512xbf16, #tpu.memory_space<vmem>>, %arg8: memref<2x1x512xf32, #tpu.memory_space<vmem>>, %arg9: memref<1x256xf32, #tpu.memory_space<vmem>>, %arg10: memref<8x1xf32, #tpu.memory_space<vmem>>, %arg11: memref<8x128xbf16, #tpu.memory_space<vmem>>, %arg12: memref<8x128xf32, #tpu.memory_space<vmem>>, %arg13: memref<8x128xbf16, #tpu.memory_space<vmem>>, %arg14: memref<8x128xf32, #tpu.memory_space<vmem>>, %arg15: memref<4x8x512xbf16, #tpu.memory_space<vmem>>, %arg16: memref<4x8x512xbf16, #tpu.memory_space<vmem>>, %arg17: memref<8x256xf32, #tpu.memory_space<vmem>>) attributes {dimension_semantics = [#tpu.dimension_semantics<arbitrary>], iteration_bounds = array<i64: 2>, scalar_prefetch = 0 : i64, scratch_operands = 7 : i64, tpu.core_type = #tpu.core_type<tc>, window_params = [{pipeline_mode = #tpu.pipeline_mode<synchronous>, transform_indices = @transform_0, window_bounds = array<i64: 8, 1>}, {transform_indices = @transform_1, window_bounds = array<i64: 4, 8, 32>}, {transform_indices = @transform_2, window_bounds = array<i64: 4, 8, 32>}, {transform_indices = @transform_3, window_bounds = array<i64: 4, 8, 32>}, {transform_indices = @transform_4, window_bounds = array<i64: 4, 8, 32>}, {pipeline_mode = #tpu.pipeline_mode<synchronous>, transform_indices = @transform_5, window_bounds = array<i64: 2, 64, 512>}, {pipeline_mode = #tpu.pipeline_mode<synchronous>, transform_indices = @transform_6, window_bounds = array<i64: 2, 128, 512>}, {pipeline_mode = #tpu.pipeline_mode<synchronous>, transform_indices = @transform_7, window_bounds = array<i64: 2, 1, 512>}, {pipeline_mode = #tpu.pipeline_mode<synchronous>, transform_indices = @transform_8, window_bounds = array<i64: 1, 256>}, {pipeline_mode = #tpu.pipeline_mode<synchronous>, transform_indices = @transform_9, window_bounds = array<i64: 8, 1>}]} {
    %c1_i32 = arith.constant 1 : i32
    %0 = arith.subi %c1_i32, %arg0 : i32
    %c0 = arith.constant 0 : index
    %c0_0 = arith.constant 0 : index
    %1 = vector.load %arg1[%c0, %c0_0] : memref<8x1xi32, #tpu.memory_space<vmem>>, vector<8x1xi32>
    %c0_i32 = arith.constant 0 : i32
    %2 = arith.cmpi eq, %arg0, %c0_i32 : i32
    %3 = arith.extui %2 : i1 to i32
    %c0_i32_1 = arith.constant 0 : i32
    %4 = arith.cmpi ne, %3, %c0_i32_1 : i32
    scf.if %4 {
      %cst_223 = arith.constant 0.000000e+00 : bf16
      %500 = vector.broadcast %cst_223 : bf16 to vector<8x128xbf16>
      %c0_224 = arith.constant 0 : index
      %c0_225 = arith.constant 0 : index
      %501 = vector.load %arg11[%c0_224, %c0_225] : memref<8x128xbf16, #tpu.memory_space<vmem>>, vector<8x128xbf16>
      tpu.vector_store %arg11[%c0_224, %c0_225], %500 {strides = array<i32>} : memref<8x128xbf16, #tpu.memory_space<vmem>>, vector<8x128xbf16>,
      %cst_226 = arith.constant 0.000000e+00 : f32
      %502 = vector.broadcast %cst_226 : f32 to vector<8x128xf32>
      %c0_227 = arith.constant 0 : index
      %c0_228 = arith.constant 0 : index
      %503 = vector.load %arg12[%c0_227, %c0_228] : memref<8x128xf32, #tpu.memory_space<vmem>>, vector<8x128xf32>
      tpu.vector_store %arg12[%c0_227, %c0_228], %502 {strides = array<i32>} : memref<8x128xf32, #tpu.memory_space<vmem>>, vector<8x128xf32>,
      %cst_229 = arith.constant 0.000000e+00 : bf16
      %504 = vector.broadcast %cst_229 : bf16 to vector<8x128xbf16>
      %c0_230 = arith.constant 0 : index
      %c0_231 = arith.constant 0 : index
      %505 = vector.load %arg13[%c0_230, %c0_231] : memref<8x128xbf16, #tpu.memory_space<vmem>>, vector<8x128xbf16>
      tpu.vector_store %arg13[%c0_230, %c0_231], %504 {strides = array<i32>} : memref<8x128xbf16, #tpu.memory_space<vmem>>, vector<8x128xbf16>,
      %cst_232 = arith.constant 0.000000e+00 : f32
      %506 = vector.broadcast %cst_232 : f32 to vector<8x128xf32>
      %c0_233 = arith.constant 0 : index
      %c0_234 = arith.constant 0 : index
      %507 = vector.load %arg14[%c0_233, %c0_234] : memref<8x128xf32, #tpu.memory_space<vmem>>, vector<8x128xf32>
      tpu.vector_store %arg14[%c0_233, %c0_234], %506 {strides = array<i32>} : memref<8x128xf32, #tpu.memory_space<vmem>>, vector<8x128xf32>,
      %cst_235 = arith.constant 0.000000e+00 : f32
      %508 = vector.broadcast %cst_235 : f32 to vector<8x256xf32>
      %c0_236 = arith.constant 0 : index
      %c0_237 = arith.constant 0 : index
      %509 = vector.load %arg17[%c0_236, %c0_237] : memref<8x256xf32, #tpu.memory_space<vmem>>, vector<8x256xf32>
      tpu.vector_store %arg17[%c0_236, %c0_237], %508 {strides = array<i32>} : memref<8x256xf32, #tpu.memory_space<vmem>>, vector<8x256xf32>,
      %cst_238 = arith.constant 0.000000e+00 : f32
      %510 = vector.broadcast %cst_238 : f32 to vector<8x1xf32>
      %c0_239 = arith.constant 0 : index
      %c0_240 = arith.constant 0 : index
      %511 = vector.load %arg10[%c0_239, %c0_240] : memref<8x1xf32, #tpu.memory_space<vmem>>, vector<8x1xf32>
      tpu.vector_store %arg10[%c0_239, %c0_240], %510 {strides = array<i32>} : memref<8x1xf32, #tpu.memory_space<vmem>>, vector<8x1xf32>,
    } else {
    }
    %c0_2 = arith.constant 0 : index
    %c0_3 = arith.constant 0 : index
    %c0_4 = arith.constant 0 : index
    %5 = vector.load %arg6[%c0_2, %c0_3, %c0_4] : memref<2x64x512xbf16, #tpu.memory_space<vmem>>, vector<1x64x512xbf16>
    %6 = vector.shape_cast %5 : vector<1x64x512xbf16> to vector<64x512xbf16>
    %c0_5 = arith.constant 0 : index
    %c0_6 = arith.constant 0 : index
    %c0_7 = arith.constant 0 : index
    %7 = vector.load %arg2[%c0_5, %c0_6, %c0_7] : memref<4x8x32xbf16, #tpu.memory_space<vmem>>, vector<4x8x32xbf16>
    %8 = vector.shape_cast %7 : vector<4x8x32xbf16> to vector<32x32xbf16>
    %9 = vector.extract_strided_slice %6 {offsets = [0, 0], sizes = [32, 512], strides = [1, 1]} : vector<64x512xbf16> to vector<32x512xbf16>
    %cst = arith.constant dense<0.000000e+00> : vector<32x512xf32>
    %10 = tpu.matmul %8, %9, %cst {dimension_numbers = #tpu.dot_dimension_numbers<[1], [0], [0], [1], [0, 0, 1, 1], [], []>} : vector<32x32xbf16>, vector<32x512xbf16>, vector<32x512xf32> -> vector<32x512xf32>
    %c0_8 = arith.constant 0 : index
    %c0_9 = arith.constant 0 : index
    %c0_10 = arith.constant 0 : index
    %11 = vector.load %arg3[%c0_8, %c0_9, %c0_10] : memref<4x8x32xbf16, #tpu.memory_space<vmem>>, vector<4x8x32xbf16>
    %12 = vector.shape_cast %11 : vector<4x8x32xbf16> to vector<32x32xbf16>
    %13 = vector.extract_strided_slice %6 {offsets = [32, 0], sizes = [32, 512], strides = [1, 1]} : vector<64x512xbf16> to vector<32x512xbf16>
    %cst_11 = arith.constant dense<0.000000e+00> : vector<32x512xf32>
    %14 = tpu.matmul %12, %13, %cst_11 {dimension_numbers = #tpu.dot_dimension_numbers<[1], [0], [0], [1], [0, 0, 1, 1], [], []>} : vector<32x32xbf16>, vector<32x512xbf16>, vector<32x512xf32> -> vector<32x512xf32>
    %15 = arith.addf %10, %14 : vector<32x512xf32>
    %c0_12 = arith.constant 0 : index
    %c0_13 = arith.constant 0 : index
    %c0_14 = arith.constant 0 : index
    %16 = vector.load %arg8[%c0_12, %c0_13, %c0_14] : memref<2x1x512xf32, #tpu.memory_space<vmem>>, vector<1x1x512xf32>
    %17 = vector.shape_cast %16 : vector<1x1x512xf32> to vector<1x512xf32>
    %18 = vector.broadcast %17 : vector<1x512xf32> to vector<32x512xf32>
    %19 = arith.addf %15, %18 : vector<32x512xf32>
    %20 = vector.shape_cast %19 : vector<32x512xf32> to vector<4x8x512xf32>
    %21 = arith.truncf %20 : vector<4x8x512xf32> to vector<4x8x512xbf16>
    %c0_15 = arith.constant 0 : index
    %c0_16 = arith.constant 0 : index
    %c0_17 = arith.constant 0 : index
    %22 = vector.load %arg15[%c0_15, %c0_16, %c0_17] : memref<4x8x512xbf16, #tpu.memory_space<vmem>>, vector<4x8x512xbf16>
    tpu.vector_store %arg15[%c0_15, %c0_16, %c0_17], %21 {strides = array<i32>} : memref<4x8x512xbf16, #tpu.memory_space<vmem>>, vector<4x8x512xbf16>,
    %c1 = arith.constant 1 : index
    %c0_18 = arith.constant 0 : index
    %c0_19 = arith.constant 0 : index
    %23 = vector.load %arg6[%c1, %c0_18, %c0_19] : memref<2x64x512xbf16, #tpu.memory_space<vmem>>, vector<1x64x512xbf16>
    %24 = vector.shape_cast %23 : vector<1x64x512xbf16> to vector<64x512xbf16>
    %c0_20 = arith.constant 0 : index
    %c0_21 = arith.constant 0 : index
    %c0_22 = arith.constant 0 : index
    %25 = vector.load %arg4[%c0_20, %c0_21, %c0_22] : memref<4x8x32xbf16, #tpu.memory_space<vmem>>, vector<4x8x32xbf16>
    %26 = vector.shape_cast %25 : vector<4x8x32xbf16> to vector<32x32xbf16>
    %27 = vector.extract_strided_slice %24 {offsets = [0, 0], sizes = [32, 512], strides = [1, 1]} : vector<64x512xbf16> to vector<32x512xbf16>
    %cst_23 = arith.constant dense<0.000000e+00> : vector<32x512xf32>
    %28 = tpu.matmul %26, %27, %cst_23 {dimension_numbers = #tpu.dot_dimension_numbers<[1], [0], [0], [1], [0, 0, 1, 1], [], []>} : vector<32x32xbf16>, vector<32x512xbf16>, vector<32x512xf32> -> vector<32x512xf32>
    %c0_24 = arith.constant 0 : index
    %c0_25 = arith.constant 0 : index
    %c0_26 = arith.constant 0 : index
    %29 = vector.load %arg5[%c0_24, %c0_25, %c0_26] : memref<4x8x32xbf16, #tpu.memory_space<vmem>>, vector<4x8x32xbf16>
    %30 = vector.shape_cast %29 : vector<4x8x32xbf16> to vector<32x32xbf16>
    %31 = vector.extract_strided_slice %24 {offsets = [32, 0], sizes = [32, 512], strides = [1, 1]} : vector<64x512xbf16> to vector<32x512xbf16>
    %cst_27 = arith.constant dense<0.000000e+00> : vector<32x512xf32>
    %32 = tpu.matmul %30, %31, %cst_27 {dimension_numbers = #tpu.dot_dimension_numbers<[1], [0], [0], [1], [0, 0, 1, 1], [], []>} : vector<32x32xbf16>, vector<32x512xbf16>, vector<32x512xf32> -> vector<32x512xf32>
    %33 = arith.addf %28, %32 : vector<32x512xf32>
    %c1_28 = arith.constant 1 : index
    %c0_29 = arith.constant 0 : index
    %c0_30 = arith.constant 0 : index
    %34 = vector.load %arg8[%c1_28, %c0_29, %c0_30] : memref<2x1x512xf32, #tpu.memory_space<vmem>>, vector<1x1x512xf32>
    %35 = vector.shape_cast %34 : vector<1x1x512xf32> to vector<1x512xf32>
    %36 = vector.broadcast %35 : vector<1x512xf32> to vector<32x512xf32>
    %37 = arith.addf %33, %36 : vector<32x512xf32>
    %38 = vector.shape_cast %37 : vector<32x512xf32> to vector<4x8x512xf32>
    %39 = arith.truncf %38 : vector<4x8x512xf32> to vector<4x8x512xbf16>
    %c0_31 = arith.constant 0 : index
    %c0_32 = arith.constant 0 : index
    %c0_33 = arith.constant 0 : index
    %40 = vector.load %arg16[%c0_31, %c0_32, %c0_33] : memref<4x8x512xbf16, #tpu.memory_space<vmem>>, vector<4x8x512xbf16>
    tpu.vector_store %arg16[%c0_31, %c0_32, %c0_33], %39 {strides = array<i32>} : memref<4x8x512xbf16, #tpu.memory_space<vmem>>, vector<4x8x512xbf16>,
    %c0_34 = arith.constant 0 : index
    %c0_35 = arith.constant 0 : index
    %c0_36 = arith.constant 0 : index
    %41 = vector.load %arg7[%c0_34, %c0_35, %c0_36] : memref<2x128x512xbf16, #tpu.memory_space<vmem>>, vector<1x128x512xbf16>
    %42 = vector.shape_cast %41 : vector<1x128x512xbf16> to vector<128x512xbf16>
    %c1_37 = arith.constant 1 : index
    %c0_38 = arith.constant 0 : index
    %c0_39 = arith.constant 0 : index
    %43 = vector.load %arg7[%c1_37, %c0_38, %c0_39] : memref<2x128x512xbf16, #tpu.memory_space<vmem>>, vector<1x128x512xbf16>
    %44 = vector.shape_cast %43 : vector<1x128x512xbf16> to vector<128x512xbf16>
    %c0_i32_40 = arith.constant 0 : i32
    %c4_i32 = arith.constant 4 : i32
    %45 = arith.muli %arg0, %c4_i32 : i32
    %46 = arith.addi %45, %c0_i32_40 : i32
    %47 = vector.broadcast %46 : i32 to vector<8x1xi32>
    %48 = arith.cmpi sgt, %1, %47 : vector<8x1xi32>
    %c0_41 = arith.constant 0 : index
    %c0_42 = arith.constant 0 : index
    %49 = vector.load %arg11[%c0_41, %c0_42] : memref<8x128xbf16, #tpu.memory_space<vmem>>, vector<8x128xbf16>
    %50 = arith.index_cast %c0_i32_40 : i32 to index
    %c0_43 = arith.constant 0 : index
    %c0_44 = arith.constant 0 : index
    %51 = vector.load %arg15[%50, %c0_43, %c0_44] : memref<4x8x512xbf16, #tpu.memory_space<vmem>>, vector<1x8x512xbf16>
    %52 = vector.shape_cast %51 : vector<1x8x512xbf16> to vector<8x512xbf16>
    %53 = arith.extf %52 : vector<8x512xbf16> to vector<8x512xf32>
    %cst_45 = arith.constant dense<0.000000e+00> : vector<8x512xf32>
    %54 = tpu.matmul %49, %42, %cst_45 {dimension_numbers = #tpu.dot_dimension_numbers<[1], [0], [0], [1], [0, 0, 1, 1], [], []>} : vector<8x128xbf16>, vector<128x512xbf16>, vector<8x512xf32> -> vector<8x512xf32>
    %55 = arith.addf %53, %54 : vector<8x512xf32>
    %56 = vector.extract_strided_slice %55 {offsets = [0, 0], sizes = [8, 128], strides = [1, 1]} : vector<8x512xf32> to vector<8x128xf32>
    %57 = arith.negf %56 : vector<8x128xf32>
    %58 = math.exp %57 : vector<8x128xf32>
    %cst_46 = arith.constant 1.000000e+00 : f32
    %59 = vector.broadcast %cst_46 : f32 to vector<8x128xf32>
    %60 = arith.addf %59, %58 : vector<8x128xf32>
    %61 = arith.divf %59, %60 : vector<8x128xf32>
    %62 = vector.extract_strided_slice %55 {offsets = [0, 128], sizes = [8, 128], strides = [1, 1]} : vector<8x512xf32> to vector<8x128xf32>
    %63 = arith.negf %62 : vector<8x128xf32>
    %64 = math.exp %63 : vector<8x128xf32>
    %cst_47 = arith.constant 1.000000e+00 : f32
    %65 = vector.broadcast %cst_47 : f32 to vector<8x128xf32>
    %66 = arith.addf %65, %64 : vector<8x128xf32>
    %67 = arith.divf %65, %66 : vector<8x128xf32>
    %68 = vector.extract_strided_slice %55 {offsets = [0, 256], sizes = [8, 128], strides = [1, 1]} : vector<8x512xf32> to vector<8x128xf32>
    %69 = math.tanh %68 : vector<8x128xf32>
    %70 = vector.extract_strided_slice %55 {offsets = [0, 384], sizes = [8, 128], strides = [1, 1]} : vector<8x512xf32> to vector<8x128xf32>
    %71 = arith.negf %70 : vector<8x128xf32>
    %72 = math.exp %71 : vector<8x128xf32>
    %cst_48 = arith.constant 1.000000e+00 : f32
    %73 = vector.broadcast %cst_48 : f32 to vector<8x128xf32>
    %74 = arith.addf %73, %72 : vector<8x128xf32>
    %75 = arith.divf %73, %74 : vector<8x128xf32>
    %c0_49 = arith.constant 0 : index
    %c0_50 = arith.constant 0 : index
    %76 = vector.load %arg12[%c0_49, %c0_50] : memref<8x128xf32, #tpu.memory_space<vmem>>, vector<8x128xf32>
    %77 = arith.mulf %67, %76 : vector<8x128xf32>
    %78 = arith.mulf %61, %69 : vector<8x128xf32>
    %79 = arith.addf %77, %78 : vector<8x128xf32>
    %80 = math.tanh %79 : vector<8x128xf32>
    %81 = arith.mulf %75, %80 : vector<8x128xf32>
    %82 = arith.extf %49 : vector<8x128xbf16> to vector<8x128xf32>
    %83 = vector.shape_cast %48 : vector<8x1xi1> to vector<8x1xi1>
    %84 = vector.broadcast %83 : vector<8x1xi1> to vector<8x128xi1>
    %85 = arith.select %84, %81, %82 : vector<8x128xi1>, vector<8x128xf32>
    %86 = arith.truncf %85 : vector<8x128xf32> to vector<8x128xbf16>
    %c0_51 = arith.constant 0 : index
    %c0_52 = arith.constant 0 : index
    %87 = vector.load %arg11[%c0_51, %c0_52] : memref<8x128xbf16, #tpu.memory_space<vmem>>, vector<8x128xbf16>
    tpu.vector_store %arg11[%c0_51, %c0_52], %86 {strides = array<i32>} : memref<8x128xbf16, #tpu.memory_space<vmem>>, vector<8x128xbf16>,
    %c0_53 = arith.constant 0 : index
    %c0_54 = arith.constant 0 : index
    %88 = vector.load %arg12[%c0_53, %c0_54] : memref<8x128xf32, #tpu.memory_space<vmem>>, vector<8x128xf32>
    %89 = vector.shape_cast %48 : vector<8x1xi1> to vector<8x1xi1>
    %90 = vector.broadcast %89 : vector<8x1xi1> to vector<8x128xi1>
    %91 = arith.select %90, %79, %88 : vector<8x128xi1>, vector<8x128xf32>
    %c0_55 = arith.constant 0 : index
    %c0_56 = arith.constant 0 : index
    %92 = vector.load %arg12[%c0_55, %c0_56] : memref<8x128xf32, #tpu.memory_space<vmem>>, vector<8x128xf32>
    tpu.vector_store %arg12[%c0_55, %c0_56], %91 {strides = array<i32>} : memref<8x128xf32, #tpu.memory_space<vmem>>, vector<8x128xf32>,
    %c3_i32 = arith.constant 3 : i32
    %93 = arith.subi %c3_i32, %c0_i32_40 : i32
    %c4_i32_57 = arith.constant 4 : i32
    %94 = arith.muli %0, %c4_i32_57 : i32
    %95 = arith.addi %94, %93 : i32
    %96 = vector.broadcast %95 : i32 to vector<8x1xi32>
    %97 = arith.cmpi sgt, %1, %96 : vector<8x1xi32>
    %c0_58 = arith.constant 0 : index
    %c0_59 = arith.constant 0 : index
    %98 = vector.load %arg13[%c0_58, %c0_59] : memref<8x128xbf16, #tpu.memory_space<vmem>>, vector<8x128xbf16>
    %99 = arith.index_cast %93 : i32 to index
    %c0_60 = arith.constant 0 : index
    %c0_61 = arith.constant 0 : index
    %100 = vector.load %arg16[%99, %c0_60, %c0_61] : memref<4x8x512xbf16, #tpu.memory_space<vmem>>, vector<1x8x512xbf16>
    %101 = vector.shape_cast %100 : vector<1x8x512xbf16> to vector<8x512xbf16>
    %102 = arith.extf %101 : vector<8x512xbf16> to vector<8x512xf32>
    %cst_62 = arith.constant dense<0.000000e+00> : vector<8x512xf32>
    %103 = tpu.matmul %98, %44, %cst_62 {dimension_numbers = #tpu.dot_dimension_numbers<[1], [0], [0], [1], [0, 0, 1, 1], [], []>} : vector<8x128xbf16>, vector<128x512xbf16>, vector<8x512xf32> -> vector<8x512xf32>
    %104 = arith.addf %102, %103 : vector<8x512xf32>
    %105 = vector.extract_strided_slice %104 {offsets = [0, 0], sizes = [8, 128], strides = [1, 1]} : vector<8x512xf32> to vector<8x128xf32>
    %106 = arith.negf %105 : vector<8x128xf32>
    %107 = math.exp %106 : vector<8x128xf32>
    %cst_63 = arith.constant 1.000000e+00 : f32
    %108 = vector.broadcast %cst_63 : f32 to vector<8x128xf32>
    %109 = arith.addf %108, %107 : vector<8x128xf32>
    %110 = arith.divf %108, %109 : vector<8x128xf32>
    %111 = vector.extract_strided_slice %104 {offsets = [0, 128], sizes = [8, 128], strides = [1, 1]} : vector<8x512xf32> to vector<8x128xf32>
    %112 = arith.negf %111 : vector<8x128xf32>
    %113 = math.exp %112 : vector<8x128xf32>
    %cst_64 = arith.constant 1.000000e+00 : f32
    %114 = vector.broadcast %cst_64 : f32 to vector<8x128xf32>
    %115 = arith.addf %114, %113 : vector<8x128xf32>
    %116 = arith.divf %114, %115 : vector<8x128xf32>
    %117 = vector.extract_strided_slice %104 {offsets = [0, 256], sizes = [8, 128], strides = [1, 1]} : vector<8x512xf32> to vector<8x128xf32>
    %118 = math.tanh %117 : vector<8x128xf32>
    %119 = vector.extract_strided_slice %104 {offsets = [0, 384], sizes = [8, 128], strides = [1, 1]} : vector<8x512xf32> to vector<8x128xf32>
    %120 = arith.negf %119 : vector<8x128xf32>
    %121 = math.exp %120 : vector<8x128xf32>
    %cst_65 = arith.constant 1.000000e+00 : f32
    %122 = vector.broadcast %cst_65 : f32 to vector<8x128xf32>
    %123 = arith.addf %122, %121 : vector<8x128xf32>
    %124 = arith.divf %122, %123 : vector<8x128xf32>
    %c0_66 = arith.constant 0 : index
    %c0_67 = arith.constant 0 : index
    %125 = vector.load %arg14[%c0_66, %c0_67] : memref<8x128xf32, #tpu.memory_space<vmem>>, vector<8x128xf32>
    %126 = arith.mulf %116, %125 : vector<8x128xf32>
    %127 = arith.mulf %110, %118 : vector<8x128xf32>
    %128 = arith.addf %126, %127 : vector<8x128xf32>
    %129 = math.tanh %128 : vector<8x128xf32>
    %130 = arith.mulf %124, %129 : vector<8x128xf32>
    %131 = arith.extf %98 : vector<8x128xbf16> to vector<8x128xf32>
    %132 = vector.shape_cast %97 : vector<8x1xi1> to vector<8x1xi1>
    %133 = vector.broadcast %132 : vector<8x1xi1> to vector<8x128xi1>
    %134 = arith.select %133, %130, %131 : vector<8x128xi1>, vector<8x128xf32>
    %135 = arith.truncf %134 : vector<8x128xf32> to vector<8x128xbf16>
    %c0_68 = arith.constant 0 : index
    %c0_69 = arith.constant 0 : index
    %136 = vector.load %arg13[%c0_68, %c0_69] : memref<8x128xbf16, #tpu.memory_space<vmem>>, vector<8x128xbf16>
    tpu.vector_store %arg13[%c0_68, %c0_69], %135 {strides = array<i32>} : memref<8x128xbf16, #tpu.memory_space<vmem>>, vector<8x128xbf16>,
    %c0_70 = arith.constant 0 : index
    %c0_71 = arith.constant 0 : index
    %137 = vector.load %arg14[%c0_70, %c0_71] : memref<8x128xf32, #tpu.memory_space<vmem>>, vector<8x128xf32>
    %138 = vector.shape_cast %97 : vector<8x1xi1> to vector<8x1xi1>
    %139 = vector.broadcast %138 : vector<8x1xi1> to vector<8x128xi1>
    %140 = arith.select %139, %128, %137 : vector<8x128xi1>, vector<8x128xf32>
    %c0_72 = arith.constant 0 : index
    %c0_73 = arith.constant 0 : index
    %141 = vector.load %arg14[%c0_72, %c0_73] : memref<8x128xf32, #tpu.memory_space<vmem>>, vector<8x128xf32>
    tpu.vector_store %arg14[%c0_72, %c0_73], %140 {strides = array<i32>} : memref<8x128xf32, #tpu.memory_space<vmem>>, vector<8x128xf32>,
    %c1_i32_74 = arith.constant 1 : i32
    %142 = arith.addi %46, %c1_i32_74 : i32
    %143 = vector.broadcast %142 : i32 to vector<8x1xi32>
    %144 = arith.cmpi eq, %1, %143 : vector<8x1xi32>
    %c0_75 = arith.constant 0 : index
    %c0_76 = arith.constant 0 : index
    %145 = vector.load %arg17[%c0_75, %c0_76] : memref<8x256xf32, #tpu.memory_space<vmem>>, vector<8x128xf32>
    %146 = vector.shape_cast %144 : vector<8x1xi1> to vector<8x1xi1>
    %147 = vector.broadcast %146 : vector<8x1xi1> to vector<8x128xi1>
    %148 = arith.select %147, %85, %145 : vector<8x128xi1>, vector<8x128xf32>
    %c0_77 = arith.constant 0 : index
    %c0_78 = arith.constant 0 : index
    %149 = vector.load %arg17[%c0_77, %c0_78] : memref<8x256xf32, #tpu.memory_space<vmem>>, vector<8x128xf32>
    tpu.vector_store %arg17[%c0_77, %c0_78], %148 {strides = array<i32>} : memref<8x256xf32, #tpu.memory_space<vmem>>, vector<8x128xf32>,
    %c1_i32_79 = arith.constant 1 : i32
    %150 = arith.addi %95, %c1_i32_79 : i32
    %151 = vector.broadcast %150 : i32 to vector<8x1xi32>
    %152 = arith.cmpi eq, %1, %151 : vector<8x1xi32>
    %c0_80 = arith.constant 0 : index
    %c128 = arith.constant 128 : index
    %153 = vector.load %arg17[%c0_80, %c128] : memref<8x256xf32, #tpu.memory_space<vmem>>, vector<8x128xf32>
    %154 = vector.shape_cast %152 : vector<8x1xi1> to vector<8x1xi1>
    %155 = vector.broadcast %154 : vector<8x1xi1> to vector<8x128xi1>
    %156 = arith.select %155, %134, %153 : vector<8x128xi1>, vector<8x128xf32>
    %c0_81 = arith.constant 0 : index
    %c128_82 = arith.constant 128 : index
    %157 = vector.load %arg17[%c0_81, %c128_82] : memref<8x256xf32, #tpu.memory_space<vmem>>, vector<8x128xf32>
    tpu.vector_store %arg17[%c0_81, %c128_82], %156 {strides = array<i32>} : memref<8x256xf32, #tpu.memory_space<vmem>>, vector<8x128xf32>,
    %c1_i32_83 = arith.constant 1 : i32
    %c4_i32_84 = arith.constant 4 : i32
    %158 = arith.muli %arg0, %c4_i32_84 : i32
    %159 = arith.addi %158, %c1_i32_83 : i32
    %160 = vector.broadcast %159 : i32 to vector<8x1xi32>
    %161 = arith.cmpi sgt, %1, %160 : vector<8x1xi32>
    %c0_85 = arith.constant 0 : index
    %c0_86 = arith.constant 0 : index
    %162 = vector.load %arg11[%c0_85, %c0_86] : memref<8x128xbf16, #tpu.memory_space<vmem>>, vector<8x128xbf16>
    %163 = arith.index_cast %c1_i32_83 : i32 to index
    %c0_87 = arith.constant 0 : index
    %c0_88 = arith.constant 0 : index
    %164 = vector.load %arg15[%163, %c0_87, %c0_88] : memref<4x8x512xbf16, #tpu.memory_space<vmem>>, vector<1x8x512xbf16>
    %165 = vector.shape_cast %164 : vector<1x8x512xbf16> to vector<8x512xbf16>
    %166 = arith.extf %165 : vector<8x512xbf16> to vector<8x512xf32>
    %cst_89 = arith.constant dense<0.000000e+00> : vector<8x512xf32>
    %167 = tpu.matmul %162, %42, %cst_89 {dimension_numbers = #tpu.dot_dimension_numbers<[1], [0], [0], [1], [0, 0, 1, 1], [], []>} : vector<8x128xbf16>, vector<128x512xbf16>, vector<8x512xf32> -> vector<8x512xf32>
    %168 = arith.addf %166, %167 : vector<8x512xf32>
    %169 = vector.extract_strided_slice %168 {offsets = [0, 0], sizes = [8, 128], strides = [1, 1]} : vector<8x512xf32> to vector<8x128xf32>
    %170 = arith.negf %169 : vector<8x128xf32>
    %171 = math.exp %170 : vector<8x128xf32>
    %cst_90 = arith.constant 1.000000e+00 : f32
    %172 = vector.broadcast %cst_90 : f32 to vector<8x128xf32>
    %173 = arith.addf %172, %171 : vector<8x128xf32>
    %174 = arith.divf %172, %173 : vector<8x128xf32>
    %175 = vector.extract_strided_slice %168 {offsets = [0, 128], sizes = [8, 128], strides = [1, 1]} : vector<8x512xf32> to vector<8x128xf32>
    %176 = arith.negf %175 : vector<8x128xf32>
    %177 = math.exp %176 : vector<8x128xf32>
    %cst_91 = arith.constant 1.000000e+00 : f32
    %178 = vector.broadcast %cst_91 : f32 to vector<8x128xf32>
    %179 = arith.addf %178, %177 : vector<8x128xf32>
    %180 = arith.divf %178, %179 : vector<8x128xf32>
    %181 = vector.extract_strided_slice %168 {offsets = [0, 256], sizes = [8, 128], strides = [1, 1]} : vector<8x512xf32> to vector<8x128xf32>
    %182 = math.tanh %181 : vector<8x128xf32>
    %183 = vector.extract_strided_slice %168 {offsets = [0, 384], sizes = [8, 128], strides = [1, 1]} : vector<8x512xf32> to vector<8x128xf32>
    %184 = arith.negf %183 : vector<8x128xf32>
    %185 = math.exp %184 : vector<8x128xf32>
    %cst_92 = arith.constant 1.000000e+00 : f32
    %186 = vector.broadcast %cst_92 : f32 to vector<8x128xf32>
    %187 = arith.addf %186, %185 : vector<8x128xf32>
    %188 = arith.divf %186, %187 : vector<8x128xf32>
    %c0_93 = arith.constant 0 : index
    %c0_94 = arith.constant 0 : index
    %189 = vector.load %arg12[%c0_93, %c0_94] : memref<8x128xf32, #tpu.memory_space<vmem>>, vector<8x128xf32>
    %190 = arith.mulf %180, %189 : vector<8x128xf32>
    %191 = arith.mulf %174, %182 : vector<8x128xf32>
    %192 = arith.addf %190, %191 : vector<8x128xf32>
    %193 = math.tanh %192 : vector<8x128xf32>
    %194 = arith.mulf %188, %193 : vector<8x128xf32>
    %195 = arith.extf %162 : vector<8x128xbf16> to vector<8x128xf32>
    %196 = vector.shape_cast %161 : vector<8x1xi1> to vector<8x1xi1>
    %197 = vector.broadcast %196 : vector<8x1xi1> to vector<8x128xi1>
    %198 = arith.select %197, %194, %195 : vector<8x128xi1>, vector<8x128xf32>
    %199 = arith.truncf %198 : vector<8x128xf32> to vector<8x128xbf16>
    %c0_95 = arith.constant 0 : index
    %c0_96 = arith.constant 0 : index
    %200 = vector.load %arg11[%c0_95, %c0_96] : memref<8x128xbf16, #tpu.memory_space<vmem>>, vector<8x128xbf16>
    tpu.vector_store %arg11[%c0_95, %c0_96], %199 {strides = array<i32>} : memref<8x128xbf16, #tpu.memory_space<vmem>>, vector<8x128xbf16>,
    %c0_97 = arith.constant 0 : index
    %c0_98 = arith.constant 0 : index
    %201 = vector.load %arg12[%c0_97, %c0_98] : memref<8x128xf32, #tpu.memory_space<vmem>>, vector<8x128xf32>
    %202 = vector.shape_cast %161 : vector<8x1xi1> to vector<8x1xi1>
    %203 = vector.broadcast %202 : vector<8x1xi1> to vector<8x128xi1>
    %204 = arith.select %203, %192, %201 : vector<8x128xi1>, vector<8x128xf32>
    %c0_99 = arith.constant 0 : index
    %c0_100 = arith.constant 0 : index
    %205 = vector.load %arg12[%c0_99, %c0_100] : memref<8x128xf32, #tpu.memory_space<vmem>>, vector<8x128xf32>
    tpu.vector_store %arg12[%c0_99, %c0_100], %204 {strides = array<i32>} : memref<8x128xf32, #tpu.memory_space<vmem>>, vector<8x128xf32>,
    %c3_i32_101 = arith.constant 3 : i32
    %206 = arith.subi %c3_i32_101, %c1_i32_83 : i32
    %c4_i32_102 = arith.constant 4 : i32
    %207 = arith.muli %0, %c4_i32_102 : i32
    %208 = arith.addi %207, %206 : i32
    %209 = vector.broadcast %208 : i32 to vector<8x1xi32>
    %210 = arith.cmpi sgt, %1, %209 : vector<8x1xi32>
    %c0_103 = arith.constant 0 : index
    %c0_104 = arith.constant 0 : index
    %211 = vector.load %arg13[%c0_103, %c0_104] : memref<8x128xbf16, #tpu.memory_space<vmem>>, vector<8x128xbf16>
    %212 = arith.index_cast %206 : i32 to index
    %c0_105 = arith.constant 0 : index
    %c0_106 = arith.constant 0 : index
    %213 = vector.load %arg16[%212, %c0_105, %c0_106] : memref<4x8x512xbf16, #tpu.memory_space<vmem>>, vector<1x8x512xbf16>
    %214 = vector.shape_cast %213 : vector<1x8x512xbf16> to vector<8x512xbf16>
    %215 = arith.extf %214 : vector<8x512xbf16> to vector<8x512xf32>
    %cst_107 = arith.constant dense<0.000000e+00> : vector<8x512xf32>
    %216 = tpu.matmul %211, %44, %cst_107 {dimension_numbers = #tpu.dot_dimension_numbers<[1], [0], [0], [1], [0, 0, 1, 1], [], []>} : vector<8x128xbf16>, vector<128x512xbf16>, vector<8x512xf32> -> vector<8x512xf32>
    %217 = arith.addf %215, %216 : vector<8x512xf32>
    %218 = vector.extract_strided_slice %217 {offsets = [0, 0], sizes = [8, 128], strides = [1, 1]} : vector<8x512xf32> to vector<8x128xf32>
    %219 = arith.negf %218 : vector<8x128xf32>
    %220 = math.exp %219 : vector<8x128xf32>
    %cst_108 = arith.constant 1.000000e+00 : f32
    %221 = vector.broadcast %cst_108 : f32 to vector<8x128xf32>
    %222 = arith.addf %221, %220 : vector<8x128xf32>
    %223 = arith.divf %221, %222 : vector<8x128xf32>
    %224 = vector.extract_strided_slice %217 {offsets = [0, 128], sizes = [8, 128], strides = [1, 1]} : vector<8x512xf32> to vector<8x128xf32>
    %225 = arith.negf %224 : vector<8x128xf32>
    %226 = math.exp %225 : vector<8x128xf32>
    %cst_109 = arith.constant 1.000000e+00 : f32
    %227 = vector.broadcast %cst_109 : f32 to vector<8x128xf32>
    %228 = arith.addf %227, %226 : vector<8x128xf32>
    %229 = arith.divf %227, %228 : vector<8x128xf32>
    %230 = vector.extract_strided_slice %217 {offsets = [0, 256], sizes = [8, 128], strides = [1, 1]} : vector<8x512xf32> to vector<8x128xf32>
    %231 = math.tanh %230 : vector<8x128xf32>
    %232 = vector.extract_strided_slice %217 {offsets = [0, 384], sizes = [8, 128], strides = [1, 1]} : vector<8x512xf32> to vector<8x128xf32>
    %233 = arith.negf %232 : vector<8x128xf32>
    %234 = math.exp %233 : vector<8x128xf32>
    %cst_110 = arith.constant 1.000000e+00 : f32
    %235 = vector.broadcast %cst_110 : f32 to vector<8x128xf32>
    %236 = arith.addf %235, %234 : vector<8x128xf32>
    %237 = arith.divf %235, %236 : vector<8x128xf32>
    %c0_111 = arith.constant 0 : index
    %c0_112 = arith.constant 0 : index
    %238 = vector.load %arg14[%c0_111, %c0_112] : memref<8x128xf32, #tpu.memory_space<vmem>>, vector<8x128xf32>
    %239 = arith.mulf %229, %238 : vector<8x128xf32>
    %240 = arith.mulf %223, %231 : vector<8x128xf32>
    %241 = arith.addf %239, %240 : vector<8x128xf32>
    %242 = math.tanh %241 : vector<8x128xf32>
    %243 = arith.mulf %237, %242 : vector<8x128xf32>
    %244 = arith.extf %211 : vector<8x128xbf16> to vector<8x128xf32>
    %245 = vector.shape_cast %210 : vector<8x1xi1> to vector<8x1xi1>
    %246 = vector.broadcast %245 : vector<8x1xi1> to vector<8x128xi1>
    %247 = arith.select %246, %243, %244 : vector<8x128xi1>, vector<8x128xf32>
    %248 = arith.truncf %247 : vector<8x128xf32> to vector<8x128xbf16>
    %c0_113 = arith.constant 0 : index
    %c0_114 = arith.constant 0 : index
    %249 = vector.load %arg13[%c0_113, %c0_114] : memref<8x128xbf16, #tpu.memory_space<vmem>>, vector<8x128xbf16>
    tpu.vector_store %arg13[%c0_113, %c0_114], %248 {strides = array<i32>} : memref<8x128xbf16, #tpu.memory_space<vmem>>, vector<8x128xbf16>,
    %c0_115 = arith.constant 0 : index
    %c0_116 = arith.constant 0 : index
    %250 = vector.load %arg14[%c0_115, %c0_116] : memref<8x128xf32, #tpu.memory_space<vmem>>, vector<8x128xf32>
    %251 = vector.shape_cast %210 : vector<8x1xi1> to vector<8x1xi1>
    %252 = vector.broadcast %251 : vector<8x1xi1> to vector<8x128xi1>
    %253 = arith.select %252, %241, %250 : vector<8x128xi1>, vector<8x128xf32>
    %c0_117 = arith.constant 0 : index
    %c0_118 = arith.constant 0 : index
    %254 = vector.load %arg14[%c0_117, %c0_118] : memref<8x128xf32, #tpu.memory_space<vmem>>, vector<8x128xf32>
    tpu.vector_store %arg14[%c0_117, %c0_118], %253 {strides = array<i32>} : memref<8x128xf32, #tpu.memory_space<vmem>>, vector<8x128xf32>,
    %c1_i32_119 = arith.constant 1 : i32
    %255 = arith.addi %159, %c1_i32_119 : i32
    %256 = vector.broadcast %255 : i32 to vector<8x1xi32>
    %257 = arith.cmpi eq, %1, %256 : vector<8x1xi32>
    %c0_120 = arith.constant 0 : index
    %c0_121 = arith.constant 0 : index
    %258 = vector.load %arg17[%c0_120, %c0_121] : memref<8x256xf32, #tpu.memory_space<vmem>>, vector<8x128xf32>
    %259 = vector.shape_cast %257 : vector<8x1xi1> to vector<8x1xi1>
    %260 = vector.broadcast %259 : vector<8x1xi1> to vector<8x128xi1>
    %261 = arith.select %260, %198, %258 : vector<8x128xi1>, vector<8x128xf32>
    %c0_122 = arith.constant 0 : index
    %c0_123 = arith.constant 0 : index
    %262 = vector.load %arg17[%c0_122, %c0_123] : memref<8x256xf32, #tpu.memory_space<vmem>>, vector<8x128xf32>
    tpu.vector_store %arg17[%c0_122, %c0_123], %261 {strides = array<i32>} : memref<8x256xf32, #tpu.memory_space<vmem>>, vector<8x128xf32>,
    %c1_i32_124 = arith.constant 1 : i32
    %263 = arith.addi %208, %c1_i32_124 : i32
    %264 = vector.broadcast %263 : i32 to vector<8x1xi32>
    %265 = arith.cmpi eq, %1, %264 : vector<8x1xi32>
    %c0_125 = arith.constant 0 : index
    %c128_126 = arith.constant 128 : index
    %266 = vector.load %arg17[%c0_125, %c128_126] : memref<8x256xf32, #tpu.memory_space<vmem>>, vector<8x128xf32>
    %267 = vector.shape_cast %265 : vector<8x1xi1> to vector<8x1xi1>
    %268 = vector.broadcast %267 : vector<8x1xi1> to vector<8x128xi1>
    %269 = arith.select %268, %247, %266 : vector<8x128xi1>, vector<8x128xf32>
    %c0_127 = arith.constant 0 : index
    %c128_128 = arith.constant 128 : index
    %270 = vector.load %arg17[%c0_127, %c128_128] : memref<8x256xf32, #tpu.memory_space<vmem>>, vector<8x128xf32>
    tpu.vector_store %arg17[%c0_127, %c128_128], %269 {strides = array<i32>} : memref<8x256xf32, #tpu.memory_space<vmem>>, vector<8x128xf32>,
    %c2_i32 = arith.constant 2 : i32
    %c4_i32_129 = arith.constant 4 : i32
    %271 = arith.muli %arg0, %c4_i32_129 : i32
    %272 = arith.addi %271, %c2_i32 : i32
    %273 = vector.broadcast %272 : i32 to vector<8x1xi32>
    %274 = arith.cmpi sgt, %1, %273 : vector<8x1xi32>
    %c0_130 = arith.constant 0 : index
    %c0_131 = arith.constant 0 : index
    %275 = vector.load %arg11[%c0_130, %c0_131] : memref<8x128xbf16, #tpu.memory_space<vmem>>, vector<8x128xbf16>
    %276 = arith.index_cast %c2_i32 : i32 to index
    %c0_132 = arith.constant 0 : index
    %c0_133 = arith.constant 0 : index
    %277 = vector.load %arg15[%276, %c0_132, %c0_133] : memref<4x8x512xbf16, #tpu.memory_space<vmem>>, vector<1x8x512xbf16>
    %278 = vector.shape_cast %277 : vector<1x8x512xbf16> to vector<8x512xbf16>
    %279 = arith.extf %278 : vector<8x512xbf16> to vector<8x512xf32>
    %cst_134 = arith.constant dense<0.000000e+00> : vector<8x512xf32>
    %280 = tpu.matmul %275, %42, %cst_134 {dimension_numbers = #tpu.dot_dimension_numbers<[1], [0], [0], [1], [0, 0, 1, 1], [], []>} : vector<8x128xbf16>, vector<128x512xbf16>, vector<8x512xf32> -> vector<8x512xf32>
    %281 = arith.addf %279, %280 : vector<8x512xf32>
    %282 = vector.extract_strided_slice %281 {offsets = [0, 0], sizes = [8, 128], strides = [1, 1]} : vector<8x512xf32> to vector<8x128xf32>
    %283 = arith.negf %282 : vector<8x128xf32>
    %284 = math.exp %283 : vector<8x128xf32>
    %cst_135 = arith.constant 1.000000e+00 : f32
    %285 = vector.broadcast %cst_135 : f32 to vector<8x128xf32>
    %286 = arith.addf %285, %284 : vector<8x128xf32>
    %287 = arith.divf %285, %286 : vector<8x128xf32>
    %288 = vector.extract_strided_slice %281 {offsets = [0, 128], sizes = [8, 128], strides = [1, 1]} : vector<8x512xf32> to vector<8x128xf32>
    %289 = arith.negf %288 : vector<8x128xf32>
    %290 = math.exp %289 : vector<8x128xf32>
    %cst_136 = arith.constant 1.000000e+00 : f32
    %291 = vector.broadcast %cst_136 : f32 to vector<8x128xf32>
    %292 = arith.addf %291, %290 : vector<8x128xf32>
    %293 = arith.divf %291, %292 : vector<8x128xf32>
    %294 = vector.extract_strided_slice %281 {offsets = [0, 256], sizes = [8, 128], strides = [1, 1]} : vector<8x512xf32> to vector<8x128xf32>
    %295 = math.tanh %294 : vector<8x128xf32>
    %296 = vector.extract_strided_slice %281 {offsets = [0, 384], sizes = [8, 128], strides = [1, 1]} : vector<8x512xf32> to vector<8x128xf32>
    %297 = arith.negf %296 : vector<8x128xf32>
    %298 = math.exp %297 : vector<8x128xf32>
    %cst_137 = arith.constant 1.000000e+00 : f32
    %299 = vector.broadcast %cst_137 : f32 to vector<8x128xf32>
    %300 = arith.addf %299, %298 : vector<8x128xf32>
    %301 = arith.divf %299, %300 : vector<8x128xf32>
    %c0_138 = arith.constant 0 : index
    %c0_139 = arith.constant 0 : index
    %302 = vector.load %arg12[%c0_138, %c0_139] : memref<8x128xf32, #tpu.memory_space<vmem>>, vector<8x128xf32>
    %303 = arith.mulf %293, %302 : vector<8x128xf32>
    %304 = arith.mulf %287, %295 : vector<8x128xf32>
    %305 = arith.addf %303, %304 : vector<8x128xf32>
    %306 = math.tanh %305 : vector<8x128xf32>
    %307 = arith.mulf %301, %306 : vector<8x128xf32>
    %308 = arith.extf %275 : vector<8x128xbf16> to vector<8x128xf32>
    %309 = vector.shape_cast %274 : vector<8x1xi1> to vector<8x1xi1>
    %310 = vector.broadcast %309 : vector<8x1xi1> to vector<8x128xi1>
    %311 = arith.select %310, %307, %308 : vector<8x128xi1>, vector<8x128xf32>
    %312 = arith.truncf %311 : vector<8x128xf32> to vector<8x128xbf16>
    %c0_140 = arith.constant 0 : index
    %c0_141 = arith.constant 0 : index
    %313 = vector.load %arg11[%c0_140, %c0_141] : memref<8x128xbf16, #tpu.memory_space<vmem>>, vector<8x128xbf16>
    tpu.vector_store %arg11[%c0_140, %c0_141], %312 {strides = array<i32>} : memref<8x128xbf16, #tpu.memory_space<vmem>>, vector<8x128xbf16>,
    %c0_142 = arith.constant 0 : index
    %c0_143 = arith.constant 0 : index
    %314 = vector.load %arg12[%c0_142, %c0_143] : memref<8x128xf32, #tpu.memory_space<vmem>>, vector<8x128xf32>
    %315 = vector.shape_cast %274 : vector<8x1xi1> to vector<8x1xi1>
    %316 = vector.broadcast %315 : vector<8x1xi1> to vector<8x128xi1>
    %317 = arith.select %316, %305, %314 : vector<8x128xi1>, vector<8x128xf32>
    %c0_144 = arith.constant 0 : index
    %c0_145 = arith.constant 0 : index
    %318 = vector.load %arg12[%c0_144, %c0_145] : memref<8x128xf32, #tpu.memory_space<vmem>>, vector<8x128xf32>
    tpu.vector_store %arg12[%c0_144, %c0_145], %317 {strides = array<i32>} : memref<8x128xf32, #tpu.memory_space<vmem>>, vector<8x128xf32>,
    %c3_i32_146 = arith.constant 3 : i32
    %319 = arith.subi %c3_i32_146, %c2_i32 : i32
    %c4_i32_147 = arith.constant 4 : i32
    %320 = arith.muli %0, %c4_i32_147 : i32
    %321 = arith.addi %320, %319 : i32
    %322 = vector.broadcast %321 : i32 to vector<8x1xi32>
    %323 = arith.cmpi sgt, %1, %322 : vector<8x1xi32>
    %c0_148 = arith.constant 0 : index
    %c0_149 = arith.constant 0 : index
    %324 = vector.load %arg13[%c0_148, %c0_149] : memref<8x128xbf16, #tpu.memory_space<vmem>>, vector<8x128xbf16>
    %325 = arith.index_cast %319 : i32 to index
    %c0_150 = arith.constant 0 : index
    %c0_151 = arith.constant 0 : index
    %326 = vector.load %arg16[%325, %c0_150, %c0_151] : memref<4x8x512xbf16, #tpu.memory_space<vmem>>, vector<1x8x512xbf16>
    %327 = vector.shape_cast %326 : vector<1x8x512xbf16> to vector<8x512xbf16>
    %328 = arith.extf %327 : vector<8x512xbf16> to vector<8x512xf32>
    %cst_152 = arith.constant dense<0.000000e+00> : vector<8x512xf32>
    %329 = tpu.matmul %324, %44, %cst_152 {dimension_numbers = #tpu.dot_dimension_numbers<[1], [0], [0], [1], [0, 0, 1, 1], [], []>} : vector<8x128xbf16>, vector<128x512xbf16>, vector<8x512xf32> -> vector<8x512xf32>
    %330 = arith.addf %328, %329 : vector<8x512xf32>
    %331 = vector.extract_strided_slice %330 {offsets = [0, 0], sizes = [8, 128], strides = [1, 1]} : vector<8x512xf32> to vector<8x128xf32>
    %332 = arith.negf %331 : vector<8x128xf32>
    %333 = math.exp %332 : vector<8x128xf32>
    %cst_153 = arith.constant 1.000000e+00 : f32
    %334 = vector.broadcast %cst_153 : f32 to vector<8x128xf32>
    %335 = arith.addf %334, %333 : vector<8x128xf32>
    %336 = arith.divf %334, %335 : vector<8x128xf32>
    %337 = vector.extract_strided_slice %330 {offsets = [0, 128], sizes = [8, 128], strides = [1, 1]} : vector<8x512xf32> to vector<8x128xf32>
    %338 = arith.negf %337 : vector<8x128xf32>
    %339 = math.exp %338 : vector<8x128xf32>
    %cst_154 = arith.constant 1.000000e+00 : f32
    %340 = vector.broadcast %cst_154 : f32 to vector<8x128xf32>
    %341 = arith.addf %340, %339 : vector<8x128xf32>
    %342 = arith.divf %340, %341 : vector<8x128xf32>
    %343 = vector.extract_strided_slice %330 {offsets = [0, 256], sizes = [8, 128], strides = [1, 1]} : vector<8x512xf32> to vector<8x128xf32>
    %344 = math.tanh %343 : vector<8x128xf32>
    %345 = vector.extract_strided_slice %330 {offsets = [0, 384], sizes = [8, 128], strides = [1, 1]} : vector<8x512xf32> to vector<8x128xf32>
    %346 = arith.negf %345 : vector<8x128xf32>
    %347 = math.exp %346 : vector<8x128xf32>
    %cst_155 = arith.constant 1.000000e+00 : f32
    %348 = vector.broadcast %cst_155 : f32 to vector<8x128xf32>
    %349 = arith.addf %348, %347 : vector<8x128xf32>
    %350 = arith.divf %348, %349 : vector<8x128xf32>
    %c0_156 = arith.constant 0 : index
    %c0_157 = arith.constant 0 : index
    %351 = vector.load %arg14[%c0_156, %c0_157] : memref<8x128xf32, #tpu.memory_space<vmem>>, vector<8x128xf32>
    %352 = arith.mulf %342, %351 : vector<8x128xf32>
    %353 = arith.mulf %336, %344 : vector<8x128xf32>
    %354 = arith.addf %352, %353 : vector<8x128xf32>
    %355 = math.tanh %354 : vector<8x128xf32>
    %356 = arith.mulf %350, %355 : vector<8x128xf32>
    %357 = arith.extf %324 : vector<8x128xbf16> to vector<8x128xf32>
    %358 = vector.shape_cast %323 : vector<8x1xi1> to vector<8x1xi1>
    %359 = vector.broadcast %358 : vector<8x1xi1> to vector<8x128xi1>
    %360 = arith.select %359, %356, %357 : vector<8x128xi1>, vector<8x128xf32>
    %361 = arith.truncf %360 : vector<8x128xf32> to vector<8x128xbf16>
    %c0_158 = arith.constant 0 : index
    %c0_159 = arith.constant 0 : index
    %362 = vector.load %arg13[%c0_158, %c0_159] : memref<8x128xbf16, #tpu.memory_space<vmem>>, vector<8x128xbf16>
    tpu.vector_store %arg13[%c0_158, %c0_159], %361 {strides = array<i32>} : memref<8x128xbf16, #tpu.memory_space<vmem>>, vector<8x128xbf16>,
    %c0_160 = arith.constant 0 : index
    %c0_161 = arith.constant 0 : index
    %363 = vector.load %arg14[%c0_160, %c0_161] : memref<8x128xf32, #tpu.memory_space<vmem>>, vector<8x128xf32>
    %364 = vector.shape_cast %323 : vector<8x1xi1> to vector<8x1xi1>
    %365 = vector.broadcast %364 : vector<8x1xi1> to vector<8x128xi1>
    %366 = arith.select %365, %354, %363 : vector<8x128xi1>, vector<8x128xf32>
    %c0_162 = arith.constant 0 : index
    %c0_163 = arith.constant 0 : index
    %367 = vector.load %arg14[%c0_162, %c0_163] : memref<8x128xf32, #tpu.memory_space<vmem>>, vector<8x128xf32>
    tpu.vector_store %arg14[%c0_162, %c0_163], %366 {strides = array<i32>} : memref<8x128xf32, #tpu.memory_space<vmem>>, vector<8x128xf32>,
    %c1_i32_164 = arith.constant 1 : i32
    %368 = arith.addi %272, %c1_i32_164 : i32
    %369 = vector.broadcast %368 : i32 to vector<8x1xi32>
    %370 = arith.cmpi eq, %1, %369 : vector<8x1xi32>
    %c0_165 = arith.constant 0 : index
    %c0_166 = arith.constant 0 : index
    %371 = vector.load %arg17[%c0_165, %c0_166] : memref<8x256xf32, #tpu.memory_space<vmem>>, vector<8x128xf32>
    %372 = vector.shape_cast %370 : vector<8x1xi1> to vector<8x1xi1>
    %373 = vector.broadcast %372 : vector<8x1xi1> to vector<8x128xi1>
    %374 = arith.select %373, %311, %371 : vector<8x128xi1>, vector<8x128xf32>
    %c0_167 = arith.constant 0 : index
    %c0_168 = arith.constant 0 : index
    %375 = vector.load %arg17[%c0_167, %c0_168] : memref<8x256xf32, #tpu.memory_space<vmem>>, vector<8x128xf32>
    tpu.vector_store %arg17[%c0_167, %c0_168], %374 {strides = array<i32>} : memref<8x256xf32, #tpu.memory_space<vmem>>, vector<8x128xf32>,
    %c1_i32_169 = arith.constant 1 : i32
    %376 = arith.addi %321, %c1_i32_169 : i32
    %377 = vector.broadcast %376 : i32 to vector<8x1xi32>
    %378 = arith.cmpi eq, %1, %377 : vector<8x1xi32>
    %c0_170 = arith.constant 0 : index
    %c128_171 = arith.constant 128 : index
    %379 = vector.load %arg17[%c0_170, %c128_171] : memref<8x256xf32, #tpu.memory_space<vmem>>, vector<8x128xf32>
    %380 = vector.shape_cast %378 : vector<8x1xi1> to vector<8x1xi1>
    %381 = vector.broadcast %380 : vector<8x1xi1> to vector<8x128xi1>
    %382 = arith.select %381, %360, %379 : vector<8x128xi1>, vector<8x128xf32>
    %c0_172 = arith.constant 0 : index
    %c128_173 = arith.constant 128 : index
    %383 = vector.load %arg17[%c0_172, %c128_173] : memref<8x256xf32, #tpu.memory_space<vmem>>, vector<8x128xf32>
    tpu.vector_store %arg17[%c0_172, %c128_173], %382 {strides = array<i32>} : memref<8x256xf32, #tpu.memory_space<vmem>>, vector<8x128xf32>,
    %c3_i32_174 = arith.constant 3 : i32
    %c4_i32_175 = arith.constant 4 : i32
    %384 = arith.muli %arg0, %c4_i32_175 : i32
    %385 = arith.addi %384, %c3_i32_174 : i32
    %386 = vector.broadcast %385 : i32 to vector<8x1xi32>
    %387 = arith.cmpi sgt, %1, %386 : vector<8x1xi32>
    %c0_176 = arith.constant 0 : index
    %c0_177 = arith.constant 0 : index
    %388 = vector.load %arg11[%c0_176, %c0_177] : memref<8x128xbf16, #tpu.memory_space<vmem>>, vector<8x128xbf16>
    %389 = arith.index_cast %c3_i32_174 : i32 to index
    %c0_178 = arith.constant 0 : index
    %c0_179 = arith.constant 0 : index
    %390 = vector.load %arg15[%389, %c0_178, %c0_179] : memref<4x8x512xbf16, #tpu.memory_space<vmem>>, vector<1x8x512xbf16>
    %391 = vector.shape_cast %390 : vector<1x8x512xbf16> to vector<8x512xbf16>
    %392 = arith.extf %391 : vector<8x512xbf16> to vector<8x512xf32>
    %cst_180 = arith.constant dense<0.000000e+00> : vector<8x512xf32>
    %393 = tpu.matmul %388, %42, %cst_180 {dimension_numbers = #tpu.dot_dimension_numbers<[1], [0], [0], [1], [0, 0, 1, 1], [], []>} : vector<8x128xbf16>, vector<128x512xbf16>, vector<8x512xf32> -> vector<8x512xf32>
    %394 = arith.addf %392, %393 : vector<8x512xf32>
    %395 = vector.extract_strided_slice %394 {offsets = [0, 0], sizes = [8, 128], strides = [1, 1]} : vector<8x512xf32> to vector<8x128xf32>
    %396 = arith.negf %395 : vector<8x128xf32>
    %397 = math.exp %396 : vector<8x128xf32>
    %cst_181 = arith.constant 1.000000e+00 : f32
    %398 = vector.broadcast %cst_181 : f32 to vector<8x128xf32>
    %399 = arith.addf %398, %397 : vector<8x128xf32>
    %400 = arith.divf %398, %399 : vector<8x128xf32>
    %401 = vector.extract_strided_slice %394 {offsets = [0, 128], sizes = [8, 128], strides = [1, 1]} : vector<8x512xf32> to vector<8x128xf32>
    %402 = arith.negf %401 : vector<8x128xf32>
    %403 = math.exp %402 : vector<8x128xf32>
    %cst_182 = arith.constant 1.000000e+00 : f32
    %404 = vector.broadcast %cst_182 : f32 to vector<8x128xf32>
    %405 = arith.addf %404, %403 : vector<8x128xf32>
    %406 = arith.divf %404, %405 : vector<8x128xf32>
    %407 = vector.extract_strided_slice %394 {offsets = [0, 256], sizes = [8, 128], strides = [1, 1]} : vector<8x512xf32> to vector<8x128xf32>
    %408 = math.tanh %407 : vector<8x128xf32>
    %409 = vector.extract_strided_slice %394 {offsets = [0, 384], sizes = [8, 128], strides = [1, 1]} : vector<8x512xf32> to vector<8x128xf32>
    %410 = arith.negf %409 : vector<8x128xf32>
    %411 = math.exp %410 : vector<8x128xf32>
    %cst_183 = arith.constant 1.000000e+00 : f32
    %412 = vector.broadcast %cst_183 : f32 to vector<8x128xf32>
    %413 = arith.addf %412, %411 : vector<8x128xf32>
    %414 = arith.divf %412, %413 : vector<8x128xf32>
    %c0_184 = arith.constant 0 : index
    %c0_185 = arith.constant 0 : index
    %415 = vector.load %arg12[%c0_184, %c0_185] : memref<8x128xf32, #tpu.memory_space<vmem>>, vector<8x128xf32>
    %416 = arith.mulf %406, %415 : vector<8x128xf32>
    %417 = arith.mulf %400, %408 : vector<8x128xf32>
    %418 = arith.addf %416, %417 : vector<8x128xf32>
    %419 = math.tanh %418 : vector<8x128xf32>
    %420 = arith.mulf %414, %419 : vector<8x128xf32>
    %421 = arith.extf %388 : vector<8x128xbf16> to vector<8x128xf32>
    %422 = vector.shape_cast %387 : vector<8x1xi1> to vector<8x1xi1>
    %423 = vector.broadcast %422 : vector<8x1xi1> to vector<8x128xi1>
    %424 = arith.select %423, %420, %421 : vector<8x128xi1>, vector<8x128xf32>
    %425 = arith.truncf %424 : vector<8x128xf32> to vector<8x128xbf16>
    %c0_186 = arith.constant 0 : index
    %c0_187 = arith.constant 0 : index
    %426 = vector.load %arg11[%c0_186, %c0_187] : memref<8x128xbf16, #tpu.memory_space<vmem>>, vector<8x128xbf16>
    tpu.vector_store %arg11[%c0_186, %c0_187], %425 {strides = array<i32>} : memref<8x128xbf16, #tpu.memory_space<vmem>>, vector<8x128xbf16>,
    %c0_188 = arith.constant 0 : index
    %c0_189 = arith.constant 0 : index
    %427 = vector.load %arg12[%c0_188, %c0_189] : memref<8x128xf32, #tpu.memory_space<vmem>>, vector<8x128xf32>
    %428 = vector.shape_cast %387 : vector<8x1xi1> to vector<8x1xi1>
    %429 = vector.broadcast %428 : vector<8x1xi1> to vector<8x128xi1>
    %430 = arith.select %429, %418, %427 : vector<8x128xi1>, vector<8x128xf32>
    %c0_190 = arith.constant 0 : index
    %c0_191 = arith.constant 0 : index
    %431 = vector.load %arg12[%c0_190, %c0_191] : memref<8x128xf32, #tpu.memory_space<vmem>>, vector<8x128xf32>
    tpu.vector_store %arg12[%c0_190, %c0_191], %430 {strides = array<i32>} : memref<8x128xf32, #tpu.memory_space<vmem>>, vector<8x128xf32>,
    %c3_i32_192 = arith.constant 3 : i32
    %432 = arith.subi %c3_i32_192, %c3_i32_174 : i32
    %c4_i32_193 = arith.constant 4 : i32
    %433 = arith.muli %0, %c4_i32_193 : i32
    %434 = arith.addi %433, %432 : i32
    %435 = vector.broadcast %434 : i32 to vector<8x1xi32>
    %436 = arith.cmpi sgt, %1, %435 : vector<8x1xi32>
    %c0_194 = arith.constant 0 : index
    %c0_195 = arith.constant 0 : index
    %437 = vector.load %arg13[%c0_194, %c0_195] : memref<8x128xbf16, #tpu.memory_space<vmem>>, vector<8x128xbf16>
    %438 = arith.index_cast %432 : i32 to index
    %c0_196 = arith.constant 0 : index
    %c0_197 = arith.constant 0 : index
    %439 = vector.load %arg16[%438, %c0_196, %c0_197] : memref<4x8x512xbf16, #tpu.memory_space<vmem>>, vector<1x8x512xbf16>
    %440 = vector.shape_cast %439 : vector<1x8x512xbf16> to vector<8x512xbf16>
    %441 = arith.extf %440 : vector<8x512xbf16> to vector<8x512xf32>
    %cst_198 = arith.constant dense<0.000000e+00> : vector<8x512xf32>
    %442 = tpu.matmul %437, %44, %cst_198 {dimension_numbers = #tpu.dot_dimension_numbers<[1], [0], [0], [1], [0, 0, 1, 1], [], []>} : vector<8x128xbf16>, vector<128x512xbf16>, vector<8x512xf32> -> vector<8x512xf32>
    %443 = arith.addf %441, %442 : vector<8x512xf32>
    %444 = vector.extract_strided_slice %443 {offsets = [0, 0], sizes = [8, 128], strides = [1, 1]} : vector<8x512xf32> to vector<8x128xf32>
    %445 = arith.negf %444 : vector<8x128xf32>
    %446 = math.exp %445 : vector<8x128xf32>
    %cst_199 = arith.constant 1.000000e+00 : f32
    %447 = vector.broadcast %cst_199 : f32 to vector<8x128xf32>
    %448 = arith.addf %447, %446 : vector<8x128xf32>
    %449 = arith.divf %447, %448 : vector<8x128xf32>
    %450 = vector.extract_strided_slice %443 {offsets = [0, 128], sizes = [8, 128], strides = [1, 1]} : vector<8x512xf32> to vector<8x128xf32>
    %451 = arith.negf %450 : vector<8x128xf32>
    %452 = math.exp %451 : vector<8x128xf32>
    %cst_200 = arith.constant 1.000000e+00 : f32
    %453 = vector.broadcast %cst_200 : f32 to vector<8x128xf32>
    %454 = arith.addf %453, %452 : vector<8x128xf32>
    %455 = arith.divf %453, %454 : vector<8x128xf32>
    %456 = vector.extract_strided_slice %443 {offsets = [0, 256], sizes = [8, 128], strides = [1, 1]} : vector<8x512xf32> to vector<8x128xf32>
    %457 = math.tanh %456 : vector<8x128xf32>
    %458 = vector.extract_strided_slice %443 {offsets = [0, 384], sizes = [8, 128], strides = [1, 1]} : vector<8x512xf32> to vector<8x128xf32>
    %459 = arith.negf %458 : vector<8x128xf32>
    %460 = math.exp %459 : vector<8x128xf32>
    %cst_201 = arith.constant 1.000000e+00 : f32
    %461 = vector.broadcast %cst_201 : f32 to vector<8x128xf32>
    %462 = arith.addf %461, %460 : vector<8x128xf32>
    %463 = arith.divf %461, %462 : vector<8x128xf32>
    %c0_202 = arith.constant 0 : index
    %c0_203 = arith.constant 0 : index
    %464 = vector.load %arg14[%c0_202, %c0_203] : memref<8x128xf32, #tpu.memory_space<vmem>>, vector<8x128xf32>
    %465 = arith.mulf %455, %464 : vector<8x128xf32>
    %466 = arith.mulf %449, %457 : vector<8x128xf32>
    %467 = arith.addf %465, %466 : vector<8x128xf32>
    %468 = math.tanh %467 : vector<8x128xf32>
    %469 = arith.mulf %463, %468 : vector<8x128xf32>
    %470 = arith.extf %437 : vector<8x128xbf16> to vector<8x128xf32>
    %471 = vector.shape_cast %436 : vector<8x1xi1> to vector<8x1xi1>
    %472 = vector.broadcast %471 : vector<8x1xi1> to vector<8x128xi1>
    %473 = arith.select %472, %469, %470 : vector<8x128xi1>, vector<8x128xf32>
    %474 = arith.truncf %473 : vector<8x128xf32> to vector<8x128xbf16>
    %c0_204 = arith.constant 0 : index
    %c0_205 = arith.constant 0 : index
    %475 = vector.load %arg13[%c0_204, %c0_205] : memref<8x128xbf16, #tpu.memory_space<vmem>>, vector<8x128xbf16>
    tpu.vector_store %arg13[%c0_204, %c0_205], %474 {strides = array<i32>} : memref<8x128xbf16, #tpu.memory_space<vmem>>, vector<8x128xbf16>,
    %c0_206 = arith.constant 0 : index
    %c0_207 = arith.constant 0 : index
    %476 = vector.load %arg14[%c0_206, %c0_207] : memref<8x128xf32, #tpu.memory_space<vmem>>, vector<8x128xf32>
    %477 = vector.shape_cast %436 : vector<8x1xi1> to vector<8x1xi1>
    %478 = vector.broadcast %477 : vector<8x1xi1> to vector<8x128xi1>
    %479 = arith.select %478, %467, %476 : vector<8x128xi1>, vector<8x128xf32>
    %c0_208 = arith.constant 0 : index
    %c0_209 = arith.constant 0 : index
    %480 = vector.load %arg14[%c0_208, %c0_209] : memref<8x128xf32, #tpu.memory_space<vmem>>, vector<8x128xf32>
    tpu.vector_store %arg14[%c0_208, %c0_209], %479 {strides = array<i32>} : memref<8x128xf32, #tpu.memory_space<vmem>>, vector<8x128xf32>,
    %c1_i32_210 = arith.constant 1 : i32
    %481 = arith.addi %385, %c1_i32_210 : i32
    %482 = vector.broadcast %481 : i32 to vector<8x1xi32>
    %483 = arith.cmpi eq, %1, %482 : vector<8x1xi32>
    %c0_211 = arith.constant 0 : index
    %c0_212 = arith.constant 0 : index
    %484 = vector.load %arg17[%c0_211, %c0_212] : memref<8x256xf32, #tpu.memory_space<vmem>>, vector<8x128xf32>
    %485 = vector.shape_cast %483 : vector<8x1xi1> to vector<8x1xi1>
    %486 = vector.broadcast %485 : vector<8x1xi1> to vector<8x128xi1>
    %487 = arith.select %486, %424, %484 : vector<8x128xi1>, vector<8x128xf32>
    %c0_213 = arith.constant 0 : index
    %c0_214 = arith.constant 0 : index
    %488 = vector.load %arg17[%c0_213, %c0_214] : memref<8x256xf32, #tpu.memory_space<vmem>>, vector<8x128xf32>
    tpu.vector_store %arg17[%c0_213, %c0_214], %487 {strides = array<i32>} : memref<8x256xf32, #tpu.memory_space<vmem>>, vector<8x128xf32>,
    %c1_i32_215 = arith.constant 1 : i32
    %489 = arith.addi %434, %c1_i32_215 : i32
    %490 = vector.broadcast %489 : i32 to vector<8x1xi32>
    %491 = arith.cmpi eq, %1, %490 : vector<8x1xi32>
    %c0_216 = arith.constant 0 : index
    %c128_217 = arith.constant 128 : index
    %492 = vector.load %arg17[%c0_216, %c128_217] : memref<8x256xf32, #tpu.memory_space<vmem>>, vector<8x128xf32>
    %493 = vector.shape_cast %491 : vector<8x1xi1> to vector<8x1xi1>
    %494 = vector.broadcast %493 : vector<8x1xi1> to vector<8x128xi1>
    %495 = arith.select %494, %473, %492 : vector<8x128xi1>, vector<8x128xf32>
    %c0_218 = arith.constant 0 : index
    %c128_219 = arith.constant 128 : index
    %496 = vector.load %arg17[%c0_218, %c128_219] : memref<8x256xf32, #tpu.memory_space<vmem>>, vector<8x128xf32>
    tpu.vector_store %arg17[%c0_218, %c128_219], %495 {strides = array<i32>} : memref<8x256xf32, #tpu.memory_space<vmem>>, vector<8x128xf32>,
    %c4_i32_220 = arith.constant 4 : i32
    %c1_i32_221 = arith.constant 1 : i32
    %497 = arith.cmpi eq, %arg0, %c1_i32_221 : i32
    %498 = arith.extui %497 : i1 to i32
    %c0_i32_222 = arith.constant 0 : i32
    %499 = arith.cmpi ne, %498, %c0_i32_222 : i32
    scf.if %499 {
      %c0_223 = arith.constant 0 : index
      %c0_224 = arith.constant 0 : index
      %500 = vector.load %arg17[%c0_223, %c0_224] : memref<8x256xf32, #tpu.memory_space<vmem>>, vector<8x256xf32>
      %c0_225 = arith.constant 0 : index
      %c0_226 = arith.constant 0 : index
      %501 = vector.load %arg9[%c0_225, %c0_226] : memref<1x256xf32, #tpu.memory_space<vmem>>, vector<1x256xf32>
      %c0_i32_227 = arith.constant 0 : i32
      %502 = vector.broadcast %c0_i32_227 : i32 to vector<8x1xi32>
      %503 = arith.cmpi sgt, %1, %502 : vector<8x1xi32>
      %504 = vector.broadcast %501 : vector<1x256xf32> to vector<8x256xf32>
      %505 = arith.mulf %500, %504 : vector<8x256xf32>
      %cst_228 = arith.constant dense<0.000000e+00> : vector<8xf32>
      %506 = vector.multi_reduction <add>, %505, %cst_228 [1] : vector<8x256xf32> to vector<8xf32>
      %507 = vector.shape_cast %506 : vector<8xf32> to vector<8x1xf32>
      %cst_229 = arith.constant 0.000000e+00 : f32
      %508 = vector.broadcast %cst_229 : f32 to vector<8x1xf32>
      %509 = arith.maximumf %507, %508 : vector<8x1xf32>
      %cst_230 = arith.constant -1.000000e+30 : f32
      %510 = vector.broadcast %cst_230 : f32 to vector<8x1xf32>
      %511 = arith.select %503, %509, %510 : vector<8x1xi1>, vector<8x1xf32>
      %cst_231 = arith.constant dense<0xFF800000> : vector<1xf32>
      %512 = vector.multi_reduction <maximumf>, %511, %cst_231 [0] : vector<8x1xf32> to vector<1xf32>
      %513 = vector.shape_cast %512 : vector<1xf32> to vector<1x1xf32>
      %514 = vector.broadcast %513 : vector<1x1xf32> to vector<8x1xf32>
      %515 = arith.subf %511, %514 : vector<8x1xf32>
      %516 = math.exp %515 : vector<8x1xf32>
      %cst_232 = arith.constant 0.000000e+00 : f32
      %517 = vector.broadcast %cst_232 : f32 to vector<8x1xf32>
      %518 = arith.select %503, %516, %517 : vector<8x1xi1>, vector<8x1xf32>
      %cst_233 = arith.constant dense<0.000000e+00> : vector<1xf32>
      %519 = vector.multi_reduction <add>, %518, %cst_233 [0] : vector<8x1xf32> to vector<1xf32>
      %520 = vector.shape_cast %519 : vector<1xf32> to vector<1x1xf32>
      %521 = vector.broadcast %520 : vector<1x1xf32> to vector<8x1xf32>
      %522 = arith.divf %518, %521 : vector<8x1xf32>
      %cst_234 = arith.constant dense<0.000000e+00> : vector<1xf32>
      %523 = vector.multi_reduction <add>, %522, %cst_234 [0] : vector<8x1xf32> to vector<1xf32>
      %524 = vector.shape_cast %523 : vector<1xf32> to vector<1x1xf32>
      %525 = vector.broadcast %524 : vector<1x1xf32> to vector<8x1xf32>
      %526 = arith.divf %522, %525 : vector<8x1xf32>
      %527 = vector.broadcast %526 : vector<8x1xf32> to vector<8x256xf32>
      %528 = arith.mulf %500, %527 : vector<8x256xf32>
      %cst_235 = arith.constant dense<0.000000e+00> : vector<8xf32>
      %529 = vector.multi_reduction <add>, %528, %cst_235 [1] : vector<8x256xf32> to vector<8xf32>
      %530 = vector.shape_cast %529 : vector<8xf32> to vector<8x1xf32>
      %531 = arith.negf %530 : vector<8x1xf32>
      %532 = math.exp %531 : vector<8x1xf32>
      %cst_236 = arith.constant 1.000000e+00 : f32
      %533 = vector.broadcast %cst_236 : f32 to vector<8x1xf32>
      %534 = arith.addf %533, %532 : vector<8x1xf32>
      %535 = arith.divf %533, %534 : vector<8x1xf32>
      %c0_237 = arith.constant 0 : index
      %c0_238 = arith.constant 0 : index
      %536 = vector.load %arg10[%c0_237, %c0_238] : memref<8x1xf32, #tpu.memory_space<vmem>>, vector<8x1xf32>
      tpu.vector_store %arg10[%c0_237, %c0_238], %535 {strides = array<i32>} : memref<8x1xf32, #tpu.memory_space<vmem>>, vector<8x1xf32>,
    } else {
    }
    return
  }
  func.func @transform_0(%arg0: i32) -> (i32, i32) {
    %c0_i32 = arith.constant 0 : i32
    %c0_i32_0 = arith.constant 0 : i32
    %c0_i32_1 = arith.constant 0 : i32
    return %c0_i32, %c0_i32_0 : i32, i32
  }
  func.func @transform_1(%arg0: i32) -> (i32, i32, i32) {
    %c0_i32 = arith.constant 0 : i32
    %c0_i32_0 = arith.constant 0 : i32
    %c0_i32_1 = arith.constant 0 : i32
    return %arg0, %c0_i32, %c0_i32_0 : i32, i32, i32
  }
  func.func @transform_2(%arg0: i32) -> (i32, i32, i32) {
    %c0_i32 = arith.constant 0 : i32
    %c0_i32_0 = arith.constant 0 : i32
    %c0_i32_1 = arith.constant 0 : i32
    return %arg0, %c0_i32, %c0_i32_0 : i32, i32, i32
  }
  func.func @transform_3(%arg0: i32) -> (i32, i32, i32) {
    %c1_i32 = arith.constant 1 : i32
    %0 = arith.subi %c1_i32, %arg0 : i32
    %c0_i32 = arith.constant 0 : i32
    %c0_i32_0 = arith.constant 0 : i32
    %c0_i32_1 = arith.constant 0 : i32
    return %0, %c0_i32, %c0_i32_0 : i32, i32, i32
  }
  func.func @transform_4(%arg0: i32) -> (i32, i32, i32) {
    %c1_i32 = arith.constant 1 : i32
    %0 = arith.subi %c1_i32, %arg0 : i32
    %c0_i32 = arith.constant 0 : i32
    %c0_i32_0 = arith.constant 0 : i32
    %c0_i32_1 = arith.constant 0 : i32
    return %0, %c0_i32, %c0_i32_0 : i32, i32, i32
  }
  func.func @transform_5(%arg0: i32) -> (i32, i32, i32) {
    %c0_i32 = arith.constant 0 : i32
    %c0_i32_0 = arith.constant 0 : i32
    %c0_i32_1 = arith.constant 0 : i32
    %c0_i32_2 = arith.constant 0 : i32
    return %c0_i32, %c0_i32_0, %c0_i32_1 : i32, i32, i32
  }
  func.func @transform_6(%arg0: i32) -> (i32, i32, i32) {
    %c0_i32 = arith.constant 0 : i32
    %c0_i32_0 = arith.constant 0 : i32
    %c0_i32_1 = arith.constant 0 : i32
    %c0_i32_2 = arith.constant 0 : i32
    return %c0_i32, %c0_i32_0, %c0_i32_1 : i32, i32, i32
  }
  func.func @transform_7(%arg0: i32) -> (i32, i32, i32) {
    %c0_i32 = arith.constant 0 : i32
    %c0_i32_0 = arith.constant 0 : i32
    %c0_i32_1 = arith.constant 0 : i32
    %c0_i32_2 = arith.constant 0 : i32
    return %c0_i32, %c0_i32_0, %c0_i32_1 : i32, i32, i32
  }
  func.func @transform_8(%arg0: i32) -> (i32, i32) {
    %c0_i32 = arith.constant 0 : i32
    %c0_i32_0 = arith.constant 0 : i32
    %c0_i32_1 = arith.constant 0 : i32
    return %c0_i32, %c0_i32_0 : i32, i32
  }
  func.func @transform_9(%arg0: i32) -> (i32, i32) {
    %c0_i32 = arith.constant 0 : i32
    %c0_i32_0 = arith.constant 0 : i32
    %c0_i32_1 = arith.constant 0 : i32
    return %c0_i32, %c0_i32_0 : i32, i32
  }
}

</mosaic_0001>

<llo_original>
// kernel: forward.2
$region0: #{forward.2}
  #allocation0 [shape = 'u32[]', space=smem, size = 0x4, offset = 0x4, fixed_abs, tag = 'smem constant byte address 0x4 - core index']
  #allocation1 [shape = 'u32[144,128]{1,0:T(1,128)}', space=vmem, size = 0x12000, scoped, tag = 'internal scratch']
  #allocation2 [shape = 'bf16[8,128]{1,0:T(8,128)(2,1)}', space=vmem, size = 0x800, scoped, tag = 'scratch operand']
  #allocation3 [shape = 'f32[8,128]{1,0:T(8,128)}', space=vmem, size = 0x1000, scoped, tag = 'scratch operand']
  #allocation4 [shape = 'bf16[8,128]{1,0:T(8,128)(2,1)}', space=vmem, size = 0x800, scoped, tag = 'scratch operand']
  #allocation5 [shape = 'f32[8,128]{1,0:T(8,128)}', space=vmem, size = 0x1000, scoped, tag = 'scratch operand']
  #allocation6 [shape = 'bf16[4,8,512]{2,1,0:T(8,128)(2,1)}', space=vmem, size = 0x8000, scoped, tag = 'scratch operand']
  #allocation7 [shape = 'bf16[4,8,512]{2,1,0:T(8,128)(2,1)}', space=vmem, size = 0x8000, scoped, tag = 'scratch operand']
  %s0 = inlined_call_operand.vmem [shape: s32[8,1], index: 0, kind: input, shape index: {}]
  %s1 = inlined_call_operand.vmem [shape: bf16[8,8,16], index: 1, kind: input, shape index: {}, may-alias: {1,2}]
  %s2 = inlined_call_operand.vmem [shape: bf16[8,8,16], index: 2, kind: input, shape index: {}, may-alias: {1,2}]
  %s3 = inlined_call_operand.vmem [shape: bf16[2,16,512], index: 3, kind: input, shape index: {}]
  %s4 = inlined_call_operand.vmem [shape: bf16[2,128,512], index: 4, kind: input, shape index: {}]
  %s5 = inlined_call_operand.vmem [shape: f32[2,1,512], index: 5, kind: input, shape index: {}]
  %s6 = inlined_call_operand.vmem [shape: bf16[8,8,32], index: 6, kind: output, shape index: {0}]
  %s7 = inlined_call_operand.vmem [shape: bf16[8,8,32], index: 7, kind: output, shape index: {1}]
  %8 = xla_tuple %s6, %s7
  %s9 = sld [smem:[#allocation0]]
  $region69: #{forward.2} parent=0
    _
  %s11 = ssub.s32 1, %s9
  %s12 = scalar_select 0, %s11, %s9
  loop: start=0, step=1, limit=4
  $region2: #{forward.2} parent=0 // loop_pre_header
    _
  $region3: #{forward.2} parent=0 // loop_header
    %s14 = sphi 0, %s18
    %p15 = scmp.ge.s32.totalorder %s14, 4
    %s22 = sphi 0, %s22
    %s24 = sphi 0, %s22
    %s25 = sphi 0, %s24
    %s39 = sphi 0, %s25
    %s45 = sphi 0, %s47
    %s48 = sphi 0, %s45
    %s49 = sphi 0, %s48
    %s65 = sphi 0, %s49
    %s73 = sphi 0, %s75
    %s76 = sphi 0, %s73
    %s77 = sphi 0, %s76
    %s93 = sphi 0, %s77
    %s97 = sphi 0, %s97
    %s99 = sphi 0, %s97
    %s100 = sphi 0, %s99
    %s114 = sphi 0, %s100
    %s118 = sphi 0, %s118
    %s120 = sphi 0, %s118
    %s121 = sphi 0, %s120
    %s135 = sphi 0, %s121
    %s139 = sphi 0, %s139
    %s141 = sphi 0, %s139
    %s142 = sphi 0, %s141
    %s156 = sphi 0, %s142
    %s162 = sphi 0, %s164
    %s165 = sphi 0, %s162
    %s166 = sphi 0, %s165
    %s182 = sphi 0, %s166
    %s190 = sphi 0, %s192
    %s193 = sphi 0, %s190
    %s194 = sphi 0, %s193
    %s210 = sphi 0, %s194
  $region4: #{forward.2} parent=0 // loop_header_branch
    %17 = sbr.rel (%p15) target = $region8
  $region5: #{forward.2} parent=0 // loop_body
    %s19 = ssub.s32 %s14, 1
    %s20 = ssub.s32 %s14, 2
    %s21 = sadd.s32 %s14, 1
    %s23 = sadd.s32 %s22, 1
    %p26 = scmp.eq.s32.totalorder %s14, 1
    %p27 = scmp.ne.s32.totalorder %s22, %s24
    %p28 = scmp.eq.s32.totalorder %s14, 0
    %p29 = por %p27, %p28
    %p30 = scmp.ne.s32.totalorder %s22, %s24
    %p31 = scmp.eq.s32.totalorder %s19, 1
    %p32 = por %p30, %p31
    %p33 = scmp.ne.s32.totalorder %s24, %s25
    %p34 = scmp.eq.s32.totalorder %s19, 0
    %p35 = por %p33, %p34
    %p36 = scmp.ne.s32.totalorder %s24, %s25
    %p37 = scmp.eq.s32.totalorder %s20, 1
    %p38 = por %p36, %p37
    %p40 = scmp.ne.s32.totalorder %s25, %s39
    %p41 = scmp.eq.s32.totalorder %s20, 0
    %p42 = por %p40, %p41
    %s43 = ssub.s32 %s14, %s21
    %p44 = scmp.eq.s32.totalorder %s43, 0
    %s46 = sadd.s32 %s45, 1
    %s47 = scalar_select %p44, %s45, %s46
    %p50 = pneg %p44
    %p51 = scmp.eq.s32.totalorder %s14, 1
    %p52 = por %p50, %p51
    %p53 = scmp.ne.s32.totalorder %s45, %s48
    %p54 = scmp.eq.s32.totalorder %s14, 0
    %p55 = por %p53, %p54
    %p56 = scmp.ne.s32.totalorder %s45, %s48
    %p57 = scmp.eq.s32.totalorder %s19, 1
    %p58 = por %p56, %p57
    %p59 = scmp.ne.s32.totalorder %s48, %s49
    %p60 = scmp.eq.s32.totalorder %s19, 0
    %p61 = por %p59, %p60
    %p62 = scmp.ne.s32.totalorder %s48, %s49
    %p63 = scmp.eq.s32.totalorder %s20, 1
    %p64 = por %p62, %p63
    %p66 = scmp.ne.s32.totalorder %s49, %s65
    %p67 = scmp.eq.s32.totalorder %s20, 0
    %p68 = por %p66, %p67
    %s69 = ssub.s32 1, %s14
    %s70 = ssub.s32 1, %s21
    %s71 = ssub.s32 %s69, %s70
    %p72 = scmp.eq.s32.totalorder %s71, 0
    %s74 = sadd.s32 %s73, 1
    %s75 = scalar_select %p72, %s73, %s74
    %p78 = pneg %p72
    %p79 = scmp.eq.s32.totalorder %s14, 1
    %p80 = por %p78, %p79
    %p81 = scmp.ne.s32.totalorder %s73, %s76
    %p82 = scmp.eq.s32.totalorder %s14, 0
    %p83 = por %p81, %p82
    %p84 = scmp.ne.s32.totalorder %s73, %s76
    %p85 = scmp.eq.s32.totalorder %s19, 1
    %p86 = por %p84, %p85
    %p87 = scmp.ne.s32.totalorder %s76, %s77
    %p88 = scmp.eq.s32.totalorder %s19, 0
    %p89 = por %p87, %p88
    %p90 = scmp.ne.s32.totalorder %s76, %s77
    %p91 = scmp.eq.s32.totalorder %s20, 1
    %p92 = por %p90, %p91
    %p94 = scmp.ne.s32.totalorder %s77, %s93
    %p95 = scmp.eq.s32.totalorder %s20, 0
    %p96 = por %p94, %p95
    %s98 = sadd.s32 %s97, 1
    %p101 = scmp.eq.s32.totalorder %s14, 1
    %p102 = scmp.ne.s32.totalorder %s97, %s99
    %p103 = scmp.eq.s32.totalorder %s14, 0
    %p104 = por %p102, %p103
    %p105 = scmp.ne.s32.totalorder %s97, %s99
    %p106 = scmp.eq.s32.totalorder %s19, 1
    %p107 = por %p105, %p106
    %p108 = scmp.ne.s32.totalorder %s99, %s100
    %p109 = scmp.eq.s32.totalorder %s19, 0
    %p110 = por %p108, %p109
    %p111 = scmp.ne.s32.totalorder %s99, %s100
    %p112 = scmp.eq.s32.totalorder %s20, 1
    %p113 = por %p111, %p112
    %p115 = scmp.ne.s32.totalorder %s100, %s114
    %p116 = scmp.eq.s32.totalorder %s20, 0
    %p117 = por %p115, %p116
    %s119 = sadd.s32 %s118, 1
    %p122 = scmp.eq.s32.totalorder %s14, 1
    %p123 = scmp.ne.s32.totalorder %s118, %s120
    %p124 = scmp.eq.s32.totalorder %s14, 0
    %p125 = por %p123, %p124
    %p126 = scmp.ne.s32.totalorder %s118, %s120
    %p127 = scmp.eq.s32.totalorder %s19, 1
    %p128 = por %p126, %p127
    %p129 = scmp.ne.s32.totalorder %s120, %s121
    %p130 = scmp.eq.s32.totalorder %s19, 0
    %p131 = por %p129, %p130
    %p132 = scmp.ne.s32.totalorder %s120, %s121
    %p133 = scmp.eq.s32.totalorder %s20, 1
    %p134 = por %p132, %p133
    %p136 = scmp.ne.s32.totalorder %s121, %s135
    %p137 = scmp.eq.s32.totalorder %s20, 0
    %p138 = por %p136, %p137
    %s140 = sadd.s32 %s139, 1
    %p143 = scmp.eq.s32.totalorder %s14, 1
    %p144 = scmp.ne.s32.totalorder %s139, %s141
    %p145 = scmp.eq.s32.totalorder %s14, 0
    %p146 = por %p144, %p145
    %p147 = scmp.ne.s32.totalorder %s139, %s141
    %p148 = scmp.eq.s32.totalorder %s19, 1
    %p149 = por %p147, %p148
    %p150 = scmp.ne.s32.totalorder %s141, %s142
    %p151 = scmp.eq.s32.totalorder %s19, 0
    %p152 = por %p150, %p151
    %p153 = scmp.ne.s32.totalorder %s141, %s142
    %p154 = scmp.eq.s32.totalorder %s20, 1
    %p155 = por %p153, %p154
    %p157 = scmp.ne.s32.totalorder %s142, %s156
    %p158 = scmp.eq.s32.totalorder %s20, 0
    %p159 = por %p157, %p158
    %s160 = ssub.s32 %s14, %s21
    %p161 = scmp.eq.s32.totalorder %s160, 0
    %s163 = sadd.s32 %s162, 1
    %s164 = scalar_select %p161, %s162, %s163
    %p167 = pneg %p161
    %p168 = scmp.eq.s32.totalorder %s14, 1
    %p169 = por %p167, %p168
    %p170 = scmp.ne.s32.totalorder %s162, %s165
    %p171 = scmp.eq.s32.totalorder %s14, 0
    %p172 = por %p170, %p171
    %p173 = scmp.ne.s32.totalorder %s162, %s165
    %p174 = scmp.eq.s32.totalorder %s19, 1
    %p175 = por %p173, %p174
    %p176 = scmp.ne.s32.totalorder %s165, %s166
    %p177 = scmp.eq.s32.totalorder %s19, 0
    %p178 = por %p176, %p177
    %p179 = scmp.ne.s32.totalorder %s165, %s166
    %p180 = scmp.eq.s32.totalorder %s20, 1
    %p181 = por %p179, %p180
    %p183 = scmp.ne.s32.totalorder %s166, %s182
    %p184 = scmp.eq.s32.totalorder %s20, 0
    %p185 = por %p183, %p184
    %s186 = ssub.s32 1, %s14
    %s187 = ssub.s32 1, %s21
    %s188 = ssub.s32 %s186, %s187
    %p189 = scmp.eq.s32.totalorder %s188, 0
    %s191 = sadd.s32 %s190, 1
    %s192 = scalar_select %p189, %s190, %s191
    %p195 = pneg %p189
    %p196 = scmp.eq.s32.totalorder %s14, 1
    %p197 = por %p195, %p196
    %p198 = scmp.ne.s32.totalorder %s190, %s193
    %p199 = scmp.eq.s32.totalorder %s14, 0
    %p200 = por %p198, %p199
    %p201 = scmp.ne.s32.totalorder %s190, %s193
    %p202 = scmp.eq.s32.totalorder %s19, 1
    %p203 = por %p201, %p202
    %p204 = scmp.ne.s32.totalorder %s193, %s194
    %p205 = scmp.eq.s32.totalorder %s19, 0
    %p206 = por %p204, %p205
    %p207 = scmp.ne.s32.totalorder %s193, %s194
    %p208 = scmp.eq.s32.totalorder %s20, 1
    %p209 = por %p207, %p208
    %p211 = scmp.ne.s32.totalorder %s194, %s210
    %p212 = scmp.eq.s32.totalorder %s20, 0
    %p213 = por %p211, %p212
    %p214 = scmp.le.s32.totalorder 1, %s14
    %p215 = scmp.lt.s32.totalorder %s14, 3
    %p216 = pnand %p214, %p215
    %p217 = pneg %p216
    // Predicated region
    $region9: #{forward.2} parent=5 // pred_check
      _
    $region10: #{forward.2} parent=5 // pred_check_branch
      %219 = sbr.rel (%p216) target = $region12
    $region11: #{forward.2} parent=5 // pred_region
      %s220 = ssub.s32 %s14, 1
      // Predicated region
      $region13: #{forward.2} parent=11 // pred_check
        %p221 = pneg %p35
      $region14: #{forward.2} parent=11 // pred_check_branch
        %223 = sbr.rel (%p221) target = $region16
      $region15: #{forward.2} parent=11 // pred_region
        _
      $region16: #{forward.2} parent=11 // pred_fallthru
        _
      // Predicated region
      $region17: #{forward.2} parent=11 // pred_check
        %p224 = pneg %p110
      $region18: #{forward.2} parent=11 // pred_check_branch
        %226 = sbr.rel (%p224) target = $region20
      $region19: #{forward.2} parent=11 // pred_region
        _
      $region20: #{forward.2} parent=11 // pred_fallthru
        _
      // Predicated region
      $region21: #{forward.2} parent=11 // pred_check
        %p227 = pneg %p131
      $region22: #{forward.2} parent=11 // pred_check_branch
        %229 = sbr.rel (%p227) target = $region24
      $region23: #{forward.2} parent=11 // pred_region
        _
      $region24: #{forward.2} parent=11 // pred_fallthru
        _
      // Predicated region
      $region25: #{forward.2} parent=11 // pred_check
        %p230 = pneg %p152
      $region26: #{forward.2} parent=11 // pred_check_branch
        %232 = sbr.rel (%p230) target = $region28
      $region27: #{forward.2} parent=11 // pred_region
        _
      $region28: #{forward.2} parent=11 // pred_fallthru
        _
    $region12: #{forward.2} parent=5 // pred_fallthru
      _
    %p233 = scmp.lt.s32.totalorder %s14, 2
    // Predicated region
    $region29: #{forward.2} parent=5 // pred_check
      %p234 = pneg %p233
    $region30: #{forward.2} parent=5 // pred_check_branch
      %236 = sbr.rel (%p234) target = $region32
    $region31: #{forward.2} parent=5 // pred_region
      // Predicated region
      $region33: #{forward.2} parent=31 // pred_check
        %p237 = pneg %p55
      $region34: #{forward.2} parent=31 // pred_check_branch
        %239 = sbr.rel (%p237) target = $region36
      $region35: #{forward.2} parent=31 // pred_region
        %s240 = smul.u32 4, %s14
        %p241 = scmp.lt.s32.totalorder %s240, 7
        %s242 = scalar_select %p241, %s240, 7
        %s243 = smul.addr %s242, 4
        %s244 = scalar_lea.vmem %s1, %s243
        %s245 = smul.u32 4, %s14
      $region36: #{forward.2} parent=31 // pred_fallthru
        _
      // Predicated region
      $region37: #{forward.2} parent=31 // pred_check
        %p246 = pneg %p83
      $region38: #{forward.2} parent=31 // pred_check_branch
        %248 = sbr.rel (%p246) target = $region40
      $region39: #{forward.2} parent=31 // pred_region
        %s249 = ssub.s32 1, %s14
        %s250 = smul.u32 4, %s249
        %p251 = scmp.lt.s32.totalorder %s250, 7
        %s252 = scalar_select %p251, %s250, 7
        %s253 = smul.addr %s252, 4
        %s254 = scalar_lea.vmem %s2, %s253
        %s255 = ssub.s32 1, %s14
        %s256 = smul.u32 4, %s255
      $region40: #{forward.2} parent=31 // pred_fallthru
        _
    $region32: #{forward.2} parent=5 // pred_fallthru
      _
    %p257 = scmp.le.s32.totalorder 1, %s14
    %p258 = scmp.lt.s32.totalorder %s14, 3
    %p259 = pnand %p257, %p258
    %p260 = pneg %p259
    // Predicated region
    $region41: #{forward.2} parent=5 // pred_check
      _
    $region42: #{forward.2} parent=5 // pred_check_branch
      %262 = sbr.rel (%p259) target = $region44
    $region43: #{forward.2} parent=5 // pred_region
      %s263 = ssub.s32 %s14, 1
      %p264 = pneg %p35
      %p265 = pneg %p32
      %s266 = smul.u32 4, %s19
      %p267 = scmp.lt.s32.totalorder %s266, 7
      %s268 = scalar_select %p267, %s266, 7
      %s269 = smul.addr %s268, 4
      %s270 = scalar_lea.vmem %s1, %s269
      %p271 = pneg %p61
      %p272 = pneg %p58
      %s273 = ssub.s32 1, %s19
      %s274 = smul.u32 4, %s273
      %p275 = scmp.lt.s32.totalorder %s274, 7
      %s276 = scalar_select %p275, %s274, 7
      %s277 = smul.addr %s276, 4
      %s278 = scalar_lea.vmem %s2, %s277
      %p279 = pneg %p89
      %p280 = pneg %p86
      %p281 = pneg %p110
      %p282 = pneg %p107
      %p283 = pneg %p131
      %p284 = pneg %p128
      %p285 = pneg %p152
      %p286 = pneg %p149
      %p287 = pneg %p178
      %p288 = pneg %p175
      %s289 = smul.u32 4, %s19
      %p290 = scmp.lt.s32.totalorder %s289, 7
      %s291 = scalar_select %p290, %s289, 7
      %s292 = smul.addr %s291, 4
      %s293 = scalar_lea.vmem %s6, %s292
      %p294 = pneg %p206
      %p295 = pneg %p203
      %s296 = ssub.s32 1, %s19
      %s297 = smul.u32 4, %s296
      %p298 = scmp.lt.s32.totalorder %s297, 7
      %s299 = scalar_select %p298, %s297, 7
      %s300 = smul.addr %s299, 4
      %s301 = scalar_lea.vmem %s7, %s300
      %s302 = smul.u32 4, %s19
      %p303 = scmp.lt.s32.totalorder %s302, 7
      %s304 = scalar_select %p303, %s302, 7
      %s305 = smul.addr %s304, 4
      %s306 = scalar_lea.vmem %s1, %s305
      %s307 = smul.u32 4, %s19
      %s308 = ssub.s32 1, %s19
      %s309 = smul.u32 4, %s308
      %p310 = scmp.lt.s32.totalorder %s309, 7
      %s311 = scalar_select %p310, %s309, 7
      %s312 = smul.addr %s311, 4
      %s313 = scalar_lea.vmem %s2, %s312
      %s314 = ssub.s32 1, %s19
      %s315 = smul.u32 4, %s314
      %s316 = smul.u32 4, %s19
      %p317 = scmp.lt.s32.totalorder %s316, 7
      %s318 = scalar_select %p317, %s316, 7
      %s319 = smul.addr %s318, 4
      %s320 = scalar_lea.vmem %s6, %s319
      %s321 = smul.u32 4, %s19
      %s322 = ssub.s32 1, %s19
      %s323 = smul.u32 4, %s322
      %p324 = scmp.lt.s32.totalorder %s323, 7
      %s325 = scalar_select %p324, %s323, 7
      %s326 = smul.addr %s325, 4
      %s327 = scalar_lea.vmem %s7, %s326
      %s328 = ssub.s32 1, %s19
      %s329 = smul.u32 4, %s328
      %s331 = ssub.s32 1, %s19
      %v332 = vld [vmem:[%s0] sm:$0xff]
      %p333 = scmp.eq.s32.totalorder %s19, 0
      // Predicated region
      $region45: #{forward.2} parent=43 // pred_check
        %p334 = pneg %p333
      $region46: #{forward.2} parent=43 // pred_check_branch
        %336 = sbr.rel (%p334) target = $region48
      $region47: #{forward.2} parent=43 // pred_region
        %337 = vst [vmem:[#allocation2] sm:$0xf] 0
        %338 = vst [vmem:[#allocation3] sm:$0xff] 0.0
        %339 = vst [vmem:[#allocation4] sm:$0xf] 0
        %340 = vst [vmem:[#allocation5] sm:$0xff] 0.0
      $region48: #{forward.2} parent=43 // pred_fallthru
        _
      %v341 = vld [vmem:[%s3] sm:$0xff]
      %v342 = vld [vmem:[%s3 + $0x8] sm:$0xff]
      %v343 = vld [vmem:[%s3 + $0x10] sm:$0xff]
      %v344 = vld [vmem:[%s3 + $0x18] sm:$0xff]
      %v345 = vld [vmem:[%s306] sm:$0xf]
      %v346 = vld [vmem:[%s306 + $0x4] sm:$0xf]
      %v347 = vld [vmem:[%s306 + $0x8] sm:$0xf]
      %v348 = vld [vmem:[%s306 + $0xc] sm:$0xf]
      %v349 = vld [vmem:[%s5] sm:$0xf]
      %v351 = vlaneseq
      %v352 = vshrl.u32 %v351, 7
      %v353 = vsub.s32 0, %v352
      %v354 = vrot.slane %v349, %v353
      %v355 = vlaneseq
      %v356 = vshrl.u32 %v355, 7
      %v357 = vsub.s32 1, %v356
      %v358 = vrot.slane %v349, %v357
      %v359 = vlaneseq
      %v360 = vshrl.u32 %v359, 7
      %v361 = vsub.s32 2, %v360
      %v362 = vrot.slane %v349, %v361
      %v363 = vlaneseq
      %v364 = vshrl.u32 %v363, 7
      %v365 = vsub.s32 3, %v364
      %v366 = vrot.slane %v349, %v365
      %v375 = vunpack.c.l.b16 %v345
      %v376 = vunpack.c.l.b16 %v346
      %v377 = vunpack.c.l.b16 %v347
      %v378 = vunpack.c.l.b16 %v348
      %v379 = vpack.c.b16 %v376, %v375
      %v380 = vpack.c.b16 %v378, %v377
      %v385 = vunpack.c.l.b16 %v341
      %v386 = vunpack.c.h.b16 %v341
      %v387 = vunpack.c.l.b16 %v342
      %v388 = vunpack.c.h.b16 %v342
      %v389 = vunpack.c.l.b16 %v343
      %v390 = vunpack.c.h.b16 %v343
      %v391 = vunpack.c.l.b16 %v344
      %v392 = vunpack.c.h.b16 %v344
      %v393 = vpack.c.b16 %v389, %v385
      %v394 = vpack.c.b16 %v390, %v386
      %v395 = vpack.c.b16 %v391, %v387
      %v396 = vpack.c.b16 %v392, %v388
      %vm401 = vcmask 130048
      %v403 = vsel %vm401, %v379, 0
      %v406 = vsel %vm401, %v380, 0
      %408 = vmatprep.subr.bf16.mxu0 %v394
      %409 = vmatpush1.bf16.msra.mxu0 %v393
      %410 = vmatprep.subr.bf16.mxu0 0
      %411 = vmatpush1.bf16.msra.mxu0 0
      %412 = vmatprep.subr.bf16.mxu0 0
      %413 = vmatpush1.bf16.msra.mxu0 0
      %414 = vmatprep.subr.bf16.mxu0 0
      %415 = vmatpush1.bf16.msra.mxu0 0
      %416 = vmatprep.subr.bf16.mxu0 0
      %417 = vmatpush1.bf16.msra.mxu0 0
      %418 = vmatprep.subr.bf16.mxu0 0
      %419 = vmatpush1.bf16.msra.mxu0 0
      %420 = vmatprep.subr.bf16.mxu0 0
      %421 = vmatpush1.bf16.msra.mxu0 0
      %422 = vmatprep.subr.bf16.mxu0 0
      %423 = vmatpush1.bf16.msra.mxu0 0
      %424 = vmatprep.subr.bf16.mxu0 0
      %425 = vmatpush1.bf16.msra.mxu0 0
      %426 = vmatprep.subr.bf16.mxu0 0
      %427 = vmatpush1.bf16.msra.mxu0 0
      %428 = vmatprep.subr.bf16.mxu0 0
      %429 = vmatpush1.bf16.msra.mxu0 0
      %430 = vmatprep.subr.bf16.mxu0 0
      %431 = vmatpush1.bf16.msra.mxu0 0
      %432 = vmatprep.subr.bf16.mxu0 0
      %433 = vmatpush1.bf16.msra.mxu0 0
      %434 = vmatprep.subr.bf16.mxu0 0
      %435 = vmatpush1.bf16.msra.mxu0 0
      %436 = vmatprep.subr.bf16.mxu0 0
      %437 = vmatpush1.bf16.msra.mxu0 0
      %438 = vmatprep.subr.bf16.mxu0 0
      %439 = vmatpush1.bf16.msra.mxu0 0
      %440 = vmatprep.mubr.bf16.mxu0 0
      %441 = vmatmul.mubr.bf16.gmra.mrb[0].mxu0 %v403
      %v442 = vpop.f32.mrb[0].mxu0
      %v443 = vadd.f32 %v354, %v442
      %v444 = vpop.f32.mrb[0].mxu0
      %v445 = vadd.f32 %v358, %v444
      %v446 = vpop.f32.mrb[0].mxu0
      %v447 = vadd.f32 %v354, %v446
      %v448 = vpop.f32.mrb[0].mxu0
      %v449 = vadd.f32 %v358, %v448
      %450 = vmatprep.mubr.bf16.mxu0 0
      %451 = vmatmul.mubr.bf16.gmra.mrb[0].mxu0 %v406
      %v452 = vpop.f32.mrb[0].mxu0
      %v453 = vadd.f32 %v354, %v452
      %v454 = vpop.f32.mrb[0].mxu0
      %v455 = vadd.f32 %v358, %v454
      %v456 = vpop.f32.mrb[0].mxu0
      %v457 = vadd.f32 %v354, %v456
      %v458 = vpop.f32.mrb[0].mxu0
      %v459 = vadd.f32 %v358, %v458
      %460 = vdwg.mxu0
      %461 = vmatprep.subr.bf16.mxu0 %v396
      %462 = vmatpush1.bf16.msra.mxu0 %v395
      %463 = vmatprep.subr.bf16.mxu0 0
      %464 = vmatpush1.bf16.msra.mxu0 0
      %465 = vmatprep.subr.bf16.mxu0 0
      %466 = vmatpush1.bf16.msra.mxu0 0
      %467 = vmatprep.subr.bf16.mxu0 0
      %468 = vmatpush1.bf16.msra.mxu0 0
      %469 = vmatprep.subr.bf16.mxu0 0
      %470 = vmatpush1.bf16.msra.mxu0 0
      %471 = vmatprep.subr.bf16.mxu0 0
      %472 = vmatpush1.bf16.msra.mxu0 0
      %473 = vmatprep.subr.bf16.mxu0 0
      %474 = vmatpush1.bf16.msra.mxu0 0
      %475 = vmatprep.subr.bf16.mxu0 0
      %476 = vmatpush1.bf16.msra.mxu0 0
      %477 = vmatprep.subr.bf16.mxu0 0
      %478 = vmatpush1.bf16.msra.mxu0 0
      %479 = vmatprep.subr.bf16.mxu0 0
      %480 = vmatpush1.bf16.msra.mxu0 0
      %481 = vmatprep.subr.bf16.mxu0 0
      %482 = vmatpush1.bf16.msra.mxu0 0
      %483 = vmatprep.subr.bf16.mxu0 0
      %484 = vmatpush1.bf16.msra.mxu0 0
      %485 = vmatprep.subr.bf16.mxu0 0
      %486 = vmatpush1.bf16.msra.mxu0 0
      %487 = vmatprep.subr.bf16.mxu0 0
      %488 = vmatpush1.bf16.msra.mxu0 0
      %489 = vmatprep.subr.bf16.mxu0 0
      %490 = vmatpush1.bf16.msra.mxu0 0
      %491 = vmatprep.subr.bf16.mxu0 0
      %492 = vmatpush1.bf16.msra.mxu0 0
      %493 = vmatprep.mubr.bf16.mxu0 0
      %494 = vmatmul.mubr.bf16.gmra.mrb[0].mxu0 %v403
      %v495 = vpop.f32.mrb[0].mxu0
      %v496 = vadd.f32 %v362, %v495
      %v497 = vpop.f32.mrb[0].mxu0
      %v498 = vadd.f32 %v366, %v497
      %v499 = vpop.f32.mrb[0].mxu0
      %v500 = vadd.f32 %v362, %v499
      %v501 = vpop.f32.mrb[0].mxu0
      %v502 = vadd.f32 %v366, %v501
      %503 = vmatprep.mubr.bf16.mxu0 0
      %504 = vmatmul.mubr.bf16.gmra.mrb[0].mxu0 %v406
      %v505 = vpop.f32.mrb[0].mxu0
      %v506 = vadd.f32 %v362, %v505
      %v507 = vpop.f32.mrb[0].mxu0
      %v508 = vadd.f32 %v366, %v507
      %v509 = vpop.f32.mrb[0].mxu0
      %v510 = vadd.f32 %v362, %v509
      %v511 = vpop.f32.mrb[0].mxu0
      %v512 = vadd.f32 %v366, %v511
      %513 = vdwg.mxu0
      %v514 = vpack.c.bf16 %v443, %v443
      %v515 = vpack.c.bf16 %v445, %v445
      %v516 = vpack.c.bf16 %v496, %v496
      %v517 = vpack.c.bf16 %v498, %v498
      %v518 = vpack.c.bf16 %v447, %v447
      %v519 = vpack.c.bf16 %v449, %v449
      %v520 = vpack.c.bf16 %v500, %v500
      %v521 = vpack.c.bf16 %v502, %v502
      %v522 = vpack.c.bf16 %v453, %v453
      %v523 = vpack.c.bf16 %v455, %v455
      %v524 = vpack.c.bf16 %v506, %v506
      %v525 = vpack.c.bf16 %v508, %v508
      %v526 = vpack.c.bf16 %v457, %v457
      %v527 = vpack.c.bf16 %v459, %v459
      %v528 = vpack.c.bf16 %v510, %v510
      %v529 = vpack.c.bf16 %v512, %v512
      %v546 = vunpack.c.l.b16 %v514
      %v547 = vunpack.c.l.b16 %v515
      %v548 = vunpack.c.l.b16 %v516
      %v549 = vunpack.c.l.b16 %v517
      %v550 = vunpack.c.l.b16 %v518
      %v551 = vunpack.c.l.b16 %v519
      %v552 = vunpack.c.l.b16 %v520
      %v553 = vunpack.c.l.b16 %v521
      %v554 = vunpack.c.l.b16 %v522
      %v555 = vunpack.c.l.b16 %v523
      %v556 = vunpack.c.l.b16 %v524
      %v557 = vunpack.c.l.b16 %v525
      %v558 = vunpack.c.l.b16 %v526
      %v559 = vunpack.c.l.b16 %v527
      %v560 = vunpack.c.l.b16 %v528
      %v561 = vunpack.c.l.b16 %v529
      %v562 = vpack.c.b16 %v547, %v546
      %v563 = vpack.c.b16 %v549, %v548
      %v564 = vpack.c.b16 %v551, %v550
      %v565 = vpack.c.b16 %v553, %v552
      %v566 = vpack.c.b16 %v555, %v554
      %v567 = vpack.c.b16 %v557, %v556
      %v568 = vpack.c.b16 %v559, %v558
      %v569 = vpack.c.b16 %v561, %v560
      %578 = vst [vmem:[#allocation6] sm:$0xff] %v562
      %579 = vst [vmem:[#allocation6 + $0x8] sm:$0xff] %v563
      %580 = vst [vmem:[#allocation6 + $0x10] sm:$0xff] %v564
      %581 = vst [vmem:[#allocation6 + $0x18] sm:$0xff] %v565
      %582 = vst [vmem:[#allocation6 + $0x20] sm:$0xff] %v566
      %583 = vst [vmem:[#allocation6 + $0x28] sm:$0xff] %v567
      %584 = vst [vmem:[#allocation6 + $0x30] sm:$0xff] %v568
      %585 = vst [vmem:[#allocation6 + $0x38] sm:$0xff] %v569
      %s586 = scalar_lea.vmem %s3, 32
      %v587 = vld [vmem:[%s586] sm:$0xff]
      %v588 = vld [vmem:[%s586 + $0x8] sm:$0xff]
      %v589 = vld [vmem:[%s586 + $0x10] sm:$0xff]
      %v590 = vld [vmem:[%s586 + $0x18] sm:$0xff]
      %v591 = vld [vmem:[%s313] sm:$0xf]
      %v592 = vld [vmem:[%s313 + $0x4] sm:$0xf]
      %v593 = vld [vmem:[%s313 + $0x8] sm:$0xf]
      %v594 = vld [vmem:[%s313 + $0xc] sm:$0xf]
      %s595 = scalar_lea.vmem %s5, 4
      %v596 = vld [vmem:[%s595] sm:$0xf]
      %v598 = vlaneseq
      %v599 = vshrl.u32 %v598, 7
      %v600 = vsub.s32 0, %v599
      %v601 = vrot.slane %v596, %v600
      %v602 = vlaneseq
      %v603 = vshrl.u32 %v602, 7
      %v604 = vsub.s32 1, %v603
      %v605 = vrot.slane %v596, %v604
      %v606 = vlaneseq
      %v607 = vshrl.u32 %v606, 7
      %v608 = vsub.s32 2, %v607
      %v609 = vrot.slane %v596, %v608
      %v610 = vlaneseq
      %v611 = vshrl.u32 %v610, 7
      %v612 = vsub.s32 3, %v611
      %v613 = vrot.slane %v596, %v612
      %v622 = vunpack.c.l.b16 %v591
      %v623 = vunpack.c.l.b16 %v592
      %v624 = vunpack.c.l.b16 %v593
      %v625 = vunpack.c.l.b16 %v594
      %v626 = vpack.c.b16 %v623, %v622
      %v627 = vpack.c.b16 %v625, %v624
      %v632 = vunpack.c.l.b16 %v587
      %v633 = vunpack.c.h.b16 %v587
      %v634 = vunpack.c.l.b16 %v588
      %v635 = vunpack.c.h.b16 %v588
      %v636 = vunpack.c.l.b16 %v589
      %v637 = vunpack.c.h.b16 %v589
      %v638 = vunpack.c.l.b16 %v590
      %v639 = vunpack.c.h.b16 %v590
      %v640 = vpack.c.b16 %v636, %v632
      %v641 = vpack.c.b16 %v637, %v633
      %v642 = vpack.c.b16 %v638, %v634
      %v643 = vpack.c.b16 %v639, %v635
      %v649 = vsel %vm401, %v626, 0
      %v652 = vsel %vm401, %v627, 0
      %654 = vmatprep.subr.bf16.mxu0 %v641
      %655 = vmatpush1.bf16.msra.mxu0 %v640
      %656 = vmatprep.subr.bf16.mxu0 0
      %657 = vmatpush1.bf16.msra.mxu0 0
      %658 = vmatprep.subr.bf16.mxu0 0
      %659 = vmatpush1.bf16.msra.mxu0 0
      %660 = vmatprep.subr.bf16.mxu0 0
      %661 = vmatpush1.bf16.msra.mxu0 0
      %662 = vmatprep.subr.bf16.mxu0 0
      %663 = vmatpush1.bf16.msra.mxu0 0
      %664 = vmatprep.subr.bf16.mxu0 0
      %665 = vmatpush1.bf16.msra.mxu0 0
      %666 = vmatprep.subr.bf16.mxu0 0
      %667 = vmatpush1.bf16.msra.mxu0 0
      %668 = vmatprep.subr.bf16.mxu0 0
      %669 = vmatpush1.bf16.msra.mxu0 0
      %670 = vmatprep.subr.bf16.mxu0 0
      %671 = vmatpush1.bf16.msra.mxu0 0
      %672 = vmatprep.subr.bf16.mxu0 0
      %673 = vmatpush1.bf16.msra.mxu0 0
      %674 = vmatprep.subr.bf16.mxu0 0
      %675 = vmatpush1.bf16.msra.mxu0 0
      %676 = vmatprep.subr.bf16.mxu0 0
      %677 = vmatpush1.bf16.msra.mxu0 0
      %678 = vmatprep.subr.bf16.mxu0 0
      %679 = vmatpush1.bf16.msra.mxu0 0
      %680 = vmatprep.subr.bf16.mxu0 0
      %681 = vmatpush1.bf16.msra.mxu0 0
      %682 = vmatprep.subr.bf16.mxu0 0
      %683 = vmatpush1.bf16.msra.mxu0 0
      %684 = vmatprep.subr.bf16.mxu0 0
      %685 = vmatpush1.bf16.msra.mxu0 0
      %686 = vmatprep.mubr.bf16.mxu0 0
      %687 = vmatmul.mubr.bf16.gmra.mrb[0].mxu0 %v649
      %v688 = vpop.f32.mrb[0].mxu0
      %v689 = vadd.f32 %v601, %v688
      %v690 = vpop.f32.mrb[0].mxu0
      %v691 = vadd.f32 %v605, %v690
      %v692 = vpop.f32.mrb[0].mxu0
      %v693 = vadd.f32 %v601, %v692
      %v694 = vpop.f32.mrb[0].mxu0
      %v695 = vadd.f32 %v605, %v694
      %696 = vmatprep.mubr.bf16.mxu0 0
      %697 = vmatmul.mubr.bf16.gmra.mrb[0].mxu0 %v652
      %v698 = vpop.f32.mrb[0].mxu0
      %v699 = vadd.f32 %v601, %v698
      %v700 = vpop.f32.mrb[0].mxu0
      %v701 = vadd.f32 %v605, %v700
      %v702 = vpop.f32.mrb[0].mxu0
      %v703 = vadd.f32 %v601, %v702
      %v704 = vpop.f32.mrb[0].mxu0
      %v705 = vadd.f32 %v605, %v704
      %706 = vdwg.mxu0
      %707 = vmatprep.subr.bf16.mxu0 %v643
      %708 = vmatpush1.bf16.msra.mxu0 %v642
      %709 = vmatprep.subr.bf16.mxu0 0
      %710 = vmatpush1.bf16.msra.mxu0 0
      %711 = vmatprep.subr.bf16.mxu0 0
      %712 = vmatpush1.bf16.msra.mxu0 0
      %713 = vmatprep.subr.bf16.mxu0 0
      %714 = vmatpush1.bf16.msra.mxu0 0
      %715 = vmatprep.subr.bf16.mxu0 0
      %716 = vmatpush1.bf16.msra.mxu0 0
      %717 = vmatprep.subr.bf16.mxu0 0
      %718 = vmatpush1.bf16.msra.mxu0 0
      %719 = vmatprep.subr.bf16.mxu0 0
      %720 = vmatpush1.bf16.msra.mxu0 0
      %721 = vmatprep.subr.bf16.mxu0 0
      %722 = vmatpush1.bf16.msra.mxu0 0
      %723 = vmatprep.subr.bf16.mxu0 0
      %724 = vmatpush1.bf16.msra.mxu0 0
      %725 = vmatprep.subr.bf16.mxu0 0
      %726 = vmatpush1.bf16.msra.mxu0 0
      %727 = vmatprep.subr.bf16.mxu0 0
      %728 = vmatpush1.bf16.msra.mxu0 0
      %729 = vmatprep.subr.bf16.mxu0 0
      %730 = vmatpush1.bf16.msra.mxu0 0
      %731 = vmatprep.subr.bf16.mxu0 0
      %732 = vmatpush1.bf16.msra.mxu0 0
      %733 = vmatprep.subr.bf16.mxu0 0
      %734 = vmatpush1.bf16.msra.mxu0 0
      %735 = vmatprep.subr.bf16.mxu0 0
      %736 = vmatpush1.bf16.msra.mxu0 0
      %737 = vmatprep.subr.bf16.mxu0 0
      %738 = vmatpush1.bf16.msra.mxu0 0
      %739 = vmatprep.mubr.bf16.mxu0 0
      %740 = vmatmul.mubr.bf16.gmra.mrb[0].mxu0 %v649
      %v741 = vpop.f32.mrb[0].mxu0
      %v742 = vadd.f32 %v609, %v741
      %v743 = vpop.f32.mrb[0].mxu0
      %v744 = vadd.f32 %v613, %v743
      %v745 = vpop.f32.mrb[0].mxu0
      %v746 = vadd.f32 %v609, %v745
      %v747 = vpop.f32.mrb[0].mxu0
      %v748 = vadd.f32 %v613, %v747
      %749 = vmatprep.mubr.bf16.mxu0 0
      %750 = vmatmul.mubr.bf16.gmra.mrb[0].mxu0 %v652
      %v751 = vpop.f32.mrb[0].mxu0
      %v752 = vadd.f32 %v609, %v751
      %v753 = vpop.f32.mrb[0].mxu0
      %v754 = vadd.f32 %v613, %v753
      %v755 = vpop.f32.mrb[0].mxu0
      %v756 = vadd.f32 %v609, %v755
      %v757 = vpop.f32.mrb[0].mxu0
      %v758 = vadd.f32 %v613, %v757
      %759 = vdwg.mxu0
      %v760 = vpack.c.bf16 %v689, %v689
      %v761 = vpack.c.bf16 %v691, %v691
      %v762 = vpack.c.bf16 %v742, %v742
      %v763 = vpack.c.bf16 %v744, %v744
      %v764 = vpack.c.bf16 %v693, %v693
      %v765 = vpack.c.bf16 %v695, %v695
      %v766 = vpack.c.bf16 %v746, %v746
      %v767 = vpack.c.bf16 %v748, %v748
      %v768 = vpack.c.bf16 %v699, %v699
      %v769 = vpack.c.bf16 %v701, %v701
      %v770 = vpack.c.bf16 %v752, %v752
      %v771 = vpack.c.bf16 %v754, %v754
      %v772 = vpack.c.bf16 %v703, %v703
      %v773 = vpack.c.bf16 %v705, %v705
      %v774 = vpack.c.bf16 %v756, %v756
      %v775 = vpack.c.bf16 %v758, %v758
      %v792 = vunpack.c.l.b16 %v760
      %v793 = vunpack.c.l.b16 %v761
      %v794 = vunpack.c.l.b16 %v762
      %v795 = vunpack.c.l.b16 %v763
      %v796 = vunpack.c.l.b16 %v764
      %v797 = vunpack.c.l.b16 %v765
      %v798 = vunpack.c.l.b16 %v766
      %v799 = vunpack.c.l.b16 %v767
      %v800 = vunpack.c.l.b16 %v768
      %v801 = vunpack.c.l.b16 %v769
      %v802 = vunpack.c.l.b16 %v770
      %v803 = vunpack.c.l.b16 %v771
      %v804 = vunpack.c.l.b16 %v772
      %v805 = vunpack.c.l.b16 %v773
      %v806 = vunpack.c.l.b16 %v774
      %v807 = vunpack.c.l.b16 %v775
      %v808 = vpack.c.b16 %v793, %v792
      %v809 = vpack.c.b16 %v795, %v794
      %v810 = vpack.c.b16 %v797, %v796
      %v811 = vpack.c.b16 %v799, %v798
      %v812 = vpack.c.b16 %v801, %v800
      %v813 = vpack.c.b16 %v803, %v802
      %v814 = vpack.c.b16 %v805, %v804
      %v815 = vpack.c.b16 %v807, %v806
      %824 = vst [vmem:[#allocation7] sm:$0xff] %v808
      %825 = vst [vmem:[#allocation7 + $0x8] sm:$0xff] %v809
      %826 = vst [vmem:[#allocation7 + $0x10] sm:$0xff] %v810
      %827 = vst [vmem:[#allocation7 + $0x18] sm:$0xff] %v811
      %828 = vst [vmem:[#allocation7 + $0x20] sm:$0xff] %v812
      %829 = vst [vmem:[#allocation7 + $0x28] sm:$0xff] %v813
      %830 = vst [vmem:[#allocation7 + $0x30] sm:$0xff] %v814
      %831 = vst [vmem:[#allocation7 + $0x38] sm:$0xff] %v815
      %v832 = vld [vmem:[%s4] sm:$0xff]
      %v833 = vld [vmem:[%s4 + $0x8] sm:$0xff]
      %v834 = vld [vmem:[%s4 + $0x10] sm:$0xff]
      %v835 = vld [vmem:[%s4 + $0x18] sm:$0xff]
      %v836 = vld [vmem:[%s4 + $0x20] sm:$0xff]
      %v837 = vld [vmem:[%s4 + $0x28] sm:$0xff]
      %v838 = vld [vmem:[%s4 + $0x30] sm:$0xff]
      %v839 = vld [vmem:[%s4 + $0x38] sm:$0xff]
      %v840 = vld [vmem:[%s4 + $0x40] sm:$0xff]
      %v841 = vld [vmem:[%s4 + $0x48] sm:$0xff]
      %v842 = vld [vmem:[%s4 + $0x50] sm:$0xff]
      %v843 = vld [vmem:[%s4 + $0x58] sm:$0xff]
      %v844 = vld [vmem:[%s4 + $0x60] sm:$0xff]
      %v845 = vld [vmem:[%s4 + $0x68] sm:$0xff]
      %v846 = vld [vmem:[%s4 + $0x70] sm:$0xff]
      %v847 = vld [vmem:[%s4 + $0x78] sm:$0xff]
      %v848 = vld [vmem:[%s4 + $0x80] sm:$0xff]
      %v849 = vld [vmem:[%s4 + $0x88] sm:$0xff]
      %v850 = vld [vmem:[%s4 + $0x90] sm:$0xff]
      %v851 = vld [vmem:[%s4 + $0x98] sm:$0xff]
      %v852 = vld [vmem:[%s4 + $0xa0] sm:$0xff]
      %v853 = vld [vmem:[%s4 + $0xa8] sm:$0xff]
      %v854 = vld [vmem:[%s4 + $0xb0] sm:$0xff]
      %v855 = vld [vmem:[%s4 + $0xb8] sm:$0xff]
      %v856 = vld [vmem:[%s4 + $0xc0] sm:$0xff]
      %v857 = vld [vmem:[%s4 + $0xc8] sm:$0xff]
      %v858 = vld [vmem:[%s4 + $0xd0] sm:$0xff]
      %v859 = vld [vmem:[%s4 + $0xd8] sm:$0xff]
      %v860 = vld [vmem:[%s4 + $0xe0] sm:$0xff]
      %v861 = vld [vmem:[%s4 + $0xe8] sm:$0xff]
      %v862 = vld [vmem:[%s4 + $0xf0] sm:$0xff]
      %v863 = vld [vmem:[%s4 + $0xf8] sm:$0xff]
      %s864 = scalar_lea.vmem %s4, 256
      %v865 = vld [vmem:[%s864] sm:$0xff]
      %v866 = vld [vmem:[%s864 + $0x8] sm:$0xff]
      %v867 = vld [vmem:[%s864 + $0x10] sm:$0xff]
      %v868 = vld [vmem:[%s864 + $0x18] sm:$0xff]
      %v869 = vld [vmem:[%s864 + $0x20] sm:$0xff]
      %v870 = vld [vmem:[%s864 + $0x28] sm:$0xff]
      %v871 = vld [vmem:[%s864 + $0x30] sm:$0xff]
      %v872 = vld [vmem:[%s864 + $0x38] sm:$0xff]
      %v873 = vld [vmem:[%s864 + $0x40] sm:$0xff]
      %v874 = vld [vmem:[%s864 + $0x48] sm:$0xff]
      %v875 = vld [vmem:[%s864 + $0x50] sm:$0xff]
      %v876 = vld [vmem:[%s864 + $0x58] sm:$0xff]
      %v877 = vld [vmem:[%s864 + $0x60] sm:$0xff]
      %v878 = vld [vmem:[%s864 + $0x68] sm:$0xff]
      %v879 = vld [vmem:[%s864 + $0x70] sm:$0xff]
      %v880 = vld [vmem:[%s864 + $0x78] sm:$0xff]
      %v881 = vld [vmem:[%s864 + $0x80] sm:$0xff]
      %v882 = vld [vmem:[%s864 + $0x88] sm:$0xff]
      %v883 = vld [vmem:[%s864 + $0x90] sm:$0xff]
      %v884 = vld [vmem:[%s864 + $0x98] sm:$0xff]
      %v885 = vld [vmem:[%s864 + $0xa0] sm:$0xff]
      %v886 = vld [vmem:[%s864 + $0xa8] sm:$0xff]
      %v887 = vld [vmem:[%s864 + $0xb0] sm:$0xff]
      %v888 = vld [vmem:[%s864 + $0xb8] sm:$0xff]
      %v889 = vld [vmem:[%s864 + $0xc0] sm:$0xff]
      %v890 = vld [vmem:[%s864 + $0xc8] sm:$0xff]
      %v891 = vld [vmem:[%s864 + $0xd0] sm:$0xff]
      %v892 = vld [vmem:[%s864 + $0xd8] sm:$0xff]
      %v893 = vld [vmem:[%s864 + $0xe0] sm:$0xff]
      %v894 = vld [vmem:[%s864 + $0xe8] sm:$0xff]
      %v895 = vld [vmem:[%s864 + $0xf0] sm:$0xff]
      %v896 = vld [vmem:[%s864 + $0xf8] sm:$0xff]
      %s897 = smul.u32 %s19, 4
      %v898 = vstv %s897
      %vm899 = vcmp.gt.s32.totalorder %v332, %v898
      %v900 = vld [vmem:[#allocation2] sm:$0xf]
      %v901 = vld [vmem:[#allocation6] sm:$0xff]
      %v902 = vld [vmem:[#allocation6 + $0x8] sm:$0xff]
      %v903 = vunpack.c.l.bf16 %v901
      %v904 = vunpack.c.h.bf16 %v901
      %v905 = vunpack.c.l.bf16 %v902
      %v906 = vunpack.c.h.bf16 %v902
      %v939 = vunpack.c.l.b16 %v832
      %v940 = vunpack.c.h.b16 %v832
      %v941 = vunpack.c.l.b16 %v833
      %v942 = vunpack.c.h.b16 %v833
      %v943 = vunpack.c.l.b16 %v834
      %v944 = vunpack.c.h.b16 %v834
      %v945 = vunpack.c.l.b16 %v835
      %v946 = vunpack.c.h.b16 %v835
      %v947 = vunpack.c.l.b16 %v836
      %v948 = vunpack.c.h.b16 %v836
      %v949 = vunpack.c.l.b16 %v837
      %v950 = vunpack.c.h.b16 %v837
      %v951 = vunpack.c.l.b16 %v838
      %v952 = vunpack.c.h.b16 %v838
      %v953 = vunpack.c.l.b16 %v839
      %v954 = vunpack.c.h.b16 %v839
      %v955 = vunpack.c.l.b16 %v840
      %v956 = vunpack.c.h.b16 %v840
      %v957 = vunpack.c.l.b16 %v841
      %v958 = vunpack.c.h.b16 %v841
      %v959 = vunpack.c.l.b16 %v842
      %v960 = vunpack.c.h.b16 %v842
      %v961 = vunpack.c.l.b16 %v843
      %v962 = vunpack.c.h.b16 %v843
      %v963 = vunpack.c.l.b16 %v844
      %v964 = vunpack.c.h.b16 %v844
      %v965 = vunpack.c.l.b16 %v845
      %v966 = vunpack.c.h.b16 %v845
      %v967 = vunpack.c.l.b16 %v846
      %v968 = vunpack.c.h.b16 %v846
      %v969 = vunpack.c.l.b16 %v847
      %v970 = vunpack.c.h.b16 %v847
      %v971 = vunpack.c.l.b16 %v848
      %v972 = vunpack.c.h.b16 %v848
      %v973 = vunpack.c.l.b16 %v849
      %v974 = vunpack.c.h.b16 %v849
      %v975 = vunpack.c.l.b16 %v850
      %v976 = vunpack.c.h.b16 %v850
      %v977 = vunpack.c.l.b16 %v851
      %v978 = vunpack.c.h.b16 %v851
      %v979 = vunpack.c.l.b16 %v852
      %v980 = vunpack.c.h.b16 %v852
      %v981 = vunpack.c.l.b16 %v853
      %v982 = vunpack.c.h.b16 %v853
      %v983 = vunpack.c.l.b16 %v854
      %v984 = vunpack.c.h.b16 %v854
      %v985 = vunpack.c.l.b16 %v855
      %v986 = vunpack.c.h.b16 %v855
      %v987 = vunpack.c.l.b16 %v856
      %v988 = vunpack.c.h.b16 %v856
      %v989 = vunpack.c.l.b16 %v857
      %v990 = vunpack.c.h.b16 %v857
      %v991 = vunpack.c.l.b16 %v858
      %v992 = vunpack.c.h.b16 %v858
      %v993 = vunpack.c.l.b16 %v859
      %v994 = vunpack.c.h.b16 %v859
      %v995 = vunpack.c.l.b16 %v860
      %v996 = vunpack.c.h.b16 %v860
      %v997 = vunpack.c.l.b16 %v861
      %v998 = vunpack.c.h.b16 %v861
      %v999 = vunpack.c.l.b16 %v862
      %v1000 = vunpack.c.h.b16 %v862
      %v1001 = vunpack.c.l.b16 %v863
      %v1002 = vunpack.c.h.b16 %v863
      %v1003 = vpack.c.b16 %v943, %v939
      %v1004 = vpack.c.b16 %v944, %v940
      %v1005 = vpack.c.b16 %v945, %v941
      %v1006 = vpack.c.b16 %v946, %v942
      %v1007 = vpack.c.b16 %v951, %v947
      %v1008 = vpack.c.b16 %v952, %v948
      %v1009 = vpack.c.b16 %v953, %v949
      %v1010 = vpack.c.b16 %v954, %v950
      %v1011 = vpack.c.b16 %v959, %v955
      %v1012 = vpack.c.b16 %v960, %v956
      %v1013 = vpack.c.b16 %v961, %v957
      %v1014 = vpack.c.b16 %v962, %v958
      %v1015 = vpack.c.b16 %v967, %v963
      %v1016 = vpack.c.b16 %v968, %v964
      %v1017 = vpack.c.b16 %v969, %v965
      %v1018 = vpack.c.b16 %v970, %v966
      %v1019 = vpack.c.b16 %v975, %v971
      %v1020 = vpack.c.b16 %v976, %v972
      %v1021 = vpack.c.b16 %v977, %v973
      %v1022 = vpack.c.b16 %v978, %v974
      %v1023 = vpack.c.b16 %v983, %v979
      %v1024 = vpack.c.b16 %v984, %v980
      %v1025 = vpack.c.b16 %v985, %v981
      %v1026 = vpack.c.b16 %v986, %v982
      %v1027 = vpack.c.b16 %v991, %v987
      %v1028 = vpack.c.b16 %v992, %v988
      %v1029 = vpack.c.b16 %v993, %v989
      %v1030 = vpack.c.b16 %v994, %v990
      %v1031 = vpack.c.b16 %v999, %v995
      %v1032 = vpack.c.b16 %v1000, %v996
      %v1033 = vpack.c.b16 %v1001, %v997
      %v1034 = vpack.c.b16 %v1002, %v998
      %1067 = vmatprep.subr.bf16.mxu0 %v1004
      %1068 = vmatpush1.bf16.msra.mxu0 %v1003
      %1069 = vmatprep.subr.bf16.mxu0 %v1008
      %1070 = vmatpush1.bf16.msra.mxu0 %v1007
      %1071 = vmatprep.subr.bf16.mxu0 %v1012
      %1072 = vmatpush1.bf16.msra.mxu0 %v1011
      %1073 = vmatprep.subr.bf16.mxu0 %v1016
      %1074 = vmatpush1.bf16.msra.mxu0 %v1015
      %1075 = vmatprep.subr.bf16.mxu0 %v1020
      %1076 = vmatpush1.bf16.msra.mxu0 %v1019
      %1077 = vmatprep.subr.bf16.mxu0 %v1024
      %1078 = vmatpush1.bf16.msra.mxu0 %v1023
      %1079 = vmatprep.subr.bf16.mxu0 %v1028
      %1080 = vmatpush1.bf16.msra.mxu0 %v1027
      %1081 = vmatprep.subr.bf16.mxu0 %v1032
      %1082 = vmatpush1.bf16.msra.mxu0 %v1031
      %1083 = vmatprep.subr.bf16.mxu0 0
      %1084 = vmatpush1.bf16.msra.mxu0 0
      %1085 = vmatprep.subr.bf16.mxu0 0
      %1086 = vmatpush1.bf16.msra.mxu0 0
      %1087 = vmatprep.subr.bf16.mxu0 0
      %1088 = vmatpush1.bf16.msra.mxu0 0
      %1089 = vmatprep.subr.bf16.mxu0 0
      %1090 = vmatpush1.bf16.msra.mxu0 0
      %1091 = vmatprep.subr.bf16.mxu0 0
      %1092 = vmatpush1.bf16.msra.mxu0 0
      %1093 = vmatprep.subr.bf16.mxu0 0
      %1094 = vmatpush1.bf16.msra.mxu0 0
      %1095 = vmatprep.subr.bf16.mxu0 0
      %1096 = vmatpush1.bf16.msra.mxu0 0
      %1097 = vmatprep.subr.bf16.mxu0 0
      %1098 = vmatpush1.bf16.msra.mxu0 0
      %1099 = vmatprep.mubr.bf16.mxu0 0
      %1100 = vmatmul.mubr.bf16.gmra.mrb[0].mxu0 %v900
      %v1101 = vpop.f32.mrb[0].mxu0
      %v1102 = vadd.f32 0.0, %v1101
      %v1103 = vpop.f32.mrb[0].mxu0
      %v1104 = vadd.f32 0.0, %v1103
      %v1105 = vpop.f32.mrb[0].mxu0
      %v1106 = vpop.f32.mrb[0].mxu0
      %1107 = vdwg.mxu0
      %1108 = vmatprep.subr.bf16.mxu0 %v1006
      %1109 = vmatpush1.bf16.msra.mxu0 %v1005
      %1110 = vmatprep.subr.bf16.mxu0 %v1010
      %1111 = vmatpush1.bf16.msra.mxu0 %v1009
      %1112 = vmatprep.subr.bf16.mxu0 %v1014
      %1113 = vmatpush1.bf16.msra.mxu0 %v1013
      %1114 = vmatprep.subr.bf16.mxu0 %v1018
      %1115 = vmatpush1.bf16.msra.mxu0 %v1017
      %1116 = vmatprep.subr.bf16.mxu0 %v1022
      %1117 = vmatpush1.bf16.msra.mxu0 %v1021
      %1118 = vmatprep.subr.bf16.mxu0 %v1026
      %1119 = vmatpush1.bf16.msra.mxu0 %v1025
      %1120 = vmatprep.subr.bf16.mxu0 %v1030
      %1121 = vmatpush1.bf16.msra.mxu0 %v1029
      %1122 = vmatprep.subr.bf16.mxu0 %v1034
      %1123 = vmatpush1.bf16.msra.mxu0 %v1033
      %1124 = vmatprep.subr.bf16.mxu0 0
      %1125 = vmatpush1.bf16.msra.mxu0 0
      %1126 = vmatprep.subr.bf16.mxu0 0
      %1127 = vmatpush1.bf16.msra.mxu0 0
      %1128 = vmatprep.subr.bf16.mxu0 0
      %1129 = vmatpush1.bf16.msra.mxu0 0
      %1130 = vmatprep.subr.bf16.mxu0 0
      %1131 = vmatpush1.bf16.msra.mxu0 0
      %1132 = vmatprep.subr.bf16.mxu0 0
      %1133 = vmatpush1.bf16.msra.mxu0 0
      %1134 = vmatprep.subr.bf16.mxu0 0
      %1135 = vmatpush1.bf16.msra.mxu0 0
      %1136 = vmatprep.subr.bf16.mxu0 0
      %1137 = vmatpush1.bf16.msra.mxu0 0
      %1138 = vmatprep.subr.bf16.mxu0 0
      %1139 = vmatpush1.bf16.msra.mxu0 0
      %1140 = vmatprep.mubr.bf16.mxu0 0
      %1141 = vmatmul.mubr.bf16.gmra.mrb[0].mxu0 %v900
      %v1142 = vpop.f32.mrb[0].mxu0
      %v1143 = vadd.f32 0.0, %v1142
      %v1144 = vpop.f32.mrb[0].mxu0
      %v1145 = vadd.f32 0.0, %v1144
      %v1146 = vpop.f32.mrb[0].mxu0
      %v1147 = vpop.f32.mrb[0].mxu0
      %1148 = vdwg.mxu0
      %v1149 = vadd.f32 %v903, %v1102
      %v1150 = vadd.f32 %v904, %v1104
      %v1151 = vadd.f32 %v905, %v1143
      %v1152 = vadd.f32 %v906, %v1145
      %v1153 = vxor.u32 %v1149, 2147483648
      %v1154 = vmul.f32 %v1153, 1.442695
      %v1155 = vpow.pop %v1154
      %v1156 = vadd.f32 %v1155, 1.0
      %v1157 = vrcp.pop %v1156
      %v1158 = vmul.f32 1.0, %v1157
      %v1159 = vxor.u32 %v1150, 2147483648
      %v1160 = vmul.f32 %v1159, 1.442695
      %v1161 = vpow.pop %v1160
      %v1162 = vadd.f32 %v1161, 1.0
      %v1163 = vrcp.pop %v1162
      %v1164 = vmul.f32 1.0, %v1163
      %v1165 = vtanh.pop %v1151
      %v1166 = vxor.u32 %v1152, 2147483648
      %v1167 = vmul.f32 %v1166, 1.442695
      %v1168 = vpow.pop %v1167
      %v1169 = vadd.f32 %v1168, 1.0
      %v1170 = vrcp.pop %v1169
      %v1171 = vmul.f32 1.0, %v1170
      %v1172 = vld [vmem:[#allocation3] sm:$0xff]
      %v1173 = vmul.f32 %v1164, %v1172
      %v1174 = vmul.f32 %v1158, %v1165
      %v1175 = vadd.f32 %v1173, %v1174
      %v1176 = vtanh.pop %v1175
      %v1177 = vmul.f32 %v1171, %v1176
      %v1178 = vunpack.c.l.bf16 %v900
      %v1179 = vsel %vm899, 1, 0
      %1180 = vset.pattern.permute.xlu0 0
      %1181 = vperm.xlu0 %1180, %v1179
      %v1182 = vpop.permute.xlu0 %1181
      %vm1183 = vcmp.eq.s32.totalorder %v1182, 1
      %v1184 = vsel %vm1183, %v1177, %v1178
      %v1185 = vpack.c.bf16 %v1184, %v1184
      %1186 = vst [vmem:[#allocation2] sm:$0xf] %v1185
      %v1187 = vld [vmem:[#allocation3] sm:$0xff]
      %v1188 = vsel %vm1183, %v1175, %v1187
      %1189 = vst [vmem:[#allocation3] sm:$0xff] %v1188
      %s1190 = smul.u32 %s331, 4
      %s1191 = sadd.s32 %s1190, 3
      %v1192 = vstv %s1191
      %vm1193 = vcmp.gt.s32.totalorder %v332, %v1192
      %v1194 = vld [vmem:[#allocation4] sm:$0xf]
      %s1195 = scalar_lea.vmem [#allocation7], 48
      %v1196 = vld [vmem:[%s1195] sm:$0xff]
      %v1197 = vld [vmem:[%s1195 + $0x8] sm:$0xff]
      %v1198 = vunpack.c.l.bf16 %v1196
      %v1199 = vunpack.c.h.bf16 %v1196
      %v1200 = vunpack.c.l.bf16 %v1197
      %v1201 = vunpack.c.h.bf16 %v1197
      %v1234 = vunpack.c.l.b16 %v865
      %v1235 = vunpack.c.h.b16 %v865
      %v1236 = vunpack.c.l.b16 %v866
      %v1237 = vunpack.c.h.b16 %v866
      %v1238 = vunpack.c.l.b16 %v867
      %v1239 = vunpack.c.h.b16 %v867
      %v1240 = vunpack.c.l.b16 %v868
      %v1241 = vunpack.c.h.b16 %v868
      %v1242 = vunpack.c.l.b16 %v869
      %v1243 = vunpack.c.h.b16 %v869
      %v1244 = vunpack.c.l.b16 %v870
      %v1245 = vunpack.c.h.b16 %v870
      %v1246 = vunpack.c.l.b16 %v871
      %v1247 = vunpack.c.h.b16 %v871
      %v1248 = vunpack.c.l.b16 %v872
      %v1249 = vunpack.c.h.b16 %v872
      %v1250 = vunpack.c.l.b16 %v873
      %v1251 = vunpack.c.h.b16 %v873
      %v1252 = vunpack.c.l.b16 %v874
      %v1253 = vunpack.c.h.b16 %v874
      %v1254 = vunpack.c.l.b16 %v875
      %v1255 = vunpack.c.h.b16 %v875
      %v1256 = vunpack.c.l.b16 %v876
      %v1257 = vunpack.c.h.b16 %v876
      %v1258 = vunpack.c.l.b16 %v877
      %v1259 = vunpack.c.h.b16 %v877
      %v1260 = vunpack.c.l.b16 %v878
      %v1261 = vunpack.c.h.b16 %v878
      %v1262 = vunpack.c.l.b16 %v879
      %v1263 = vunpack.c.h.b16 %v879
      %v1264 = vunpack.c.l.b16 %v880
      %v1265 = vunpack.c.h.b16 %v880
      %v1266 = vunpack.c.l.b16 %v881
      %v1267 = vunpack.c.h.b16 %v881
      %v1268 = vunpack.c.l.b16 %v882
      %v1269 = vunpack.c.h.b16 %v882
      %v1270 = vunpack.c.l.b16 %v883
      %v1271 = vunpack.c.h.b16 %v883
      %v1272 = vunpack.c.l.b16 %v884
      %v1273 = vunpack.c.h.b16 %v884
      %v1274 = vunpack.c.l.b16 %v885
      %v1275 = vunpack.c.h.b16 %v885
      %v1276 = vunpack.c.l.b16 %v886
      %v1277 = vunpack.c.h.b16 %v886
      %v1278 = vunpack.c.l.b16 %v887
      %v1279 = vunpack.c.h.b16 %v887
      %v1280 = vunpack.c.l.b16 %v888
      %v1281 = vunpack.c.h.b16 %v888
      %v1282 = vunpack.c.l.b16 %v889
      %v1283 = vunpack.c.h.b16 %v889
      %v1284 = vunpack.c.l.b16 %v890
      %v1285 = vunpack.c.h.b16 %v890
      %v1286 = vunpack.c.l.b16 %v891
      %v1287 = vunpack.c.h.b16 %v891
      %v1288 = vunpack.c.l.b16 %v892
      %v1289 = vunpack.c.h.b16 %v892
      %v1290 = vunpack.c.l.b16 %v893
      %v1291 = vunpack.c.h.b16 %v893
      %v1292 = vunpack.c.l.b16 %v894
      %v1293 = vunpack.c.h.b16 %v894
      %v1294 = vunpack.c.l.b16 %v895
      %v1295 = vunpack.c.h.b16 %v895
      %v1296 = vunpack.c.l.b16 %v896
      %v1297 = vunpack.c.h.b16 %v896
      %v1298 = vpack.c.b16 %v1238, %v1234
      %v1299 = vpack.c.b16 %v1239, %v1235
      %v1300 = vpack.c.b16 %v1240, %v1236
      %v1301 = vpack.c.b16 %v1241, %v1237
      %v1302 = vpack.c.b16 %v1246, %v1242
      %v1303 = vpack.c.b16 %v1247, %v1243
      %v1304 = vpack.c.b16 %v1248, %v1244
      %v1305 = vpack.c.b16 %v1249, %v1245
      %v1306 = vpack.c.b16 %v1254, %v1250
      %v1307 = vpack.c.b16 %v1255, %v1251
      %v1308 = vpack.c.b16 %v1256, %v1252
      %v1309 = vpack.c.b16 %v1257, %v1253
      %v1310 = vpack.c.b16 %v1262, %v1258
      %v1311 = vpack.c.b16 %v1263, %v1259
      %v1312 = vpack.c.b16 %v1264, %v1260
      %v1313 = vpack.c.b16 %v1265, %v1261
      %v1314 = vpack.c.b16 %v1270, %v1266
      %v1315 = vpack.c.b16 %v1271, %v1267
      %v1316 = vpack.c.b16 %v1272, %v1268
      %v1317 = vpack.c.b16 %v1273, %v1269
      %v1318 = vpack.c.b16 %v1278, %v1274
      %v1319 = vpack.c.b16 %v1279, %v1275
      %v1320 = vpack.c.b16 %v1280, %v1276
      %v1321 = vpack.c.b16 %v1281, %v1277
      %v1322 = vpack.c.b16 %v1286, %v1282
      %v1323 = vpack.c.b16 %v1287, %v1283
      %v1324 = vpack.c.b16 %v1288, %v1284
      %v1325 = vpack.c.b16 %v1289, %v1285
      %v1326 = vpack.c.b16 %v1294, %v1290
      %v1327 = vpack.c.b16 %v1295, %v1291
      %v1328 = vpack.c.b16 %v1296, %v1292
      %v1329 = vpack.c.b16 %v1297, %v1293
      %1362 = vmatprep.subr.bf16.mxu0 %v1299
      %1363 = vmatpush1.bf16.msra.mxu0 %v1298
      %1364 = vmatprep.subr.bf16.mxu0 %v1303
      %1365 = vmatpush1.bf16.msra.mxu0 %v1302
      %1366 = vmatprep.subr.bf16.mxu0 %v1307
      %1367 = vmatpush1.bf16.msra.mxu0 %v1306
      %1368 = vmatprep.subr.bf16.mxu0 %v1311
      %1369 = vmatpush1.bf16.msra.mxu0 %v1310
      %1370 = vmatprep.subr.bf16.mxu0 %v1315
      %1371 = vmatpush1.bf16.msra.mxu0 %v1314
      %1372 = vmatprep.subr.bf16.mxu0 %v1319
      %1373 = vmatpush1.bf16.msra.mxu0 %v1318
      %1374 = vmatprep.subr.bf16.mxu0 %v1323
      %1375 = vmatpush1.bf16.msra.mxu0 %v1322
      %1376 = vmatprep.subr.bf16.mxu0 %v1327
      %1377 = vmatpush1.bf16.msra.mxu0 %v1326
      %1378 = vmatprep.subr.bf16.mxu0 0
      %1379 = vmatpush1.bf16.msra.mxu0 0
      %1380 = vmatprep.subr.bf16.mxu0 0
      %1381 = vmatpush1.bf16.msra.mxu0 0
      %1382 = vmatprep.subr.bf16.mxu0 0
      %1383 = vmatpush1.bf16.msra.mxu0 0
      %1384 = vmatprep.subr.bf16.mxu0 0
      %1385 = vmatpush1.bf16.msra.mxu0 0
      %1386 = vmatprep.subr.bf16.mxu0 0
      %1387 = vmatpush1.bf16.msra.mxu0 0
      %1388 = vmatprep.subr.bf16.mxu0 0
      %1389 = vmatpush1.bf16.msra.mxu0 0
      %1390 = vmatprep.subr.bf16.mxu0 0
      %1391 = vmatpush1.bf16.msra.mxu0 0
      %1392 = vmatprep.subr.bf16.mxu0 0
      %1393 = vmatpush1.bf16.msra.mxu0 0
      %1394 = vmatprep.mubr.bf16.mxu0 0
      %1395 = vmatmul.mubr.bf16.gmra.mrb[0].mxu0 %v1194
      %v1396 = vpop.f32.mrb[0].mxu0
      %v1397 = vadd.f32 0.0, %v1396
      %v1398 = vpop.f32.mrb[0].mxu0
      %v1399 = vadd.f32 0.0, %v1398
      %v1400 = vpop.f32.mrb[0].mxu0
      %v1401 = vpop.f32.mrb[0].mxu0
      %1402 = vdwg.mxu0
      %1403 = vmatprep.subr.bf16.mxu0 %v1301
      %1404 = vmatpush1.bf16.msra.mxu0 %v1300
      %1405 = vmatprep.subr.bf16.mxu0 %v1305
      %1406 = vmatpush1.bf16.msra.mxu0 %v1304
      %1407 = vmatprep.subr.bf16.mxu0 %v1309
      %1408 = vmatpush1.bf16.msra.mxu0 %v1308
      %1409 = vmatprep.subr.bf16.mxu0 %v1313
      %1410 = vmatpush1.bf16.msra.mxu0 %v1312
      %1411 = vmatprep.subr.bf16.mxu0 %v1317
      %1412 = vmatpush1.bf16.msra.mxu0 %v1316
      %1413 = vmatprep.subr.bf16.mxu0 %v1321
      %1414 = vmatpush1.bf16.msra.mxu0 %v1320
      %1415 = vmatprep.subr.bf16.mxu0 %v1325
      %1416 = vmatpush1.bf16.msra.mxu0 %v1324
      %1417 = vmatprep.subr.bf16.mxu0 %v1329
      %1418 = vmatpush1.bf16.msra.mxu0 %v1328
      %1419 = vmatprep.subr.bf16.mxu0 0
      %1420 = vmatpush1.bf16.msra.mxu0 0
      %1421 = vmatprep.subr.bf16.mxu0 0
      %1422 = vmatpush1.bf16.msra.mxu0 0
      %1423 = vmatprep.subr.bf16.mxu0 0
      %1424 = vmatpush1.bf16.msra.mxu0 0
      %1425 = vmatprep.subr.bf16.mxu0 0
      %1426 = vmatpush1.bf16.msra.mxu0 0
      %1427 = vmatprep.subr.bf16.mxu0 0
      %1428 = vmatpush1.bf16.msra.mxu0 0
      %1429 = vmatprep.subr.bf16.mxu0 0
      %1430 = vmatpush1.bf16.msra.mxu0 0
      %1431 = vmatprep.subr.bf16.mxu0 0
      %1432 = vmatpush1.bf16.msra.mxu0 0
      %1433 = vmatprep.subr.bf16.mxu0 0
      %1434 = vmatpush1.bf16.msra.mxu0 0
      %1435 = vmatprep.mubr.bf16.mxu0 0
      %1436 = vmatmul.mubr.bf16.gmra.mrb[0].mxu0 %v1194
      %v1437 = vpop.f32.mrb[0].mxu0
      %v1438 = vadd.f32 0.0, %v1437
      %v1439 = vpop.f32.mrb[0].mxu0
      %v1440 = vadd.f32 0.0, %v1439
      %v1441 = vpop.f32.mrb[0].mxu0
      %v1442 = vpop.f32.mrb[0].mxu0
      %1443 = vdwg.mxu0
      %v1444 = vadd.f32 %v1198, %v1397
      %v1445 = vadd.f32 %v1199, %v1399
      %v1446 = vadd.f32 %v1200, %v1438
      %v1447 = vadd.f32 %v1201, %v1440
      %v1448 = vxor.u32 %v1444, 2147483648
      %v1449 = vmul.f32 %v1448, 1.442695
      %v1450 = vpow.pop %v1449
      %v1451 = vadd.f32 %v1450, 1.0
      %v1452 = vrcp.pop %v1451
      %v1453 = vmul.f32 1.0, %v1452
      %v1454 = vxor.u32 %v1445, 2147483648
      %v1455 = vmul.f32 %v1454, 1.442695
      %v1456 = vpow.pop %v1455
      %v1457 = vadd.f32 %v1456, 1.0
      %v1458 = vrcp.pop %v1457
      %v1459 = vmul.f32 1.0, %v1458
      %v1460 = vtanh.pop %v1446
      %v1461 = vxor.u32 %v1447, 2147483648
      %v1462 = vmul.f32 %v1461, 1.442695
      %v1463 = vpow.pop %v1462
      %v1464 = vadd.f32 %v1463, 1.0
      %v1465 = vrcp.pop %v1464
      %v1466 = vmul.f32 1.0, %v1465
      %v1467 = vld [vmem:[#allocation5] sm:$0xff]
      %v1468 = vmul.f32 %v1459, %v1467
      %v1469 = vmul.f32 %v1453, %v1460
      %v1470 = vadd.f32 %v1468, %v1469
      %v1471 = vtanh.pop %v1470
      %v1472 = vmul.f32 %v1466, %v1471
      %v1473 = vunpack.c.l.bf16 %v1194
      %v1474 = vsel %vm1193, 1, 0
      %1475 = vset.pattern.permute.xlu0 0
      %1476 = vperm.xlu0 %1475, %v1474
      %v1477 = vpop.permute.xlu0 %1476
      %vm1478 = vcmp.eq.s32.totalorder %v1477, 1
      %v1479 = vsel %vm1478, %v1472, %v1473
      %v1480 = vpack.c.bf16 %v1479, %v1479
      %1481 = vst [vmem:[#allocation4] sm:$0xf] %v1480
      %v1482 = vld [vmem:[#allocation5] sm:$0xff]
      %v1483 = vsel %vm1478, %v1470, %v1482
      %1484 = vst [vmem:[#allocation5] sm:$0xff] %v1483
      %v1485 = vsel %vm1183, %v1177, 0.0
      %v1486 = vpack.c.bf16 %v1485, %v1485
      %vm1487 = vcmask 257024
      %1488 = vst.msk [vmem:[%s320] sm:$0xf] %vm1487, %v1486
      %v1489 = vsel %vm1478, %v1472, 0.0
      %v1490 = vpack.c.bf16 %v1489, %v1489
      %s1491 = scalar_lea.vmem %s327, 12
      %1492 = vst.msk [vmem:[%s1491] sm:$0xf] %vm1487, %v1490
      %s1493 = sadd.s32 %s897, 1
      %v1494 = vstv %s1493
      %vm1495 = vcmp.gt.s32.totalorder %v332, %v1494
      %v1496 = vld [vmem:[#allocation2] sm:$0xf]
      %s1497 = scalar_lea.vmem [#allocation6], 16
      %v1498 = vld [vmem:[%s1497] sm:$0xff]
      %v1499 = vld [vmem:[%s1497 + $0x8] sm:$0xff]
      %v1500 = vunpack.c.l.bf16 %v1498
      %v1501 = vunpack.c.h.bf16 %v1498
      %v1502 = vunpack.c.l.bf16 %v1499
      %v1503 = vunpack.c.h.bf16 %v1499
      %1504 = vmatprep.subr.bf16.mxu0 %v1004
      %1505 = vmatpush1.bf16.msra.mxu0 %v1003
      %1506 = vmatprep.subr.bf16.mxu0 %v1008
      %1507 = vmatpush1.bf16.msra.mxu0 %v1007
      %1508 = vmatprep.subr.bf16.mxu0 %v1012
      %1509 = vmatpush1.bf16.msra.mxu0 %v1011
      %1510 = vmatprep.subr.bf16.mxu0 %v1016
      %1511 = vmatpush1.bf16.msra.mxu0 %v1015
      %1512 = vmatprep.subr.bf16.mxu0 %v1020
      %1513 = vmatpush1.bf16.msra.mxu0 %v1019
      %1514 = vmatprep.subr.bf16.mxu0 %v1024
      %1515 = vmatpush1.bf16.msra.mxu0 %v1023
      %1516 = vmatprep.subr.bf16.mxu0 %v1028
      %1517 = vmatpush1.bf16.msra.mxu0 %v1027
      %1518 = vmatprep.subr.bf16.mxu0 %v1032
      %1519 = vmatpush1.bf16.msra.mxu0 %v1031
      %1520 = vmatprep.subr.bf16.mxu0 0
      %1521 = vmatpush1.bf16.msra.mxu0 0
      %1522 = vmatprep.subr.bf16.mxu0 0
      %1523 = vmatpush1.bf16.msra.mxu0 0
      %1524 = vmatprep.subr.bf16.mxu0 0
      %1525 = vmatpush1.bf16.msra.mxu0 0
      %1526 = vmatprep.subr.bf16.mxu0 0
      %1527 = vmatpush1.bf16.msra.mxu0 0
      %1528 = vmatprep.subr.bf16.mxu0 0
      %1529 = vmatpush1.bf16.msra.mxu0 0
      %1530 = vmatprep.subr.bf16.mxu0 0
      %1531 = vmatpush1.bf16.msra.mxu0 0
      %1532 = vmatprep.subr.bf16.mxu0 0
      %1533 = vmatpush1.bf16.msra.mxu0 0
      %1534 = vmatprep.subr.bf16.mxu0 0
      %1535 = vmatpush1.bf16.msra.mxu0 0
      %1536 = vmatprep.mubr.bf16.mxu0 0
      %1537 = vmatmul.mubr.bf16.gmra.mrb[0].mxu0 %v1496
      %v1538 = vpop.f32.mrb[0].mxu0
      %v1539 = vadd.f32 0.0, %v1538
      %v1540 = vpop.f32.mrb[0].mxu0
      %v1541 = vadd.f32 0.0, %v1540
      %v1542 = vpop.f32.mrb[0].mxu0
      %v1543 = vpop.f32.mrb[0].mxu0
      %1544 = vdwg.mxu0
      %1545 = vmatprep.subr.bf16.mxu0 %v1006
      %1546 = vmatpush1.bf16.msra.mxu0 %v1005
      %1547 = vmatprep.subr.bf16.mxu0 %v1010
      %1548 = vmatpush1.bf16.msra.mxu0 %v1009
      %1549 = vmatprep.subr.bf16.mxu0 %v1014
      %1550 = vmatpush1.bf16.msra.mxu0 %v1013
      %1551 = vmatprep.subr.bf16.mxu0 %v1018
      %1552 = vmatpush1.bf16.msra.mxu0 %v1017
      %1553 = vmatprep.subr.bf16.mxu0 %v1022
      %1554 = vmatpush1.bf16.msra.mxu0 %v1021
      %1555 = vmatprep.subr.bf16.mxu0 %v1026
      %1556 = vmatpush1.bf16.msra.mxu0 %v1025
      %1557 = vmatprep.subr.bf16.mxu0 %v1030
      %1558 = vmatpush1.bf16.msra.mxu0 %v1029
      %1559 = vmatprep.subr.bf16.mxu0 %v1034
      %1560 = vmatpush1.bf16.msra.mxu0 %v1033
      %1561 = vmatprep.subr.bf16.mxu0 0
      %1562 = vmatpush1.bf16.msra.mxu0 0
      %1563 = vmatprep.subr.bf16.mxu0 0
      %1564 = vmatpush1.bf16.msra.mxu0 0
      %1565 = vmatprep.subr.bf16.mxu0 0
      %1566 = vmatpush1.bf16.msra.mxu0 0
      %1567 = vmatprep.subr.bf16.mxu0 0
      %1568 = vmatpush1.bf16.msra.mxu0 0
      %1569 = vmatprep.subr.bf16.mxu0 0
      %1570 = vmatpush1.bf16.msra.mxu0 0
      %1571 = vmatprep.subr.bf16.mxu0 0
      %1572 = vmatpush1.bf16.msra.mxu0 0
      %1573 = vmatprep.subr.bf16.mxu0 0
      %1574 = vmatpush1.bf16.msra.mxu0 0
      %1575 = vmatprep.subr.bf16.mxu0 0
      %1576 = vmatpush1.bf16.msra.mxu0 0
      %1577 = vmatprep.mubr.bf16.mxu0 0
      %1578 = vmatmul.mubr.bf16.gmra.mrb[0].mxu0 %v1496
      %v1579 = vpop.f32.mrb[0].mxu0
      %v1580 = vadd.f32 0.0, %v1579
      %v1581 = vpop.f32.mrb[0].mxu0
      %v1582 = vadd.f32 0.0, %v1581
      %v1583 = vpop.f32.mrb[0].mxu0
      %v1584 = vpop.f32.mrb[0].mxu0
      %1585 = vdwg.mxu0
      %v1586 = vadd.f32 %v1500, %v1539
      %v1587 = vadd.f32 %v1501, %v1541
      %v1588 = vadd.f32 %v1502, %v1580
      %v1589 = vadd.f32 %v1503, %v1582
      %v1590 = vxor.u32 %v1586, 2147483648
      %v1591 = vmul.f32 %v1590, 1.442695
      %v1592 = vpow.pop %v1591
      %v1593 = vadd.f32 %v1592, 1.0
      %v1594 = vrcp.pop %v1593
      %v1595 = vmul.f32 1.0, %v1594
      %v1596 = vxor.u32 %v1587, 2147483648
      %v1597 = vmul.f32 %v1596, 1.442695
      %v1598 = vpow.pop %v1597
      %v1599 = vadd.f32 %v1598, 1.0
      %v1600 = vrcp.pop %v1599
      %v1601 = vmul.f32 1.0, %v1600
      %v1602 = vtanh.pop %v1588
      %v1603 = vxor.u32 %v1589, 2147483648
      %v1604 = vmul.f32 %v1603, 1.442695
      %v1605 = vpow.pop %v1604
      %v1606 = vadd.f32 %v1605, 1.0
      %v1607 = vrcp.pop %v1606
      %v1608 = vmul.f32 1.0, %v1607
      %v1609 = vld [vmem:[#allocation3] sm:$0xff]
      %v1610 = vmul.f32 %v1601, %v1609
      %v1611 = vmul.f32 %v1595, %v1602
      %v1612 = vadd.f32 %v1610, %v1611
      %v1613 = vtanh.pop %v1612
      %v1614 = vmul.f32 %v1608, %v1613
      %v1615 = vunpack.c.l.bf16 %v1496
      %v1616 = vsel %vm1495, 1, 0
      %1617 = vset.pattern.permute.xlu0 0
      %1618 = vperm.xlu0 %1617, %v1616
      %v1619 = vpop.permute.xlu0 %1618
      %vm1620 = vcmp.eq.s32.totalorder %v1619, 1
      %v1621 = vsel %vm1620, %v1614, %v1615
      %v1622 = vpack.c.bf16 %v1621, %v1621
      %1623 = vst [vmem:[#allocation2] sm:$0xf] %v1622
      %v1624 = vld [vmem:[#allocation3] sm:$0xff]
      %v1625 = vsel %vm1620, %v1612, %v1624
      %1626 = vst [vmem:[#allocation3] sm:$0xff] %v1625
      %s1627 = sadd.s32 %s1190, 2
      %v1628 = vstv %s1627
      %vm1629 = vcmp.gt.s32.totalorder %v332, %v1628
      %v1630 = vld [vmem:[#allocation4] sm:$0xf]
      %s1631 = scalar_lea.vmem [#allocation7], 32
      %v1632 = vld [vmem:[%s1631] sm:$0xff]
      %v1633 = vld [vmem:[%s1631 + $0x8] sm:$0xff]
      %v1634 = vunpack.c.l.bf16 %v1632
      %v1635 = vunpack.c.h.bf16 %v1632
      %v1636 = vunpack.c.l.bf16 %v1633
      %v1637 = vunpack.c.h.bf16 %v1633
      %1638 = vmatprep.subr.bf16.mxu0 %v1299
      %1639 = vmatpush1.bf16.msra.mxu0 %v1298
      %1640 = vmatprep.subr.bf16.mxu0 %v1303
      %1641 = vmatpush1.bf16.msra.mxu0 %v1302
      %1642 = vmatprep.subr.bf16.mxu0 %v1307
      %1643 = vmatpush1.bf16.msra.mxu0 %v1306
      %1644 = vmatprep.subr.bf16.mxu0 %v1311
      %1645 = vmatpush1.bf16.msra.mxu0 %v1310
      %1646 = vmatprep.subr.bf16.mxu0 %v1315
      %1647 = vmatpush1.bf16.msra.mxu0 %v1314
      %1648 = vmatprep.subr.bf16.mxu0 %v1319
      %1649 = vmatpush1.bf16.msra.mxu0 %v1318
      %1650 = vmatprep.subr.bf16.mxu0 %v1323
      %1651 = vmatpush1.bf16.msra.mxu0 %v1322
      %1652 = vmatprep.subr.bf16.mxu0 %v1327
      %1653 = vmatpush1.bf16.msra.mxu0 %v1326
      %1654 = vmatprep.subr.bf16.mxu0 0
      %1655 = vmatpush1.bf16.msra.mxu0 0
      %1656 = vmatprep.subr.bf16.mxu0 0
      %1657 = vmatpush1.bf16.msra.mxu0 0
      %1658 = vmatprep.subr.bf16.mxu0 0
      %1659 = vmatpush1.bf16.msra.mxu0 0
      %1660 = vmatprep.subr.bf16.mxu0 0
      %1661 = vmatpush1.bf16.msra.mxu0 0
      %1662 = vmatprep.subr.bf16.mxu0 0
      %1663 = vmatpush1.bf16.msra.mxu0 0
      %1664 = vmatprep.subr.bf16.mxu0 0
      %1665 = vmatpush1.bf16.msra.mxu0 0
      %1666 = vmatprep.subr.bf16.mxu0 0
      %1667 = vmatpush1.bf16.msra.mxu0 0
      %1668 = vmatprep.subr.bf16.mxu0 0
      %1669 = vmatpush1.bf16.msra.mxu0 0
      %1670 = vmatprep.mubr.bf16.mxu0 0
      %1671 = vmatmul.mubr.bf16.gmra.mrb[0].mxu0 %v1630
      %v1672 = vpop.f32.mrb[0].mxu0
      %v1673 = vadd.f32 0.0, %v1672
      %v1674 = vpop.f32.mrb[0].mxu0
      %v1675 = vadd.f32 0.0, %v1674
      %v1676 = vpop.f32.mrb[0].mxu0
      %v1677 = vpop.f32.mrb[0].mxu0
      %1678 = vdwg.mxu0
      %1679 = vmatprep.subr.bf16.mxu0 %v1301
      %1680 = vmatpush1.bf16.msra.mxu0 %v1300
      %1681 = vmatprep.subr.bf16.mxu0 %v1305
      %1682 = vmatpush1.bf16.msra.mxu0 %v1304
      %1683 = vmatprep.subr.bf16.mxu0 %v1309
      %1684 = vmatpush1.bf16.msra.mxu0 %v1308
      %1685 = vmatprep.subr.bf16.mxu0 %v1313
      %1686 = vmatpush1.bf16.msra.mxu0 %v1312
      %1687 = vmatprep.subr.bf16.mxu0 %v1317
      %1688 = vmatpush1.bf16.msra.mxu0 %v1316
      %1689 = vmatprep.subr.bf16.mxu0 %v1321
      %1690 = vmatpush1.bf16.msra.mxu0 %v1320
      %1691 = vmatprep.subr.bf16.mxu0 %v1325
      %1692 = vmatpush1.bf16.msra.mxu0 %v1324
      %1693 = vmatprep.subr.bf16.mxu0 %v1329
      %1694 = vmatpush1.bf16.msra.mxu0 %v1328
      %1695 = vmatprep.subr.bf16.mxu0 0
      %1696 = vmatpush1.bf16.msra.mxu0 0
      %1697 = vmatprep.subr.bf16.mxu0 0
      %1698 = vmatpush1.bf16.msra.mxu0 0
      %1699 = vmatprep.subr.bf16.mxu0 0
      %1700 = vmatpush1.bf16.msra.mxu0 0
      %1701 = vmatprep.subr.bf16.mxu0 0
      %1702 = vmatpush1.bf16.msra.mxu0 0
      %1703 = vmatprep.subr.bf16.mxu0 0
      %1704 = vmatpush1.bf16.msra.mxu0 0
      %1705 = vmatprep.subr.bf16.mxu0 0
      %1706 = vmatpush1.bf16.msra.mxu0 0
      %1707 = vmatprep.subr.bf16.mxu0 0
      %1708 = vmatpush1.bf16.msra.mxu0 0
      %1709 = vmatprep.subr.bf16.mxu0 0
      %1710 = vmatpush1.bf16.msra.mxu0 0
      %1711 = vmatprep.mubr.bf16.mxu0 0
      %1712 = vmatmul.mubr.bf16.gmra.mrb[0].mxu0 %v1630
      %v1713 = vpop.f32.mrb[0].mxu0
      %v1714 = vadd.f32 0.0, %v1713
      %v1715 = vpop.f32.mrb[0].mxu0
      %v1716 = vadd.f32 0.0, %v1715
      %v1717 = vpop.f32.mrb[0].mxu0
      %v1718 = vpop.f32.mrb[0].mxu0
      %1719 = vdwg.mxu0
      %v1720 = vadd.f32 %v1634, %v1673
      %v1721 = vadd.f32 %v1635, %v1675
      %v1722 = vadd.f32 %v1636, %v1714
      %v1723 = vadd.f32 %v1637, %v1716
      %v1724 = vxor.u32 %v1720, 2147483648
      %v1725 = vmul.f32 %v1724, 1.442695
      %v1726 = vpow.pop %v1725
      %v1727 = vadd.f32 %v1726, 1.0
      %v1728 = vrcp.pop %v1727
      %v1729 = vmul.f32 1.0, %v1728
      %v1730 = vxor.u32 %v1721, 2147483648
      %v1731 = vmul.f32 %v1730, 1.442695
      %v1732 = vpow.pop %v1731
      %v1733 = vadd.f32 %v1732, 1.0
      %v1734 = vrcp.pop %v1733
      %v1735 = vmul.f32 1.0, %v1734
      %v1736 = vtanh.pop %v1722
      %v1737 = vxor.u32 %v1723, 2147483648
      %v1738 = vmul.f32 %v1737, 1.442695
      %v1739 = vpow.pop %v1738
      %v1740 = vadd.f32 %v1739, 1.0
      %v1741 = vrcp.pop %v1740
      %v1742 = vmul.f32 1.0, %v1741
      %v1743 = vld [vmem:[#allocation5] sm:$0xff]
      %v1744 = vmul.f32 %v1735, %v1743
      %v1745 = vmul.f32 %v1729, %v1736
      %v1746 = vadd.f32 %v1744, %v1745
      %v1747 = vtanh.pop %v1746
      %v1748 = vmul.f32 %v1742, %v1747
      %v1749 = vunpack.c.l.bf16 %v1630
      %v1750 = vsel %vm1629, 1, 0
      %1751 = vset.pattern.permute.xlu0 0
      %1752 = vperm.xlu0 %1751, %v1750
      %v1753 = vpop.permute.xlu0 %1752
      %vm1754 = vcmp.eq.s32.totalorder %v1753, 1
      %v1755 = vsel %vm1754, %v1748, %v1749
      %v1756 = vpack.c.bf16 %v1755, %v1755
      %1757 = vst [vmem:[#allocation4] sm:$0xf] %v1756
      %v1758 = vld [vmem:[#allocation5] sm:$0xff]
      %v1759 = vsel %vm1754, %v1746, %v1758
      %1760 = vst [vmem:[#allocation5] sm:$0xff] %v1759
      %v1761 = vsel %vm1620, %v1614, 0.0
      %v1762 = vpack.c.bf16 %v1761, %v1761
      %s1763 = scalar_lea.vmem %s320, 4
      %1764 = vst.msk [vmem:[%s1763] sm:$0xf] %vm1487, %v1762
      %v1765 = vsel %vm1754, %v1748, 0.0
      %v1766 = vpack.c.bf16 %v1765, %v1765
      %s1767 = scalar_lea.vmem %s327, 8
      %1768 = vst.msk [vmem:[%s1767] sm:$0xf] %vm1487, %v1766
      %s1769 = sadd.s32 %s897, 2
      %v1770 = vstv %s1769
      %vm1771 = vcmp.gt.s32.totalorder %v332, %v1770
      %v1772 = vld [vmem:[#allocation2] sm:$0xf]
      %s1773 = scalar_lea.vmem [#allocation6], 32
      %v1774 = vld [vmem:[%s1773] sm:$0xff]
      %v1775 = vld [vmem:[%s1773 + $0x8] sm:$0xff]
      %v1776 = vunpack.c.l.bf16 %v1774
      %v1777 = vunpack.c.h.bf16 %v1774
      %v1778 = vunpack.c.l.bf16 %v1775
      %v1779 = vunpack.c.h.bf16 %v1775
      %1780 = vmatprep.subr.bf16.mxu0 %v1004
      %1781 = vmatpush1.bf16.msra.mxu0 %v1003
      %1782 = vmatprep.subr.bf16.mxu0 %v1008
      %1783 = vmatpush1.bf16.msra.mxu0 %v1007
      %1784 = vmatprep.subr.bf16.mxu0 %v1012
      %1785 = vmatpush1.bf16.msra.mxu0 %v1011
      %1786 = vmatprep.subr.bf16.mxu0 %v1016
      %1787 = vmatpush1.bf16.msra.mxu0 %v1015
      %1788 = vmatprep.subr.bf16.mxu0 %v1020
      %1789 = vmatpush1.bf16.msra.mxu0 %v1019
      %1790 = vmatprep.subr.bf16.mxu0 %v1024
      %1791 = vmatpush1.bf16.msra.mxu0 %v1023
      %1792 = vmatprep.subr.bf16.mxu0 %v1028
      %1793 = vmatpush1.bf16.msra.mxu0 %v1027
      %1794 = vmatprep.subr.bf16.mxu0 %v1032
      %1795 = vmatpush1.bf16.msra.mxu0 %v1031
      %1796 = vmatprep.subr.bf16.mxu0 0
      %1797 = vmatpush1.bf16.msra.mxu0 0
      %1798 = vmatprep.subr.bf16.mxu0 0
      %1799 = vmatpush1.bf16.msra.mxu0 0
      %1800 = vmatprep.subr.bf16.mxu0 0
      %1801 = vmatpush1.bf16.msra.mxu0 0
      %1802 = vmatprep.subr.bf16.mxu0 0
      %1803 = vmatpush1.bf16.msra.mxu0 0
      %1804 = vmatprep.subr.bf16.mxu0 0
      %1805 = vmatpush1.bf16.msra.mxu0 0
      %1806 = vmatprep.subr.bf16.mxu0 0
      %1807 = vmatpush1.bf16.msra.mxu0 0
      %1808 = vmatprep.subr.bf16.mxu0 0
      %1809 = vmatpush1.bf16.msra.mxu0 0
      %1810 = vmatprep.subr.bf16.mxu0 0
      %1811 = vmatpush1.bf16.msra.mxu0 0
      %1812 = vmatprep.mubr.bf16.mxu0 0
      %1813 = vmatmul.mubr.bf16.gmra.mrb[0].mxu0 %v1772
      %v1814 = vpop.f32.mrb[0].mxu0
      %v1815 = vadd.f32 0.0, %v1814
      %v1816 = vpop.f32.mrb[0].mxu0
      %v1817 = vadd.f32 0.0, %v1816
      %v1818 = vpop.f32.mrb[0].mxu0
      %v1819 = vpop.f32.mrb[0].mxu0
      %1820 = vdwg.mxu0
      %1821 = vmatprep.subr.bf16.mxu0 %v1006
      %1822 = vmatpush1.bf16.msra.mxu0 %v1005
      %1823 = vmatprep.subr.bf16.mxu0 %v1010
      %1824 = vmatpush1.bf16.msra.mxu0 %v1009
      %1825 = vmatprep.subr.bf16.mxu0 %v1014
      %1826 = vmatpush1.bf16.msra.mxu0 %v1013
      %1827 = vmatprep.subr.bf16.mxu0 %v1018
      %1828 = vmatpush1.bf16.msra.mxu0 %v1017
      %1829 = vmatprep.subr.bf16.mxu0 %v1022
      %1830 = vmatpush1.bf16.msra.mxu0 %v1021
      %1831 = vmatprep.subr.bf16.mxu0 %v1026
      %1832 = vmatpush1.bf16.msra.mxu0 %v1025
      %1833 = vmatprep.subr.bf16.mxu0 %v1030
      %1834 = vmatpush1.bf16.msra.mxu0 %v1029
      %1835 = vmatprep.subr.bf16.mxu0 %v1034
      %1836 = vmatpush1.bf16.msra.mxu0 %v1033
      %1837 = vmatprep.subr.bf16.mxu0 0
      %1838 = vmatpush1.bf16.msra.mxu0 0
      %1839 = vmatprep.subr.bf16.mxu0 0
      %1840 = vmatpush1.bf16.msra.mxu0 0
      %1841 = vmatprep.subr.bf16.mxu0 0
      %1842 = vmatpush1.bf16.msra.mxu0 0
      %1843 = vmatprep.subr.bf16.mxu0 0
      %1844 = vmatpush1.bf16.msra.mxu0 0
      %1845 = vmatprep.subr.bf16.mxu0 0
      %1846 = vmatpush1.bf16.msra.mxu0 0
      %1847 = vmatprep.subr.bf16.mxu0 0
      %1848 = vmatpush1.bf16.msra.mxu0 0
      %1849 = vmatprep.subr.bf16.mxu0 0
      %1850 = vmatpush1.bf16.msra.mxu0 0
      %1851 = vmatprep.subr.bf16.mxu0 0
      %1852 = vmatpush1.bf16.msra.mxu0 0
      %1853 = vmatprep.mubr.bf16.mxu0 0
      %1854 = vmatmul.mubr.bf16.gmra.mrb[0].mxu0 %v1772
      %v1855 = vpop.f32.mrb[0].mxu0
      %v1856 = vadd.f32 0.0, %v1855
      %v1857 = vpop.f32.mrb[0].mxu0
      %v1858 = vadd.f32 0.0, %v1857
      %v1859 = vpop.f32.mrb[0].mxu0
      %v1860 = vpop.f32.mrb[0].mxu0
      %1861 = vdwg.mxu0
      %v1862 = vadd.f32 %v1776, %v1815
      %v1863 = vadd.f32 %v1777, %v1817
      %v1864 = vadd.f32 %v1778, %v1856
      %v1865 = vadd.f32 %v1779, %v1858
      %v1866 = vxor.u32 %v1862, 2147483648
      %v1867 = vmul.f32 %v1866, 1.442695
      %v1868 = vpow.pop %v1867
      %v1869 = vadd.f32 %v1868, 1.0
      %v1870 = vrcp.pop %v1869
      %v1871 = vmul.f32 1.0, %v1870
      %v1872 = vxor.u32 %v1863, 2147483648
      %v1873 = vmul.f32 %v1872, 1.442695
      %v1874 = vpow.pop %v1873
      %v1875 = vadd.f32 %v1874, 1.0
      %v1876 = vrcp.pop %v1875
      %v1877 = vmul.f32 1.0, %v1876
      %v1878 = vtanh.pop %v1864
      %v1879 = vxor.u32 %v1865, 2147483648
      %v1880 = vmul.f32 %v1879, 1.442695
      %v1881 = vpow.pop %v1880
      %v1882 = vadd.f32 %v1881, 1.0
      %v1883 = vrcp.pop %v1882
      %v1884 = vmul.f32 1.0, %v1883
      %v1885 = vld [vmem:[#allocation3] sm:$0xff]
      %v1886 = vmul.f32 %v1877, %v1885
      %v1887 = vmul.f32 %v1871, %v1878
      %v1888 = vadd.f32 %v1886, %v1887
      %v1889 = vtanh.pop %v1888
      %v1890 = vmul.f32 %v1884, %v1889
      %v1891 = vunpack.c.l.bf16 %v1772
      %v1892 = vsel %vm1771, 1, 0
      %1893 = vset.pattern.permute.xlu0 0
      %1894 = vperm.xlu0 %1893, %v1892
      %v1895 = vpop.permute.xlu0 %1894
      %vm1896 = vcmp.eq.s32.totalorder %v1895, 1
      %v1897 = vsel %vm1896, %v1890, %v1891
      %v1898 = vpack.c.bf16 %v1897, %v1897
      %1899 = vst [vmem:[#allocation2] sm:$0xf] %v1898
      %v1900 = vld [vmem:[#allocation3] sm:$0xff]
      %v1901 = vsel %vm1896, %v1888, %v1900
      %1902 = vst [vmem:[#allocation3] sm:$0xff] %v1901
      %s1903 = sadd.s32 %s1190, 1
      %v1904 = vstv %s1903
      %vm1905 = vcmp.gt.s32.totalorder %v332, %v1904
      %v1906 = vld [vmem:[#allocation4] sm:$0xf]
      %s1907 = scalar_lea.vmem [#allocation7], 16
      %v1908 = vld [vmem:[%s1907] sm:$0xff]
      %v1909 = vld [vmem:[%s1907 + $0x8] sm:$0xff]
      %v1910 = vunpack.c.l.bf16 %v1908
      %v1911 = vunpack.c.h.bf16 %v1908
      %v1912 = vunpack.c.l.bf16 %v1909
      %v1913 = vunpack.c.h.bf16 %v1909
      %1914 = vmatprep.subr.bf16.mxu0 %v1299
      %1915 = vmatpush1.bf16.msra.mxu0 %v1298
      %1916 = vmatprep.subr.bf16.mxu0 %v1303
      %1917 = vmatpush1.bf16.msra.mxu0 %v1302
      %1918 = vmatprep.subr.bf16.mxu0 %v1307
      %1919 = vmatpush1.bf16.msra.mxu0 %v1306
      %1920 = vmatprep.subr.bf16.mxu0 %v1311
      %1921 = vmatpush1.bf16.msra.mxu0 %v1310
      %1922 = vmatprep.subr.bf16.mxu0 %v1315
      %1923 = vmatpush1.bf16.msra.mxu0 %v1314
      %1924 = vmatprep.subr.bf16.mxu0 %v1319
      %1925 = vmatpush1.bf16.msra.mxu0 %v1318
      %1926 = vmatprep.subr.bf16.mxu0 %v1323
      %1927 = vmatpush1.bf16.msra.mxu0 %v1322
      %1928 = vmatprep.subr.bf16.mxu0 %v1327
      %1929 = vmatpush1.bf16.msra.mxu0 %v1326
      %1930 = vmatprep.subr.bf16.mxu0 0
      %1931 = vmatpush1.bf16.msra.mxu0 0
      %1932 = vmatprep.subr.bf16.mxu0 0
      %1933 = vmatpush1.bf16.msra.mxu0 0
      %1934 = vmatprep.subr.bf16.mxu0 0
      %1935 = vmatpush1.bf16.msra.mxu0 0
      %1936 = vmatprep.subr.bf16.mxu0 0
      %1937 = vmatpush1.bf16.msra.mxu0 0
      %1938 = vmatprep.subr.bf16.mxu0 0
      %1939 = vmatpush1.bf16.msra.mxu0 0
      %1940 = vmatprep.subr.bf16.mxu0 0
      %1941 = vmatpush1.bf16.msra.mxu0 0
      %1942 = vmatprep.subr.bf16.mxu0 0
      %1943 = vmatpush1.bf16.msra.mxu0 0
      %1944 = vmatprep.subr.bf16.mxu0 0
      %1945 = vmatpush1.bf16.msra.mxu0 0
      %1946 = vmatprep.mubr.bf16.mxu0 0
      %1947 = vmatmul.mubr.bf16.gmra.mrb[0].mxu0 %v1906
      %v1948 = vpop.f32.mrb[0].mxu0
      %v1949 = vadd.f32 0.0, %v1948
      %v1950 = vpop.f32.mrb[0].mxu0
      %v1951 = vadd.f32 0.0, %v1950
      %v1952 = vpop.f32.mrb[0].mxu0
      %v1953 = vpop.f32.mrb[0].mxu0
      %1954 = vdwg.mxu0
      %1955 = vmatprep.subr.bf16.mxu0 %v1301
      %1956 = vmatpush1.bf16.msra.mxu0 %v1300
      %1957 = vmatprep.subr.bf16.mxu0 %v1305
      %1958 = vmatpush1.bf16.msra.mxu0 %v1304
      %1959 = vmatprep.subr.bf16.mxu0 %v1309
      %1960 = vmatpush1.bf16.msra.mxu0 %v1308
      %1961 = vmatprep.subr.bf16.mxu0 %v1313
      %1962 = vmatpush1.bf16.msra.mxu0 %v1312
      %1963 = vmatprep.subr.bf16.mxu0 %v1317
      %1964 = vmatpush1.bf16.msra.mxu0 %v1316
      %1965 = vmatprep.subr.bf16.mxu0 %v1321
      %1966 = vmatpush1.bf16.msra.mxu0 %v1320
      %1967 = vmatprep.subr.bf16.mxu0 %v1325
      %1968 = vmatpush1.bf16.msra.mxu0 %v1324
      %1969 = vmatprep.subr.bf16.mxu0 %v1329
      %1970 = vmatpush1.bf16.msra.mxu0 %v1328
      %1971 = vmatprep.subr.bf16.mxu0 0
      %1972 = vmatpush1.bf16.msra.mxu0 0
      %1973 = vmatprep.subr.bf16.mxu0 0
      %1974 = vmatpush1.bf16.msra.mxu0 0
      %1975 = vmatprep.subr.bf16.mxu0 0
      %1976 = vmatpush1.bf16.msra.mxu0 0
      %1977 = vmatprep.subr.bf16.mxu0 0
      %1978 = vmatpush1.bf16.msra.mxu0 0
      %1979 = vmatprep.subr.bf16.mxu0 0
      %1980 = vmatpush1.bf16.msra.mxu0 0
      %1981 = vmatprep.subr.bf16.mxu0 0
      %1982 = vmatpush1.bf16.msra.mxu0 0
      %1983 = vmatprep.subr.bf16.mxu0 0
      %1984 = vmatpush1.bf16.msra.mxu0 0
      %1985 = vmatprep.subr.bf16.mxu0 0
      %1986 = vmatpush1.bf16.msra.mxu0 0
      %1987 = vmatprep.mubr.bf16.mxu0 0
      %1988 = vmatmul.mubr.bf16.gmra.mrb[0].mxu0 %v1906
      %v1989 = vpop.f32.mrb[0].mxu0
      %v1990 = vadd.f32 0.0, %v1989
      %v1991 = vpop.f32.mrb[0].mxu0
      %v1992 = vadd.f32 0.0, %v1991
      %v1993 = vpop.f32.mrb[0].mxu0
      %v1994 = vpop.f32.mrb[0].mxu0
      %1995 = vdwg.mxu0
      %v1996 = vadd.f32 %v1910, %v1949
      %v1997 = vadd.f32 %v1911, %v1951
      %v1998 = vadd.f32 %v1912, %v1990
      %v1999 = vadd.f32 %v1913, %v1992
      %v2000 = vxor.u32 %v1996, 2147483648
      %v2001 = vmul.f32 %v2000, 1.442695
      %v2002 = vpow.pop %v2001
      %v2003 = vadd.f32 %v2002, 1.0
      %v2004 = vrcp.pop %v2003
      %v2005 = vmul.f32 1.0, %v2004
      %v2006 = vxor.u32 %v1997, 2147483648
      %v2007 = vmul.f32 %v2006, 1.442695
      %v2008 = vpow.pop %v2007
      %v2009 = vadd.f32 %v2008, 1.0
      %v2010 = vrcp.pop %v2009
      %v2011 = vmul.f32 1.0, %v2010
      %v2012 = vtanh.pop %v1998
      %v2013 = vxor.u32 %v1999, 2147483648
      %v2014 = vmul.f32 %v2013, 1.442695
      %v2015 = vpow.pop %v2014
      %v2016 = vadd.f32 %v2015, 1.0
      %v2017 = vrcp.pop %v2016
      %v2018 = vmul.f32 1.0, %v2017
      %v2019 = vld [vmem:[#allocation5] sm:$0xff]
      %v2020 = vmul.f32 %v2011, %v2019
      %v2021 = vmul.f32 %v2005, %v2012
      %v2022 = vadd.f32 %v2020, %v2021
      %v2023 = vtanh.pop %v2022
      %v2024 = vmul.f32 %v2018, %v2023
      %v2025 = vunpack.c.l.bf16 %v1906
      %v2026 = vsel %vm1905, 1, 0
      %2027 = vset.pattern.permute.xlu0 0
      %2028 = vperm.xlu0 %2027, %v2026
      %v2029 = vpop.permute.xlu0 %2028
      %vm2030 = vcmp.eq.s32.totalorder %v2029, 1
      %v2031 = vsel %vm2030, %v2024, %v2025
      %v2032 = vpack.c.bf16 %v2031, %v2031
      %2033 = vst [vmem:[#allocation4] sm:$0xf] %v2032
      %v2034 = vld [vmem:[#allocation5] sm:$0xff]
      %v2035 = vsel %vm2030, %v2022, %v2034
      %2036 = vst [vmem:[#allocation5] sm:$0xff] %v2035
      %v2037 = vsel %vm1896, %v1890, 0.0
      %v2038 = vpack.c.bf16 %v2037, %v2037
      %s2039 = scalar_lea.vmem %s320, 8
      %2040 = vst.msk [vmem:[%s2039] sm:$0xf] %vm1487, %v2038
      %v2041 = vsel %vm2030, %v2024, 0.0
      %v2042 = vpack.c.bf16 %v2041, %v2041
      %s2043 = scalar_lea.vmem %s327, 4
      %2044 = vst.msk [vmem:[%s2043] sm:$0xf] %vm1487, %v2042
      %s2045 = sadd.s32 %s897, 3
      %v2046 = vstv %s2045
      %vm2047 = vcmp.gt.s32.totalorder %v332, %v2046
      %v2048 = vld [vmem:[#allocation2] sm:$0xf]
      %s2049 = scalar_lea.vmem [#allocation6], 48
      %v2050 = vld [vmem:[%s2049] sm:$0xff]
      %v2051 = vld [vmem:[%s2049 + $0x8] sm:$0xff]
      %v2052 = vunpack.c.l.bf16 %v2050
      %v2053 = vunpack.c.h.bf16 %v2050
      %v2054 = vunpack.c.l.bf16 %v2051
      %v2055 = vunpack.c.h.bf16 %v2051
      %2056 = vmatprep.subr.bf16.mxu0 %v1004
      %2057 = vmatpush1.bf16.msra.mxu0 %v1003
      %2058 = vmatprep.subr.bf16.mxu0 %v1008
      %2059 = vmatpush1.bf16.msra.mxu0 %v1007
      %2060 = vmatprep.subr.bf16.mxu0 %v1012
      %2061 = vmatpush1.bf16.msra.mxu0 %v1011
      %2062 = vmatprep.subr.bf16.mxu0 %v1016
      %2063 = vmatpush1.bf16.msra.mxu0 %v1015
      %2064 = vmatprep.subr.bf16.mxu0 %v1020
      %2065 = vmatpush1.bf16.msra.mxu0 %v1019
      %2066 = vmatprep.subr.bf16.mxu0 %v1024
      %2067 = vmatpush1.bf16.msra.mxu0 %v1023
      %2068 = vmatprep.subr.bf16.mxu0 %v1028
      %2069 = vmatpush1.bf16.msra.mxu0 %v1027
      %2070 = vmatprep.subr.bf16.mxu0 %v1032
      %2071 = vmatpush1.bf16.msra.mxu0 %v1031
      %2072 = vmatprep.subr.bf16.mxu0 0
      %2073 = vmatpush1.bf16.msra.mxu0 0
      %2074 = vmatprep.subr.bf16.mxu0 0
      %2075 = vmatpush1.bf16.msra.mxu0 0
      %2076 = vmatprep.subr.bf16.mxu0 0
      %2077 = vmatpush1.bf16.msra.mxu0 0
      %2078 = vmatprep.subr.bf16.mxu0 0
      %2079 = vmatpush1.bf16.msra.mxu0 0
      %2080 = vmatprep.subr.bf16.mxu0 0
      %2081 = vmatpush1.bf16.msra.mxu0 0
      %2082 = vmatprep.subr.bf16.mxu0 0
      %2083 = vmatpush1.bf16.msra.mxu0 0
      %2084 = vmatprep.subr.bf16.mxu0 0
      %2085 = vmatpush1.bf16.msra.mxu0 0
      %2086 = vmatprep.subr.bf16.mxu0 0
      %2087 = vmatpush1.bf16.msra.mxu0 0
      %2088 = vmatprep.mubr.bf16.mxu0 0
      %2089 = vmatmul.mubr.bf16.gmra.mrb[0].mxu0 %v2048
      %v2090 = vpop.f32.mrb[0].mxu0
      %v2091 = vadd.f32 0.0, %v2090
      %v2092 = vpop.f32.mrb[0].mxu0
      %v2093 = vadd.f32 0.0, %v2092
      %v2094 = vpop.f32.mrb[0].mxu0
      %v2095 = vpop.f32.mrb[0].mxu0
      %2096 = vdwg.mxu0
      %2097 = vmatprep.subr.bf16.mxu0 %v1006
      %2098 = vmatpush1.bf16.msra.mxu0 %v1005
      %2099 = vmatprep.subr.bf16.mxu0 %v1010
      %2100 = vmatpush1.bf16.msra.mxu0 %v1009
      %2101 = vmatprep.subr.bf16.mxu0 %v1014
      %2102 = vmatpush1.bf16.msra.mxu0 %v1013
      %2103 = vmatprep.subr.bf16.mxu0 %v1018
      %2104 = vmatpush1.bf16.msra.mxu0 %v1017
      %2105 = vmatprep.subr.bf16.mxu0 %v1022
      %2106 = vmatpush1.bf16.msra.mxu0 %v1021
      %2107 = vmatprep.subr.bf16.mxu0 %v1026
      %2108 = vmatpush1.bf16.msra.mxu0 %v1025
      %2109 = vmatprep.subr.bf16.mxu0 %v1030
      %2110 = vmatpush1.bf16.msra.mxu0 %v1029
      %2111 = vmatprep.subr.bf16.mxu0 %v1034
      %2112 = vmatpush1.bf16.msra.mxu0 %v1033
      %2113 = vmatprep.subr.bf16.mxu0 0
      %2114 = vmatpush1.bf16.msra.mxu0 0
      %2115 = vmatprep.subr.bf16.mxu0 0
      %2116 = vmatpush1.bf16.msra.mxu0 0
      %2117 = vmatprep.subr.bf16.mxu0 0
      %2118 = vmatpush1.bf16.msra.mxu0 0
      %2119 = vmatprep.subr.bf16.mxu0 0
      %2120 = vmatpush1.bf16.msra.mxu0 0
      %2121 = vmatprep.subr.bf16.mxu0 0
      %2122 = vmatpush1.bf16.msra.mxu0 0
      %2123 = vmatprep.subr.bf16.mxu0 0
      %2124 = vmatpush1.bf16.msra.mxu0 0
      %2125 = vmatprep.subr.bf16.mxu0 0
      %2126 = vmatpush1.bf16.msra.mxu0 0
      %2127 = vmatprep.subr.bf16.mxu0 0
      %2128 = vmatpush1.bf16.msra.mxu0 0
      %2129 = vmatprep.mubr.bf16.mxu0 0
      %2130 = vmatmul.mubr.bf16.gmra.mrb[0].mxu0 %v2048
      %v2131 = vpop.f32.mrb[0].mxu0
      %v2132 = vadd.f32 0.0, %v2131
      %v2133 = vpop.f32.mrb[0].mxu0
      %v2134 = vadd.f32 0.0, %v2133
      %v2135 = vpop.f32.mrb[0].mxu0
      %v2136 = vpop.f32.mrb[0].mxu0
      %2137 = vdwg.mxu0
      %v2138 = vadd.f32 %v2052, %v2091
      %v2139 = vadd.f32 %v2053, %v2093
      %v2140 = vadd.f32 %v2054, %v2132
      %v2141 = vadd.f32 %v2055, %v2134
      %v2142 = vxor.u32 %v2138, 2147483648
      %v2143 = vmul.f32 %v2142, 1.442695
      %v2144 = vpow.pop %v2143
      %v2145 = vadd.f32 %v2144, 1.0
      %v2146 = vrcp.pop %v2145
      %v2147 = vmul.f32 1.0, %v2146
      %v2148 = vxor.u32 %v2139, 2147483648
      %v2149 = vmul.f32 %v2148, 1.442695
      %v2150 = vpow.pop %v2149
      %v2151 = vadd.f32 %v2150, 1.0
      %v2152 = vrcp.pop %v2151
      %v2153 = vmul.f32 1.0, %v2152
      %v2154 = vtanh.pop %v2140
      %v2155 = vxor.u32 %v2141, 2147483648
      %v2156 = vmul.f32 %v2155, 1.442695
      %v2157 = vpow.pop %v2156
      %v2158 = vadd.f32 %v2157, 1.0
      %v2159 = vrcp.pop %v2158
      %v2160 = vmul.f32 1.0, %v2159
      %v2161 = vld [vmem:[#allocation3] sm:$0xff]
      %v2162 = vmul.f32 %v2153, %v2161
      %v2163 = vmul.f32 %v2147, %v2154
      %v2164 = vadd.f32 %v2162, %v2163
      %v2165 = vtanh.pop %v2164
      %v2166 = vmul.f32 %v2160, %v2165
      %v2167 = vunpack.c.l.bf16 %v2048
      %v2168 = vsel %vm2047, 1, 0
      %2169 = vset.pattern.permute.xlu0 0
      %2170 = vperm.xlu0 %2169, %v2168
      %v2171 = vpop.permute.xlu0 %2170
      %vm2172 = vcmp.eq.s32.totalorder %v2171, 1
      %v2173 = vsel %vm2172, %v2166, %v2167
      %v2174 = vpack.c.bf16 %v2173, %v2173
      %2175 = vst [vmem:[#allocation2] sm:$0xf] %v2174
      %v2176 = vld [vmem:[#allocation3] sm:$0xff]
      %v2177 = vsel %vm2172, %v2164, %v2176
      %2178 = vst [vmem:[#allocation3] sm:$0xff] %v2177
      %v2179 = vstv %s1190
      %vm2180 = vcmp.gt.s32.totalorder %v332, %v2179
      %v2181 = vld [vmem:[#allocation4] sm:$0xf]
      %v2182 = vld [vmem:[#allocation7] sm:$0xff]
      %v2183 = vld [vmem:[#allocation7 + $0x8] sm:$0xff]
      %v2184 = vunpack.c.l.bf16 %v2182
      %v2185 = vunpack.c.h.bf16 %v2182
      %v2186 = vunpack.c.l.bf16 %v2183
      %v2187 = vunpack.c.h.bf16 %v2183
      %2188 = vmatprep.subr.bf16.mxu0 %v1299
      %2189 = vmatpush1.bf16.msra.mxu0 %v1298
      %2190 = vmatprep.subr.bf16.mxu0 %v1303
      %2191 = vmatpush1.bf16.msra.mxu0 %v1302
      %2192 = vmatprep.subr.bf16.mxu0 %v1307
      %2193 = vmatpush1.bf16.msra.mxu0 %v1306
      %2194 = vmatprep.subr.bf16.mxu0 %v1311
      %2195 = vmatpush1.bf16.msra.mxu0 %v1310
      %2196 = vmatprep.subr.bf16.mxu0 %v1315
      %2197 = vmatpush1.bf16.msra.mxu0 %v1314
      %2198 = vmatprep.subr.bf16.mxu0 %v1319
      %2199 = vmatpush1.bf16.msra.mxu0 %v1318
      %2200 = vmatprep.subr.bf16.mxu0 %v1323
      %2201 = vmatpush1.bf16.msra.mxu0 %v1322
      %2202 = vmatprep.subr.bf16.mxu0 %v1327
      %2203 = vmatpush1.bf16.msra.mxu0 %v1326
      %2204 = vmatprep.subr.bf16.mxu0 0
      %2205 = vmatpush1.bf16.msra.mxu0 0
      %2206 = vmatprep.subr.bf16.mxu0 0
      %2207 = vmatpush1.bf16.msra.mxu0 0
      %2208 = vmatprep.subr.bf16.mxu0 0
      %2209 = vmatpush1.bf16.msra.mxu0 0
      %2210 = vmatprep.subr.bf16.mxu0 0
      %2211 = vmatpush1.bf16.msra.mxu0 0
      %2212 = vmatprep.subr.bf16.mxu0 0
      %2213 = vmatpush1.bf16.msra.mxu0 0
      %2214 = vmatprep.subr.bf16.mxu0 0
      %2215 = vmatpush1.bf16.msra.mxu0 0
      %2216 = vmatprep.subr.bf16.mxu0 0
      %2217 = vmatpush1.bf16.msra.mxu0 0
      %2218 = vmatprep.subr.bf16.mxu0 0
      %2219 = vmatpush1.bf16.msra.mxu0 0
      %2220 = vmatprep.mubr.bf16.mxu0 0
      %2221 = vmatmul.mubr.bf16.gmra.mrb[0].mxu0 %v2181
      %v2222 = vpop.f32.mrb[0].mxu0
      %v2223 = vadd.f32 0.0, %v2222
      %v2224 = vpop.f32.mrb[0].mxu0
      %v2225 = vadd.f32 0.0, %v2224
      %v2226 = vpop.f32.mrb[0].mxu0
      %v2227 = vpop.f32.mrb[0].mxu0
      %2228 = vdwg.mxu0
      %2229 = vmatprep.subr.bf16.mxu0 %v1301
      %2230 = vmatpush1.bf16.msra.mxu0 %v1300
      %2231 = vmatprep.subr.bf16.mxu0 %v1305
      %2232 = vmatpush1.bf16.msra.mxu0 %v1304
      %2233 = vmatprep.subr.bf16.mxu0 %v1309
      %2234 = vmatpush1.bf16.msra.mxu0 %v1308
      %2235 = vmatprep.subr.bf16.mxu0 %v1313
      %2236 = vmatpush1.bf16.msra.mxu0 %v1312
      %2237 = vmatprep.subr.bf16.mxu0 %v1317
      %2238 = vmatpush1.bf16.msra.mxu0 %v1316
      %2239 = vmatprep.subr.bf16.mxu0 %v1321
      %2240 = vmatpush1.bf16.msra.mxu0 %v1320
      %2241 = vmatprep.subr.bf16.mxu0 %v1325
      %2242 = vmatpush1.bf16.msra.mxu0 %v1324
      %2243 = vmatprep.subr.bf16.mxu0 %v1329
      %2244 = vmatpush1.bf16.msra.mxu0 %v1328
      %2245 = vmatprep.subr.bf16.mxu0 0
      %2246 = vmatpush1.bf16.msra.mxu0 0
      %2247 = vmatprep.subr.bf16.mxu0 0
      %2248 = vmatpush1.bf16.msra.mxu0 0
      %2249 = vmatprep.subr.bf16.mxu0 0
      %2250 = vmatpush1.bf16.msra.mxu0 0
      %2251 = vmatprep.subr.bf16.mxu0 0
      %2252 = vmatpush1.bf16.msra.mxu0 0
      %2253 = vmatprep.subr.bf16.mxu0 0
      %2254 = vmatpush1.bf16.msra.mxu0 0
      %2255 = vmatprep.subr.bf16.mxu0 0
      %2256 = vmatpush1.bf16.msra.mxu0 0
      %2257 = vmatprep.subr.bf16.mxu0 0
      %2258 = vmatpush1.bf16.msra.mxu0 0
      %2259 = vmatprep.subr.bf16.mxu0 0
      %2260 = vmatpush1.bf16.msra.mxu0 0
      %2261 = vmatprep.mubr.bf16.mxu0 0
      %2262 = vmatmul.mubr.bf16.gmra.mrb[0].mxu0 %v2181
      %v2263 = vpop.f32.mrb[0].mxu0
      %v2264 = vadd.f32 0.0, %v2263
      %v2265 = vpop.f32.mrb[0].mxu0
      %v2266 = vadd.f32 0.0, %v2265
      %v2267 = vpop.f32.mrb[0].mxu0
      %v2268 = vpop.f32.mrb[0].mxu0
      %2269 = vdwg.mxu0
      %v2270 = vadd.f32 %v2184, %v2223
      %v2271 = vadd.f32 %v2185, %v2225
      %v2272 = vadd.f32 %v2186, %v2264
      %v2273 = vadd.f32 %v2187, %v2266
      %v2274 = vxor.u32 %v2270, 2147483648
      %v2275 = vmul.f32 %v2274, 1.442695
      %v2276 = vpow.pop %v2275
      %v2277 = vadd.f32 %v2276, 1.0
      %v2278 = vrcp.pop %v2277
      %v2279 = vmul.f32 1.0, %v2278
      %v2280 = vxor.u32 %v2271, 2147483648
      %v2281 = vmul.f32 %v2280, 1.442695
      %v2282 = vpow.pop %v2281
      %v2283 = vadd.f32 %v2282, 1.0
      %v2284 = vrcp.pop %v2283
      %v2285 = vmul.f32 1.0, %v2284
      %v2286 = vtanh.pop %v2272
      %v2287 = vxor.u32 %v2273, 2147483648
      %v2288 = vmul.f32 %v2287, 1.442695
      %v2289 = vpow.pop %v2288
      %v2290 = vadd.f32 %v2289, 1.0
      %v2291 = vrcp.pop %v2290
      %v2292 = vmul.f32 1.0, %v2291
      %v2293 = vld [vmem:[#allocation5] sm:$0xff]
      %v2294 = vmul.f32 %v2285, %v2293
      %v2295 = vmul.f32 %v2279, %v2286
      %v2296 = vadd.f32 %v2294, %v2295
      %v2297 = vtanh.pop %v2296
      %v2298 = vmul.f32 %v2292, %v2297
      %v2299 = vunpack.c.l.bf16 %v2181
      %v2300 = vsel %vm2180, 1, 0
      %2301 = vset.pattern.permute.xlu0 0
      %2302 = vperm.xlu0 %2301, %v2300
      %v2303 = vpop.permute.xlu0 %2302
      %vm2304 = vcmp.eq.s32.totalorder %v2303, 1
      %v2305 = vsel %vm2304, %v2298, %v2299
      %v2306 = vpack.c.bf16 %v2305, %v2305
      %2307 = vst [vmem:[#allocation4] sm:$0xf] %v2306
      %v2308 = vld [vmem:[#allocation5] sm:$0xff]
      %v2309 = vsel %vm2304, %v2296, %v2308
      %2310 = vst [vmem:[#allocation5] sm:$0xff] %v2309
      %v2311 = vsel %vm2172, %v2166, 0.0
      %v2312 = vpack.c.bf16 %v2311, %v2311
      %s2313 = scalar_lea.vmem %s320, 12
      %2314 = vst.msk [vmem:[%s2313] sm:$0xf] %vm1487, %v2312
      %v2315 = vsel %vm2304, %v2298, 0.0
      %v2316 = vpack.c.bf16 %v2315, %v2315
      %2317 = vst.msk [vmem:[%s327] sm:$0xf] %vm1487, %v2316
      %s2318 = smul.u32 4, %s19
      %p2319 = scmp.lt.s32.totalorder %s2318, 7
      %s2320 = scalar_select %p2319, %s2318, 7
      %s2321 = smul.addr %s2320, 4
      %s2322 = scalar_lea.vmem %s6, %s2321
      %s2323 = ssub.s32 1, %s19
      %s2324 = smul.u32 4, %s2323
      %p2325 = scmp.lt.s32.totalorder %s2324, 7
      %s2326 = scalar_select %p2325, %s2324, 7
      %s2327 = smul.addr %s2326, 4
      %s2328 = scalar_lea.vmem %s7, %s2327
      // Predicated region
      $region49: #{forward.2} parent=43 // pred_check
        %p2329 = pneg %p175
      $region50: #{forward.2} parent=43 // pred_check_branch
        %2331 = sbr.rel (%p2329) target = $region52
      $region51: #{forward.2} parent=43 // pred_region
        %s2332 = smul.u32 4, %s19
      $region52: #{forward.2} parent=43 // pred_fallthru
        _
      // Predicated region
      $region53: #{forward.2} parent=43 // pred_check
        %p2333 = pneg %p203
      $region54: #{forward.2} parent=43 // pred_check_branch
        %2335 = sbr.rel (%p2333) target = $region56
      $region55: #{forward.2} parent=43 // pred_region
        %s2336 = ssub.s32 1, %s19
        %s2337 = smul.u32 4, %s2336
      $region56: #{forward.2} parent=43 // pred_fallthru
        _
    $region44: #{forward.2} parent=5 // pred_fallthru
      _
    %p2338 = scmp.le.s32.totalorder 2, %s14
    // Predicated region
    $region57: #{forward.2} parent=5 // pred_check
      %p2339 = pneg %p2338
    $region58: #{forward.2} parent=5 // pred_check_branch
      %2341 = sbr.rel (%p2339) target = $region60
    $region59: #{forward.2} parent=5 // pred_region
      %s2342 = ssub.s32 %s14, 2
      // Predicated region
      $region61: #{forward.2} parent=59 // pred_check
        %p2343 = pneg %p181
      $region62: #{forward.2} parent=59 // pred_check_branch
        %2345 = sbr.rel (%p2343) target = $region64
      $region63: #{forward.2} parent=59 // pred_region
        %s2346 = smul.u32 4, %s20
        %p2347 = scmp.lt.s32.totalorder %s2346, 7
        %s2348 = scalar_select %p2347, %s2346, 7
        %s2349 = smul.addr %s2348, 4
        %s2350 = scalar_lea.vmem %s6, %s2349
      $region64: #{forward.2} parent=59 // pred_fallthru
        _
      // Predicated region
      $region65: #{forward.2} parent=59 // pred_check
        %p2351 = pneg %p209
      $region66: #{forward.2} parent=59 // pred_check_branch
        %2353 = sbr.rel (%p2351) target = $region68
      $region67: #{forward.2} parent=59 // pred_region
        %s2354 = ssub.s32 1, %s20
        %s2355 = smul.u32 4, %s2354
        %p2356 = scmp.lt.s32.totalorder %s2355, 7
        %s2357 = scalar_select %p2356, %s2355, 7
        %s2358 = smul.addr %s2357, 4
        %s2359 = scalar_lea.vmem %s7, %s2358
      $region68: #{forward.2} parent=59 // pred_fallthru
        _
    $region60: #{forward.2} parent=5 // pred_fallthru
      _
  $region6: #{forward.2} parent=0 // loop_footer
    %s18 = sadd.s32 1, %s14
  $region7: #{forward.2} parent=0 // loop_footer_branch
    %13 = sbr.rel target = $region3
  $region8: #{forward.2} parent=0 // loop_exit
    _

// kernel: forward.3
$region0: #{forward.3}
  #allocation0 [shape = 'u32[]', space=smem, size = 0x4, offset = 0x4, fixed_abs, tag = 'smem constant byte address 0x4 - core index']
  #allocation1 [shape = 'u32[144,128]{1,0:T(1,128)}', space=vmem, size = 0x12000, scoped, tag = 'internal scratch']
  #allocation2 [shape = 'bf16[8,128]{1,0:T(8,128)(2,1)}', space=vmem, size = 0x800, scoped, tag = 'scratch operand']
  #allocation3 [shape = 'f32[8,128]{1,0:T(8,128)}', space=vmem, size = 0x1000, scoped, tag = 'scratch operand']
  #allocation4 [shape = 'bf16[8,128]{1,0:T(8,128)(2,1)}', space=vmem, size = 0x800, scoped, tag = 'scratch operand']
  #allocation5 [shape = 'f32[8,128]{1,0:T(8,128)}', space=vmem, size = 0x1000, scoped, tag = 'scratch operand']
  #allocation6 [shape = 'bf16[4,8,512]{2,1,0:T(8,128)(2,1)}', space=vmem, size = 0x8000, scoped, tag = 'scratch operand']
  #allocation7 [shape = 'bf16[4,8,512]{2,1,0:T(8,128)(2,1)}', space=vmem, size = 0x8000, scoped, tag = 'scratch operand']
  #allocation8 [shape = 'f32[8,256]{1,0:T(8,128)}', space=vmem, size = 0x2000, scoped, tag = 'scratch operand']
  %s0 = inlined_call_operand.vmem [shape: s32[8,1], index: 0, kind: input, shape index: {}]
  %s1 = inlined_call_operand.vmem [shape: bf16[8,8,32], index: 1, kind: input, shape index: {}, may-alias: {1,3}]
  %s2 = inlined_call_operand.vmem [shape: bf16[8,8,32], index: 2, kind: input, shape index: {}, may-alias: {2,4}]
  %s3 = inlined_call_operand.vmem [shape: bf16[8,8,32], index: 3, kind: input, shape index: {}, may-alias: {1,3}]
  %s4 = inlined_call_operand.vmem [shape: bf16[8,8,32], index: 4, kind: input, shape index: {}, may-alias: {2,4}]
  %s5 = inlined_call_operand.vmem [shape: bf16[2,64,512], index: 5, kind: input, shape index: {}]
  %s6 = inlined_call_operand.vmem [shape: bf16[2,128,512], index: 6, kind: input, shape index: {}]
  %s7 = inlined_call_operand.vmem [shape: f32[2,1,512], index: 7, kind: input, shape index: {}]
  %s8 = inlined_call_operand.vmem [shape: f32[1,256], index: 8, kind: input, shape index: {}]
  %s9 = inlined_call_operand.vmem [shape: f32[8,1], index: 9, kind: output, shape index: {}]
  %s10 = sld [smem:[#allocation0]]
  $region77: #{forward.3} parent=0
    _
  %s12 = ssub.s32 1, %s10
  %s13 = scalar_select 0, %s12, %s10
  loop: start=0, step=1, limit=4
  $region2: #{forward.3} parent=0 // loop_pre_header
    _
  $region3: #{forward.3} parent=0 // loop_header
    %s15 = sphi 0, %s19
    %p16 = scmp.ge.s32.totalorder %s15, 4
    %s23 = sphi 0, %s23
    %s25 = sphi 0, %s23
    %s26 = sphi 0, %s25
    %s40 = sphi 0, %s26
    %s46 = sphi 0, %s48
    %s49 = sphi 0, %s46
    %s50 = sphi 0, %s49
    %s66 = sphi 0, %s50
    %s72 = sphi 0, %s74
    %s75 = sphi 0, %s72
    %s76 = sphi 0, %s75
    %s92 = sphi 0, %s76
    %s100 = sphi 0, %s102
    %s103 = sphi 0, %s100
    %s104 = sphi 0, %s103
    %s120 = sphi 0, %s104
    %s128 = sphi 0, %s130
    %s131 = sphi 0, %s128
    %s132 = sphi 0, %s131
    %s148 = sphi 0, %s132
    %s152 = sphi 0, %s152
    %s154 = sphi 0, %s152
    %s155 = sphi 0, %s154
    %s169 = sphi 0, %s155
    %s173 = sphi 0, %s173
    %s175 = sphi 0, %s173
    %s176 = sphi 0, %s175
    %s190 = sphi 0, %s176
    %s194 = sphi 0, %s194
    %s196 = sphi 0, %s194
    %s197 = sphi 0, %s196
    %s211 = sphi 0, %s197
    %s215 = sphi 0, %s215
    %s217 = sphi 0, %s215
    %s218 = sphi 0, %s217
    %s232 = sphi 0, %s218
    %s236 = sphi 0, %s236
    %s238 = sphi 0, %s236
    %s239 = sphi 0, %s238
    %s253 = sphi 0, %s239
  $region4: #{forward.3} parent=0 // loop_header_branch
    %18 = sbr.rel (%p16) target = $region8
  $region5: #{forward.3} parent=0 // loop_body
    %s20 = ssub.s32 %s15, 1
    %s21 = ssub.s32 %s15, 2
    %s22 = sadd.s32 %s15, 1
    %s24 = sadd.s32 %s23, 1
    %p27 = scmp.eq.s32.totalorder %s15, 1
    %p28 = scmp.ne.s32.totalorder %s23, %s25
    %p29 = scmp.eq.s32.totalorder %s15, 0
    %p30 = por %p28, %p29
    %p31 = scmp.ne.s32.totalorder %s23, %s25
    %p32 = scmp.eq.s32.totalorder %s20, 1
    %p33 = por %p31, %p32
    %p34 = scmp.ne.s32.totalorder %s25, %s26
    %p35 = scmp.eq.s32.totalorder %s20, 0
    %p36 = por %p34, %p35
    %p37 = scmp.ne.s32.totalorder %s25, %s26
    %p38 = scmp.eq.s32.totalorder %s21, 1
    %p39 = por %p37, %p38
    %p41 = scmp.ne.s32.totalorder %s26, %s40
    %p42 = scmp.eq.s32.totalorder %s21, 0
    %p43 = por %p41, %p42
    %s44 = ssub.s32 %s15, %s22
    %p45 = scmp.eq.s32.totalorder %s44, 0
    %s47 = sadd.s32 %s46, 1
    %s48 = scalar_select %p45, %s46, %s47
    %p51 = pneg %p45
    %p52 = scmp.eq.s32.totalorder %s15, 1
    %p53 = por %p51, %p52
    %p54 = scmp.ne.s32.totalorder %s46, %s49
    %p55 = scmp.eq.s32.totalorder %s15, 0
    %p56 = por %p54, %p55
    %p57 = scmp.ne.s32.totalorder %s46, %s49
    %p58 = scmp.eq.s32.totalorder %s20, 1
    %p59 = por %p57, %p58
    %p60 = scmp.ne.s32.totalorder %s49, %s50
    %p61 = scmp.eq.s32.totalorder %s20, 0
    %p62 = por %p60, %p61
    %p63 = scmp.ne.s32.totalorder %s49, %s50
    %p64 = scmp.eq.s32.totalorder %s21, 1
    %p65 = por %p63, %p64
    %p67 = scmp.ne.s32.totalorder %s50, %s66
    %p68 = scmp.eq.s32.totalorder %s21, 0
    %p69 = por %p67, %p68
    %s70 = ssub.s32 %s15, %s22
    %p71 = scmp.eq.s32.totalorder %s70, 0
    %s73 = sadd.s32 %s72, 1
    %s74 = scalar_select %p71, %s72, %s73
    %p77 = pneg %p71
    %p78 = scmp.eq.s32.totalorder %s15, 1
    %p79 = por %p77, %p78
    %p80 = scmp.ne.s32.totalorder %s72, %s75
    %p81 = scmp.eq.s32.totalorder %s15, 0
    %p82 = por %p80, %p81
    %p83 = scmp.ne.s32.totalorder %s72, %s75
    %p84 = scmp.eq.s32.totalorder %s20, 1
    %p85 = por %p83, %p84
    %p86 = scmp.ne.s32.totalorder %s75, %s76
    %p87 = scmp.eq.s32.totalorder %s20, 0
    %p88 = por %p86, %p87
    %p89 = scmp.ne.s32.totalorder %s75, %s76
    %p90 = scmp.eq.s32.totalorder %s21, 1
    %p91 = por %p89, %p90
    %p93 = scmp.ne.s32.totalorder %s76, %s92
    %p94 = scmp.eq.s32.totalorder %s21, 0
    %p95 = por %p93, %p94
    %s96 = ssub.s32 1, %s15
    %s97 = ssub.s32 1, %s22
    %s98 = ssub.s32 %s96, %s97
    %p99 = scmp.eq.s32.totalorder %s98, 0
    %s101 = sadd.s32 %s100, 1
    %s102 = scalar_select %p99, %s100, %s101
    %p105 = pneg %p99
    %p106 = scmp.eq.s32.totalorder %s15, 1
    %p107 = por %p105, %p106
    %p108 = scmp.ne.s32.totalorder %s100, %s103
    %p109 = scmp.eq.s32.totalorder %s15, 0
    %p110 = por %p108, %p109
    %p111 = scmp.ne.s32.totalorder %s100, %s103
    %p112 = scmp.eq.s32.totalorder %s20, 1
    %p113 = por %p111, %p112
    %p114 = scmp.ne.s32.totalorder %s103, %s104
    %p115 = scmp.eq.s32.totalorder %s20, 0
    %p116 = por %p114, %p115
    %p117 = scmp.ne.s32.totalorder %s103, %s104
    %p118 = scmp.eq.s32.totalorder %s21, 1
    %p119 = por %p117, %p118
    %p121 = scmp.ne.s32.totalorder %s104, %s120
    %p122 = scmp.eq.s32.totalorder %s21, 0
    %p123 = por %p121, %p122
    %s124 = ssub.s32 1, %s15
    %s125 = ssub.s32 1, %s22
    %s126 = ssub.s32 %s124, %s125
    %p127 = scmp.eq.s32.totalorder %s126, 0
    %s129 = sadd.s32 %s128, 1
    %s130 = scalar_select %p127, %s128, %s129
    %p133 = pneg %p127
    %p134 = scmp.eq.s32.totalorder %s15, 1
    %p135 = por %p133, %p134
    %p136 = scmp.ne.s32.totalorder %s128, %s131
    %p137 = scmp.eq.s32.totalorder %s15, 0
    %p138 = por %p136, %p137
    %p139 = scmp.ne.s32.totalorder %s128, %s131
    %p140 = scmp.eq.s32.totalorder %s20, 1
    %p141 = por %p139, %p140
    %p142 = scmp.ne.s32.totalorder %s131, %s132
    %p143 = scmp.eq.s32.totalorder %s20, 0
    %p144 = por %p142, %p143
    %p145 = scmp.ne.s32.totalorder %s131, %s132
    %p146 = scmp.eq.s32.totalorder %s21, 1
    %p147 = por %p145, %p146
    %p149 = scmp.ne.s32.totalorder %s132, %s148
    %p150 = scmp.eq.s32.totalorder %s21, 0
    %p151 = por %p149, %p150
    %s153 = sadd.s32 %s152, 1
    %p156 = scmp.eq.s32.totalorder %s15, 1
    %p157 = scmp.ne.s32.totalorder %s152, %s154
    %p158 = scmp.eq.s32.totalorder %s15, 0
    %p159 = por %p157, %p158
    %p160 = scmp.ne.s32.totalorder %s152, %s154
    %p161 = scmp.eq.s32.totalorder %s20, 1
    %p162 = por %p160, %p161
    %p163 = scmp.ne.s32.totalorder %s154, %s155
    %p164 = scmp.eq.s32.totalorder %s20, 0
    %p165 = por %p163, %p164
    %p166 = scmp.ne.s32.totalorder %s154, %s155
    %p167 = scmp.eq.s32.totalorder %s21, 1
    %p168 = por %p166, %p167
    %p170 = scmp.ne.s32.totalorder %s155, %s169
    %p171 = scmp.eq.s32.totalorder %s21, 0
    %p172 = por %p170, %p171
    %s174 = sadd.s32 %s173, 1
    %p177 = scmp.eq.s32.totalorder %s15, 1
    %p178 = scmp.ne.s32.totalorder %s173, %s175
    %p179 = scmp.eq.s32.totalorder %s15, 0
    %p180 = por %p178, %p179
    %p181 = scmp.ne.s32.totalorder %s173, %s175
    %p182 = scmp.eq.s32.totalorder %s20, 1
    %p183 = por %p181, %p182
    %p184 = scmp.ne.s32.totalorder %s175, %s176
    %p185 = scmp.eq.s32.totalorder %s20, 0
    %p186 = por %p184, %p185
    %p187 = scmp.ne.s32.totalorder %s175, %s176
    %p188 = scmp.eq.s32.totalorder %s21, 1
    %p189 = por %p187, %p188
    %p191 = scmp.ne.s32.totalorder %s176, %s190
    %p192 = scmp.eq.s32.totalorder %s21, 0
    %p193 = por %p191, %p192
    %s195 = sadd.s32 %s194, 1
    %p198 = scmp.eq.s32.totalorder %s15, 1
    %p199 = scmp.ne.s32.totalorder %s194, %s196
    %p200 = scmp.eq.s32.totalorder %s15, 0
    %p201 = por %p199, %p200
    %p202 = scmp.ne.s32.totalorder %s194, %s196
    %p203 = scmp.eq.s32.totalorder %s20, 1
    %p204 = por %p202, %p203
    %p205 = scmp.ne.s32.totalorder %s196, %s197
    %p206 = scmp.eq.s32.totalorder %s20, 0
    %p207 = por %p205, %p206
    %p208 = scmp.ne.s32.totalorder %s196, %s197
    %p209 = scmp.eq.s32.totalorder %s21, 1
    %p210 = por %p208, %p209
    %p212 = scmp.ne.s32.totalorder %s197, %s211
    %p213 = scmp.eq.s32.totalorder %s21, 0
    %p214 = por %p212, %p213
    %s216 = sadd.s32 %s215, 1
    %p219 = scmp.eq.s32.totalorder %s15, 1
    %p220 = scmp.ne.s32.totalorder %s215, %s217
    %p221 = scmp.eq.s32.totalorder %s15, 0
    %p222 = por %p220, %p221
    %p223 = scmp.ne.s32.totalorder %s215, %s217
    %p224 = scmp.eq.s32.totalorder %s20, 1
    %p225 = por %p223, %p224
    %p226 = scmp.ne.s32.totalorder %s217, %s218
    %p227 = scmp.eq.s32.totalorder %s20, 0
    %p228 = por %p226, %p227
    %p229 = scmp.ne.s32.totalorder %s217, %s218
    %p230 = scmp.eq.s32.totalorder %s21, 1
    %p231 = por %p229, %p230
    %p233 = scmp.ne.s32.totalorder %s218, %s232
    %p234 = scmp.eq.s32.totalorder %s21, 0
    %p235 = por %p233, %p234
    %s237 = sadd.s32 %s236, 1
    %p240 = scmp.eq.s32.totalorder %s15, 1
    %p241 = scmp.ne.s32.totalorder %s236, %s238
    %p242 = scmp.eq.s32.totalorder %s15, 0
    %p243 = por %p241, %p242
    %p244 = scmp.ne.s32.totalorder %s236, %s238
    %p245 = scmp.eq.s32.totalorder %s20, 1
    %p246 = por %p244, %p245
    %p247 = scmp.ne.s32.totalorder %s238, %s239
    %p248 = scmp.eq.s32.totalorder %s20, 0
    %p249 = por %p247, %p248
    %p250 = scmp.ne.s32.totalorder %s238, %s239
    %p251 = scmp.eq.s32.totalorder %s21, 1
    %p252 = por %p250, %p251
    %p254 = scmp.ne.s32.totalorder %s239, %s253
    %p255 = scmp.eq.s32.totalorder %s21, 0
    %p256 = por %p254, %p255
    %p257 = scmp.le.s32.totalorder 1, %s15
    %p258 = scmp.lt.s32.totalorder %s15, 3
    %p259 = pnand %p257, %p258
    %p260 = pneg %p259
    // Predicated region
    $region9: #{forward.3} parent=5 // pred_check
      _
    $region10: #{forward.3} parent=5 // pred_check_branch
      %262 = sbr.rel (%p259) target = $region12
    $region11: #{forward.3} parent=5 // pred_region
      %s263 = ssub.s32 %s15, 1
      // Predicated region
      $region13: #{forward.3} parent=11 // pred_check
        %p264 = pneg %p36
      $region14: #{forward.3} parent=11 // pred_check_branch
        %266 = sbr.rel (%p264) target = $region16
      $region15: #{forward.3} parent=11 // pred_region
        _
      $region16: #{forward.3} parent=11 // pred_fallthru
        _
      // Predicated region
      $region17: #{forward.3} parent=11 // pred_check
        %p267 = pneg %p165
      $region18: #{forward.3} parent=11 // pred_check_branch
        %269 = sbr.rel (%p267) target = $region20
      $region19: #{forward.3} parent=11 // pred_region
        _
      $region20: #{forward.3} parent=11 // pred_fallthru
        _
      // Predicated region
      $region21: #{forward.3} parent=11 // pred_check
        %p270 = pneg %p186
      $region22: #{forward.3} parent=11 // pred_check_branch
        %272 = sbr.rel (%p270) target = $region24
      $region23: #{forward.3} parent=11 // pred_region
        _
      $region24: #{forward.3} parent=11 // pred_fallthru
        _
      // Predicated region
      $region25: #{forward.3} parent=11 // pred_check
        %p273 = pneg %p207
      $region26: #{forward.3} parent=11 // pred_check_branch
        %275 = sbr.rel (%p273) target = $region28
      $region27: #{forward.3} parent=11 // pred_region
        _
      $region28: #{forward.3} parent=11 // pred_fallthru
        _
      // Predicated region
      $region29: #{forward.3} parent=11 // pred_check
        %p276 = pneg %p228
      $region30: #{forward.3} parent=11 // pred_check_branch
        %278 = sbr.rel (%p276) target = $region32
      $region31: #{forward.3} parent=11 // pred_region
        _
      $region32: #{forward.3} parent=11 // pred_fallthru
        _
    $region12: #{forward.3} parent=5 // pred_fallthru
      _
    %p279 = scmp.lt.s32.totalorder %s15, 2
    // Predicated region
    $region33: #{forward.3} parent=5 // pred_check
      %p280 = pneg %p279
    $region34: #{forward.3} parent=5 // pred_check_branch
      %282 = sbr.rel (%p280) target = $region36
    $region35: #{forward.3} parent=5 // pred_region
      // Predicated region
      $region37: #{forward.3} parent=35 // pred_check
        %p283 = pneg %p56
      $region38: #{forward.3} parent=35 // pred_check_branch
        %285 = sbr.rel (%p283) target = $region40
      $region39: #{forward.3} parent=35 // pred_region
        %s286 = smul.u32 4, %s15
        %p287 = scmp.lt.s32.totalorder %s286, 7
        %s288 = scalar_select %p287, %s286, 7
        %s289 = smul.addr %s288, 4
        %s290 = scalar_lea.vmem %s1, %s289
        %s291 = smul.u32 4, %s15
      $region40: #{forward.3} parent=35 // pred_fallthru
        _
      // Predicated region
      $region41: #{forward.3} parent=35 // pred_check
        %p292 = pneg %p82
      $region42: #{forward.3} parent=35 // pred_check_branch
        %294 = sbr.rel (%p292) target = $region44
      $region43: #{forward.3} parent=35 // pred_region
        %s295 = smul.u32 4, %s15
        %p296 = scmp.lt.s32.totalorder %s295, 7
        %s297 = scalar_select %p296, %s295, 7
        %s298 = smul.addr %s297, 4
        %s299 = scalar_lea.vmem %s2, %s298
        %s300 = smul.u32 4, %s15
      $region44: #{forward.3} parent=35 // pred_fallthru
        _
      // Predicated region
      $region45: #{forward.3} parent=35 // pred_check
        %p301 = pneg %p110
      $region46: #{forward.3} parent=35 // pred_check_branch
        %303 = sbr.rel (%p301) target = $region48
      $region47: #{forward.3} parent=35 // pred_region
        %s304 = ssub.s32 1, %s15
        %s305 = smul.u32 4, %s304
        %p306 = scmp.lt.s32.totalorder %s305, 7
        %s307 = scalar_select %p306, %s305, 7
        %s308 = smul.addr %s307, 4
        %s309 = scalar_lea.vmem %s3, %s308
        %s310 = ssub.s32 1, %s15
        %s311 = smul.u32 4, %s310
      $region48: #{forward.3} parent=35 // pred_fallthru
        _
      // Predicated region
      $region49: #{forward.3} parent=35 // pred_check
        %p312 = pneg %p138
      $region50: #{forward.3} parent=35 // pred_check_branch
        %314 = sbr.rel (%p312) target = $region52
      $region51: #{forward.3} parent=35 // pred_region
        %s315 = ssub.s32 1, %s15
        %s316 = smul.u32 4, %s315
        %p317 = scmp.lt.s32.totalorder %s316, 7
        %s318 = scalar_select %p317, %s316, 7
        %s319 = smul.addr %s318, 4
        %s320 = scalar_lea.vmem %s4, %s319
        %s321 = ssub.s32 1, %s15
        %s322 = smul.u32 4, %s321
      $region52: #{forward.3} parent=35 // pred_fallthru
        _
    $region36: #{forward.3} parent=5 // pred_fallthru
      _
    %p323 = scmp.le.s32.totalorder 1, %s15
    %p324 = scmp.lt.s32.totalorder %s15, 3
    %p325 = pnand %p323, %p324
    %p326 = pneg %p325
    // Predicated region
    $region53: #{forward.3} parent=5 // pred_check
      _
    $region54: #{forward.3} parent=5 // pred_check_branch
      %328 = sbr.rel (%p325) target = $region56
    $region55: #{forward.3} parent=5 // pred_region
      %s329 = ssub.s32 %s15, 1
      %p330 = pneg %p36
      %p331 = pneg %p33
      %s332 = smul.u32 4, %s20
      %p333 = scmp.lt.s32.totalorder %s332, 7
      %s334 = scalar_select %p333, %s332, 7
      %s335 = smul.addr %s334, 4
      %s336 = scalar_lea.vmem %s1, %s335
      %p337 = pneg %p62
      %p338 = pneg %p59
      %s339 = smul.u32 4, %s20
      %p340 = scmp.lt.s32.totalorder %s339, 7
      %s341 = scalar_select %p340, %s339, 7
      %s342 = smul.addr %s341, 4
      %s343 = scalar_lea.vmem %s2, %s342
      %p344 = pneg %p88
      %p345 = pneg %p85
      %s346 = ssub.s32 1, %s20
      %s347 = smul.u32 4, %s346
      %p348 = scmp.lt.s32.totalorder %s347, 7
      %s349 = scalar_select %p348, %s347, 7
      %s350 = smul.addr %s349, 4
      %s351 = scalar_lea.vmem %s3, %s350
      %p352 = pneg %p116
      %p353 = pneg %p113
      %s354 = ssub.s32 1, %s20
      %s355 = smul.u32 4, %s354
      %p356 = scmp.lt.s32.totalorder %s355, 7
      %s357 = scalar_select %p356, %s355, 7
      %s358 = smul.addr %s357, 4
      %s359 = scalar_lea.vmem %s4, %s358
      %p360 = pneg %p144
      %p361 = pneg %p141
      %p362 = pneg %p165
      %p363 = pneg %p162
      %p364 = pneg %p186
      %p365 = pneg %p183
      %p366 = pneg %p207
      %p367 = pneg %p204
      %p368 = pneg %p228
      %p369 = pneg %p225
      %p370 = pneg %p249
      %p371 = pneg %p246
      %s372 = smul.u32 4, %s20
      %p373 = scmp.lt.s32.totalorder %s372, 7
      %s374 = scalar_select %p373, %s372, 7
      %s375 = smul.addr %s374, 4
      %s376 = scalar_lea.vmem %s1, %s375
      %s377 = smul.u32 4, %s20
      %s378 = smul.u32 4, %s20
      %p379 = scmp.lt.s32.totalorder %s378, 7
      %s380 = scalar_select %p379, %s378, 7
      %s381 = smul.addr %s380, 4
      %s382 = scalar_lea.vmem %s2, %s381
      %s383 = smul.u32 4, %s20
      %s384 = ssub.s32 1, %s20
      %s385 = smul.u32 4, %s384
      %p386 = scmp.lt.s32.totalorder %s385, 7
      %s387 = scalar_select %p386, %s385, 7
      %s388 = smul.addr %s387, 4
      %s389 = scalar_lea.vmem %s3, %s388
      %s390 = ssub.s32 1, %s20
      %s391 = smul.u32 4, %s390
      %s392 = ssub.s32 1, %s20
      %s393 = smul.u32 4, %s392
      %p394 = scmp.lt.s32.totalorder %s393, 7
      %s395 = scalar_select %p394, %s393, 7
      %s396 = smul.addr %s395, 4
      %s397 = scalar_lea.vmem %s4, %s396
      %s398 = ssub.s32 1, %s20
      %s399 = smul.u32 4, %s398
      %s401 = ssub.s32 1, %s20
      %v402 = vld [vmem:[%s0] sm:$0xff]
      %p403 = scmp.eq.s32.totalorder %s20, 0
      // Predicated region
      $region57: #{forward.3} parent=55 // pred_check
        %p404 = pneg %p403
      $region58: #{forward.3} parent=55 // pred_check_branch
        %406 = sbr.rel (%p404) target = $region60
      $region59: #{forward.3} parent=55 // pred_region
        %407 = vst [vmem:[#allocation2] sm:$0xf] 0
        %408 = vst [vmem:[#allocation3] sm:$0xff] 0.0
        %409 = vst [vmem:[#allocation4] sm:$0xf] 0
        %410 = vst [vmem:[#allocation5] sm:$0xff] 0.0
        %411 = vst [vmem:[#allocation8] sm:$0xff] 0.0
        %412 = vst [vmem:[#allocation8 + $0x8] sm:$0xff] 0.0
        %vm413 = vcmask 7168
        %414 = vst.msk [vmem:[%s9] sm:$0xff] %vm413, 0.0
      $region60: #{forward.3} parent=55 // pred_fallthru
        _
      %v415 = vld [vmem:[%s5] sm:$0xff]
      %v416 = vld [vmem:[%s5 + $0x8] sm:$0xff]
      %v417 = vld [vmem:[%s5 + $0x10] sm:$0xff]
      %v418 = vld [vmem:[%s5 + $0x18] sm:$0xff]
      %v419 = vld [vmem:[%s5 + $0x20] sm:$0xff]
      %v420 = vld [vmem:[%s5 + $0x28] sm:$0xff]
      %v421 = vld [vmem:[%s5 + $0x30] sm:$0xff]
      %v422 = vld [vmem:[%s5 + $0x38] sm:$0xff]
      %v423 = vld [vmem:[%s5 + $0x40] sm:$0xff]
      %v424 = vld [vmem:[%s5 + $0x48] sm:$0xff]
      %v425 = vld [vmem:[%s5 + $0x50] sm:$0xff]
      %v426 = vld [vmem:[%s5 + $0x58] sm:$0xff]
      %v427 = vld [vmem:[%s5 + $0x60] sm:$0xff]
      %v428 = vld [vmem:[%s5 + $0x68] sm:$0xff]
      %v429 = vld [vmem:[%s5 + $0x70] sm:$0xff]
      %v430 = vld [vmem:[%s5 + $0x78] sm:$0xff]
      %v431 = vld [vmem:[%s376] sm:$0xf]
      %v432 = vld [vmem:[%s376 + $0x4] sm:$0xf]
      %v433 = vld [vmem:[%s376 + $0x8] sm:$0xf]
      %v434 = vld [vmem:[%s376 + $0xc] sm:$0xf]
      %v435 = vld [vmem:[%s382] sm:$0xf]
      %v436 = vld [vmem:[%s382 + $0x4] sm:$0xf]
      %v437 = vld [vmem:[%s382 + $0x8] sm:$0xf]
      %v438 = vld [vmem:[%s382 + $0xc] sm:$0xf]
      %v443 = vunpack.c.l.b16 %v435
      %v444 = vunpack.c.l.b16 %v436
      %v445 = vunpack.c.l.b16 %v437
      %v446 = vunpack.c.l.b16 %v438
      %v447 = vpack.c.b16 %v444, %v443
      %v448 = vpack.c.b16 %v446, %v445
      %v457 = vunpack.c.l.b16 %v423
      %v458 = vunpack.c.h.b16 %v423
      %v459 = vunpack.c.l.b16 %v424
      %v460 = vunpack.c.h.b16 %v424
      %v461 = vunpack.c.l.b16 %v425
      %v462 = vunpack.c.h.b16 %v425
      %v463 = vunpack.c.l.b16 %v426
      %v464 = vunpack.c.h.b16 %v426
      %v465 = vunpack.c.l.b16 %v427
      %v466 = vunpack.c.h.b16 %v427
      %v467 = vunpack.c.l.b16 %v428
      %v468 = vunpack.c.h.b16 %v428
      %v469 = vunpack.c.l.b16 %v429
      %v470 = vunpack.c.h.b16 %v429
      %v471 = vunpack.c.l.b16 %v430
      %v472 = vunpack.c.h.b16 %v430
      %v473 = vpack.c.b16 %v461, %v457
      %v474 = vpack.c.b16 %v462, %v458
      %v475 = vpack.c.b16 %v463, %v459
      %v476 = vpack.c.b16 %v464, %v460
      %v477 = vpack.c.b16 %v469, %v465
      %v478 = vpack.c.b16 %v470, %v466
      %v479 = vpack.c.b16 %v471, %v467
      %v480 = vpack.c.b16 %v472, %v468
      %vm489 = vcmask 261120
      %v491 = vsel %vm489, %v447, 0
      %v494 = vsel %vm489, %v448, 0
      %496 = vmatprep.subr.bf16.mxu0 %v474
      %497 = vmatpush1.bf16.msra.mxu0 %v473
      %498 = vmatprep.subr.bf16.mxu0 %v478
      %499 = vmatpush1.bf16.msra.mxu0 %v477
      %500 = vmatprep.subr.bf16.mxu0 0
      %501 = vmatpush1.bf16.msra.mxu0 0
      %502 = vmatprep.subr.bf16.mxu0 0
      %503 = vmatpush1.bf16.msra.mxu0 0
      %504 = vmatprep.subr.bf16.mxu0 0
      %505 = vmatpush1.bf16.msra.mxu0 0
      %506 = vmatprep.subr.bf16.mxu0 0
      %507 = vmatpush1.bf16.msra.mxu0 0
      %508 = vmatprep.subr.bf16.mxu0 0
      %509 = vmatpush1.bf16.msra.mxu0 0
      %510 = vmatprep.subr.bf16.mxu0 0
      %511 = vmatpush1.bf16.msra.mxu0 0
      %512 = vmatprep.subr.bf16.mxu0 0
      %513 = vmatpush1.bf16.msra.mxu0 0
      %514 = vmatprep.subr.bf16.mxu0 0
      %515 = vmatpush1.bf16.msra.mxu0 0
      %516 = vmatprep.subr.bf16.mxu0 0
      %517 = vmatpush1.bf16.msra.mxu0 0
      %518 = vmatprep.subr.bf16.mxu0 0
      %519 = vmatpush1.bf16.msra.mxu0 0
      %520 = vmatprep.subr.bf16.mxu0 0
      %521 = vmatpush1.bf16.msra.mxu0 0
      %522 = vmatprep.subr.bf16.mxu0 0
      %523 = vmatpush1.bf16.msra.mxu0 0
      %524 = vmatprep.subr.bf16.mxu0 0
      %525 = vmatpush1.bf16.msra.mxu0 0
      %526 = vmatprep.subr.bf16.mxu0 0
      %527 = vmatpush1.bf16.msra.mxu0 0
      %528 = vmatprep.mubr.bf16.mxu0 0
      %529 = vmatmul.mubr.bf16.gmra.mrb[0].mxu0 %v491
      %v530 = vpop.f32.mrb[0].mxu0
      %v531 = vadd.f32 0.0, %v530
      %v532 = vpop.f32.mrb[0].mxu0
      %v533 = vadd.f32 0.0, %v532
      %v534 = vpop.f32.mrb[0].mxu0
      %v535 = vadd.f32 0.0, %v534
      %v536 = vpop.f32.mrb[0].mxu0
      %v537 = vadd.f32 0.0, %v536
      %538 = vmatprep.mubr.bf16.mxu0 0
      %539 = vmatmul.mubr.bf16.gmra.mrb[0].mxu0 %v494
      %v540 = vpop.f32.mrb[0].mxu0
      %v541 = vadd.f32 0.0, %v540
      %v542 = vpop.f32.mrb[0].mxu0
      %v543 = vadd.f32 0.0, %v542
      %v544 = vpop.f32.mrb[0].mxu0
      %v545 = vadd.f32 0.0, %v544
      %v546 = vpop.f32.mrb[0].mxu0
      %v547 = vadd.f32 0.0, %v546
      %548 = vdwg.mxu0
      %549 = vmatprep.subr.bf16.mxu0 %v476
      %550 = vmatpush1.bf16.msra.mxu0 %v475
      %551 = vmatprep.subr.bf16.mxu0 %v480
      %552 = vmatpush1.bf16.msra.mxu0 %v479
      %553 = vmatprep.subr.bf16.mxu0 0
      %554 = vmatpush1.bf16.msra.mxu0 0
      %555 = vmatprep.subr.bf16.mxu0 0
      %556 = vmatpush1.bf16.msra.mxu0 0
      %557 = vmatprep.subr.bf16.mxu0 0
      %558 = vmatpush1.bf16.msra.mxu0 0
      %559 = vmatprep.subr.bf16.mxu0 0
      %560 = vmatpush1.bf16.msra.mxu0 0
      %561 = vmatprep.subr.bf16.mxu0 0
      %562 = vmatpush1.bf16.msra.mxu0 0
      %563 = vmatprep.subr.bf16.mxu0 0
      %564 = vmatpush1.bf16.msra.mxu0 0
      %565 = vmatprep.subr.bf16.mxu0 0
      %566 = vmatpush1.bf16.msra.mxu0 0
      %567 = vmatprep.subr.bf16.mxu0 0
      %568 = vmatpush1.bf16.msra.mxu0 0
      %569 = vmatprep.subr.bf16.mxu0 0
      %570 = vmatpush1.bf16.msra.mxu0 0
      %571 = vmatprep.subr.bf16.mxu0 0
      %572 = vmatpush1.bf16.msra.mxu0 0
      %573 = vmatprep.subr.bf16.mxu0 0
      %574 = vmatpush1.bf16.msra.mxu0 0
      %575 = vmatprep.subr.bf16.mxu0 0
      %576 = vmatpush1.bf16.msra.mxu0 0
      %577 = vmatprep.subr.bf16.mxu0 0
      %578 = vmatpush1.bf16.msra.mxu0 0
      %579 = vmatprep.subr.bf16.mxu0 0
      %580 = vmatpush1.bf16.msra.mxu0 0
      %581 = vmatprep.mubr.bf16.mxu0 0
      %582 = vmatmul.mubr.bf16.gmra.mrb[0].mxu0 %v491
      %v583 = vpop.f32.mrb[0].mxu0
      %v584 = vadd.f32 0.0, %v583
      %v585 = vpop.f32.mrb[0].mxu0
      %v586 = vadd.f32 0.0, %v585
      %v587 = vpop.f32.mrb[0].mxu0
      %v588 = vadd.f32 0.0, %v587
      %v589 = vpop.f32.mrb[0].mxu0
      %v590 = vadd.f32 0.0, %v589
      %591 = vmatprep.mubr.bf16.mxu0 0
      %592 = vmatmul.mubr.bf16.gmra.mrb[0].mxu0 %v494
      %v593 = vpop.f32.mrb[0].mxu0
      %v594 = vadd.f32 0.0, %v593
      %v595 = vpop.f32.mrb[0].mxu0
      %v596 = vadd.f32 0.0, %v595
      %v597 = vpop.f32.mrb[0].mxu0
      %v598 = vadd.f32 0.0, %v597
      %v599 = vpop.f32.mrb[0].mxu0
      %v600 = vadd.f32 0.0, %v599
      %601 = vdwg.mxu0
      %v606 = vunpack.c.l.b16 %v431
      %v607 = vunpack.c.l.b16 %v432
      %v608 = vunpack.c.l.b16 %v433
      %v609 = vunpack.c.l.b16 %v434
      %v610 = vpack.c.b16 %v607, %v606
      %v611 = vpack.c.b16 %v609, %v608
      %v620 = vunpack.c.l.b16 %v415
      %v621 = vunpack.c.h.b16 %v415
      %v622 = vunpack.c.l.b16 %v416
      %v623 = vunpack.c.h.b16 %v416
      %v624 = vunpack.c.l.b16 %v417
      %v625 = vunpack.c.h.b16 %v417
      %v626 = vunpack.c.l.b16 %v418
      %v627 = vunpack.c.h.b16 %v418
      %v628 = vunpack.c.l.b16 %v419
      %v629 = vunpack.c.h.b16 %v419
      %v630 = vunpack.c.l.b16 %v420
      %v631 = vunpack.c.h.b16 %v420
      %v632 = vunpack.c.l.b16 %v421
      %v633 = vunpack.c.h.b16 %v421
      %v634 = vunpack.c.l.b16 %v422
      %v635 = vunpack.c.h.b16 %v422
      %v636 = vpack.c.b16 %v624, %v620
      %v637 = vpack.c.b16 %v625, %v621
      %v638 = vpack.c.b16 %v626, %v622
      %v639 = vpack.c.b16 %v627, %v623
      %v640 = vpack.c.b16 %v632, %v628
      %v641 = vpack.c.b16 %v633, %v629
      %v642 = vpack.c.b16 %v634, %v630
      %v643 = vpack.c.b16 %v635, %v631
      %v653 = vsel %vm489, %v610, 0
      %v656 = vsel %vm489, %v611, 0
      %658 = vmatprep.subr.bf16.mxu0 %v637
      %659 = vmatpush1.bf16.msra.mxu0 %v636
      %660 = vmatprep.subr.bf16.mxu0 %v641
      %661 = vmatpush1.bf16.msra.mxu0 %v640
      %662 = vmatprep.subr.bf16.mxu0 0
      %663 = vmatpush1.bf16.msra.mxu0 0
      %664 = vmatprep.subr.bf16.mxu0 0
      %665 = vmatpush1.bf16.msra.mxu0 0
      %666 = vmatprep.subr.bf16.mxu0 0
      %667 = vmatpush1.bf16.msra.mxu0 0
      %668 = vmatprep.subr.bf16.mxu0 0
      %669 = vmatpush1.bf16.msra.mxu0 0
      %670 = vmatprep.subr.bf16.mxu0 0
      %671 = vmatpush1.bf16.msra.mxu0 0
      %672 = vmatprep.subr.bf16.mxu0 0
      %673 = vmatpush1.bf16.msra.mxu0 0
      %674 = vmatprep.subr.bf16.mxu0 0
      %675 = vmatpush1.bf16.msra.mxu0 0
      %676 = vmatprep.subr.bf16.mxu0 0
      %677 = vmatpush1.bf16.msra.mxu0 0
      %678 = vmatprep.subr.bf16.mxu0 0
      %679 = vmatpush1.bf16.msra.mxu0 0
      %680 = vmatprep.subr.bf16.mxu0 0
      %681 = vmatpush1.bf16.msra.mxu0 0
      %682 = vmatprep.subr.bf16.mxu0 0
      %683 = vmatpush1.bf16.msra.mxu0 0
      %684 = vmatprep.subr.bf16.mxu0 0
      %685 = vmatpush1.bf16.msra.mxu0 0
      %686 = vmatprep.subr.bf16.mxu0 0
      %687 = vmatpush1.bf16.msra.mxu0 0
      %688 = vmatprep.subr.bf16.mxu0 0
      %689 = vmatpush1.bf16.msra.mxu0 0
      %690 = vmatprep.mubr.bf16.mxu0 0
      %691 = vmatmul.mubr.bf16.gmra.mrb[0].mxu0 %v653
      %v692 = vpop.f32.mrb[0].mxu0
      %v693 = vadd.f32 %v531, %v692
      %v694 = vpop.f32.mrb[0].mxu0
      %v695 = vadd.f32 %v533, %v694
      %v696 = vpop.f32.mrb[0].mxu0
      %v697 = vadd.f32 %v535, %v696
      %v698 = vpop.f32.mrb[0].mxu0
      %v699 = vadd.f32 %v537, %v698
      %700 = vmatprep.mubr.bf16.mxu0 0
      %701 = vmatmul.mubr.bf16.gmra.mrb[0].mxu0 %v656
      %v702 = vpop.f32.mrb[0].mxu0
      %v703 = vadd.f32 %v541, %v702
      %v704 = vpop.f32.mrb[0].mxu0
      %v705 = vadd.f32 %v543, %v704
      %v706 = vpop.f32.mrb[0].mxu0
      %v707 = vadd.f32 %v545, %v706
      %v708 = vpop.f32.mrb[0].mxu0
      %v709 = vadd.f32 %v547, %v708
      %710 = vdwg.mxu0
      %711 = vmatprep.subr.bf16.mxu0 %v639
      %712 = vmatpush1.bf16.msra.mxu0 %v638
      %713 = vmatprep.subr.bf16.mxu0 %v643
      %714 = vmatpush1.bf16.msra.mxu0 %v642
      %715 = vmatprep.subr.bf16.mxu0 0
      %716 = vmatpush1.bf16.msra.mxu0 0
      %717 = vmatprep.subr.bf16.mxu0 0
      %718 = vmatpush1.bf16.msra.mxu0 0
      %719 = vmatprep.subr.bf16.mxu0 0
      %720 = vmatpush1.bf16.msra.mxu0 0
      %721 = vmatprep.subr.bf16.mxu0 0
      %722 = vmatpush1.bf16.msra.mxu0 0
      %723 = vmatprep.subr.bf16.mxu0 0
      %724 = vmatpush1.bf16.msra.mxu0 0
      %725 = vmatprep.subr.bf16.mxu0 0
      %726 = vmatpush1.bf16.msra.mxu0 0
      %727 = vmatprep.subr.bf16.mxu0 0
      %728 = vmatpush1.bf16.msra.mxu0 0
      %729 = vmatprep.subr.bf16.mxu0 0
      %730 = vmatpush1.bf16.msra.mxu0 0
      %731 = vmatprep.subr.bf16.mxu0 0
      %732 = vmatpush1.bf16.msra.mxu0 0
      %733 = vmatprep.subr.bf16.mxu0 0
      %734 = vmatpush1.bf16.msra.mxu0 0
      %735 = vmatprep.subr.bf16.mxu0 0
      %736 = vmatpush1.bf16.msra.mxu0 0
      %737 = vmatprep.subr.bf16.mxu0 0
      %738 = vmatpush1.bf16.msra.mxu0 0
      %739 = vmatprep.subr.bf16.mxu0 0
      %740 = vmatpush1.bf16.msra.mxu0 0
      %741 = vmatprep.subr.bf16.mxu0 0
      %742 = vmatpush1.bf16.msra.mxu0 0
      %743 = vmatprep.mubr.bf16.mxu0 0
      %744 = vmatmul.mubr.bf16.gmra.mrb[0].mxu0 %v653
      %v745 = vpop.f32.mrb[0].mxu0
      %v746 = vadd.f32 %v584, %v745
      %v747 = vpop.f32.mrb[0].mxu0
      %v748 = vadd.f32 %v586, %v747
      %v749 = vpop.f32.mrb[0].mxu0
      %v750 = vadd.f32 %v588, %v749
      %v751 = vpop.f32.mrb[0].mxu0
      %v752 = vadd.f32 %v590, %v751
      %753 = vmatprep.mubr.bf16.mxu0 0
      %754 = vmatmul.mubr.bf16.gmra.mrb[0].mxu0 %v656
      %v755 = vpop.f32.mrb[0].mxu0
      %v756 = vadd.f32 %v594, %v755
      %v757 = vpop.f32.mrb[0].mxu0
      %v758 = vadd.f32 %v596, %v757
      %v759 = vpop.f32.mrb[0].mxu0
      %v760 = vadd.f32 %v598, %v759
      %v761 = vpop.f32.mrb[0].mxu0
      %v762 = vadd.f32 %v600, %v761
      %763 = vdwg.mxu0
      %v764 = vld [vmem:[%s7] sm:$0xf]
      %v766 = vlaneseq
      %v767 = vshrl.u32 %v766, 7
      %v768 = vsub.s32 0, %v767
      %v769 = vrot.slane %v764, %v768
      %v770 = vlaneseq
      %v771 = vshrl.u32 %v770, 7
      %v772 = vsub.s32 1, %v771
      %v773 = vrot.slane %v764, %v772
      %v774 = vlaneseq
      %v775 = vshrl.u32 %v774, 7
      %v776 = vsub.s32 2, %v775
      %v777 = vrot.slane %v764, %v776
      %v778 = vlaneseq
      %v779 = vshrl.u32 %v778, 7
      %v780 = vsub.s32 3, %v779
      %v781 = vrot.slane %v764, %v780
      %v786 = vadd.f32 %v693, %v769
      %v787 = vadd.f32 %v695, %v773
      %v788 = vadd.f32 %v746, %v777
      %v789 = vadd.f32 %v748, %v781
      %v790 = vadd.f32 %v697, %v769
      %v791 = vadd.f32 %v699, %v773
      %v792 = vadd.f32 %v750, %v777
      %v793 = vadd.f32 %v752, %v781
      %v794 = vadd.f32 %v703, %v769
      %v795 = vadd.f32 %v705, %v773
      %v796 = vadd.f32 %v756, %v777
      %v797 = vadd.f32 %v758, %v781
      %v798 = vadd.f32 %v707, %v769
      %v799 = vadd.f32 %v709, %v773
      %v800 = vadd.f32 %v760, %v777
      %v801 = vadd.f32 %v762, %v781
      %v802 = vpack.c.bf16 %v786, %v786
      %v803 = vpack.c.bf16 %v787, %v787
      %v804 = vpack.c.bf16 %v788, %v788
      %v805 = vpack.c.bf16 %v789, %v789
      %v806 = vpack.c.bf16 %v790, %v790
      %v807 = vpack.c.bf16 %v791, %v791
      %v808 = vpack.c.bf16 %v792, %v792
      %v809 = vpack.c.bf16 %v793, %v793
      %v810 = vpack.c.bf16 %v794, %v794
      %v811 = vpack.c.bf16 %v795, %v795
      %v812 = vpack.c.bf16 %v796, %v796
      %v813 = vpack.c.bf16 %v797, %v797
      %v814 = vpack.c.bf16 %v798, %v798
      %v815 = vpack.c.bf16 %v799, %v799
      %v816 = vpack.c.bf16 %v800, %v800
      %v817 = vpack.c.bf16 %v801, %v801
      %v834 = vunpack.c.l.b16 %v802
      %v835 = vunpack.c.l.b16 %v803
      %v836 = vunpack.c.l.b16 %v804
      %v837 = vunpack.c.l.b16 %v805
      %v838 = vunpack.c.l.b16 %v806
      %v839 = vunpack.c.l.b16 %v807
      %v840 = vunpack.c.l.b16 %v808
      %v841 = vunpack.c.l.b16 %v809
      %v842 = vunpack.c.l.b16 %v810
      %v843 = vunpack.c.l.b16 %v811
      %v844 = vunpack.c.l.b16 %v812
      %v845 = vunpack.c.l.b16 %v813
      %v846 = vunpack.c.l.b16 %v814
      %v847 = vunpack.c.l.b16 %v815
      %v848 = vunpack.c.l.b16 %v816
      %v849 = vunpack.c.l.b16 %v817
      %v850 = vpack.c.b16 %v835, %v834
      %v851 = vpack.c.b16 %v837, %v836
      %v852 = vpack.c.b16 %v839, %v838
      %v853 = vpack.c.b16 %v841, %v840
      %v854 = vpack.c.b16 %v843, %v842
      %v855 = vpack.c.b16 %v845, %v844
      %v856 = vpack.c.b16 %v847, %v846
      %v857 = vpack.c.b16 %v849, %v848
      %866 = vst [vmem:[#allocation6] sm:$0xff] %v850
      %867 = vst [vmem:[#allocation6 + $0x8] sm:$0xff] %v851
      %868 = vst [vmem:[#allocation6 + $0x10] sm:$0xff] %v852
      %869 = vst [vmem:[#allocation6 + $0x18] sm:$0xff] %v853
      %870 = vst [vmem:[#allocation6 + $0x20] sm:$0xff] %v854
      %871 = vst [vmem:[#allocation6 + $0x28] sm:$0xff] %v855
      %872 = vst [vmem:[#allocation6 + $0x30] sm:$0xff] %v856
      %873 = vst [vmem:[#allocation6 + $0x38] sm:$0xff] %v857
      %s874 = scalar_lea.vmem %s5, 128
      %v875 = vld [vmem:[%s874] sm:$0xff]
      %v876 = vld [vmem:[%s874 + $0x8] sm:$0xff]
      %v877 = vld [vmem:[%s874 + $0x10] sm:$0xff]
      %v878 = vld [vmem:[%s874 + $0x18] sm:$0xff]
      %v879 = vld [vmem:[%s874 + $0x20] sm:$0xff]
      %v880 = vld [vmem:[%s874 + $0x28] sm:$0xff]
      %v881 = vld [vmem:[%s874 + $0x30] sm:$0xff]
      %v882 = vld [vmem:[%s874 + $0x38] sm:$0xff]
      %v883 = vld [vmem:[%s874 + $0x40] sm:$0xff]
      %v884 = vld [vmem:[%s874 + $0x48] sm:$0xff]
      %v885 = vld [vmem:[%s874 + $0x50] sm:$0xff]
      %v886 = vld [vmem:[%s874 + $0x58] sm:$0xff]
      %v887 = vld [vmem:[%s874 + $0x60] sm:$0xff]
      %v888 = vld [vmem:[%s874 + $0x68] sm:$0xff]
      %v889 = vld [vmem:[%s874 + $0x70] sm:$0xff]
      %v890 = vld [vmem:[%s874 + $0x78] sm:$0xff]
      %v891 = vld [vmem:[%s389] sm:$0xf]
      %v892 = vld [vmem:[%s389 + $0x4] sm:$0xf]
      %v893 = vld [vmem:[%s389 + $0x8] sm:$0xf]
      %v894 = vld [vmem:[%s389 + $0xc] sm:$0xf]
      %v895 = vld [vmem:[%s397] sm:$0xf]
      %v896 = vld [vmem:[%s397 + $0x4] sm:$0xf]
      %v897 = vld [vmem:[%s397 + $0x8] sm:$0xf]
      %v898 = vld [vmem:[%s397 + $0xc] sm:$0xf]
      %v903 = vunpack.c.l.b16 %v895
      %v904 = vunpack.c.l.b16 %v896
      %v905 = vunpack.c.l.b16 %v897
      %v906 = vunpack.c.l.b16 %v898
      %v907 = vpack.c.b16 %v904, %v903
      %v908 = vpack.c.b16 %v906, %v905
      %v917 = vunpack.c.l.b16 %v883
      %v918 = vunpack.c.h.b16 %v883
      %v919 = vunpack.c.l.b16 %v884
      %v920 = vunpack.c.h.b16 %v884
      %v921 = vunpack.c.l.b16 %v885
      %v922 = vunpack.c.h.b16 %v885
      %v923 = vunpack.c.l.b16 %v886
      %v924 = vunpack.c.h.b16 %v886
      %v925 = vunpack.c.l.b16 %v887
      %v926 = vunpack.c.h.b16 %v887
      %v927 = vunpack.c.l.b16 %v888
      %v928 = vunpack.c.h.b16 %v888
      %v929 = vunpack.c.l.b16 %v889
      %v930 = vunpack.c.h.b16 %v889
      %v931 = vunpack.c.l.b16 %v890
      %v932 = vunpack.c.h.b16 %v890
      %v933 = vpack.c.b16 %v921, %v917
      %v934 = vpack.c.b16 %v922, %v918
      %v935 = vpack.c.b16 %v923, %v919
      %v936 = vpack.c.b16 %v924, %v920
      %v937 = vpack.c.b16 %v929, %v925
      %v938 = vpack.c.b16 %v930, %v926
      %v939 = vpack.c.b16 %v931, %v927
      %v940 = vpack.c.b16 %v932, %v928
      %v950 = vsel %vm489, %v907, 0
      %v953 = vsel %vm489, %v908, 0
      %955 = vmatprep.subr.bf16.mxu0 %v934
      %956 = vmatpush1.bf16.msra.mxu0 %v933
      %957 = vmatprep.subr.bf16.mxu0 %v938
      %958 = vmatpush1.bf16.msra.mxu0 %v937
      %959 = vmatprep.subr.bf16.mxu0 0
      %960 = vmatpush1.bf16.msra.mxu0 0
      %961 = vmatprep.subr.bf16.mxu0 0
      %962 = vmatpush1.bf16.msra.mxu0 0
      %963 = vmatprep.subr.bf16.mxu0 0
      %964 = vmatpush1.bf16.msra.mxu0 0
      %965 = vmatprep.subr.bf16.mxu0 0
      %966 = vmatpush1.bf16.msra.mxu0 0
      %967 = vmatprep.subr.bf16.mxu0 0
      %968 = vmatpush1.bf16.msra.mxu0 0
      %969 = vmatprep.subr.bf16.mxu0 0
      %970 = vmatpush1.bf16.msra.mxu0 0
      %971 = vmatprep.subr.bf16.mxu0 0
      %972 = vmatpush1.bf16.msra.mxu0 0
      %973 = vmatprep.subr.bf16.mxu0 0
      %974 = vmatpush1.bf16.msra.mxu0 0
      %975 = vmatprep.subr.bf16.mxu0 0
      %976 = vmatpush1.bf16.msra.mxu0 0
      %977 = vmatprep.subr.bf16.mxu0 0
      %978 = vmatpush1.bf16.msra.mxu0 0
      %979 = vmatprep.subr.bf16.mxu0 0
      %980 = vmatpush1.bf16.msra.mxu0 0
      %981 = vmatprep.subr.bf16.mxu0 0
      %982 = vmatpush1.bf16.msra.mxu0 0
      %983 = vmatprep.subr.bf16.mxu0 0
      %984 = vmatpush1.bf16.msra.mxu0 0
      %985 = vmatprep.subr.bf16.mxu0 0
      %986 = vmatpush1.bf16.msra.mxu0 0
      %987 = vmatprep.mubr.bf16.mxu0 0
      %988 = vmatmul.mubr.bf16.gmra.mrb[0].mxu0 %v950
      %v989 = vpop.f32.mrb[0].mxu0
      %v990 = vadd.f32 0.0, %v989
      %v991 = vpop.f32.mrb[0].mxu0
      %v992 = vadd.f32 0.0, %v991
      %v993 = vpop.f32.mrb[0].mxu0
      %v994 = vadd.f32 0.0, %v993
      %v995 = vpop.f32.mrb[0].mxu0
      %v996 = vadd.f32 0.0, %v995
      %997 = vmatprep.mubr.bf16.mxu0 0
      %998 = vmatmul.mubr.bf16.gmra.mrb[0].mxu0 %v953
      %v999 = vpop.f32.mrb[0].mxu0
      %v1000 = vadd.f32 0.0, %v999
      %v1001 = vpop.f32.mrb[0].mxu0
      %v1002 = vadd.f32 0.0, %v1001
      %v1003 = vpop.f32.mrb[0].mxu0
      %v1004 = vadd.f32 0.0, %v1003
      %v1005 = vpop.f32.mrb[0].mxu0
      %v1006 = vadd.f32 0.0, %v1005
      %1007 = vdwg.mxu0
      %1008 = vmatprep.subr.bf16.mxu0 %v936
      %1009 = vmatpush1.bf16.msra.mxu0 %v935
      %1010 = vmatprep.subr.bf16.mxu0 %v940
      %1011 = vmatpush1.bf16.msra.mxu0 %v939
      %1012 = vmatprep.subr.bf16.mxu0 0
      %1013 = vmatpush1.bf16.msra.mxu0 0
      %1014 = vmatprep.subr.bf16.mxu0 0
      %1015 = vmatpush1.bf16.msra.mxu0 0
      %1016 = vmatprep.subr.bf16.mxu0 0
      %1017 = vmatpush1.bf16.msra.mxu0 0
      %1018 = vmatprep.subr.bf16.mxu0 0
      %1019 = vmatpush1.bf16.msra.mxu0 0
      %1020 = vmatprep.subr.bf16.mxu0 0
      %1021 = vmatpush1.bf16.msra.mxu0 0
      %1022 = vmatprep.subr.bf16.mxu0 0
      %1023 = vmatpush1.bf16.msra.mxu0 0
      %1024 = vmatprep.subr.bf16.mxu0 0
      %1025 = vmatpush1.bf16.msra.mxu0 0
      %1026 = vmatprep.subr.bf16.mxu0 0
      %1027 = vmatpush1.bf16.msra.mxu0 0
      %1028 = vmatprep.subr.bf16.mxu0 0
      %1029 = vmatpush1.bf16.msra.mxu0 0
      %1030 = vmatprep.subr.bf16.mxu0 0
      %1031 = vmatpush1.bf16.msra.mxu0 0
      %1032 = vmatprep.subr.bf16.mxu0 0
      %1033 = vmatpush1.bf16.msra.mxu0 0
      %1034 = vmatprep.subr.bf16.mxu0 0
      %1035 = vmatpush1.bf16.msra.mxu0 0
      %1036 = vmatprep.subr.bf16.mxu0 0
      %1037 = vmatpush1.bf16.msra.mxu0 0
      %1038 = vmatprep.subr.bf16.mxu0 0
      %1039 = vmatpush1.bf16.msra.mxu0 0
      %1040 = vmatprep.mubr.bf16.mxu0 0
      %1041 = vmatmul.mubr.bf16.gmra.mrb[0].mxu0 %v950
      %v1042 = vpop.f32.mrb[0].mxu0
      %v1043 = vadd.f32 0.0, %v1042
      %v1044 = vpop.f32.mrb[0].mxu0
      %v1045 = vadd.f32 0.0, %v1044
      %v1046 = vpop.f32.mrb[0].mxu0
      %v1047 = vadd.f32 0.0, %v1046
      %v1048 = vpop.f32.mrb[0].mxu0
      %v1049 = vadd.f32 0.0, %v1048
      %1050 = vmatprep.mubr.bf16.mxu0 0
      %1051 = vmatmul.mubr.bf16.gmra.mrb[0].mxu0 %v953
      %v1052 = vpop.f32.mrb[0].mxu0
      %v1053 = vadd.f32 0.0, %v1052
      %v1054 = vpop.f32.mrb[0].mxu0
      %v1055 = vadd.f32 0.0, %v1054
      %v1056 = vpop.f32.mrb[0].mxu0
      %v1057 = vadd.f32 0.0, %v1056
      %v1058 = vpop.f32.mrb[0].mxu0
      %v1059 = vadd.f32 0.0, %v1058
      %1060 = vdwg.mxu0
      %v1065 = vunpack.c.l.b16 %v891
      %v1066 = vunpack.c.l.b16 %v892
      %v1067 = vunpack.c.l.b16 %v893
      %v1068 = vunpack.c.l.b16 %v894
      %v1069 = vpack.c.b16 %v1066, %v1065
      %v1070 = vpack.c.b16 %v1068, %v1067
      %v1079 = vunpack.c.l.b16 %v875
      %v1080 = vunpack.c.h.b16 %v875
      %v1081 = vunpack.c.l.b16 %v876
      %v1082 = vunpack.c.h.b16 %v876
      %v1083 = vunpack.c.l.b16 %v877
      %v1084 = vunpack.c.h.b16 %v877
      %v1085 = vunpack.c.l.b16 %v878
      %v1086 = vunpack.c.h.b16 %v878
      %v1087 = vunpack.c.l.b16 %v879
      %v1088 = vunpack.c.h.b16 %v879
      %v1089 = vunpack.c.l.b16 %v880
      %v1090 = vunpack.c.h.b16 %v880
      %v1091 = vunpack.c.l.b16 %v881
      %v1092 = vunpack.c.h.b16 %v881
      %v1093 = vunpack.c.l.b16 %v882
      %v1094 = vunpack.c.h.b16 %v882
      %v1095 = vpack.c.b16 %v1083, %v1079
      %v1096 = vpack.c.b16 %v1084, %v1080
      %v1097 = vpack.c.b16 %v1085, %v1081
      %v1098 = vpack.c.b16 %v1086, %v1082
      %v1099 = vpack.c.b16 %v1091, %v1087
      %v1100 = vpack.c.b16 %v1092, %v1088
      %v1101 = vpack.c.b16 %v1093, %v1089
      %v1102 = vpack.c.b16 %v1094, %v1090
      %v1112 = vsel %vm489, %v1069, 0
      %v1115 = vsel %vm489, %v1070, 0
      %1117 = vmatprep.subr.bf16.mxu0 %v1096
      %1118 = vmatpush1.bf16.msra.mxu0 %v1095
      %1119 = vmatprep.subr.bf16.mxu0 %v1100
      %1120 = vmatpush1.bf16.msra.mxu0 %v1099
      %1121 = vmatprep.subr.bf16.mxu0 0
      %1122 = vmatpush1.bf16.msra.mxu0 0
      %1123 = vmatprep.subr.bf16.mxu0 0
      %1124 = vmatpush1.bf16.msra.mxu0 0
      %1125 = vmatprep.subr.bf16.mxu0 0
      %1126 = vmatpush1.bf16.msra.mxu0 0
      %1127 = vmatprep.subr.bf16.mxu0 0
      %1128 = vmatpush1.bf16.msra.mxu0 0
      %1129 = vmatprep.subr.bf16.mxu0 0
      %1130 = vmatpush1.bf16.msra.mxu0 0
      %1131 = vmatprep.subr.bf16.mxu0 0
      %1132 = vmatpush1.bf16.msra.mxu0 0
      %1133 = vmatprep.subr.bf16.mxu0 0
      %1134 = vmatpush1.bf16.msra.mxu0 0
      %1135 = vmatprep.subr.bf16.mxu0 0
      %1136 = vmatpush1.bf16.msra.mxu0 0
      %1137 = vmatprep.subr.bf16.mxu0 0
      %1138 = vmatpush1.bf16.msra.mxu0 0
      %1139 = vmatprep.subr.bf16.mxu0 0
      %1140 = vmatpush1.bf16.msra.mxu0 0
      %1141 = vmatprep.subr.bf16.mxu0 0
      %1142 = vmatpush1.bf16.msra.mxu0 0
      %1143 = vmatprep.subr.bf16.mxu0 0
      %1144 = vmatpush1.bf16.msra.mxu0 0
      %1145 = vmatprep.subr.bf16.mxu0 0
      %1146 = vmatpush1.bf16.msra.mxu0 0
      %1147 = vmatprep.subr.bf16.mxu0 0
      %1148 = vmatpush1.bf16.msra.mxu0 0
      %1149 = vmatprep.mubr.bf16.mxu0 0
      %1150 = vmatmul.mubr.bf16.gmra.mrb[0].mxu0 %v1112
      %v1151 = vpop.f32.mrb[0].mxu0
      %v1152 = vadd.f32 %v990, %v1151
      %v1153 = vpop.f32.mrb[0].mxu0
      %v1154 = vadd.f32 %v992, %v1153
      %v1155 = vpop.f32.mrb[0].mxu0
      %v1156 = vadd.f32 %v994, %v1155
      %v1157 = vpop.f32.mrb[0].mxu0
      %v1158 = vadd.f32 %v996, %v1157
      %1159 = vmatprep.mubr.bf16.mxu0 0
      %1160 = vmatmul.mubr.bf16.gmra.mrb[0].mxu0 %v1115
      %v1161 = vpop.f32.mrb[0].mxu0
      %v1162 = vadd.f32 %v1000, %v1161
      %v1163 = vpop.f32.mrb[0].mxu0
      %v1164 = vadd.f32 %v1002, %v1163
      %v1165 = vpop.f32.mrb[0].mxu0
      %v1166 = vadd.f32 %v1004, %v1165
      %v1167 = vpop.f32.mrb[0].mxu0
      %v1168 = vadd.f32 %v1006, %v1167
      %1169 = vdwg.mxu0
      %1170 = vmatprep.subr.bf16.mxu0 %v1098
      %1171 = vmatpush1.bf16.msra.mxu0 %v1097
      %1172 = vmatprep.subr.bf16.mxu0 %v1102
      %1173 = vmatpush1.bf16.msra.mxu0 %v1101
      %1174 = vmatprep.subr.bf16.mxu0 0
      %1175 = vmatpush1.bf16.msra.mxu0 0
      %1176 = vmatprep.subr.bf16.mxu0 0
      %1177 = vmatpush1.bf16.msra.mxu0 0
      %1178 = vmatprep.subr.bf16.mxu0 0
      %1179 = vmatpush1.bf16.msra.mxu0 0
      %1180 = vmatprep.subr.bf16.mxu0 0
      %1181 = vmatpush1.bf16.msra.mxu0 0
      %1182 = vmatprep.subr.bf16.mxu0 0
      %1183 = vmatpush1.bf16.msra.mxu0 0
      %1184 = vmatprep.subr.bf16.mxu0 0
      %1185 = vmatpush1.bf16.msra.mxu0 0
      %1186 = vmatprep.subr.bf16.mxu0 0
      %1187 = vmatpush1.bf16.msra.mxu0 0
      %1188 = vmatprep.subr.bf16.mxu0 0
      %1189 = vmatpush1.bf16.msra.mxu0 0
      %1190 = vmatprep.subr.bf16.mxu0 0
      %1191 = vmatpush1.bf16.msra.mxu0 0
      %1192 = vmatprep.subr.bf16.mxu0 0
      %1193 = vmatpush1.bf16.msra.mxu0 0
      %1194 = vmatprep.subr.bf16.mxu0 0
      %1195 = vmatpush1.bf16.msra.mxu0 0
      %1196 = vmatprep.subr.bf16.mxu0 0
      %1197 = vmatpush1.bf16.msra.mxu0 0
      %1198 = vmatprep.subr.bf16.mxu0 0
      %1199 = vmatpush1.bf16.msra.mxu0 0
      %1200 = vmatprep.subr.bf16.mxu0 0
      %1201 = vmatpush1.bf16.msra.mxu0 0
      %1202 = vmatprep.mubr.bf16.mxu0 0
      %1203 = vmatmul.mubr.bf16.gmra.mrb[0].mxu0 %v1112
      %v1204 = vpop.f32.mrb[0].mxu0
      %v1205 = vadd.f32 %v1043, %v1204
      %v1206 = vpop.f32.mrb[0].mxu0
      %v1207 = vadd.f32 %v1045, %v1206
      %v1208 = vpop.f32.mrb[0].mxu0
      %v1209 = vadd.f32 %v1047, %v1208
      %v1210 = vpop.f32.mrb[0].mxu0
      %v1211 = vadd.f32 %v1049, %v1210
      %1212 = vmatprep.mubr.bf16.mxu0 0
      %1213 = vmatmul.mubr.bf16.gmra.mrb[0].mxu0 %v1115
      %v1214 = vpop.f32.mrb[0].mxu0
      %v1215 = vadd.f32 %v1053, %v1214
      %v1216 = vpop.f32.mrb[0].mxu0
      %v1217 = vadd.f32 %v1055, %v1216
      %v1218 = vpop.f32.mrb[0].mxu0
      %v1219 = vadd.f32 %v1057, %v1218
      %v1220 = vpop.f32.mrb[0].mxu0
      %v1221 = vadd.f32 %v1059, %v1220
      %1222 = vdwg.mxu0
      %s1223 = scalar_lea.vmem %s7, 4
      %v1224 = vld [vmem:[%s1223] sm:$0xf]
      %v1226 = vlaneseq
      %v1227 = vshrl.u32 %v1226, 7
      %v1228 = vsub.s32 0, %v1227
      %v1229 = vrot.slane %v1224, %v1228
      %v1230 = vlaneseq
      %v1231 = vshrl.u32 %v1230, 7
      %v1232 = vsub.s32 1, %v1231
      %v1233 = vrot.slane %v1224, %v1232
      %v1234 = vlaneseq
      %v1235 = vshrl.u32 %v1234, 7
      %v1236 = vsub.s32 2, %v1235
      %v1237 = vrot.slane %v1224, %v1236
      %v1238 = vlaneseq
      %v1239 = vshrl.u32 %v1238, 7
      %v1240 = vsub.s32 3, %v1239
      %v1241 = vrot.slane %v1224, %v1240
      %v1246 = vadd.f32 %v1152, %v1229
      %v1247 = vadd.f32 %v1154, %v1233
      %v1248 = vadd.f32 %v1205, %v1237
      %v1249 = vadd.f32 %v1207, %v1241
      %v1250 = vadd.f32 %v1156, %v1229
      %v1251 = vadd.f32 %v1158, %v1233
      %v1252 = vadd.f32 %v1209, %v1237
      %v1253 = vadd.f32 %v1211, %v1241
      %v1254 = vadd.f32 %v1162, %v1229
      %v1255 = vadd.f32 %v1164, %v1233
      %v1256 = vadd.f32 %v1215, %v1237
      %v1257 = vadd.f32 %v1217, %v1241
      %v1258 = vadd.f32 %v1166, %v1229
      %v1259 = vadd.f32 %v1168, %v1233
      %v1260 = vadd.f32 %v1219, %v1237
      %v1261 = vadd.f32 %v1221, %v1241
      %v1262 = vpack.c.bf16 %v1246, %v1246
      %v1263 = vpack.c.bf16 %v1247, %v1247
      %v1264 = vpack.c.bf16 %v1248, %v1248
      %v1265 = vpack.c.bf16 %v1249, %v1249
      %v1266 = vpack.c.bf16 %v1250, %v1250
      %v1267 = vpack.c.bf16 %v1251, %v1251
      %v1268 = vpack.c.bf16 %v1252, %v1252
      %v1269 = vpack.c.bf16 %v1253, %v1253
      %v1270 = vpack.c.bf16 %v1254, %v1254
      %v1271 = vpack.c.bf16 %v1255, %v1255
      %v1272 = vpack.c.bf16 %v1256, %v1256
      %v1273 = vpack.c.bf16 %v1257, %v1257
      %v1274 = vpack.c.bf16 %v1258, %v1258
      %v1275 = vpack.c.bf16 %v1259, %v1259
      %v1276 = vpack.c.bf16 %v1260, %v1260
      %v1277 = vpack.c.bf16 %v1261, %v1261
      %v1294 = vunpack.c.l.b16 %v1262
      %v1295 = vunpack.c.l.b16 %v1263
      %v1296 = vunpack.c.l.b16 %v1264
      %v1297 = vunpack.c.l.b16 %v1265
      %v1298 = vunpack.c.l.b16 %v1266
      %v1299 = vunpack.c.l.b16 %v1267
      %v1300 = vunpack.c.l.b16 %v1268
      %v1301 = vunpack.c.l.b16 %v1269
      %v1302 = vunpack.c.l.b16 %v1270
      %v1303 = vunpack.c.l.b16 %v1271
      %v1304 = vunpack.c.l.b16 %v1272
      %v1305 = vunpack.c.l.b16 %v1273
      %v1306 = vunpack.c.l.b16 %v1274
      %v1307 = vunpack.c.l.b16 %v1275
      %v1308 = vunpack.c.l.b16 %v1276
      %v1309 = vunpack.c.l.b16 %v1277
      %v1310 = vpack.c.b16 %v1295, %v1294
      %v1311 = vpack.c.b16 %v1297, %v1296
      %v1312 = vpack.c.b16 %v1299, %v1298
      %v1313 = vpack.c.b16 %v1301, %v1300
      %v1314 = vpack.c.b16 %v1303, %v1302
      %v1315 = vpack.c.b16 %v1305, %v1304
      %v1316 = vpack.c.b16 %v1307, %v1306
      %v1317 = vpack.c.b16 %v1309, %v1308
      %1326 = vst [vmem:[#allocation7] sm:$0xff] %v1310
      %1327 = vst [vmem:[#allocation7 + $0x8] sm:$0xff] %v1311
      %1328 = vst [vmem:[#allocation7 + $0x10] sm:$0xff] %v1312
      %1329 = vst [vmem:[#allocation7 + $0x18] sm:$0xff] %v1313
      %1330 = vst [vmem:[#allocation7 + $0x20] sm:$0xff] %v1314
      %1331 = vst [vmem:[#allocation7 + $0x28] sm:$0xff] %v1315
      %1332 = vst [vmem:[#allocation7 + $0x30] sm:$0xff] %v1316
      %1333 = vst [vmem:[#allocation7 + $0x38] sm:$0xff] %v1317
      %v1334 = vld [vmem:[%s6] sm:$0xff]
      %v1335 = vld [vmem:[%s6 + $0x8] sm:$0xff]
      %v1336 = vld [vmem:[%s6 + $0x10] sm:$0xff]
      %v1337 = vld [vmem:[%s6 + $0x18] sm:$0xff]
      %v1338 = vld [vmem:[%s6 + $0x20] sm:$0xff]
      %v1339 = vld [vmem:[%s6 + $0x28] sm:$0xff]
      %v1340 = vld [vmem:[%s6 + $0x30] sm:$0xff]
      %v1341 = vld [vmem:[%s6 + $0x38] sm:$0xff]
      %v1342 = vld [vmem:[%s6 + $0x40] sm:$0xff]
      %v1343 = vld [vmem:[%s6 + $0x48] sm:$0xff]
      %v1344 = vld [vmem:[%s6 + $0x50] sm:$0xff]
      %v1345 = vld [vmem:[%s6 + $0x58] sm:$0xff]
      %v1346 = vld [vmem:[%s6 + $0x60] sm:$0xff]
      %v1347 = vld [vmem:[%s6 + $0x68] sm:$0xff]
      %v1348 = vld [vmem:[%s6 + $0x70] sm:$0xff]
      %v1349 = vld [vmem:[%s6 + $0x78] sm:$0xff]
      %v1350 = vld [vmem:[%s6 + $0x80] sm:$0xff]
      %v1351 = vld [vmem:[%s6 + $0x88] sm:$0xff]
      %v1352 = vld [vmem:[%s6 + $0x90] sm:$0xff]
      %v1353 = vld [vmem:[%s6 + $0x98] sm:$0xff]
      %v1354 = vld [vmem:[%s6 + $0xa0] sm:$0xff]
      %v1355 = vld [vmem:[%s6 + $0xa8] sm:$0xff]
      %v1356 = vld [vmem:[%s6 + $0xb0] sm:$0xff]
      %v1357 = vld [vmem:[%s6 + $0xb8] sm:$0xff]
      %v1358 = vld [vmem:[%s6 + $0xc0] sm:$0xff]
      %v1359 = vld [vmem:[%s6 + $0xc8] sm:$0xff]
      %v1360 = vld [vmem:[%s6 + $0xd0] sm:$0xff]
      %v1361 = vld [vmem:[%s6 + $0xd8] sm:$0xff]
      %v1362 = vld [vmem:[%s6 + $0xe0] sm:$0xff]
      %v1363 = vld [vmem:[%s6 + $0xe8] sm:$0xff]
      %v1364 = vld [vmem:[%s6 + $0xf0] sm:$0xff]
      %v1365 = vld [vmem:[%s6 + $0xf8] sm:$0xff]
      %s1366 = scalar_lea.vmem %s6, 256
      %v1367 = vld [vmem:[%s1366] sm:$0xff]
      %v1368 = vld [vmem:[%s1366 + $0x8] sm:$0xff]
      %v1369 = vld [vmem:[%s1366 + $0x10] sm:$0xff]
      %v1370 = vld [vmem:[%s1366 + $0x18] sm:$0xff]
      %v1371 = vld [vmem:[%s1366 + $0x20] sm:$0xff]
      %v1372 = vld [vmem:[%s1366 + $0x28] sm:$0xff]
      %v1373 = vld [vmem:[%s1366 + $0x30] sm:$0xff]
      %v1374 = vld [vmem:[%s1366 + $0x38] sm:$0xff]
      %v1375 = vld [vmem:[%s1366 + $0x40] sm:$0xff]
      %v1376 = vld [vmem:[%s1366 + $0x48] sm:$0xff]
      %v1377 = vld [vmem:[%s1366 + $0x50] sm:$0xff]
      %v1378 = vld [vmem:[%s1366 + $0x58] sm:$0xff]
      %v1379 = vld [vmem:[%s1366 + $0x60] sm:$0xff]
      %v1380 = vld [vmem:[%s1366 + $0x68] sm:$0xff]
      %v1381 = vld [vmem:[%s1366 + $0x70] sm:$0xff]
      %v1382 = vld [vmem:[%s1366 + $0x78] sm:$0xff]
      %v1383 = vld [vmem:[%s1366 + $0x80] sm:$0xff]
      %v1384 = vld [vmem:[%s1366 + $0x88] sm:$0xff]
      %v1385 = vld [vmem:[%s1366 + $0x90] sm:$0xff]
      %v1386 = vld [vmem:[%s1366 + $0x98] sm:$0xff]
      %v1387 = vld [vmem:[%s1366 + $0xa0] sm:$0xff]
      %v1388 = vld [vmem:[%s1366 + $0xa8] sm:$0xff]
      %v1389 = vld [vmem:[%s1366 + $0xb0] sm:$0xff]
      %v1390 = vld [vmem:[%s1366 + $0xb8] sm:$0xff]
      %v1391 = vld [vmem:[%s1366 + $0xc0] sm:$0xff]
      %v1392 = vld [vmem:[%s1366 + $0xc8] sm:$0xff]
      %v1393 = vld [vmem:[%s1366 + $0xd0] sm:$0xff]
      %v1394 = vld [vmem:[%s1366 + $0xd8] sm:$0xff]
      %v1395 = vld [vmem:[%s1366 + $0xe0] sm:$0xff]
      %v1396 = vld [vmem:[%s1366 + $0xe8] sm:$0xff]
      %v1397 = vld [vmem:[%s1366 + $0xf0] sm:$0xff]
      %v1398 = vld [vmem:[%s1366 + $0xf8] sm:$0xff]
      %s1399 = smul.u32 %s20, 4
      %v1400 = vstv %s1399
      %vm1401 = vcmp.gt.s32.totalorder %v402, %v1400
      %v1402 = vld [vmem:[#allocation2] sm:$0xf]
      %v1403 = vld [vmem:[#allocation6] sm:$0xff]
      %v1404 = vld [vmem:[#allocation6 + $0x8] sm:$0xff]
      %v1405 = vunpack.c.l.bf16 %v1403
      %v1406 = vunpack.c.h.bf16 %v1403
      %v1407 = vunpack.c.l.bf16 %v1404
      %v1408 = vunpack.c.h.bf16 %v1404
      %v1441 = vunpack.c.l.b16 %v1334
      %v1442 = vunpack.c.h.b16 %v1334
      %v1443 = vunpack.c.l.b16 %v1335
      %v1444 = vunpack.c.h.b16 %v1335
      %v1445 = vunpack.c.l.b16 %v1336
      %v1446 = vunpack.c.h.b16 %v1336
      %v1447 = vunpack.c.l.b16 %v1337
      %v1448 = vunpack.c.h.b16 %v1337
      %v1449 = vunpack.c.l.b16 %v1338
      %v1450 = vunpack.c.h.b16 %v1338
      %v1451 = vunpack.c.l.b16 %v1339
      %v1452 = vunpack.c.h.b16 %v1339
      %v1453 = vunpack.c.l.b16 %v1340
      %v1454 = vunpack.c.h.b16 %v1340
      %v1455 = vunpack.c.l.b16 %v1341
      %v1456 = vunpack.c.h.b16 %v1341
      %v1457 = vunpack.c.l.b16 %v1342
      %v1458 = vunpack.c.h.b16 %v1342
      %v1459 = vunpack.c.l.b16 %v1343
      %v1460 = vunpack.c.h.b16 %v1343
      %v1461 = vunpack.c.l.b16 %v1344
      %v1462 = vunpack.c.h.b16 %v1344
      %v1463 = vunpack.c.l.b16 %v1345
      %v1464 = vunpack.c.h.b16 %v1345
      %v1465 = vunpack.c.l.b16 %v1346
      %v1466 = vunpack.c.h.b16 %v1346
      %v1467 = vunpack.c.l.b16 %v1347
      %v1468 = vunpack.c.h.b16 %v1347
      %v1469 = vunpack.c.l.b16 %v1348
      %v1470 = vunpack.c.h.b16 %v1348
      %v1471 = vunpack.c.l.b16 %v1349
      %v1472 = vunpack.c.h.b16 %v1349
      %v1473 = vunpack.c.l.b16 %v1350
      %v1474 = vunpack.c.h.b16 %v1350
      %v1475 = vunpack.c.l.b16 %v1351
      %v1476 = vunpack.c.h.b16 %v1351
      %v1477 = vunpack.c.l.b16 %v1352
      %v1478 = vunpack.c.h.b16 %v1352
      %v1479 = vunpack.c.l.b16 %v1353
      %v1480 = vunpack.c.h.b16 %v1353
      %v1481 = vunpack.c.l.b16 %v1354
      %v1482 = vunpack.c.h.b16 %v1354
      %v1483 = vunpack.c.l.b16 %v1355
      %v1484 = vunpack.c.h.b16 %v1355
      %v1485 = vunpack.c.l.b16 %v1356
      %v1486 = vunpack.c.h.b16 %v1356
      %v1487 = vunpack.c.l.b16 %v1357
      %v1488 = vunpack.c.h.b16 %v1357
      %v1489 = vunpack.c.l.b16 %v1358
      %v1490 = vunpack.c.h.b16 %v1358
      %v1491 = vunpack.c.l.b16 %v1359
      %v1492 = vunpack.c.h.b16 %v1359
      %v1493 = vunpack.c.l.b16 %v1360
      %v1494 = vunpack.c.h.b16 %v1360
      %v1495 = vunpack.c.l.b16 %v1361
      %v1496 = vunpack.c.h.b16 %v1361
      %v1497 = vunpack.c.l.b16 %v1362
      %v1498 = vunpack.c.h.b16 %v1362
      %v1499 = vunpack.c.l.b16 %v1363
      %v1500 = vunpack.c.h.b16 %v1363
      %v1501 = vunpack.c.l.b16 %v1364
      %v1502 = vunpack.c.h.b16 %v1364
      %v1503 = vunpack.c.l.b16 %v1365
      %v1504 = vunpack.c.h.b16 %v1365
      %v1505 = vpack.c.b16 %v1445, %v1441
      %v1506 = vpack.c.b16 %v1446, %v1442
      %v1507 = vpack.c.b16 %v1447, %v1443
      %v1508 = vpack.c.b16 %v1448, %v1444
      %v1509 = vpack.c.b16 %v1453, %v1449
      %v1510 = vpack.c.b16 %v1454, %v1450
      %v1511 = vpack.c.b16 %v1455, %v1451
      %v1512 = vpack.c.b16 %v1456, %v1452
      %v1513 = vpack.c.b16 %v1461, %v1457
      %v1514 = vpack.c.b16 %v1462, %v1458
      %v1515 = vpack.c.b16 %v1463, %v1459
      %v1516 = vpack.c.b16 %v1464, %v1460
      %v1517 = vpack.c.b16 %v1469, %v1465
      %v1518 = vpack.c.b16 %v1470, %v1466
      %v1519 = vpack.c.b16 %v1471, %v1467
      %v1520 = vpack.c.b16 %v1472, %v1468
      %v1521 = vpack.c.b16 %v1477, %v1473
      %v1522 = vpack.c.b16 %v1478, %v1474
      %v1523 = vpack.c.b16 %v1479, %v1475
      %v1524 = vpack.c.b16 %v1480, %v1476
      %v1525 = vpack.c.b16 %v1485, %v1481
      %v1526 = vpack.c.b16 %v1486, %v1482
      %v1527 = vpack.c.b16 %v1487, %v1483
      %v1528 = vpack.c.b16 %v1488, %v1484
      %v1529 = vpack.c.b16 %v1493, %v1489
      %v1530 = vpack.c.b16 %v1494, %v1490
      %v1531 = vpack.c.b16 %v1495, %v1491
      %v1532 = vpack.c.b16 %v1496, %v1492
      %v1533 = vpack.c.b16 %v1501, %v1497
      %v1534 = vpack.c.b16 %v1502, %v1498
      %v1535 = vpack.c.b16 %v1503, %v1499
      %v1536 = vpack.c.b16 %v1504, %v1500
      %1569 = vmatprep.subr.bf16.mxu0 %v1506
      %1570 = vmatpush1.bf16.msra.mxu0 %v1505
      %1571 = vmatprep.subr.bf16.mxu0 %v1510
      %1572 = vmatpush1.bf16.msra.mxu0 %v1509
      %1573 = vmatprep.subr.bf16.mxu0 %v1514
      %1574 = vmatpush1.bf16.msra.mxu0 %v1513
      %1575 = vmatprep.subr.bf16.mxu0 %v1518
      %1576 = vmatpush1.bf16.msra.mxu0 %v1517
      %1577 = vmatprep.subr.bf16.mxu0 %v1522
      %1578 = vmatpush1.bf16.msra.mxu0 %v1521
      %1579 = vmatprep.subr.bf16.mxu0 %v1526
      %1580 = vmatpush1.bf16.msra.mxu0 %v1525
      %1581 = vmatprep.subr.bf16.mxu0 %v1530
      %1582 = vmatpush1.bf16.msra.mxu0 %v1529
      %1583 = vmatprep.subr.bf16.mxu0 %v1534
      %1584 = vmatpush1.bf16.msra.mxu0 %v1533
      %1585 = vmatprep.subr.bf16.mxu0 0
      %1586 = vmatpush1.bf16.msra.mxu0 0
      %1587 = vmatprep.subr.bf16.mxu0 0
      %1588 = vmatpush1.bf16.msra.mxu0 0
      %1589 = vmatprep.subr.bf16.mxu0 0
      %1590 = vmatpush1.bf16.msra.mxu0 0
      %1591 = vmatprep.subr.bf16.mxu0 0
      %1592 = vmatpush1.bf16.msra.mxu0 0
      %1593 = vmatprep.subr.bf16.mxu0 0
      %1594 = vmatpush1.bf16.msra.mxu0 0
      %1595 = vmatprep.subr.bf16.mxu0 0
      %1596 = vmatpush1.bf16.msra.mxu0 0
      %1597 = vmatprep.subr.bf16.mxu0 0
      %1598 = vmatpush1.bf16.msra.mxu0 0
      %1599 = vmatprep.subr.bf16.mxu0 0
      %1600 = vmatpush1.bf16.msra.mxu0 0
      %1601 = vmatprep.mubr.bf16.mxu0 0
      %1602 = vmatmul.mubr.bf16.gmra.mrb[0].mxu0 %v1402
      %v1603 = vpop.f32.mrb[0].mxu0
      %v1604 = vadd.f32 0.0, %v1603
      %v1605 = vpop.f32.mrb[0].mxu0
      %v1606 = vadd.f32 0.0, %v1605
      %v1607 = vpop.f32.mrb[0].mxu0
      %v1608 = vpop.f32.mrb[0].mxu0
      %1609 = vdwg.mxu0
      %1610 = vmatprep.subr.bf16.mxu0 %v1508
      %1611 = vmatpush1.bf16.msra.mxu0 %v1507
      %1612 = vmatprep.subr.bf16.mxu0 %v1512
      %1613 = vmatpush1.bf16.msra.mxu0 %v1511
      %1614 = vmatprep.subr.bf16.mxu0 %v1516
      %1615 = vmatpush1.bf16.msra.mxu0 %v1515
      %1616 = vmatprep.subr.bf16.mxu0 %v1520
      %1617 = vmatpush1.bf16.msra.mxu0 %v1519
      %1618 = vmatprep.subr.bf16.mxu0 %v1524
      %1619 = vmatpush1.bf16.msra.mxu0 %v1523
      %1620 = vmatprep.subr.bf16.mxu0 %v1528
      %1621 = vmatpush1.bf16.msra.mxu0 %v1527
      %1622 = vmatprep.subr.bf16.mxu0 %v1532
      %1623 = vmatpush1.bf16.msra.mxu0 %v1531
      %1624 = vmatprep.subr.bf16.mxu0 %v1536
      %1625 = vmatpush1.bf16.msra.mxu0 %v1535
      %1626 = vmatprep.subr.bf16.mxu0 0
      %1627 = vmatpush1.bf16.msra.mxu0 0
      %1628 = vmatprep.subr.bf16.mxu0 0
      %1629 = vmatpush1.bf16.msra.mxu0 0
      %1630 = vmatprep.subr.bf16.mxu0 0
      %1631 = vmatpush1.bf16.msra.mxu0 0
      %1632 = vmatprep.subr.bf16.mxu0 0
      %1633 = vmatpush1.bf16.msra.mxu0 0
      %1634 = vmatprep.subr.bf16.mxu0 0
      %1635 = vmatpush1.bf16.msra.mxu0 0
      %1636 = vmatprep.subr.bf16.mxu0 0
      %1637 = vmatpush1.bf16.msra.mxu0 0
      %1638 = vmatprep.subr.bf16.mxu0 0
      %1639 = vmatpush1.bf16.msra.mxu0 0
      %1640 = vmatprep.subr.bf16.mxu0 0
      %1641 = vmatpush1.bf16.msra.mxu0 0
      %1642 = vmatprep.mubr.bf16.mxu0 0
      %1643 = vmatmul.mubr.bf16.gmra.mrb[0].mxu0 %v1402
      %v1644 = vpop.f32.mrb[0].mxu0
      %v1645 = vadd.f32 0.0, %v1644
      %v1646 = vpop.f32.mrb[0].mxu0
      %v1647 = vadd.f32 0.0, %v1646
      %v1648 = vpop.f32.mrb[0].mxu0
      %v1649 = vpop.f32.mrb[0].mxu0
      %1650 = vdwg.mxu0
      %v1651 = vadd.f32 %v1405, %v1604
      %v1652 = vadd.f32 %v1406, %v1606
      %v1653 = vadd.f32 %v1407, %v1645
      %v1654 = vadd.f32 %v1408, %v1647
      %v1655 = vxor.u32 %v1651, 2147483648
      %v1656 = vmul.f32 %v1655, 1.442695
      %v1657 = vpow.pop %v1656
      %v1658 = vadd.f32 %v1657, 1.0
      %v1659 = vrcp.pop %v1658
      %v1660 = vmul.f32 1.0, %v1659
      %v1661 = vxor.u32 %v1652, 2147483648
      %v1662 = vmul.f32 %v1661, 1.442695
      %v1663 = vpow.pop %v1662
      %v1664 = vadd.f32 %v1663, 1.0
      %v1665 = vrcp.pop %v1664
      %v1666 = vmul.f32 1.0, %v1665
      %v1667 = vtanh.pop %v1653
      %v1668 = vxor.u32 %v1654, 2147483648
      %v1669 = vmul.f32 %v1668, 1.442695
      %v1670 = vpow.pop %v1669
      %v1671 = vadd.f32 %v1670, 1.0
      %v1672 = vrcp.pop %v1671
      %v1673 = vmul.f32 1.0, %v1672
      %v1674 = vld [vmem:[#allocation3] sm:$0xff]
      %v1675 = vmul.f32 %v1666, %v1674
      %v1676 = vmul.f32 %v1660, %v1667
      %v1677 = vadd.f32 %v1675, %v1676
      %v1678 = vtanh.pop %v1677
      %v1679 = vmul.f32 %v1673, %v1678
      %v1680 = vunpack.c.l.bf16 %v1402
      %v1681 = vsel %vm1401, 1, 0
      %1682 = vset.pattern.permute.xlu0 0
      %1683 = vperm.xlu0 %1682, %v1681
      %v1684 = vpop.permute.xlu0 %1683
      %vm1685 = vcmp.eq.s32.totalorder %v1684, 1
      %v1686 = vsel %vm1685, %v1679, %v1680
      %v1687 = vpack.c.bf16 %v1686, %v1686
      %1688 = vst [vmem:[#allocation2] sm:$0xf] %v1687
      %v1689 = vld [vmem:[#allocation3] sm:$0xff]
      %v1690 = vsel %vm1685, %v1677, %v1689
      %1691 = vst [vmem:[#allocation3] sm:$0xff] %v1690
      %s1692 = smul.u32 %s401, 4
      %s1693 = sadd.s32 %s1692, 3
      %v1694 = vstv %s1693
      %vm1695 = vcmp.gt.s32.totalorder %v402, %v1694
      %v1696 = vld [vmem:[#allocation4] sm:$0xf]
      %s1697 = scalar_lea.vmem [#allocation7], 48
      %v1698 = vld [vmem:[%s1697] sm:$0xff]
      %v1699 = vld [vmem:[%s1697 + $0x8] sm:$0xff]
      %v1700 = vunpack.c.l.bf16 %v1698
      %v1701 = vunpack.c.h.bf16 %v1698
      %v1702 = vunpack.c.l.bf16 %v1699
      %v1703 = vunpack.c.h.bf16 %v1699
      %v1736 = vunpack.c.l.b16 %v1367
      %v1737 = vunpack.c.h.b16 %v1367
      %v1738 = vunpack.c.l.b16 %v1368
      %v1739 = vunpack.c.h.b16 %v1368
      %v1740 = vunpack.c.l.b16 %v1369
      %v1741 = vunpack.c.h.b16 %v1369
      %v1742 = vunpack.c.l.b16 %v1370
      %v1743 = vunpack.c.h.b16 %v1370
      %v1744 = vunpack.c.l.b16 %v1371
      %v1745 = vunpack.c.h.b16 %v1371
      %v1746 = vunpack.c.l.b16 %v1372
      %v1747 = vunpack.c.h.b16 %v1372
      %v1748 = vunpack.c.l.b16 %v1373
      %v1749 = vunpack.c.h.b16 %v1373
      %v1750 = vunpack.c.l.b16 %v1374
      %v1751 = vunpack.c.h.b16 %v1374
      %v1752 = vunpack.c.l.b16 %v1375
      %v1753 = vunpack.c.h.b16 %v1375
      %v1754 = vunpack.c.l.b16 %v1376
      %v1755 = vunpack.c.h.b16 %v1376
      %v1756 = vunpack.c.l.b16 %v1377
      %v1757 = vunpack.c.h.b16 %v1377
      %v1758 = vunpack.c.l.b16 %v1378
      %v1759 = vunpack.c.h.b16 %v1378
      %v1760 = vunpack.c.l.b16 %v1379
      %v1761 = vunpack.c.h.b16 %v1379
      %v1762 = vunpack.c.l.b16 %v1380
      %v1763 = vunpack.c.h.b16 %v1380
      %v1764 = vunpack.c.l.b16 %v1381
      %v1765 = vunpack.c.h.b16 %v1381
      %v1766 = vunpack.c.l.b16 %v1382
      %v1767 = vunpack.c.h.b16 %v1382
      %v1768 = vunpack.c.l.b16 %v1383
      %v1769 = vunpack.c.h.b16 %v1383
      %v1770 = vunpack.c.l.b16 %v1384
      %v1771 = vunpack.c.h.b16 %v1384
      %v1772 = vunpack.c.l.b16 %v1385
      %v1773 = vunpack.c.h.b16 %v1385
      %v1774 = vunpack.c.l.b16 %v1386
      %v1775 = vunpack.c.h.b16 %v1386
      %v1776 = vunpack.c.l.b16 %v1387
      %v1777 = vunpack.c.h.b16 %v1387
      %v1778 = vunpack.c.l.b16 %v1388
      %v1779 = vunpack.c.h.b16 %v1388
      %v1780 = vunpack.c.l.b16 %v1389
      %v1781 = vunpack.c.h.b16 %v1389
      %v1782 = vunpack.c.l.b16 %v1390
      %v1783 = vunpack.c.h.b16 %v1390
      %v1784 = vunpack.c.l.b16 %v1391
      %v1785 = vunpack.c.h.b16 %v1391
      %v1786 = vunpack.c.l.b16 %v1392
      %v1787 = vunpack.c.h.b16 %v1392
      %v1788 = vunpack.c.l.b16 %v1393
      %v1789 = vunpack.c.h.b16 %v1393
      %v1790 = vunpack.c.l.b16 %v1394
      %v1791 = vunpack.c.h.b16 %v1394
      %v1792 = vunpack.c.l.b16 %v1395
      %v1793 = vunpack.c.h.b16 %v1395
      %v1794 = vunpack.c.l.b16 %v1396
      %v1795 = vunpack.c.h.b16 %v1396
      %v1796 = vunpack.c.l.b16 %v1397
      %v1797 = vunpack.c.h.b16 %v1397
      %v1798 = vunpack.c.l.b16 %v1398
      %v1799 = vunpack.c.h.b16 %v1398
      %v1800 = vpack.c.b16 %v1740, %v1736
      %v1801 = vpack.c.b16 %v1741, %v1737
      %v1802 = vpack.c.b16 %v1742, %v1738
      %v1803 = vpack.c.b16 %v1743, %v1739
      %v1804 = vpack.c.b16 %v1748, %v1744
      %v1805 = vpack.c.b16 %v1749, %v1745
      %v1806 = vpack.c.b16 %v1750, %v1746
      %v1807 = vpack.c.b16 %v1751, %v1747
      %v1808 = vpack.c.b16 %v1756, %v1752
      %v1809 = vpack.c.b16 %v1757, %v1753
      %v1810 = vpack.c.b16 %v1758, %v1754
      %v1811 = vpack.c.b16 %v1759, %v1755
      %v1812 = vpack.c.b16 %v1764, %v1760
      %v1813 = vpack.c.b16 %v1765, %v1761
      %v1814 = vpack.c.b16 %v1766, %v1762
      %v1815 = vpack.c.b16 %v1767, %v1763
      %v1816 = vpack.c.b16 %v1772, %v1768
      %v1817 = vpack.c.b16 %v1773, %v1769
      %v1818 = vpack.c.b16 %v1774, %v1770
      %v1819 = vpack.c.b16 %v1775, %v1771
      %v1820 = vpack.c.b16 %v1780, %v1776
      %v1821 = vpack.c.b16 %v1781, %v1777
      %v1822 = vpack.c.b16 %v1782, %v1778
      %v1823 = vpack.c.b16 %v1783, %v1779
      %v1824 = vpack.c.b16 %v1788, %v1784
      %v1825 = vpack.c.b16 %v1789, %v1785
      %v1826 = vpack.c.b16 %v1790, %v1786
      %v1827 = vpack.c.b16 %v1791, %v1787
      %v1828 = vpack.c.b16 %v1796, %v1792
      %v1829 = vpack.c.b16 %v1797, %v1793
      %v1830 = vpack.c.b16 %v1798, %v1794
      %v1831 = vpack.c.b16 %v1799, %v1795
      %1864 = vmatprep.subr.bf16.mxu0 %v1801
      %1865 = vmatpush1.bf16.msra.mxu0 %v1800
      %1866 = vmatprep.subr.bf16.mxu0 %v1805
      %1867 = vmatpush1.bf16.msra.mxu0 %v1804
      %1868 = vmatprep.subr.bf16.mxu0 %v1809
      %1869 = vmatpush1.bf16.msra.mxu0 %v1808
      %1870 = vmatprep.subr.bf16.mxu0 %v1813
      %1871 = vmatpush1.bf16.msra.mxu0 %v1812
      %1872 = vmatprep.subr.bf16.mxu0 %v1817
      %1873 = vmatpush1.bf16.msra.mxu0 %v1816
      %1874 = vmatprep.subr.bf16.mxu0 %v1821
      %1875 = vmatpush1.bf16.msra.mxu0 %v1820
      %1876 = vmatprep.subr.bf16.mxu0 %v1825
      %1877 = vmatpush1.bf16.msra.mxu0 %v1824
      %1878 = vmatprep.subr.bf16.mxu0 %v1829
      %1879 = vmatpush1.bf16.msra.mxu0 %v1828
      %1880 = vmatprep.subr.bf16.mxu0 0
      %1881 = vmatpush1.bf16.msra.mxu0 0
      %1882 = vmatprep.subr.bf16.mxu0 0
      %1883 = vmatpush1.bf16.msra.mxu0 0
      %1884 = vmatprep.subr.bf16.mxu0 0
      %1885 = vmatpush1.bf16.msra.mxu0 0
      %1886 = vmatprep.subr.bf16.mxu0 0
      %1887 = vmatpush1.bf16.msra.mxu0 0
      %1888 = vmatprep.subr.bf16.mxu0 0
      %1889 = vmatpush1.bf16.msra.mxu0 0
      %1890 = vmatprep.subr.bf16.mxu0 0
      %1891 = vmatpush1.bf16.msra.mxu0 0
      %1892 = vmatprep.subr.bf16.mxu0 0
      %1893 = vmatpush1.bf16.msra.mxu0 0
      %1894 = vmatprep.subr.bf16.mxu0 0
      %1895 = vmatpush1.bf16.msra.mxu0 0
      %1896 = vmatprep.mubr.bf16.mxu0 0
      %1897 = vmatmul.mubr.bf16.gmra.mrb[0].mxu0 %v1696
      %v1898 = vpop.f32.mrb[0].mxu0
      %v1899 = vadd.f32 0.0, %v1898
      %v1900 = vpop.f32.mrb[0].mxu0
      %v1901 = vadd.f32 0.0, %v1900
      %v1902 = vpop.f32.mrb[0].mxu0
      %v1903 = vpop.f32.mrb[0].mxu0
      %1904 = vdwg.mxu0
      %1905 = vmatprep.subr.bf16.mxu0 %v1803
      %1906 = vmatpush1.bf16.msra.mxu0 %v1802
      %1907 = vmatprep.subr.bf16.mxu0 %v1807
      %1908 = vmatpush1.bf16.msra.mxu0 %v1806
      %1909 = vmatprep.subr.bf16.mxu0 %v1811
      %1910 = vmatpush1.bf16.msra.mxu0 %v1810
      %1911 = vmatprep.subr.bf16.mxu0 %v1815
      %1912 = vmatpush1.bf16.msra.mxu0 %v1814
      %1913 = vmatprep.subr.bf16.mxu0 %v1819
      %1914 = vmatpush1.bf16.msra.mxu0 %v1818
      %1915 = vmatprep.subr.bf16.mxu0 %v1823
      %1916 = vmatpush1.bf16.msra.mxu0 %v1822
      %1917 = vmatprep.subr.bf16.mxu0 %v1827
      %1918 = vmatpush1.bf16.msra.mxu0 %v1826
      %1919 = vmatprep.subr.bf16.mxu0 %v1831
      %1920 = vmatpush1.bf16.msra.mxu0 %v1830
      %1921 = vmatprep.subr.bf16.mxu0 0
      %1922 = vmatpush1.bf16.msra.mxu0 0
      %1923 = vmatprep.subr.bf16.mxu0 0
      %1924 = vmatpush1.bf16.msra.mxu0 0
      %1925 = vmatprep.subr.bf16.mxu0 0
      %1926 = vmatpush1.bf16.msra.mxu0 0
      %1927 = vmatprep.subr.bf16.mxu0 0
      %1928 = vmatpush1.bf16.msra.mxu0 0
      %1929 = vmatprep.subr.bf16.mxu0 0
      %1930 = vmatpush1.bf16.msra.mxu0 0
      %1931 = vmatprep.subr.bf16.mxu0 0
      %1932 = vmatpush1.bf16.msra.mxu0 0
      %1933 = vmatprep.subr.bf16.mxu0 0
      %1934 = vmatpush1.bf16.msra.mxu0 0
      %1935 = vmatprep.subr.bf16.mxu0 0
      %1936 = vmatpush1.bf16.msra.mxu0 0
      %1937 = vmatprep.mubr.bf16.mxu0 0
      %1938 = vmatmul.mubr.bf16.gmra.mrb[0].mxu0 %v1696
      %v1939 = vpop.f32.mrb[0].mxu0
      %v1940 = vadd.f32 0.0, %v1939
      %v1941 = vpop.f32.mrb[0].mxu0
      %v1942 = vadd.f32 0.0, %v1941
      %v1943 = vpop.f32.mrb[0].mxu0
      %v1944 = vpop.f32.mrb[0].mxu0
      %1945 = vdwg.mxu0
      %v1946 = vadd.f32 %v1700, %v1899
      %v1947 = vadd.f32 %v1701, %v1901
      %v1948 = vadd.f32 %v1702, %v1940
      %v1949 = vadd.f32 %v1703, %v1942
      %v1950 = vxor.u32 %v1946, 2147483648
      %v1951 = vmul.f32 %v1950, 1.442695
      %v1952 = vpow.pop %v1951
      %v1953 = vadd.f32 %v1952, 1.0
      %v1954 = vrcp.pop %v1953
      %v1955 = vmul.f32 1.0, %v1954
      %v1956 = vxor.u32 %v1947, 2147483648
      %v1957 = vmul.f32 %v1956, 1.442695
      %v1958 = vpow.pop %v1957
      %v1959 = vadd.f32 %v1958, 1.0
      %v1960 = vrcp.pop %v1959
      %v1961 = vmul.f32 1.0, %v1960
      %v1962 = vtanh.pop %v1948
      %v1963 = vxor.u32 %v1949, 2147483648
      %v1964 = vmul.f32 %v1963, 1.442695
      %v1965 = vpow.pop %v1964
      %v1966 = vadd.f32 %v1965, 1.0
      %v1967 = vrcp.pop %v1966
      %v1968 = vmul.f32 1.0, %v1967
      %v1969 = vld [vmem:[#allocation5] sm:$0xff]
      %v1970 = vmul.f32 %v1961, %v1969
      %v1971 = vmul.f32 %v1955, %v1962
      %v1972 = vadd.f32 %v1970, %v1971
      %v1973 = vtanh.pop %v1972
      %v1974 = vmul.f32 %v1968, %v1973
      %v1975 = vunpack.c.l.bf16 %v1696
      %v1976 = vsel %vm1695, 1, 0
      %1977 = vset.pattern.permute.xlu0 0
      %1978 = vperm.xlu0 %1977, %v1976
      %v1979 = vpop.permute.xlu0 %1978
      %vm1980 = vcmp.eq.s32.totalorder %v1979, 1
      %v1981 = vsel %vm1980, %v1974, %v1975
      %v1982 = vpack.c.bf16 %v1981, %v1981
      %1983 = vst [vmem:[#allocation4] sm:$0xf] %v1982
      %v1984 = vld [vmem:[#allocation5] sm:$0xff]
      %v1985 = vsel %vm1980, %v1972, %v1984
      %1986 = vst [vmem:[#allocation5] sm:$0xff] %v1985
      %s1987 = sadd.s32 %s1399, 1
      %v1988 = vstv %s1987
      %vm1989 = vcmp.eq.s32.totalorder %v402, %v1988
      %v1990 = vld [vmem:[#allocation8] sm:$0xff]
      %v1991 = vsel %vm1989, 1, 0
      %1992 = vset.pattern.permute.xlu0 0
      %1993 = vperm.xlu0 %1992, %v1991
      %v1994 = vpop.permute.xlu0 %1993
      %vm1995 = vcmp.eq.s32.totalorder %v1994, 1
      %v1996 = vsel %vm1995, %v1686, %v1990
      %1997 = vst [vmem:[#allocation8] sm:$0xff] %v1996
      %s1998 = sadd.s32 %s1692, 4
      %v1999 = vstv %s1998
      %vm2000 = vcmp.eq.s32.totalorder %v402, %v1999
      %v2001 = vld [vmem:[#allocation8 + $0x8] sm:$0xff]
      %v2002 = vsel %vm2000, 1, 0
      %2003 = vset.pattern.permute.xlu0 0
      %2004 = vperm.xlu0 %2003, %v2002
      %v2005 = vpop.permute.xlu0 %2004
      %vm2006 = vcmp.eq.s32.totalorder %v2005, 1
      %v2007 = vsel %vm2006, %v1981, %v2001
      %2008 = vst [vmem:[#allocation8 + $0x8] sm:$0xff] %v2007
      %vm2009 = vcmp.gt.s32.totalorder %v402, %v1988
      %v2010 = vld [vmem:[#allocation2] sm:$0xf]
      %s2011 = scalar_lea.vmem [#allocation6], 16
      %v2012 = vld [vmem:[%s2011] sm:$0xff]
      %v2013 = vld [vmem:[%s2011 + $0x8] sm:$0xff]
      %v2014 = vunpack.c.l.bf16 %v2012
      %v2015 = vunpack.c.h.bf16 %v2012
      %v2016 = vunpack.c.l.bf16 %v2013
      %v2017 = vunpack.c.h.bf16 %v2013
      %2018 = vmatprep.subr.bf16.mxu0 %v1506
      %2019 = vmatpush1.bf16.msra.mxu0 %v1505
      %2020 = vmatprep.subr.bf16.mxu0 %v1510
      %2021 = vmatpush1.bf16.msra.mxu0 %v1509
      %2022 = vmatprep.subr.bf16.mxu0 %v1514
      %2023 = vmatpush1.bf16.msra.mxu0 %v1513
      %2024 = vmatprep.subr.bf16.mxu0 %v1518
      %2025 = vmatpush1.bf16.msra.mxu0 %v1517
      %2026 = vmatprep.subr.bf16.mxu0 %v1522
      %2027 = vmatpush1.bf16.msra.mxu0 %v1521
      %2028 = vmatprep.subr.bf16.mxu0 %v1526
      %2029 = vmatpush1.bf16.msra.mxu0 %v1525
      %2030 = vmatprep.subr.bf16.mxu0 %v1530
      %2031 = vmatpush1.bf16.msra.mxu0 %v1529
      %2032 = vmatprep.subr.bf16.mxu0 %v1534
      %2033 = vmatpush1.bf16.msra.mxu0 %v1533
      %2034 = vmatprep.subr.bf16.mxu0 0
      %2035 = vmatpush1.bf16.msra.mxu0 0
      %2036 = vmatprep.subr.bf16.mxu0 0
      %2037 = vmatpush1.bf16.msra.mxu0 0
      %2038 = vmatprep.subr.bf16.mxu0 0
      %2039 = vmatpush1.bf16.msra.mxu0 0
      %2040 = vmatprep.subr.bf16.mxu0 0
      %2041 = vmatpush1.bf16.msra.mxu0 0
      %2042 = vmatprep.subr.bf16.mxu0 0
      %2043 = vmatpush1.bf16.msra.mxu0 0
      %2044 = vmatprep.subr.bf16.mxu0 0
      %2045 = vmatpush1.bf16.msra.mxu0 0
      %2046 = vmatprep.subr.bf16.mxu0 0
      %2047 = vmatpush1.bf16.msra.mxu0 0
      %2048 = vmatprep.subr.bf16.mxu0 0
      %2049 = vmatpush1.bf16.msra.mxu0 0
      %2050 = vmatprep.mubr.bf16.mxu0 0
      %2051 = vmatmul.mubr.bf16.gmra.mrb[0].mxu0 %v2010
      %v2052 = vpop.f32.mrb[0].mxu0
      %v2053 = vadd.f32 0.0, %v2052
      %v2054 = vpop.f32.mrb[0].mxu0
      %v2055 = vadd.f32 0.0, %v2054
      %v2056 = vpop.f32.mrb[0].mxu0
      %v2057 = vpop.f32.mrb[0].mxu0
      %2058 = vdwg.mxu0
      %2059 = vmatprep.subr.bf16.mxu0 %v1508
      %2060 = vmatpush1.bf16.msra.mxu0 %v1507
      %2061 = vmatprep.subr.bf16.mxu0 %v1512
      %2062 = vmatpush1.bf16.msra.mxu0 %v1511
      %2063 = vmatprep.subr.bf16.mxu0 %v1516
      %2064 = vmatpush1.bf16.msra.mxu0 %v1515
      %2065 = vmatprep.subr.bf16.mxu0 %v1520
      %2066 = vmatpush1.bf16.msra.mxu0 %v1519
      %2067 = vmatprep.subr.bf16.mxu0 %v1524
      %2068 = vmatpush1.bf16.msra.mxu0 %v1523
      %2069 = vmatprep.subr.bf16.mxu0 %v1528
      %2070 = vmatpush1.bf16.msra.mxu0 %v1527
      %2071 = vmatprep.subr.bf16.mxu0 %v1532
      %2072 = vmatpush1.bf16.msra.mxu0 %v1531
      %2073 = vmatprep.subr.bf16.mxu0 %v1536
      %2074 = vmatpush1.bf16.msra.mxu0 %v1535
      %2075 = vmatprep.subr.bf16.mxu0 0
      %2076 = vmatpush1.bf16.msra.mxu0 0
      %2077 = vmatprep.subr.bf16.mxu0 0
      %2078 = vmatpush1.bf16.msra.mxu0 0
      %2079 = vmatprep.subr.bf16.mxu0 0
      %2080 = vmatpush1.bf16.msra.mxu0 0
      %2081 = vmatprep.subr.bf16.mxu0 0
      %2082 = vmatpush1.bf16.msra.mxu0 0
      %2083 = vmatprep.subr.bf16.mxu0 0
      %2084 = vmatpush1.bf16.msra.mxu0 0
      %2085 = vmatprep.subr.bf16.mxu0 0
      %2086 = vmatpush1.bf16.msra.mxu0 0
      %2087 = vmatprep.subr.bf16.mxu0 0
      %2088 = vmatpush1.bf16.msra.mxu0 0
      %2089 = vmatprep.subr.bf16.mxu0 0
      %2090 = vmatpush1.bf16.msra.mxu0 0
      %2091 = vmatprep.mubr.bf16.mxu0 0
      %2092 = vmatmul.mubr.bf16.gmra.mrb[0].mxu0 %v2010
      %v2093 = vpop.f32.mrb[0].mxu0
      %v2094 = vadd.f32 0.0, %v2093
      %v2095 = vpop.f32.mrb[0].mxu0
      %v2096 = vadd.f32 0.0, %v2095
      %v2097 = vpop.f32.mrb[0].mxu0
      %v2098 = vpop.f32.mrb[0].mxu0
      %2099 = vdwg.mxu0
      %v2100 = vadd.f32 %v2014, %v2053
      %v2101 = vadd.f32 %v2015, %v2055
      %v2102 = vadd.f32 %v2016, %v2094
      %v2103 = vadd.f32 %v2017, %v2096
      %v2104 = vxor.u32 %v2100, 2147483648
      %v2105 = vmul.f32 %v2104, 1.442695
      %v2106 = vpow.pop %v2105
      %v2107 = vadd.f32 %v2106, 1.0
      %v2108 = vrcp.pop %v2107
      %v2109 = vmul.f32 1.0, %v2108
      %v2110 = vxor.u32 %v2101, 2147483648
      %v2111 = vmul.f32 %v2110, 1.442695
      %v2112 = vpow.pop %v2111
      %v2113 = vadd.f32 %v2112, 1.0
      %v2114 = vrcp.pop %v2113
      %v2115 = vmul.f32 1.0, %v2114
      %v2116 = vtanh.pop %v2102
      %v2117 = vxor.u32 %v2103, 2147483648
      %v2118 = vmul.f32 %v2117, 1.442695
      %v2119 = vpow.pop %v2118
      %v2120 = vadd.f32 %v2119, 1.0
      %v2121 = vrcp.pop %v2120
      %v2122 = vmul.f32 1.0, %v2121
      %v2123 = vld [vmem:[#allocation3] sm:$0xff]
      %v2124 = vmul.f32 %v2115, %v2123
      %v2125 = vmul.f32 %v2109, %v2116
      %v2126 = vadd.f32 %v2124, %v2125
      %v2127 = vtanh.pop %v2126
      %v2128 = vmul.f32 %v2122, %v2127
      %v2129 = vunpack.c.l.bf16 %v2010
      %v2130 = vsel %vm2009, 1, 0
      %2131 = vset.pattern.permute.xlu0 0
      %2132 = vperm.xlu0 %2131, %v2130
      %v2133 = vpop.permute.xlu0 %2132
      %vm2134 = vcmp.eq.s32.totalorder %v2133, 1
      %v2135 = vsel %vm2134, %v2128, %v2129
      %v2136 = vpack.c.bf16 %v2135, %v2135
      %2137 = vst [vmem:[#allocation2] sm:$0xf] %v2136
      %v2138 = vld [vmem:[#allocation3] sm:$0xff]
      %v2139 = vsel %vm2134, %v2126, %v2138
      %2140 = vst [vmem:[#allocation3] sm:$0xff] %v2139
      %s2141 = sadd.s32 %s1692, 2
      %v2142 = vstv %s2141
      %vm2143 = vcmp.gt.s32.totalorder %v402, %v2142
      %v2144 = vld [vmem:[#allocation4] sm:$0xf]
      %s2145 = scalar_lea.vmem [#allocation7], 32
      %v2146 = vld [vmem:[%s2145] sm:$0xff]
      %v2147 = vld [vmem:[%s2145 + $0x8] sm:$0xff]
      %v2148 = vunpack.c.l.bf16 %v2146
      %v2149 = vunpack.c.h.bf16 %v2146
      %v2150 = vunpack.c.l.bf16 %v2147
      %v2151 = vunpack.c.h.bf16 %v2147
      %2152 = vmatprep.subr.bf16.mxu0 %v1801
      %2153 = vmatpush1.bf16.msra.mxu0 %v1800
      %2154 = vmatprep.subr.bf16.mxu0 %v1805
      %2155 = vmatpush1.bf16.msra.mxu0 %v1804
      %2156 = vmatprep.subr.bf16.mxu0 %v1809
      %2157 = vmatpush1.bf16.msra.mxu0 %v1808
      %2158 = vmatprep.subr.bf16.mxu0 %v1813
      %2159 = vmatpush1.bf16.msra.mxu0 %v1812
      %2160 = vmatprep.subr.bf16.mxu0 %v1817
      %2161 = vmatpush1.bf16.msra.mxu0 %v1816
      %2162 = vmatprep.subr.bf16.mxu0 %v1821
      %2163 = vmatpush1.bf16.msra.mxu0 %v1820
      %2164 = vmatprep.subr.bf16.mxu0 %v1825
      %2165 = vmatpush1.bf16.msra.mxu0 %v1824
      %2166 = vmatprep.subr.bf16.mxu0 %v1829
      %2167 = vmatpush1.bf16.msra.mxu0 %v1828
      %2168 = vmatprep.subr.bf16.mxu0 0
      %2169 = vmatpush1.bf16.msra.mxu0 0
      %2170 = vmatprep.subr.bf16.mxu0 0
      %2171 = vmatpush1.bf16.msra.mxu0 0
      %2172 = vmatprep.subr.bf16.mxu0 0
      %2173 = vmatpush1.bf16.msra.mxu0 0
      %2174 = vmatprep.subr.bf16.mxu0 0
      %2175 = vmatpush1.bf16.msra.mxu0 0
      %2176 = vmatprep.subr.bf16.mxu0 0
      %2177 = vmatpush1.bf16.msra.mxu0 0
      %2178 = vmatprep.subr.bf16.mxu0 0
      %2179 = vmatpush1.bf16.msra.mxu0 0
      %2180 = vmatprep.subr.bf16.mxu0 0
      %2181 = vmatpush1.bf16.msra.mxu0 0
      %2182 = vmatprep.subr.bf16.mxu0 0
      %2183 = vmatpush1.bf16.msra.mxu0 0
      %2184 = vmatprep.mubr.bf16.mxu0 0
      %2185 = vmatmul.mubr.bf16.gmra.mrb[0].mxu0 %v2144
      %v2186 = vpop.f32.mrb[0].mxu0
      %v2187 = vadd.f32 0.0, %v2186
      %v2188 = vpop.f32.mrb[0].mxu0
      %v2189 = vadd.f32 0.0, %v2188
      %v2190 = vpop.f32.mrb[0].mxu0
      %v2191 = vpop.f32.mrb[0].mxu0
      %2192 = vdwg.mxu0
      %2193 = vmatprep.subr.bf16.mxu0 %v1803
      %2194 = vmatpush1.bf16.msra.mxu0 %v1802
      %2195 = vmatprep.subr.bf16.mxu0 %v1807
      %2196 = vmatpush1.bf16.msra.mxu0 %v1806
      %2197 = vmatprep.subr.bf16.mxu0 %v1811
      %2198 = vmatpush1.bf16.msra.mxu0 %v1810
      %2199 = vmatprep.subr.bf16.mxu0 %v1815
      %2200 = vmatpush1.bf16.msra.mxu0 %v1814
      %2201 = vmatprep.subr.bf16.mxu0 %v1819
      %2202 = vmatpush1.bf16.msra.mxu0 %v1818
      %2203 = vmatprep.subr.bf16.mxu0 %v1823
      %2204 = vmatpush1.bf16.msra.mxu0 %v1822
      %2205 = vmatprep.subr.bf16.mxu0 %v1827
      %2206 = vmatpush1.bf16.msra.mxu0 %v1826
      %2207 = vmatprep.subr.bf16.mxu0 %v1831
      %2208 = vmatpush1.bf16.msra.mxu0 %v1830
      %2209 = vmatprep.subr.bf16.mxu0 0
      %2210 = vmatpush1.bf16.msra.mxu0 0
      %2211 = vmatprep.subr.bf16.mxu0 0
      %2212 = vmatpush1.bf16.msra.mxu0 0
      %2213 = vmatprep.subr.bf16.mxu0 0
      %2214 = vmatpush1.bf16.msra.mxu0 0
      %2215 = vmatprep.subr.bf16.mxu0 0
      %2216 = vmatpush1.bf16.msra.mxu0 0
      %2217 = vmatprep.subr.bf16.mxu0 0
      %2218 = vmatpush1.bf16.msra.mxu0 0
      %2219 = vmatprep.subr.bf16.mxu0 0
      %2220 = vmatpush1.bf16.msra.mxu0 0
      %2221 = vmatprep.subr.bf16.mxu0 0
      %2222 = vmatpush1.bf16.msra.mxu0 0
      %2223 = vmatprep.subr.bf16.mxu0 0
      %2224 = vmatpush1.bf16.msra.mxu0 0
      %2225 = vmatprep.mubr.bf16.mxu0 0
      %2226 = vmatmul.mubr.bf16.gmra.mrb[0].mxu0 %v2144
      %v2227 = vpop.f32.mrb[0].mxu0
      %v2228 = vadd.f32 0.0, %v2227
      %v2229 = vpop.f32.mrb[0].mxu0
      %v2230 = vadd.f32 0.0, %v2229
      %v2231 = vpop.f32.mrb[0].mxu0
      %v2232 = vpop.f32.mrb[0].mxu0
      %2233 = vdwg.mxu0
      %v2234 = vadd.f32 %v2148, %v2187
      %v2235 = vadd.f32 %v2149, %v2189
      %v2236 = vadd.f32 %v2150, %v2228
      %v2237 = vadd.f32 %v2151, %v2230
      %v2238 = vxor.u32 %v2234, 2147483648
      %v2239 = vmul.f32 %v2238, 1.442695
      %v2240 = vpow.pop %v2239
      %v2241 = vadd.f32 %v2240, 1.0
      %v2242 = vrcp.pop %v2241
      %v2243 = vmul.f32 1.0, %v2242
      %v2244 = vxor.u32 %v2235, 2147483648
      %v2245 = vmul.f32 %v2244, 1.442695
      %v2246 = vpow.pop %v2245
      %v2247 = vadd.f32 %v2246, 1.0
      %v2248 = vrcp.pop %v2247
      %v2249 = vmul.f32 1.0, %v2248
      %v2250 = vtanh.pop %v2236
      %v2251 = vxor.u32 %v2237, 2147483648
      %v2252 = vmul.f32 %v2251, 1.442695
      %v2253 = vpow.pop %v2252
      %v2254 = vadd.f32 %v2253, 1.0
      %v2255 = vrcp.pop %v2254
      %v2256 = vmul.f32 1.0, %v2255
      %v2257 = vld [vmem:[#allocation5] sm:$0xff]
      %v2258 = vmul.f32 %v2249, %v2257
      %v2259 = vmul.f32 %v2243, %v2250
      %v2260 = vadd.f32 %v2258, %v2259
      %v2261 = vtanh.pop %v2260
      %v2262 = vmul.f32 %v2256, %v2261
      %v2263 = vunpack.c.l.bf16 %v2144
      %v2264 = vsel %vm2143, 1, 0
      %2265 = vset.pattern.permute.xlu0 0
      %2266 = vperm.xlu0 %2265, %v2264
      %v2267 = vpop.permute.xlu0 %2266
      %vm2268 = vcmp.eq.s32.totalorder %v2267, 1
      %v2269 = vsel %vm2268, %v2262, %v2263
      %v2270 = vpack.c.bf16 %v2269, %v2269
      %2271 = vst [vmem:[#allocation4] sm:$0xf] %v2270
      %v2272 = vld [vmem:[#allocation5] sm:$0xff]
      %v2273 = vsel %vm2268, %v2260, %v2272
      %2274 = vst [vmem:[#allocation5] sm:$0xff] %v2273
      %s2275 = sadd.s32 %s1399, 2
      %v2276 = vstv %s2275
      %vm2277 = vcmp.eq.s32.totalorder %v402, %v2276
      %v2278 = vld [vmem:[#allocation8] sm:$0xff]
      %v2279 = vsel %vm2277, 1, 0
      %2280 = vset.pattern.permute.xlu0 0
      %2281 = vperm.xlu0 %2280, %v2279
      %v2282 = vpop.permute.xlu0 %2281
      %vm2283 = vcmp.eq.s32.totalorder %v2282, 1
      %v2284 = vsel %vm2283, %v2135, %v2278
      %2285 = vst [vmem:[#allocation8] sm:$0xff] %v2284
      %vm2286 = vcmp.eq.s32.totalorder %v402, %v1694
      %v2287 = vld [vmem:[#allocation8 + $0x8] sm:$0xff]
      %v2288 = vsel %vm2286, 1, 0
      %2289 = vset.pattern.permute.xlu0 0
      %2290 = vperm.xlu0 %2289, %v2288
      %v2291 = vpop.permute.xlu0 %2290
      %vm2292 = vcmp.eq.s32.totalorder %v2291, 1
      %v2293 = vsel %vm2292, %v2269, %v2287
      %2294 = vst [vmem:[#allocation8 + $0x8] sm:$0xff] %v2293
      %vm2295 = vcmp.gt.s32.totalorder %v402, %v2276
      %v2296 = vld [vmem:[#allocation2] sm:$0xf]
      %s2297 = scalar_lea.vmem [#allocation6], 32
      %v2298 = vld [vmem:[%s2297] sm:$0xff]
      %v2299 = vld [vmem:[%s2297 + $0x8] sm:$0xff]
      %v2300 = vunpack.c.l.bf16 %v2298
      %v2301 = vunpack.c.h.bf16 %v2298
      %v2302 = vunpack.c.l.bf16 %v2299
      %v2303 = vunpack.c.h.bf16 %v2299
      %2304 = vmatprep.subr.bf16.mxu0 %v1506
      %2305 = vmatpush1.bf16.msra.mxu0 %v1505
      %2306 = vmatprep.subr.bf16.mxu0 %v1510
      %2307 = vmatpush1.bf16.msra.mxu0 %v1509
      %2308 = vmatprep.subr.bf16.mxu0 %v1514
      %2309 = vmatpush1.bf16.msra.mxu0 %v1513
      %2310 = vmatprep.subr.bf16.mxu0 %v1518
      %2311 = vmatpush1.bf16.msra.mxu0 %v1517
      %2312 = vmatprep.subr.bf16.mxu0 %v1522
      %2313 = vmatpush1.bf16.msra.mxu0 %v1521
      %2314 = vmatprep.subr.bf16.mxu0 %v1526
      %2315 = vmatpush1.bf16.msra.mxu0 %v1525
      %2316 = vmatprep.subr.bf16.mxu0 %v1530
      %2317 = vmatpush1.bf16.msra.mxu0 %v1529
      %2318 = vmatprep.subr.bf16.mxu0 %v1534
      %2319 = vmatpush1.bf16.msra.mxu0 %v1533
      %2320 = vmatprep.subr.bf16.mxu0 0
      %2321 = vmatpush1.bf16.msra.mxu0 0
      %2322 = vmatprep.subr.bf16.mxu0 0
      %2323 = vmatpush1.bf16.msra.mxu0 0
      %2324 = vmatprep.subr.bf16.mxu0 0
      %2325 = vmatpush1.bf16.msra.mxu0 0
      %2326 = vmatprep.subr.bf16.mxu0 0
      %2327 = vmatpush1.bf16.msra.mxu0 0
      %2328 = vmatprep.subr.bf16.mxu0 0
      %2329 = vmatpush1.bf16.msra.mxu0 0
      %2330 = vmatprep.subr.bf16.mxu0 0
      %2331 = vmatpush1.bf16.msra.mxu0 0
      %2332 = vmatprep.subr.bf16.mxu0 0
      %2333 = vmatpush1.bf16.msra.mxu0 0
      %2334 = vmatprep.subr.bf16.mxu0 0
      %2335 = vmatpush1.bf16.msra.mxu0 0
      %2336 = vmatprep.mubr.bf16.mxu0 0
      %2337 = vmatmul.mubr.bf16.gmra.mrb[0].mxu0 %v2296
      %v2338 = vpop.f32.mrb[0].mxu0
      %v2339 = vadd.f32 0.0, %v2338
      %v2340 = vpop.f32.mrb[0].mxu0
      %v2341 = vadd.f32 0.0, %v2340
      %v2342 = vpop.f32.mrb[0].mxu0
      %v2343 = vpop.f32.mrb[0].mxu0
      %2344 = vdwg.mxu0
      %2345 = vmatprep.subr.bf16.mxu0 %v1508
      %2346 = vmatpush1.bf16.msra.mxu0 %v1507
      %2347 = vmatprep.subr.bf16.mxu0 %v1512
      %2348 = vmatpush1.bf16.msra.mxu0 %v1511
      %2349 = vmatprep.subr.bf16.mxu0 %v1516
      %2350 = vmatpush1.bf16.msra.mxu0 %v1515
      %2351 = vmatprep.subr.bf16.mxu0 %v1520
      %2352 = vmatpush1.bf16.msra.mxu0 %v1519
      %2353 = vmatprep.subr.bf16.mxu0 %v1524
      %2354 = vmatpush1.bf16.msra.mxu0 %v1523
      %2355 = vmatprep.subr.bf16.mxu0 %v1528
      %2356 = vmatpush1.bf16.msra.mxu0 %v1527
      %2357 = vmatprep.subr.bf16.mxu0 %v1532
      %2358 = vmatpush1.bf16.msra.mxu0 %v1531
      %2359 = vmatprep.subr.bf16.mxu0 %v1536
      %2360 = vmatpush1.bf16.msra.mxu0 %v1535
      %2361 = vmatprep.subr.bf16.mxu0 0
      %2362 = vmatpush1.bf16.msra.mxu0 0
      %2363 = vmatprep.subr.bf16.mxu0 0
      %2364 = vmatpush1.bf16.msra.mxu0 0
      %2365 = vmatprep.subr.bf16.mxu0 0
      %2366 = vmatpush1.bf16.msra.mxu0 0
      %2367 = vmatprep.subr.bf16.mxu0 0
      %2368 = vmatpush1.bf16.msra.mxu0 0
      %2369 = vmatprep.subr.bf16.mxu0 0
      %2370 = vmatpush1.bf16.msra.mxu0 0
      %2371 = vmatprep.subr.bf16.mxu0 0
      %2372 = vmatpush1.bf16.msra.mxu0 0
      %2373 = vmatprep.subr.bf16.mxu0 0
      %2374 = vmatpush1.bf16.msra.mxu0 0
      %2375 = vmatprep.subr.bf16.mxu0 0
      %2376 = vmatpush1.bf16.msra.mxu0 0
      %2377 = vmatprep.mubr.bf16.mxu0 0
      %2378 = vmatmul.mubr.bf16.gmra.mrb[0].mxu0 %v2296
      %v2379 = vpop.f32.mrb[0].mxu0
      %v2380 = vadd.f32 0.0, %v2379
      %v2381 = vpop.f32.mrb[0].mxu0
      %v2382 = vadd.f32 0.0, %v2381
      %v2383 = vpop.f32.mrb[0].mxu0
      %v2384 = vpop.f32.mrb[0].mxu0
      %2385 = vdwg.mxu0
      %v2386 = vadd.f32 %v2300, %v2339
      %v2387 = vadd.f32 %v2301, %v2341
      %v2388 = vadd.f32 %v2302, %v2380
      %v2389 = vadd.f32 %v2303, %v2382
      %v2390 = vxor.u32 %v2386, 2147483648
      %v2391 = vmul.f32 %v2390, 1.442695
      %v2392 = vpow.pop %v2391
      %v2393 = vadd.f32 %v2392, 1.0
      %v2394 = vrcp.pop %v2393
      %v2395 = vmul.f32 1.0, %v2394
      %v2396 = vxor.u32 %v2387, 2147483648
      %v2397 = vmul.f32 %v2396, 1.442695
      %v2398 = vpow.pop %v2397
      %v2399 = vadd.f32 %v2398, 1.0
      %v2400 = vrcp.pop %v2399
      %v2401 = vmul.f32 1.0, %v2400
      %v2402 = vtanh.pop %v2388
      %v2403 = vxor.u32 %v2389, 2147483648
      %v2404 = vmul.f32 %v2403, 1.442695
      %v2405 = vpow.pop %v2404
      %v2406 = vadd.f32 %v2405, 1.0
      %v2407 = vrcp.pop %v2406
      %v2408 = vmul.f32 1.0, %v2407
      %v2409 = vld [vmem:[#allocation3] sm:$0xff]
      %v2410 = vmul.f32 %v2401, %v2409
      %v2411 = vmul.f32 %v2395, %v2402
      %v2412 = vadd.f32 %v2410, %v2411
      %v2413 = vtanh.pop %v2412
      %v2414 = vmul.f32 %v2408, %v2413
      %v2415 = vunpack.c.l.bf16 %v2296
      %v2416 = vsel %vm2295, 1, 0
      %2417 = vset.pattern.permute.xlu0 0
      %2418 = vperm.xlu0 %2417, %v2416
      %v2419 = vpop.permute.xlu0 %2418
      %vm2420 = vcmp.eq.s32.totalorder %v2419, 1
      %v2421 = vsel %vm2420, %v2414, %v2415
      %v2422 = vpack.c.bf16 %v2421, %v2421
      %2423 = vst [vmem:[#allocation2] sm:$0xf] %v2422
      %v2424 = vld [vmem:[#allocation3] sm:$0xff]
      %v2425 = vsel %vm2420, %v2412, %v2424
      %2426 = vst [vmem:[#allocation3] sm:$0xff] %v2425
      %s2427 = sadd.s32 %s1692, 1
      %v2428 = vstv %s2427
      %vm2429 = vcmp.gt.s32.totalorder %v402, %v2428
      %v2430 = vld [vmem:[#allocation4] sm:$0xf]
      %s2431 = scalar_lea.vmem [#allocation7], 16
      %v2432 = vld [vmem:[%s2431] sm:$0xff]
      %v2433 = vld [vmem:[%s2431 + $0x8] sm:$0xff]
      %v2434 = vunpack.c.l.bf16 %v2432
      %v2435 = vunpack.c.h.bf16 %v2432
      %v2436 = vunpack.c.l.bf16 %v2433
      %v2437 = vunpack.c.h.bf16 %v2433
      %2438 = vmatprep.subr.bf16.mxu0 %v1801
      %2439 = vmatpush1.bf16.msra.mxu0 %v1800
      %2440 = vmatprep.subr.bf16.mxu0 %v1805
      %2441 = vmatpush1.bf16.msra.mxu0 %v1804
      %2442 = vmatprep.subr.bf16.mxu0 %v1809
      %2443 = vmatpush1.bf16.msra.mxu0 %v1808
      %2444 = vmatprep.subr.bf16.mxu0 %v1813
      %2445 = vmatpush1.bf16.msra.mxu0 %v1812
      %2446 = vmatprep.subr.bf16.mxu0 %v1817
      %2447 = vmatpush1.bf16.msra.mxu0 %v1816
      %2448 = vmatprep.subr.bf16.mxu0 %v1821
      %2449 = vmatpush1.bf16.msra.mxu0 %v1820
      %2450 = vmatprep.subr.bf16.mxu0 %v1825
      %2451 = vmatpush1.bf16.msra.mxu0 %v1824
      %2452 = vmatprep.subr.bf16.mxu0 %v1829
      %2453 = vmatpush1.bf16.msra.mxu0 %v1828
      %2454 = vmatprep.subr.bf16.mxu0 0
      %2455 = vmatpush1.bf16.msra.mxu0 0
      %2456 = vmatprep.subr.bf16.mxu0 0
      %2457 = vmatpush1.bf16.msra.mxu0 0
      %2458 = vmatprep.subr.bf16.mxu0 0
      %2459 = vmatpush1.bf16.msra.mxu0 0
      %2460 = vmatprep.subr.bf16.mxu0 0
      %2461 = vmatpush1.bf16.msra.mxu0 0
      %2462 = vmatprep.subr.bf16.mxu0 0
      %2463 = vmatpush1.bf16.msra.mxu0 0
      %2464 = vmatprep.subr.bf16.mxu0 0
      %2465 = vmatpush1.bf16.msra.mxu0 0
      %2466 = vmatprep.subr.bf16.mxu0 0
      %2467 = vmatpush1.bf16.msra.mxu0 0
      %2468 = vmatprep.subr.bf16.mxu0 0
      %2469 = vmatpush1.bf16.msra.mxu0 0
      %2470 = vmatprep.mubr.bf16.mxu0 0
      %2471 = vmatmul.mubr.bf16.gmra.mrb[0].mxu0 %v2430
      %v2472 = vpop.f32.mrb[0].mxu0
      %v2473 = vadd.f32 0.0, %v2472
      %v2474 = vpop.f32.mrb[0].mxu0
      %v2475 = vadd.f32 0.0, %v2474
      %v2476 = vpop.f32.mrb[0].mxu0
      %v2477 = vpop.f32.mrb[0].mxu0
      %2478 = vdwg.mxu0
      %2479 = vmatprep.subr.bf16.mxu0 %v1803
      %2480 = vmatpush1.bf16.msra.mxu0 %v1802
      %2481 = vmatprep.subr.bf16.mxu0 %v1807
      %2482 = vmatpush1.bf16.msra.mxu0 %v1806
      %2483 = vmatprep.subr.bf16.mxu0 %v1811
      %2484 = vmatpush1.bf16.msra.mxu0 %v1810
      %2485 = vmatprep.subr.bf16.mxu0 %v1815
      %2486 = vmatpush1.bf16.msra.mxu0 %v1814
      %2487 = vmatprep.subr.bf16.mxu0 %v1819
      %2488 = vmatpush1.bf16.msra.mxu0 %v1818
      %2489 = vmatprep.subr.bf16.mxu0 %v1823
      %2490 = vmatpush1.bf16.msra.mxu0 %v1822
      %2491 = vmatprep.subr.bf16.mxu0 %v1827
      %2492 = vmatpush1.bf16.msra.mxu0 %v1826
      %2493 = vmatprep.subr.bf16.mxu0 %v1831
      %2494 = vmatpush1.bf16.msra.mxu0 %v1830
      %2495 = vmatprep.subr.bf16.mxu0 0
      %2496 = vmatpush1.bf16.msra.mxu0 0
      %2497 = vmatprep.subr.bf16.mxu0 0
      %2498 = vmatpush1.bf16.msra.mxu0 0
      %2499 = vmatprep.subr.bf16.mxu0 0
      %2500 = vmatpush1.bf16.msra.mxu0 0
      %2501 = vmatprep.subr.bf16.mxu0 0
      %2502 = vmatpush1.bf16.msra.mxu0 0
      %2503 = vmatprep.subr.bf16.mxu0 0
      %2504 = vmatpush1.bf16.msra.mxu0 0
      %2505 = vmatprep.subr.bf16.mxu0 0
      %2506 = vmatpush1.bf16.msra.mxu0 0
      %2507 = vmatprep.subr.bf16.mxu0 0
      %2508 = vmatpush1.bf16.msra.mxu0 0
      %2509 = vmatprep.subr.bf16.mxu0 0
      %2510 = vmatpush1.bf16.msra.mxu0 0
      %2511 = vmatprep.mubr.bf16.mxu0 0
      %2512 = vmatmul.mubr.bf16.gmra.mrb[0].mxu0 %v2430
      %v2513 = vpop.f32.mrb[0].mxu0
      %v2514 = vadd.f32 0.0, %v2513
      %v2515 = vpop.f32.mrb[0].mxu0
      %v2516 = vadd.f32 0.0, %v2515
      %v2517 = vpop.f32.mrb[0].mxu0
      %v2518 = vpop.f32.mrb[0].mxu0
      %2519 = vdwg.mxu0
      %v2520 = vadd.f32 %v2434, %v2473
      %v2521 = vadd.f32 %v2435, %v2475
      %v2522 = vadd.f32 %v2436, %v2514
      %v2523 = vadd.f32 %v2437, %v2516
      %v2524 = vxor.u32 %v2520, 2147483648
      %v2525 = vmul.f32 %v2524, 1.442695
      %v2526 = vpow.pop %v2525
      %v2527 = vadd.f32 %v2526, 1.0
      %v2528 = vrcp.pop %v2527
      %v2529 = vmul.f32 1.0, %v2528
      %v2530 = vxor.u32 %v2521, 2147483648
      %v2531 = vmul.f32 %v2530, 1.442695
      %v2532 = vpow.pop %v2531
      %v2533 = vadd.f32 %v2532, 1.0
      %v2534 = vrcp.pop %v2533
      %v2535 = vmul.f32 1.0, %v2534
      %v2536 = vtanh.pop %v2522
      %v2537 = vxor.u32 %v2523, 2147483648
      %v2538 = vmul.f32 %v2537, 1.442695
      %v2539 = vpow.pop %v2538
      %v2540 = vadd.f32 %v2539, 1.0
      %v2541 = vrcp.pop %v2540
      %v2542 = vmul.f32 1.0, %v2541
      %v2543 = vld [vmem:[#allocation5] sm:$0xff]
      %v2544 = vmul.f32 %v2535, %v2543
      %v2545 = vmul.f32 %v2529, %v2536
      %v2546 = vadd.f32 %v2544, %v2545
      %v2547 = vtanh.pop %v2546
      %v2548 = vmul.f32 %v2542, %v2547
      %v2549 = vunpack.c.l.bf16 %v2430
      %v2550 = vsel %vm2429, 1, 0
      %2551 = vset.pattern.permute.xlu0 0
      %2552 = vperm.xlu0 %2551, %v2550
      %v2553 = vpop.permute.xlu0 %2552
      %vm2554 = vcmp.eq.s32.totalorder %v2553, 1
      %v2555 = vsel %vm2554, %v2548, %v2549
      %v2556 = vpack.c.bf16 %v2555, %v2555
      %2557 = vst [vmem:[#allocation4] sm:$0xf] %v2556
      %v2558 = vld [vmem:[#allocation5] sm:$0xff]
      %v2559 = vsel %vm2554, %v2546, %v2558
      %2560 = vst [vmem:[#allocation5] sm:$0xff] %v2559
      %s2561 = sadd.s32 %s1399, 3
      %v2562 = vstv %s2561
      %vm2563 = vcmp.eq.s32.totalorder %v402, %v2562
      %v2564 = vld [vmem:[#allocation8] sm:$0xff]
      %v2565 = vsel %vm2563, 1, 0
      %2566 = vset.pattern.permute.xlu0 0
      %2567 = vperm.xlu0 %2566, %v2565
      %v2568 = vpop.permute.xlu0 %2567
      %vm2569 = vcmp.eq.s32.totalorder %v2568, 1
      %v2570 = vsel %vm2569, %v2421, %v2564
      %2571 = vst [vmem:[#allocation8] sm:$0xff] %v2570
      %vm2572 = vcmp.eq.s32.totalorder %v402, %v2142
      %v2573 = vld [vmem:[#allocation8 + $0x8] sm:$0xff]
      %v2574 = vsel %vm2572, 1, 0
      %2575 = vset.pattern.permute.xlu0 0
      %2576 = vperm.xlu0 %2575, %v2574
      %v2577 = vpop.permute.xlu0 %2576
      %vm2578 = vcmp.eq.s32.totalorder %v2577, 1
      %v2579 = vsel %vm2578, %v2555, %v2573
      %2580 = vst [vmem:[#allocation8 + $0x8] sm:$0xff] %v2579
      %vm2581 = vcmp.gt.s32.totalorder %v402, %v2562
      %v2582 = vld [vmem:[#allocation2] sm:$0xf]
      %s2583 = scalar_lea.vmem [#allocation6], 48
      %v2584 = vld [vmem:[%s2583] sm:$0xff]
      %v2585 = vld [vmem:[%s2583 + $0x8] sm:$0xff]
      %v2586 = vunpack.c.l.bf16 %v2584
      %v2587 = vunpack.c.h.bf16 %v2584
      %v2588 = vunpack.c.l.bf16 %v2585
      %v2589 = vunpack.c.h.bf16 %v2585
      %2590 = vmatprep.subr.bf16.mxu0 %v1506
      %2591 = vmatpush1.bf16.msra.mxu0 %v1505
      %2592 = vmatprep.subr.bf16.mxu0 %v1510
      %2593 = vmatpush1.bf16.msra.mxu0 %v1509
      %2594 = vmatprep.subr.bf16.mxu0 %v1514
      %2595 = vmatpush1.bf16.msra.mxu0 %v1513
      %2596 = vmatprep.subr.bf16.mxu0 %v1518
      %2597 = vmatpush1.bf16.msra.mxu0 %v1517
      %2598 = vmatprep.subr.bf16.mxu0 %v1522
      %2599 = vmatpush1.bf16.msra.mxu0 %v1521
      %2600 = vmatprep.subr.bf16.mxu0 %v1526
      %2601 = vmatpush1.bf16.msra.mxu0 %v1525
      %2602 = vmatprep.subr.bf16.mxu0 %v1530
      %2603 = vmatpush1.bf16.msra.mxu0 %v1529
      %2604 = vmatprep.subr.bf16.mxu0 %v1534
      %2605 = vmatpush1.bf16.msra.mxu0 %v1533
      %2606 = vmatprep.subr.bf16.mxu0 0
      %2607 = vmatpush1.bf16.msra.mxu0 0
      %2608 = vmatprep.subr.bf16.mxu0 0
      %2609 = vmatpush1.bf16.msra.mxu0 0
      %2610 = vmatprep.subr.bf16.mxu0 0
      %2611 = vmatpush1.bf16.msra.mxu0 0
      %2612 = vmatprep.subr.bf16.mxu0 0
      %2613 = vmatpush1.bf16.msra.mxu0 0
      %2614 = vmatprep.subr.bf16.mxu0 0
      %2615 = vmatpush1.bf16.msra.mxu0 0
      %2616 = vmatprep.subr.bf16.mxu0 0
      %2617 = vmatpush1.bf16.msra.mxu0 0
      %2618 = vmatprep.subr.bf16.mxu0 0
      %2619 = vmatpush1.bf16.msra.mxu0 0
      %2620 = vmatprep.subr.bf16.mxu0 0
      %2621 = vmatpush1.bf16.msra.mxu0 0
      %2622 = vmatprep.mubr.bf16.mxu0 0
      %2623 = vmatmul.mubr.bf16.gmra.mrb[0].mxu0 %v2582
      %v2624 = vpop.f32.mrb[0].mxu0
      %v2625 = vadd.f32 0.0, %v2624
      %v2626 = vpop.f32.mrb[0].mxu0
      %v2627 = vadd.f32 0.0, %v2626
      %v2628 = vpop.f32.mrb[0].mxu0
      %v2629 = vpop.f32.mrb[0].mxu0
      %2630 = vdwg.mxu0
      %2631 = vmatprep.subr.bf16.mxu0 %v1508
      %2632 = vmatpush1.bf16.msra.mxu0 %v1507
      %2633 = vmatprep.subr.bf16.mxu0 %v1512
      %2634 = vmatpush1.bf16.msra.mxu0 %v1511
      %2635 = vmatprep.subr.bf16.mxu0 %v1516
      %2636 = vmatpush1.bf16.msra.mxu0 %v1515
      %2637 = vmatprep.subr.bf16.mxu0 %v1520
      %2638 = vmatpush1.bf16.msra.mxu0 %v1519
      %2639 = vmatprep.subr.bf16.mxu0 %v1524
      %2640 = vmatpush1.bf16.msra.mxu0 %v1523
      %2641 = vmatprep.subr.bf16.mxu0 %v1528
      %2642 = vmatpush1.bf16.msra.mxu0 %v1527
      %2643 = vmatprep.subr.bf16.mxu0 %v1532
      %2644 = vmatpush1.bf16.msra.mxu0 %v1531
      %2645 = vmatprep.subr.bf16.mxu0 %v1536
      %2646 = vmatpush1.bf16.msra.mxu0 %v1535
      %2647 = vmatprep.subr.bf16.mxu0 0
      %2648 = vmatpush1.bf16.msra.mxu0 0
      %2649 = vmatprep.subr.bf16.mxu0 0
      %2650 = vmatpush1.bf16.msra.mxu0 0
      %2651 = vmatprep.subr.bf16.mxu0 0
      %2652 = vmatpush1.bf16.msra.mxu0 0
      %2653 = vmatprep.subr.bf16.mxu0 0
      %2654 = vmatpush1.bf16.msra.mxu0 0
      %2655 = vmatprep.subr.bf16.mxu0 0
      %2656 = vmatpush1.bf16.msra.mxu0 0
      %2657 = vmatprep.subr.bf16.mxu0 0
      %2658 = vmatpush1.bf16.msra.mxu0 0
      %2659 = vmatprep.subr.bf16.mxu0 0
      %2660 = vmatpush1.bf16.msra.mxu0 0
      %2661 = vmatprep.subr.bf16.mxu0 0
      %2662 = vmatpush1.bf16.msra.mxu0 0
      %2663 = vmatprep.mubr.bf16.mxu0 0
      %2664 = vmatmul.mubr.bf16.gmra.mrb[0].mxu0 %v2582
      %v2665 = vpop.f32.mrb[0].mxu0
      %v2666 = vadd.f32 0.0, %v2665
      %v2667 = vpop.f32.mrb[0].mxu0
      %v2668 = vadd.f32 0.0, %v2667
      %v2669 = vpop.f32.mrb[0].mxu0
      %v2670 = vpop.f32.mrb[0].mxu0
      %2671 = vdwg.mxu0
      %v2672 = vadd.f32 %v2586, %v2625
      %v2673 = vadd.f32 %v2587, %v2627
      %v2674 = vadd.f32 %v2588, %v2666
      %v2675 = vadd.f32 %v2589, %v2668
      %v2676 = vxor.u32 %v2672, 2147483648
      %v2677 = vmul.f32 %v2676, 1.442695
      %v2678 = vpow.pop %v2677
      %v2679 = vadd.f32 %v2678, 1.0
      %v2680 = vrcp.pop %v2679
      %v2681 = vmul.f32 1.0, %v2680
      %v2682 = vxor.u32 %v2673, 2147483648
      %v2683 = vmul.f32 %v2682, 1.442695
      %v2684 = vpow.pop %v2683
      %v2685 = vadd.f32 %v2684, 1.0
      %v2686 = vrcp.pop %v2685
      %v2687 = vmul.f32 1.0, %v2686
      %v2688 = vtanh.pop %v2674
      %v2689 = vxor.u32 %v2675, 2147483648
      %v2690 = vmul.f32 %v2689, 1.442695
      %v2691 = vpow.pop %v2690
      %v2692 = vadd.f32 %v2691, 1.0
      %v2693 = vrcp.pop %v2692
      %v2694 = vmul.f32 1.0, %v2693
      %v2695 = vld [vmem:[#allocation3] sm:$0xff]
      %v2696 = vmul.f32 %v2687, %v2695
      %v2697 = vmul.f32 %v2681, %v2688
      %v2698 = vadd.f32 %v2696, %v2697
      %v2699 = vtanh.pop %v2698
      %v2700 = vmul.f32 %v2694, %v2699
      %v2701 = vunpack.c.l.bf16 %v2582
      %v2702 = vsel %vm2581, 1, 0
      %2703 = vset.pattern.permute.xlu0 0
      %2704 = vperm.xlu0 %2703, %v2702
      %v2705 = vpop.permute.xlu0 %2704
      %vm2706 = vcmp.eq.s32.totalorder %v2705, 1
      %v2707 = vsel %vm2706, %v2700, %v2701
      %v2708 = vpack.c.bf16 %v2707, %v2707
      %2709 = vst [vmem:[#allocation2] sm:$0xf] %v2708
      %v2710 = vld [vmem:[#allocation3] sm:$0xff]
      %v2711 = vsel %vm2706, %v2698, %v2710
      %2712 = vst [vmem:[#allocation3] sm:$0xff] %v2711
      %v2713 = vstv %s1692
      %vm2714 = vcmp.gt.s32.totalorder %v402, %v2713
      %v2715 = vld [vmem:[#allocation4] sm:$0xf]
      %v2716 = vld [vmem:[#allocation7] sm:$0xff]
      %v2717 = vld [vmem:[#allocation7 + $0x8] sm:$0xff]
      %v2718 = vunpack.c.l.bf16 %v2716
      %v2719 = vunpack.c.h.bf16 %v2716
      %v2720 = vunpack.c.l.bf16 %v2717
      %v2721 = vunpack.c.h.bf16 %v2717
      %2722 = vmatprep.subr.bf16.mxu0 %v1801
      %2723 = vmatpush1.bf16.msra.mxu0 %v1800
      %2724 = vmatprep.subr.bf16.mxu0 %v1805
      %2725 = vmatpush1.bf16.msra.mxu0 %v1804
      %2726 = vmatprep.subr.bf16.mxu0 %v1809
      %2727 = vmatpush1.bf16.msra.mxu0 %v1808
      %2728 = vmatprep.subr.bf16.mxu0 %v1813
      %2729 = vmatpush1.bf16.msra.mxu0 %v1812
      %2730 = vmatprep.subr.bf16.mxu0 %v1817
      %2731 = vmatpush1.bf16.msra.mxu0 %v1816
      %2732 = vmatprep.subr.bf16.mxu0 %v1821
      %2733 = vmatpush1.bf16.msra.mxu0 %v1820
      %2734 = vmatprep.subr.bf16.mxu0 %v1825
      %2735 = vmatpush1.bf16.msra.mxu0 %v1824
      %2736 = vmatprep.subr.bf16.mxu0 %v1829
      %2737 = vmatpush1.bf16.msra.mxu0 %v1828
      %2738 = vmatprep.subr.bf16.mxu0 0
      %2739 = vmatpush1.bf16.msra.mxu0 0
      %2740 = vmatprep.subr.bf16.mxu0 0
      %2741 = vmatpush1.bf16.msra.mxu0 0
      %2742 = vmatprep.subr.bf16.mxu0 0
      %2743 = vmatpush1.bf16.msra.mxu0 0
      %2744 = vmatprep.subr.bf16.mxu0 0
      %2745 = vmatpush1.bf16.msra.mxu0 0
      %2746 = vmatprep.subr.bf16.mxu0 0
      %2747 = vmatpush1.bf16.msra.mxu0 0
      %2748 = vmatprep.subr.bf16.mxu0 0
      %2749 = vmatpush1.bf16.msra.mxu0 0
      %2750 = vmatprep.subr.bf16.mxu0 0
      %2751 = vmatpush1.bf16.msra.mxu0 0
      %2752 = vmatprep.subr.bf16.mxu0 0
      %2753 = vmatpush1.bf16.msra.mxu0 0
      %2754 = vmatprep.mubr.bf16.mxu0 0
      %2755 = vmatmul.mubr.bf16.gmra.mrb[0].mxu0 %v2715
      %v2756 = vpop.f32.mrb[0].mxu0
      %v2757 = vadd.f32 0.0, %v2756
      %v2758 = vpop.f32.mrb[0].mxu0
      %v2759 = vadd.f32 0.0, %v2758
      %v2760 = vpop.f32.mrb[0].mxu0
      %v2761 = vpop.f32.mrb[0].mxu0
      %2762 = vdwg.mxu0
      %2763 = vmatprep.subr.bf16.mxu0 %v1803
      %2764 = vmatpush1.bf16.msra.mxu0 %v1802
      %2765 = vmatprep.subr.bf16.mxu0 %v1807
      %2766 = vmatpush1.bf16.msra.mxu0 %v1806
      %2767 = vmatprep.subr.bf16.mxu0 %v1811
      %2768 = vmatpush1.bf16.msra.mxu0 %v1810
      %2769 = vmatprep.subr.bf16.mxu0 %v1815
      %2770 = vmatpush1.bf16.msra.mxu0 %v1814
      %2771 = vmatprep.subr.bf16.mxu0 %v1819
      %2772 = vmatpush1.bf16.msra.mxu0 %v1818
      %2773 = vmatprep.subr.bf16.mxu0 %v1823
      %2774 = vmatpush1.bf16.msra.mxu0 %v1822
      %2775 = vmatprep.subr.bf16.mxu0 %v1827
      %2776 = vmatpush1.bf16.msra.mxu0 %v1826
      %2777 = vmatprep.subr.bf16.mxu0 %v1831
      %2778 = vmatpush1.bf16.msra.mxu0 %v1830
      %2779 = vmatprep.subr.bf16.mxu0 0
      %2780 = vmatpush1.bf16.msra.mxu0 0
      %2781 = vmatprep.subr.bf16.mxu0 0
      %2782 = vmatpush1.bf16.msra.mxu0 0
      %2783 = vmatprep.subr.bf16.mxu0 0
      %2784 = vmatpush1.bf16.msra.mxu0 0
      %2785 = vmatprep.subr.bf16.mxu0 0
      %2786 = vmatpush1.bf16.msra.mxu0 0
      %2787 = vmatprep.subr.bf16.mxu0 0
      %2788 = vmatpush1.bf16.msra.mxu0 0
      %2789 = vmatprep.subr.bf16.mxu0 0
      %2790 = vmatpush1.bf16.msra.mxu0 0
      %2791 = vmatprep.subr.bf16.mxu0 0
      %2792 = vmatpush1.bf16.msra.mxu0 0
      %2793 = vmatprep.subr.bf16.mxu0 0
      %2794 = vmatpush1.bf16.msra.mxu0 0
      %2795 = vmatprep.mubr.bf16.mxu0 0
      %2796 = vmatmul.mubr.bf16.gmra.mrb[0].mxu0 %v2715
      %v2797 = vpop.f32.mrb[0].mxu0
      %v2798 = vadd.f32 0.0, %v2797
      %v2799 = vpop.f32.mrb[0].mxu0
      %v2800 = vadd.f32 0.0, %v2799
      %v2801 = vpop.f32.mrb[0].mxu0
      %v2802 = vpop.f32.mrb[0].mxu0
      %2803 = vdwg.mxu0
      %v2804 = vadd.f32 %v2718, %v2757
      %v2805 = vadd.f32 %v2719, %v2759
      %v2806 = vadd.f32 %v2720, %v2798
      %v2807 = vadd.f32 %v2721, %v2800
      %v2808 = vxor.u32 %v2804, 2147483648
      %v2809 = vmul.f32 %v2808, 1.442695
      %v2810 = vpow.pop %v2809
      %v2811 = vadd.f32 %v2810, 1.0
      %v2812 = vrcp.pop %v2811
      %v2813 = vmul.f32 1.0, %v2812
      %v2814 = vxor.u32 %v2805, 2147483648
      %v2815 = vmul.f32 %v2814, 1.442695
      %v2816 = vpow.pop %v2815
      %v2817 = vadd.f32 %v2816, 1.0
      %v2818 = vrcp.pop %v2817
      %v2819 = vmul.f32 1.0, %v2818
      %v2820 = vtanh.pop %v2806
      %v2821 = vxor.u32 %v2807, 2147483648
      %v2822 = vmul.f32 %v2821, 1.442695
      %v2823 = vpow.pop %v2822
      %v2824 = vadd.f32 %v2823, 1.0
      %v2825 = vrcp.pop %v2824
      %v2826 = vmul.f32 1.0, %v2825
      %v2827 = vld [vmem:[#allocation5] sm:$0xff]
      %v2828 = vmul.f32 %v2819, %v2827
      %v2829 = vmul.f32 %v2813, %v2820
      %v2830 = vadd.f32 %v2828, %v2829
      %v2831 = vtanh.pop %v2830
      %v2832 = vmul.f32 %v2826, %v2831
      %v2833 = vunpack.c.l.bf16 %v2715
      %v2834 = vsel %vm2714, 1, 0
      %2835 = vset.pattern.permute.xlu0 0
      %2836 = vperm.xlu0 %2835, %v2834
      %v2837 = vpop.permute.xlu0 %2836
      %vm2838 = vcmp.eq.s32.totalorder %v2837, 1
      %v2839 = vsel %vm2838, %v2832, %v2833
      %v2840 = vpack.c.bf16 %v2839, %v2839
      %2841 = vst [vmem:[#allocation4] sm:$0xf] %v2840
      %v2842 = vld [vmem:[#allocation5] sm:$0xff]
      %v2843 = vsel %vm2838, %v2830, %v2842
      %2844 = vst [vmem:[#allocation5] sm:$0xff] %v2843
      %s2845 = sadd.s32 %s1399, 4
      %v2846 = vstv %s2845
      %vm2847 = vcmp.eq.s32.totalorder %v402, %v2846
      %v2848 = vld [vmem:[#allocation8] sm:$0xff]
      %v2849 = vsel %vm2847, 1, 0
      %2850 = vset.pattern.permute.xlu0 0
      %2851 = vperm.xlu0 %2850, %v2849
      %v2852 = vpop.permute.xlu0 %2851
      %vm2853 = vcmp.eq.s32.totalorder %v2852, 1
      %v2854 = vsel %vm2853, %v2707, %v2848
      %2855 = vst [vmem:[#allocation8] sm:$0xff] %v2854
      %vm2856 = vcmp.eq.s32.totalorder %v402, %v2428
      %v2857 = vld [vmem:[#allocation8 + $0x8] sm:$0xff]
      %v2858 = vsel %vm2856, 1, 0
      %2859 = vset.pattern.permute.xlu0 0
      %2860 = vperm.xlu0 %2859, %v2858
      %v2861 = vpop.permute.xlu0 %2860
      %vm2862 = vcmp.eq.s32.totalorder %v2861, 1
      %v2863 = vsel %vm2862, %v2839, %v2857
      %2864 = vst [vmem:[#allocation8 + $0x8] sm:$0xff] %v2863
      %p2865 = scmp.eq.s32.totalorder %s20, 1
      // Predicated region
      $region61: #{forward.3} parent=55 // pred_check
        %p2866 = pneg %p2865
      $region62: #{forward.3} parent=55 // pred_check_branch
        %2868 = sbr.rel (%p2866) target = $region64
      $region63: #{forward.3} parent=55 // pred_region
        %v2869 = vld [vmem:[#allocation8] sm:$0xff]
        %v2870 = vld [vmem:[#allocation8 + $0x8] sm:$0xff]
        %v2871 = vld [vmem:[%s8] sm:$0x3]
        %vm2872 = vcmp.gt.s32.totalorder %v402, 0
        %v2874 = vlaneseq
        %v2875 = vshrl.u32 %v2874, 7
        %v2876 = vsub.s32 0, %v2875
        %v2877 = vrot.slane %v2871, %v2876
        %v2878 = vlaneseq
        %v2879 = vshrl.u32 %v2878, 7
        %v2880 = vsub.s32 1, %v2879
        %v2881 = vrot.slane %v2871, %v2880
        %v2884 = vmul.f32 %v2869, %v2877
        %v2885 = vmul.f32 %v2870, %v2881
        %v2886 = vadd.f32 %v2884, %v2885
        %2887 = vadd.xlane.f32.xlu0 %v2886
        %v2888 = vpop.xlane.xlu0 %2887
        %v2889 = vmax.f32 %v2888, 0.0
        %v2890 = vsel %vm2872, %v2889, -1e+30
        %vm2891 = vcmask 7168
        %v2892 = vsel %vm2891, %v2890, -inf
        %v2893 = vrot.slane %v2892, 4
        %v2894 = vmax.f32 %v2892, %v2893
        %v2895 = vrot.slane %v2894, 2
        %v2896 = vmax.f32 %v2894, %v2895
        %v2897 = vrot.slane %v2896, 1
        %v2898 = vmax.f32 %v2896, %v2897
        %v2899 = vsub.f32 %v2890, %v2898
        %v2900 = vmul.f32 %v2899, 1.442695
        %v2901 = vpow.pop %v2900
        %v2902 = vsel %vm2872, %v2901, 0.0
        %v2903 = vsel %vm2891, %v2902, 0.0
        %v2904 = vrot.slane %v2903, 4
        %v2905 = vadd.f32 %v2903, %v2904
        %v2906 = vrot.slane %v2905, 2
        %v2907 = vadd.f32 %v2905, %v2906
        %v2908 = vrot.slane %v2907, 1
        %v2909 = vadd.f32 %v2907, %v2908
        %v2910 = vrcp.pop %v2909
        %v2911 = vmul.f32 %v2902, %v2910
        %v2912 = vsel %vm2891, %v2911, 0.0
        %v2913 = vrot.slane %v2912, 4
        %v2914 = vadd.f32 %v2912, %v2913
        %v2915 = vrot.slane %v2914, 2
        %v2916 = vadd.f32 %v2914, %v2915
        %v2917 = vrot.slane %v2916, 1
        %v2918 = vadd.f32 %v2916, %v2917
        %v2919 = vrcp.pop %v2918
        %v2920 = vmul.f32 %v2911, %v2919
        %2922 = vset.pattern.permute.xlu0 0
        %2923 = vperm.xlu0 %2922, %v2920
        %v2924 = vpop.permute.xlu0 %2923
        %v2926 = vmul.f32 %v2869, %v2924
        %v2927 = vmul.f32 %v2870, %v2924
        %v2928 = vadd.f32 %v2926, %v2927
        %2929 = vadd.xlane.f32.xlu0 %v2928
        %v2930 = vpop.xlane.xlu0 %2929
        %v2931 = vxor.u32 %v2930, 2147483648
        %v2932 = vmul.f32 %v2931, 1.442695
        %v2933 = vpow.pop %v2932
        %v2934 = vadd.f32 %v2933, 1.0
        %v2935 = vrcp.pop %v2934
        %v2936 = vmul.f32 1.0, %v2935
        %2937 = vst.msk [vmem:[%s9] sm:$0xff] %vm2891, %v2936
      $region64: #{forward.3} parent=55 // pred_fallthru
        _
      // Predicated region
      $region65: #{forward.3} parent=55 // pred_check
        %p2938 = pneg %p246
      $region66: #{forward.3} parent=55 // pred_check_branch
        %2940 = sbr.rel (%p2938) target = $region68
      $region67: #{forward.3} parent=55 // pred_region
        _
      $region68: #{forward.3} parent=55 // pred_fallthru
        _
      // Predicated region
      $region69: #{forward.3} parent=55 // pred_check
        %p2941 = pneg %p246
      $region70: #{forward.3} parent=55 // pred_check_branch
        %2943 = sbr.rel (%p2941) target = $region72
      $region71: #{forward.3} parent=55 // pred_region
        _
      $region72: #{forward.3} parent=55 // pred_fallthru
        _
    $region56: #{forward.3} parent=5 // pred_fallthru
      _
    %p2944 = scmp.le.s32.totalorder 2, %s15
    // Predicated region
    $region73: #{forward.3} parent=5 // pred_check
      %p2945 = pneg %p2944
    $region74: #{forward.3} parent=5 // pred_check_branch
      %2947 = sbr.rel (%p2945) target = $region76
    $region75: #{forward.3} parent=5 // pred_region
      %s2948 = ssub.s32 %s15, 2
    $region76: #{forward.3} parent=5 // pred_fallthru
      _
  $region6: #{forward.3} parent=0 // loop_footer
    %s19 = sadd.s32 1, %s15
  $region7: #{forward.3} parent=0 // loop_footer_branch
    %14 = sbr.rel target = $region3
  $region8: #{forward.3} parent=0 // loop_exit
    _

</llo_original>
